<compile_context>
chip_gen: v7x
topology: tpu7x:2x2x1
jax: 0.10.0
libtpu: 0.0.40
codegen_flags: <defaults>
</compile_context>

<pallas_src>
import math

import jax
import jax.numpy as jnp
import numpy as np
from jax.experimental import pallas as pl
from jax.experimental.pallas import tpu as pltpu  # noqa: F401

# ----- model config (matches PlayersTransformerSeq defaults) -----
VOCAB = 64
EMBED_DIM = 64
NHEAD = 2
HEAD_DIM = EMBED_DIM // NHEAD
NUM_LAYERS = 2
SEQ = 6                  # forward implies seq len 6 (fc takes embedding_dim * 6)
FFN_DIM = 2048           # nn.TransformerEncoderLayer default dim_feedforward
OUT_DIM = 63
OUT_PAD = 64             # lane-padded FC output width
LN_EPS = 1e-5
NEG_BIG = -1e30


# ---------------------------------------------------------------------------
# in-kernel helpers
# ---------------------------------------------------------------------------
def _layer_norm(x, w, b):
    mu = jnp.mean(x, axis=-1, keepdims=True)
    var = jnp.mean((x - mu) ** 2, axis=-1, keepdims=True)
    return (x - mu) * jax.lax.rsqrt(var + LN_EPS) * w + b


# ---------------------------------------------------------------------------
# fused Pallas kernel (embedding + 2 encoder layers + FC), single invocation
# ---------------------------------------------------------------------------
def _fused_kernel(
    tok_ref,                    # (SEQ*B, 1) int32, seq-major row order (row = s*B + b)
    emb_ref,                    # (VOCAB, E)                     f32
    wqkv_ref, bqkv_ref,         # (L, E, 3E) f32, (L, 1, 3E) f32   columns = [q | k | v]
    wo_ref, bo_ref,             # (L, E, E) f32 (= out_w.T), (L, 1, E)
    ln1w_ref, ln1b_ref,         # (L, 1, E)
    w1_ref, b1_ref,             # (L, E, F) bf16, (L, 1, F) f32
    w2_ref, b2_ref,             # (L, F, E) bf16, (L, 1, E) f32
    ln2w_ref, ln2b_ref,         # (L, 1, E)
    fcw_ref,                    # (SEQ, E, OUT_PAD) f32   fcw[s] = fc_w_pad[:, s*E:(s+1)*E].T
    fcb_ref,                    # (1, OUT_PAD)
    o_ref,                      # (B, OUT_PAD)
):
    n_tok = tok_ref.shape[0]
    batch = o_ref.shape[0]
    E, D = EMBED_DIM, HEAD_DIM

    # --- embedding gather as a one-hot matmul (stays on the MXU, no dynamic gather) ---
    onehot = (
        tok_ref[...]
        == jax.lax.broadcasted_iota(jnp.int32, (n_tok, VOCAB), 1)
    ).astype(jnp.float32)
    x = jnp.dot(onehot, emb_ref[...], preferred_element_type=jnp.float32)   # (n_tok, E)

    # --- "same batch element" additive attention bias, built in-kernel ---
    # rows are seq-major, so batch id of a row is row % B.
    row_b = jax.lax.broadcasted_iota(jnp.int32, (n_tok, n_tok), 0) % batch
    col_b = jax.lax.broadcasted_iota(jnp.int32, (n_tok, n_tok), 1) % batch
    bias = jnp.where(row_b == col_b, 0.0, NEG_BIG).astype(jnp.float32)      # (n_tok, n_tok)

    scale = float(1.0 / math.sqrt(HEAD_DIM))

    # --- both post-norm encoder layers, statically unrolled ---
    for l in range(NUM_LAYERS):
        # fused Q/K/V projection: one (n_tok, E) x (E, 3E) matmul for both heads
        qkv = jnp.dot(x, wqkv_ref[l], preferred_element_type=jnp.float32) + bqkv_ref[l]

        ctx_heads = []
        for h in range(NHEAD):
            q = qkv[:, h * D:(h + 1) * D]                       # (n_tok, D)
            k = qkv[:, E + h * D:E + (h + 1) * D]               # (n_tok, D)
            v = qkv[:, 2 * E + h * D:2 * E + (h + 1) * D]       # (n_tok, D)
            s = jax.lax.dot_general(                            # q @ k.T -> (n_tok, n_tok)
                q, k, (((1,), (1,)), ((), ())),
                preferred_element_type=jnp.float32,
            ) * scale + bias
            s = s - jnp.max(s, axis=-1, keepdims=True)
            p = jnp.exp(s)
            p = p * pl.reciprocal(jnp.sum(p, axis=-1, keepdims=True), approx=True)
            ctx_heads.append(jnp.dot(p, v, preferred_element_type=jnp.float32))

        ctx = jnp.concatenate(ctx_heads, axis=-1)               # (n_tok, E), heads on lanes
        attn = jnp.dot(ctx, wo_ref[l], preferred_element_type=jnp.float32) + bo_ref[l]
        x = _layer_norm(x + attn, ln1w_ref[l], ln1b_ref[l])

        # FFN with bf16 weights/activations, f32 accumulation
        h1 = jnp.dot(x.astype(jnp.bfloat16), w1_ref[l],
                     preferred_element_type=jnp.float32) + b1_ref[l]         # (n_tok, F)
        h1 = jnp.maximum(h1, 0.0)
        ff = jnp.dot(h1.astype(jnp.bfloat16), w2_ref[l],
                     preferred_element_type=jnp.float32) + b2_ref[l]         # (n_tok, E)
        x = _layer_norm(x + ff, ln2w_ref[l], ln2b_ref[l])

    # --- final FC without any in-kernel reshape: sum over seq positions ---
    # rows are seq-major, so position s of every batch element is the contiguous
    # (and, for B=8, vreg-aligned) row block [s*batch : (s+1)*batch].
    acc = jnp.zeros((batch, OUT_PAD), jnp.float32)
    for s_idx in range(SEQ):
        acc = acc + jnp.dot(x[s_idx * batch:(s_idx + 1) * batch, :], fcw_ref[s_idx],
                            preferred_element_type=jnp.float32)
    o_ref[...] = acc + fcb_ref[...]


# ---------------------------------------------------------------------------
# wrapper
# ---------------------------------------------------------------------------
def prepare_params(params):
    """One-time re-layout of PyTorch-style weights: pre-transposed (RHS-first
    contraction), Q/K/V fused, FFN weights cast to bf16, FC pre-split per seq pos."""
    E = EMBED_DIM
    wqkv, bqkv, wo, bo = [], [], [], []
    ln1w, ln1b, w1, b1, w2, b2, ln2w, ln2b = [], [], [], [], [], [], [], []
    for lp in params["layers"]:
        wqkv.append(lp["in_w"].T)                                 # (E, 3E)
        bqkv.append(lp["in_b"])                                   # (1, 3E)
        wo.append(lp["out_w"].T)                                  # (E, E)
        bo.append(lp["out_b"])                                    # (1, E)
        ln1w.append(lp["ln1_w"]); ln1b.append(lp["ln1_b"])
        w1.append(lp["w1"].T.astype(jnp.bfloat16))                # (E, F) bf16
        b1.append(lp["b1"])                                       # (1, F) f32
        w2.append(lp["w2"].T.astype(jnp.bfloat16))                # (F, E) bf16
        b2.append(lp["b2"])                                       # (1, E) f32
        ln2w.append(lp["ln2_w"]); ln2b.append(lp["ln2_b"])

    fcw_pad = jnp.zeros((OUT_PAD, SEQ * E), jnp.float32).at[:OUT_DIM].set(params["fc_w"])
    fcw_split = fcw_pad.reshape(OUT_PAD, SEQ, E).transpose(1, 2, 0)   # (SEQ, E, OUT_PAD)
    fcb_pad = jnp.zeros((1, OUT_PAD), jnp.float32).at[:, :OUT_DIM].set(params["fc_b"])

    stk = jnp.stack
    return {
        "emb": params["emb"],
        "wqkv": stk(wqkv), "bqkv": stk(bqkv),
        "wo": stk(wo), "bo": stk(bo),
        "ln1w": stk(ln1w), "ln1b": stk(ln1b),
        "w1": stk(w1), "b1": stk(b1), "w2": stk(w2), "b2": stk(b2),
        "ln2w": stk(ln2w), "ln2b": stk(ln2b),
        "fc_w": fcw_split, "fc_b": fcb_pad,
    }


@jax.jit
def forward_pallas(prepped, tokens):
    B, S = tokens.shape
    assert S == SEQ
    n_tok = B * SEQ

    # seq-major flattening: row s*B + b holds (batch b, position s)
    tok_sm = tokens.T.reshape(n_tok, 1).astype(jnp.int32)

    out = pl.pallas_call(
        _fused_kernel,
        out_shape=jax.ShapeDtypeStruct((B, OUT_PAD), jnp.float32),
    )(
        tok_sm, prepped["emb"],
        prepped["wqkv"], prepped["bqkv"],
        prepped["wo"], prepped["bo"],
        prepped["ln1w"], prepped["ln1b"],
        prepped["w1"], prepped["b1"], prepped["w2"], prepped["b2"],
        prepped["ln2w"], prepped["ln2b"],
        prepped["fc_w"], prepped["fc_b"],
    )
    return out[:, :OUT_DIM]


# ---------------------------------------------------------------------------
# pure-JAX f32 reference (same math, PyTorch-style weights) for correctness check
# ---------------------------------------------------------------------------
def _ln_ref(x, w, b):
    mu = jnp.mean(x, axis=-1, keepdims=True)
    var = jnp.mean((x - mu) ** 2, axis=-1, keepdims=True)
    return (x - mu) * jax.lax.rsqrt(var + LN_EPS) * w + b


def forward_ref(params, tokens):
    x = params["emb"][tokens]
    B = x.shape[0]
    for lp in params["layers"]:
        qkv = x @ lp["in_w"].T + lp["in_b"][0]
        q, k, v = jnp.split(qkv, 3, axis=-1)
        qh = q.reshape(B, SEQ, NHEAD, HEAD_DIM)
        kh = k.reshape(B, SEQ, NHEAD, HEAD_DIM)
        vh = v.reshape(B, SEQ, NHEAD, HEAD_DIM)
        s = jnp.einsum("bqhd,bkhd->bhqk", qh, kh) / math.sqrt(HEAD_DIM)
        p = jax.nn.softmax(s, axis=-1)
        ctx = jnp.einsum("bhqk,bkhd->bqhd", p, vh).reshape(B, SEQ, EMBED_DIM)
        attn = ctx @ lp["out_w"].T + lp["out_b"][0]
        x = _ln_ref(x + attn, lp["ln1_w"][0], lp["ln1_b"][0])
        h1 = jax.nn.relu(x @ lp["w1"].T + lp["b1"][0])
        ff = h1 @ lp["w2"].T + lp["b2"][0]
        x = _ln_ref(x + ff, lp["ln2_w"][0], lp["ln2_b"][0])
    x = x.reshape(B, -1)
    return x @ params["fc_w"].T + params["fc_b"][0]


# ---------------------------------------------------------------------------
# deterministic synthetic parameters
# ---------------------------------------------------------------------------
def init_params(key):
    keys = iter(jax.random.split(key, 64))

    def nrm(shape, s=0.05):
        return jax.random.normal(next(keys), shape, jnp.float32) * s

    params = {
        "emb": nrm((VOCAB, EMBED_DIM), 0.5),
        "fc_w": nrm((OUT_DIM, EMBED_DIM * SEQ)),
        "fc_b": nrm((1, OUT_DIM)),
        "layers": [],
    }
    for _ in range(NUM_LAYERS):
        params["layers"].append({
            "in_w": nrm((3 * EMBED_DIM, EMBED_DIM)),
            "in_b": nrm((1, 3 * EMBED_DIM)),
            "out_w": nrm((EMBED_DIM, EMBED_DIM)),
            "out_b": nrm((1, EMBED_DIM)),
            "ln1_w": jnp.ones((1, EMBED_DIM), jnp.float32),
            "ln1_b": jnp.zeros((1, EMBED_DIM), jnp.float32),
            "w1": nrm((FFN_DIM, EMBED_DIM)),
            "b1": nrm((1, FFN_DIM)),
            "w2": nrm((EMBED_DIM, FFN_DIM)),
            "b2": nrm((1, EMBED_DIM)),
            "ln2_w": jnp.ones((1, EMBED_DIM), jnp.float32),
            "ln2_b": jnp.zeros((1, EMBED_DIM), jnp.float32),
        })
    return params


if __name__ == "__main__":
    key = jax.random.PRNGKey(0)
    pkey, tkey = jax.random.split(key)
    params = init_params(pkey)
    prepped = prepare_params(params)

    B = 8   # multiple of 8 keeps the seq-major row blocks sublane-aligned
    tokens = jax.random.randint(tkey, (B, SEQ), 0, VOCAB, dtype=jnp.int32)

    out = forward_pallas(prepped, tokens)
    out = jax.block_until_ready(out)
    assert out.shape == (B, OUT_DIM) and out.dtype == jnp.float32

    # f32 reference; kernel uses bf16 FFN weights (f32 accumulation) + approx reciprocal,
    # so allow a modest tolerance.
    ref = forward_ref(params, tokens)
    np.testing.assert_allclose(np.asarray(out), np.asarray(ref), rtol=2e-2, atol=2e-2)

    print("KERNEL_OK")
</pallas_src>

<mosaic_0001>
module attributes {stable_mosaic.version = 11 : i64} {
  func.func @_fused_kernel(%arg0: memref<48x1xi32, #tpu.memory_space<vmem>>, %arg1: memref<64x64xf32, #tpu.memory_space<vmem>>, %arg2: memref<2x64x192xf32, #tpu.memory_space<vmem>>, %arg3: memref<2x1x192xf32, #tpu.memory_space<vmem>>, %arg4: memref<2x64x64xf32, #tpu.memory_space<vmem>>, %arg5: memref<2x1x64xf32, #tpu.memory_space<vmem>>, %arg6: memref<2x1x64xf32, #tpu.memory_space<vmem>>, %arg7: memref<2x1x64xf32, #tpu.memory_space<vmem>>, %arg8: memref<2x64x2048xbf16, #tpu.memory_space<vmem>>, %arg9: memref<2x1x2048xf32, #tpu.memory_space<vmem>>, %arg10: memref<2x2048x64xbf16, #tpu.memory_space<vmem>>, %arg11: memref<2x1x64xf32, #tpu.memory_space<vmem>>, %arg12: memref<2x1x64xf32, #tpu.memory_space<vmem>>, %arg13: memref<2x1x64xf32, #tpu.memory_space<vmem>>, %arg14: memref<6x64x64xf32, #tpu.memory_space<vmem>>, %arg15: memref<1x64xf32, #tpu.memory_space<vmem>>, %arg16: memref<8x64xf32, #tpu.memory_space<vmem>>) attributes {dimension_semantics = [], scalar_prefetch = 0 : i64, scratch_operands = 0 : i64, tpu.core_type = #tpu.core_type<tc>} {
    %c0 = arith.constant 0 : index
    %c0_0 = arith.constant 0 : index
    %0 = vector.load %arg0[%c0, %c0_0] : memref<48x1xi32, #tpu.memory_space<vmem>>, vector<48x1xi32>
    %1 = tpu.iota {dimensions = array<i32: 1>} : vector<48x64xi32>
    %2 = vector.broadcast %0 : vector<48x1xi32> to vector<48x64xi32>
    %3 = arith.cmpi eq, %2, %1 : vector<48x64xi32>
    %4 = arith.extui %3 : vector<48x64xi1> to vector<48x64xi32>
    %5 = arith.sitofp %4 : vector<48x64xi32> to vector<48x64xf32>
    %c0_1 = arith.constant 0 : index
    %c0_2 = arith.constant 0 : index
    %6 = vector.load %arg1[%c0_1, %c0_2] : memref<64x64xf32, #tpu.memory_space<vmem>>, vector<64x64xf32>
    %cst = arith.constant dense<0.000000e+00> : vector<48x64xf32>
    %7 = tpu.matmul %5, %6, %cst {dimension_numbers = #tpu.dot_dimension_numbers<[1], [0], [0], [1], [0, 0, 1, 1], [], []>} : vector<48x64xf32>, vector<64x64xf32>, vector<48x64xf32> -> vector<48x64xf32>
    %8 = tpu.iota {dimensions = array<i32: 0>} : vector<48x48xi32>
    %c8_i32 = arith.constant 8 : i32
    %c0_i32 = arith.constant 0 : i32
    %9 = arith.cmpi eq, %c8_i32, %c0_i32 : i32
    %c1_i32 = arith.constant 1 : i32
    %10 = arith.select %9, %c1_i32, %c8_i32 : i32
    %11 = vector.broadcast %10 : i32 to vector<48x48xi32>
    %12 = arith.remsi %8, %11 : vector<48x48xi32>
    %c0_i32_3 = arith.constant 0 : i32
    %13 = vector.broadcast %c0_i32_3 : i32 to vector<48x48xi32>
    %14 = arith.cmpi ne, %12, %13 : vector<48x48xi32>
    %c0_i32_4 = arith.constant 0 : i32
    %15 = vector.broadcast %c0_i32_4 : i32 to vector<48x48xi32>
    %16 = arith.cmpi slt, %12, %15 : vector<48x48xi32>
    %c0_i32_5 = arith.constant 0 : i32
    %17 = arith.cmpi slt, %10, %c0_i32_5 : i32
    %18 = vector.broadcast %17 : i1 to vector<48x48xi1>
    %19 = vector.broadcast %18 : vector<48x48xi1> to vector<48x48xi1>
    %20 = arith.xori %16, %19 : vector<48x48xi1>
    %21 = arith.andi %20, %14 : vector<48x48xi1>
    %22 = vector.broadcast %10 : i32 to vector<48x48xi32>
    %23 = arith.addi %12, %22 : vector<48x48xi32>
    %24 = arith.select %21, %23, %12 : vector<48x48xi1>, vector<48x48xi32>
    %25 = tpu.iota {dimensions = array<i32: 1>} : vector<48x48xi32>
    %c8_i32_6 = arith.constant 8 : i32
    %c0_i32_7 = arith.constant 0 : i32
    %26 = arith.cmpi eq, %c8_i32_6, %c0_i32_7 : i32
    %c1_i32_8 = arith.constant 1 : i32
    %27 = arith.select %26, %c1_i32_8, %c8_i32_6 : i32
    %28 = vector.broadcast %27 : i32 to vector<48x48xi32>
    %29 = arith.remsi %25, %28 : vector<48x48xi32>
    %c0_i32_9 = arith.constant 0 : i32
    %30 = vector.broadcast %c0_i32_9 : i32 to vector<48x48xi32>
    %31 = arith.cmpi ne, %29, %30 : vector<48x48xi32>
    %c0_i32_10 = arith.constant 0 : i32
    %32 = vector.broadcast %c0_i32_10 : i32 to vector<48x48xi32>
    %33 = arith.cmpi slt, %29, %32 : vector<48x48xi32>
    %c0_i32_11 = arith.constant 0 : i32
    %34 = arith.cmpi slt, %27, %c0_i32_11 : i32
    %35 = vector.broadcast %34 : i1 to vector<48x48xi1>
    %36 = vector.broadcast %35 : vector<48x48xi1> to vector<48x48xi1>
    %37 = arith.xori %33, %36 : vector<48x48xi1>
    %38 = arith.andi %37, %31 : vector<48x48xi1>
    %39 = vector.broadcast %27 : i32 to vector<48x48xi32>
    %40 = arith.addi %29, %39 : vector<48x48xi32>
    %41 = arith.select %38, %40, %29 : vector<48x48xi1>, vector<48x48xi32>
    %42 = arith.cmpi eq, %24, %41 : vector<48x48xi32>
    %cst_12 = arith.constant 0.000000e+00 : f32
    %cst_13 = arith.constant -1.000000e+30 : f32
    %43 = vector.broadcast %cst_12 : f32 to vector<48x48xf32>
    %44 = vector.broadcast %cst_13 : f32 to vector<48x48xf32>
    %45 = arith.select %42, %43, %44 : vector<48x48xi1>, vector<48x48xf32>
    %c0_14 = arith.constant 0 : index
    %c0_15 = arith.constant 0 : index
    %c0_16 = arith.constant 0 : index
    %46 = vector.load %arg2[%c0_14, %c0_15, %c0_16] : memref<2x64x192xf32, #tpu.memory_space<vmem>>, vector<1x64x192xf32>
    %47 = vector.shape_cast %46 : vector<1x64x192xf32> to vector<64x192xf32>
    %cst_17 = arith.constant dense<0.000000e+00> : vector<48x192xf32>
    %48 = tpu.matmul %7, %47, %cst_17 {dimension_numbers = #tpu.dot_dimension_numbers<[1], [0], [0], [1], [0, 0, 1, 1], [], []>} : vector<48x64xf32>, vector<64x192xf32>, vector<48x192xf32> -> vector<48x192xf32>
    %c0_18 = arith.constant 0 : index
    %c0_19 = arith.constant 0 : index
    %c0_20 = arith.constant 0 : index
    %49 = vector.load %arg3[%c0_18, %c0_19, %c0_20] : memref<2x1x192xf32, #tpu.memory_space<vmem>>, vector<1x1x192xf32>
    %50 = vector.shape_cast %49 : vector<1x1x192xf32> to vector<1x192xf32>
    %51 = vector.broadcast %50 : vector<1x192xf32> to vector<48x192xf32>
    %52 = arith.addf %48, %51 : vector<48x192xf32>
    %53 = vector.extract_strided_slice %52 {offsets = [0, 0], sizes = [48, 32], strides = [1, 1]} : vector<48x192xf32> to vector<48x32xf32>
    %54 = vector.extract_strided_slice %52 {offsets = [0, 64], sizes = [48, 32], strides = [1, 1]} : vector<48x192xf32> to vector<48x32xf32>
    %55 = vector.extract_strided_slice %52 {offsets = [0, 128], sizes = [48, 32], strides = [1, 1]} : vector<48x192xf32> to vector<48x32xf32>
    %cst_21 = arith.constant dense<0.000000e+00> : vector<48x48xf32>
    %56 = tpu.matmul %53, %54, %cst_21 {dimension_numbers = #tpu.dot_dimension_numbers<[1], [1], [0], [0], [0, 0, 1, 0], [], []>} : vector<48x32xf32>, vector<48x32xf32>, vector<48x48xf32> -> vector<48x48xf32>
    %cst_22 = arith.constant 0.176776692 : f32
    %57 = vector.broadcast %cst_22 : f32 to vector<48x48xf32>
    %58 = arith.mulf %56, %57 : vector<48x48xf32>
    %59 = arith.addf %58, %45 : vector<48x48xf32>
    %cst_23 = arith.constant dense<0xFF800000> : vector<48xf32>
    %60 = vector.multi_reduction <maximumf>, %59, %cst_23 [1] : vector<48x48xf32> to vector<48xf32>
    %61 = vector.shape_cast %60 : vector<48xf32> to vector<48x1xf32>
    %62 = vector.broadcast %61 : vector<48x1xf32> to vector<48x48xf32>
    %63 = arith.subf %59, %62 : vector<48x48xf32>
    %64 = math.exp %63 : vector<48x48xf32>
    %cst_24 = arith.constant dense<0.000000e+00> : vector<48xf32>
    %65 = vector.multi_reduction <add>, %64, %cst_24 [1] : vector<48x48xf32> to vector<48xf32>
    %66 = vector.shape_cast %65 : vector<48xf32> to vector<48x1xf32>
    %67 = tpu.reciprocal %66 {approx = true} : vector<48x1xf32> -> vector<48x1xf32>
    %68 = vector.broadcast %67 : vector<48x1xf32> to vector<48x48xf32>
    %69 = arith.mulf %64, %68 : vector<48x48xf32>
    %cst_25 = arith.constant dense<0.000000e+00> : vector<48x32xf32>
    %70 = tpu.matmul %69, %55, %cst_25 {dimension_numbers = #tpu.dot_dimension_numbers<[1], [0], [0], [1], [0, 0, 1, 1], [], []>} : vector<48x48xf32>, vector<48x32xf32>, vector<48x32xf32> -> vector<48x32xf32>
    %71 = vector.extract_strided_slice %52 {offsets = [0, 32], sizes = [48, 32], strides = [1, 1]} : vector<48x192xf32> to vector<48x32xf32>
    %72 = vector.extract_strided_slice %52 {offsets = [0, 96], sizes = [48, 32], strides = [1, 1]} : vector<48x192xf32> to vector<48x32xf32>
    %73 = vector.extract_strided_slice %52 {offsets = [0, 160], sizes = [48, 32], strides = [1, 1]} : vector<48x192xf32> to vector<48x32xf32>
    %cst_26 = arith.constant dense<0.000000e+00> : vector<48x48xf32>
    %74 = tpu.matmul %71, %72, %cst_26 {dimension_numbers = #tpu.dot_dimension_numbers<[1], [1], [0], [0], [0, 0, 1, 0], [], []>} : vector<48x32xf32>, vector<48x32xf32>, vector<48x48xf32> -> vector<48x48xf32>
    %cst_27 = arith.constant 0.176776692 : f32
    %75 = vector.broadcast %cst_27 : f32 to vector<48x48xf32>
    %76 = arith.mulf %74, %75 : vector<48x48xf32>
    %77 = arith.addf %76, %45 : vector<48x48xf32>
    %cst_28 = arith.constant dense<0xFF800000> : vector<48xf32>
    %78 = vector.multi_reduction <maximumf>, %77, %cst_28 [1] : vector<48x48xf32> to vector<48xf32>
    %79 = vector.shape_cast %78 : vector<48xf32> to vector<48x1xf32>
    %80 = vector.broadcast %79 : vector<48x1xf32> to vector<48x48xf32>
    %81 = arith.subf %77, %80 : vector<48x48xf32>
    %82 = math.exp %81 : vector<48x48xf32>
    %cst_29 = arith.constant dense<0.000000e+00> : vector<48xf32>
    %83 = vector.multi_reduction <add>, %82, %cst_29 [1] : vector<48x48xf32> to vector<48xf32>
    %84 = vector.shape_cast %83 : vector<48xf32> to vector<48x1xf32>
    %85 = tpu.reciprocal %84 {approx = true} : vector<48x1xf32> -> vector<48x1xf32>
    %86 = vector.broadcast %85 : vector<48x1xf32> to vector<48x48xf32>
    %87 = arith.mulf %82, %86 : vector<48x48xf32>
    %cst_30 = arith.constant dense<0.000000e+00> : vector<48x32xf32>
    %88 = tpu.matmul %87, %73, %cst_30 {dimension_numbers = #tpu.dot_dimension_numbers<[1], [0], [0], [1], [0, 0, 1, 1], [], []>} : vector<48x48xf32>, vector<48x32xf32>, vector<48x32xf32> -> vector<48x32xf32>
    %89 = tpu.concatenate %70, %88 in 1 : vector<48x32xf32>, vector<48x32xf32> -> vector<48x64xf32>
    %c0_31 = arith.constant 0 : index
    %c0_32 = arith.constant 0 : index
    %c0_33 = arith.constant 0 : index
    %90 = vector.load %arg4[%c0_31, %c0_32, %c0_33] : memref<2x64x64xf32, #tpu.memory_space<vmem>>, vector<1x64x64xf32>
    %91 = vector.shape_cast %90 : vector<1x64x64xf32> to vector<64x64xf32>
    %cst_34 = arith.constant dense<0.000000e+00> : vector<48x64xf32>
    %92 = tpu.matmul %89, %91, %cst_34 {dimension_numbers = #tpu.dot_dimension_numbers<[1], [0], [0], [1], [0, 0, 1, 1], [], []>} : vector<48x64xf32>, vector<64x64xf32>, vector<48x64xf32> -> vector<48x64xf32>
    %c0_35 = arith.constant 0 : index
    %c0_36 = arith.constant 0 : index
    %c0_37 = arith.constant 0 : index
    %93 = vector.load %arg5[%c0_35, %c0_36, %c0_37] : memref<2x1x64xf32, #tpu.memory_space<vmem>>, vector<1x1x64xf32>
    %94 = vector.shape_cast %93 : vector<1x1x64xf32> to vector<1x64xf32>
    %95 = vector.broadcast %94 : vector<1x64xf32> to vector<48x64xf32>
    %96 = arith.addf %92, %95 : vector<48x64xf32>
    %97 = arith.addf %7, %96 : vector<48x64xf32>
    %c0_38 = arith.constant 0 : index
    %c0_39 = arith.constant 0 : index
    %c0_40 = arith.constant 0 : index
    %98 = vector.load %arg6[%c0_38, %c0_39, %c0_40] : memref<2x1x64xf32, #tpu.memory_space<vmem>>, vector<1x1x64xf32>
    %99 = vector.shape_cast %98 : vector<1x1x64xf32> to vector<1x64xf32>
    %c0_41 = arith.constant 0 : index
    %c0_42 = arith.constant 0 : index
    %c0_43 = arith.constant 0 : index
    %100 = vector.load %arg7[%c0_41, %c0_42, %c0_43] : memref<2x1x64xf32, #tpu.memory_space<vmem>>, vector<1x1x64xf32>
    %101 = vector.shape_cast %100 : vector<1x1x64xf32> to vector<1x64xf32>
    %cst_44 = arith.constant dense<0.000000e+00> : vector<48xf32>
    %102 = vector.multi_reduction <add>, %97, %cst_44 [1] : vector<48x64xf32> to vector<48xf32>
    %103 = vector.shape_cast %102 : vector<48xf32> to vector<48x1xf32>
    %cst_45 = arith.constant 6.400000e+01 : f32
    %104 = vector.broadcast %cst_45 : f32 to vector<48x1xf32>
    %105 = arith.divf %103, %104 : vector<48x1xf32>
    %106 = vector.broadcast %105 : vector<48x1xf32> to vector<48x64xf32>
    %107 = arith.subf %97, %106 : vector<48x64xf32>
    %108 = arith.mulf %107, %107 : vector<48x64xf32>
    %cst_46 = arith.constant dense<0.000000e+00> : vector<48xf32>
    %109 = vector.multi_reduction <add>, %108, %cst_46 [1] : vector<48x64xf32> to vector<48xf32>
    %110 = vector.shape_cast %109 : vector<48xf32> to vector<48x1xf32>
    %cst_47 = arith.constant 6.400000e+01 : f32
    %111 = vector.broadcast %cst_47 : f32 to vector<48x1xf32>
    %112 = arith.divf %110, %111 : vector<48x1xf32>
    %113 = vector.broadcast %105 : vector<48x1xf32> to vector<48x64xf32>
    %114 = arith.subf %97, %113 : vector<48x64xf32>
    %cst_48 = arith.constant 9.99999974E-6 : f32
    %115 = vector.broadcast %cst_48 : f32 to vector<48x1xf32>
    %116 = arith.addf %112, %115 : vector<48x1xf32>
    %117 = math.rsqrt %116 : vector<48x1xf32>
    %118 = vector.broadcast %117 : vector<48x1xf32> to vector<48x64xf32>
    %119 = arith.mulf %114, %118 : vector<48x64xf32>
    %120 = vector.broadcast %99 : vector<1x64xf32> to vector<48x64xf32>
    %121 = arith.mulf %119, %120 : vector<48x64xf32>
    %122 = vector.broadcast %101 : vector<1x64xf32> to vector<48x64xf32>
    %123 = arith.addf %121, %122 : vector<48x64xf32>
    %124 = arith.truncf %123 : vector<48x64xf32> to vector<48x64xbf16>
    %c0_49 = arith.constant 0 : index
    %c0_50 = arith.constant 0 : index
    %c0_51 = arith.constant 0 : index
    %125 = vector.load %arg8[%c0_49, %c0_50, %c0_51] : memref<2x64x2048xbf16, #tpu.memory_space<vmem>>, vector<1x64x2048xbf16>
    %126 = vector.shape_cast %125 : vector<1x64x2048xbf16> to vector<64x2048xbf16>
    %cst_52 = arith.constant dense<0.000000e+00> : vector<48x2048xf32>
    %127 = tpu.matmul %124, %126, %cst_52 {dimension_numbers = #tpu.dot_dimension_numbers<[1], [0], [0], [1], [0, 0, 1, 1], [], []>} : vector<48x64xbf16>, vector<64x2048xbf16>, vector<48x2048xf32> -> vector<48x2048xf32>
    %c0_53 = arith.constant 0 : index
    %c0_54 = arith.constant 0 : index
    %c0_55 = arith.constant 0 : index
    %128 = vector.load %arg9[%c0_53, %c0_54, %c0_55] : memref<2x1x2048xf32, #tpu.memory_space<vmem>>, vector<1x1x2048xf32>
    %129 = vector.shape_cast %128 : vector<1x1x2048xf32> to vector<1x2048xf32>
    %130 = vector.broadcast %129 : vector<1x2048xf32> to vector<48x2048xf32>
    %131 = arith.addf %127, %130 : vector<48x2048xf32>
    %cst_56 = arith.constant 0.000000e+00 : f32
    %132 = vector.broadcast %cst_56 : f32 to vector<48x2048xf32>
    %133 = arith.maximumf %131, %132 : vector<48x2048xf32>
    %134 = arith.truncf %133 : vector<48x2048xf32> to vector<48x2048xbf16>
    %c0_57 = arith.constant 0 : index
    %c0_58 = arith.constant 0 : index
    %c0_59 = arith.constant 0 : index
    %135 = vector.load %arg10[%c0_57, %c0_58, %c0_59] : memref<2x2048x64xbf16, #tpu.memory_space<vmem>>, vector<1x2048x64xbf16>
    %136 = vector.shape_cast %135 : vector<1x2048x64xbf16> to vector<2048x64xbf16>
    %cst_60 = arith.constant dense<0.000000e+00> : vector<48x64xf32>
    %137 = tpu.matmul %134, %136, %cst_60 {dimension_numbers = #tpu.dot_dimension_numbers<[1], [0], [0], [1], [0, 0, 1, 1], [], []>} : vector<48x2048xbf16>, vector<2048x64xbf16>, vector<48x64xf32> -> vector<48x64xf32>
    %c0_61 = arith.constant 0 : index
    %c0_62 = arith.constant 0 : index
    %c0_63 = arith.constant 0 : index
    %138 = vector.load %arg11[%c0_61, %c0_62, %c0_63] : memref<2x1x64xf32, #tpu.memory_space<vmem>>, vector<1x1x64xf32>
    %139 = vector.shape_cast %138 : vector<1x1x64xf32> to vector<1x64xf32>
    %140 = vector.broadcast %139 : vector<1x64xf32> to vector<48x64xf32>
    %141 = arith.addf %137, %140 : vector<48x64xf32>
    %142 = arith.addf %123, %141 : vector<48x64xf32>
    %c0_64 = arith.constant 0 : index
    %c0_65 = arith.constant 0 : index
    %c0_66 = arith.constant 0 : index
    %143 = vector.load %arg12[%c0_64, %c0_65, %c0_66] : memref<2x1x64xf32, #tpu.memory_space<vmem>>, vector<1x1x64xf32>
    %144 = vector.shape_cast %143 : vector<1x1x64xf32> to vector<1x64xf32>
    %c0_67 = arith.constant 0 : index
    %c0_68 = arith.constant 0 : index
    %c0_69 = arith.constant 0 : index
    %145 = vector.load %arg13[%c0_67, %c0_68, %c0_69] : memref<2x1x64xf32, #tpu.memory_space<vmem>>, vector<1x1x64xf32>
    %146 = vector.shape_cast %145 : vector<1x1x64xf32> to vector<1x64xf32>
    %cst_70 = arith.constant dense<0.000000e+00> : vector<48xf32>
    %147 = vector.multi_reduction <add>, %142, %cst_70 [1] : vector<48x64xf32> to vector<48xf32>
    %148 = vector.shape_cast %147 : vector<48xf32> to vector<48x1xf32>
    %cst_71 = arith.constant 6.400000e+01 : f32
    %149 = vector.broadcast %cst_71 : f32 to vector<48x1xf32>
    %150 = arith.divf %148, %149 : vector<48x1xf32>
    %151 = vector.broadcast %150 : vector<48x1xf32> to vector<48x64xf32>
    %152 = arith.subf %142, %151 : vector<48x64xf32>
    %153 = arith.mulf %152, %152 : vector<48x64xf32>
    %cst_72 = arith.constant dense<0.000000e+00> : vector<48xf32>
    %154 = vector.multi_reduction <add>, %153, %cst_72 [1] : vector<48x64xf32> to vector<48xf32>
    %155 = vector.shape_cast %154 : vector<48xf32> to vector<48x1xf32>
    %cst_73 = arith.constant 6.400000e+01 : f32
    %156 = vector.broadcast %cst_73 : f32 to vector<48x1xf32>
    %157 = arith.divf %155, %156 : vector<48x1xf32>
    %158 = vector.broadcast %150 : vector<48x1xf32> to vector<48x64xf32>
    %159 = arith.subf %142, %158 : vector<48x64xf32>
    %cst_74 = arith.constant 9.99999974E-6 : f32
    %160 = vector.broadcast %cst_74 : f32 to vector<48x1xf32>
    %161 = arith.addf %157, %160 : vector<48x1xf32>
    %162 = math.rsqrt %161 : vector<48x1xf32>
    %163 = vector.broadcast %162 : vector<48x1xf32> to vector<48x64xf32>
    %164 = arith.mulf %159, %163 : vector<48x64xf32>
    %165 = vector.broadcast %144 : vector<1x64xf32> to vector<48x64xf32>
    %166 = arith.mulf %164, %165 : vector<48x64xf32>
    %167 = vector.broadcast %146 : vector<1x64xf32> to vector<48x64xf32>
    %168 = arith.addf %166, %167 : vector<48x64xf32>
    %c1 = arith.constant 1 : index
    %c0_75 = arith.constant 0 : index
    %c0_76 = arith.constant 0 : index
    %169 = vector.load %arg2[%c1, %c0_75, %c0_76] : memref<2x64x192xf32, #tpu.memory_space<vmem>>, vector<1x64x192xf32>
    %170 = vector.shape_cast %169 : vector<1x64x192xf32> to vector<64x192xf32>
    %cst_77 = arith.constant dense<0.000000e+00> : vector<48x192xf32>
    %171 = tpu.matmul %168, %170, %cst_77 {dimension_numbers = #tpu.dot_dimension_numbers<[1], [0], [0], [1], [0, 0, 1, 1], [], []>} : vector<48x64xf32>, vector<64x192xf32>, vector<48x192xf32> -> vector<48x192xf32>
    %c1_78 = arith.constant 1 : index
    %c0_79 = arith.constant 0 : index
    %c0_80 = arith.constant 0 : index
    %172 = vector.load %arg3[%c1_78, %c0_79, %c0_80] : memref<2x1x192xf32, #tpu.memory_space<vmem>>, vector<1x1x192xf32>
    %173 = vector.shape_cast %172 : vector<1x1x192xf32> to vector<1x192xf32>
    %174 = vector.broadcast %173 : vector<1x192xf32> to vector<48x192xf32>
    %175 = arith.addf %171, %174 : vector<48x192xf32>
    %176 = vector.extract_strided_slice %175 {offsets = [0, 0], sizes = [48, 32], strides = [1, 1]} : vector<48x192xf32> to vector<48x32xf32>
    %177 = vector.extract_strided_slice %175 {offsets = [0, 64], sizes = [48, 32], strides = [1, 1]} : vector<48x192xf32> to vector<48x32xf32>
    %178 = vector.extract_strided_slice %175 {offsets = [0, 128], sizes = [48, 32], strides = [1, 1]} : vector<48x192xf32> to vector<48x32xf32>
    %cst_81 = arith.constant dense<0.000000e+00> : vector<48x48xf32>
    %179 = tpu.matmul %176, %177, %cst_81 {dimension_numbers = #tpu.dot_dimension_numbers<[1], [1], [0], [0], [0, 0, 1, 0], [], []>} : vector<48x32xf32>, vector<48x32xf32>, vector<48x48xf32> -> vector<48x48xf32>
    %cst_82 = arith.constant 0.176776692 : f32
    %180 = vector.broadcast %cst_82 : f32 to vector<48x48xf32>
    %181 = arith.mulf %179, %180 : vector<48x48xf32>
    %182 = arith.addf %181, %45 : vector<48x48xf32>
    %cst_83 = arith.constant dense<0xFF800000> : vector<48xf32>
    %183 = vector.multi_reduction <maximumf>, %182, %cst_83 [1] : vector<48x48xf32> to vector<48xf32>
    %184 = vector.shape_cast %183 : vector<48xf32> to vector<48x1xf32>
    %185 = vector.broadcast %184 : vector<48x1xf32> to vector<48x48xf32>
    %186 = arith.subf %182, %185 : vector<48x48xf32>
    %187 = math.exp %186 : vector<48x48xf32>
    %cst_84 = arith.constant dense<0.000000e+00> : vector<48xf32>
    %188 = vector.multi_reduction <add>, %187, %cst_84 [1] : vector<48x48xf32> to vector<48xf32>
    %189 = vector.shape_cast %188 : vector<48xf32> to vector<48x1xf32>
    %190 = tpu.reciprocal %189 {approx = true} : vector<48x1xf32> -> vector<48x1xf32>
    %191 = vector.broadcast %190 : vector<48x1xf32> to vector<48x48xf32>
    %192 = arith.mulf %187, %191 : vector<48x48xf32>
    %cst_85 = arith.constant dense<0.000000e+00> : vector<48x32xf32>
    %193 = tpu.matmul %192, %178, %cst_85 {dimension_numbers = #tpu.dot_dimension_numbers<[1], [0], [0], [1], [0, 0, 1, 1], [], []>} : vector<48x48xf32>, vector<48x32xf32>, vector<48x32xf32> -> vector<48x32xf32>
    %194 = vector.extract_strided_slice %175 {offsets = [0, 32], sizes = [48, 32], strides = [1, 1]} : vector<48x192xf32> to vector<48x32xf32>
    %195 = vector.extract_strided_slice %175 {offsets = [0, 96], sizes = [48, 32], strides = [1, 1]} : vector<48x192xf32> to vector<48x32xf32>
    %196 = vector.extract_strided_slice %175 {offsets = [0, 160], sizes = [48, 32], strides = [1, 1]} : vector<48x192xf32> to vector<48x32xf32>
    %cst_86 = arith.constant dense<0.000000e+00> : vector<48x48xf32>
    %197 = tpu.matmul %194, %195, %cst_86 {dimension_numbers = #tpu.dot_dimension_numbers<[1], [1], [0], [0], [0, 0, 1, 0], [], []>} : vector<48x32xf32>, vector<48x32xf32>, vector<48x48xf32> -> vector<48x48xf32>
    %cst_87 = arith.constant 0.176776692 : f32
    %198 = vector.broadcast %cst_87 : f32 to vector<48x48xf32>
    %199 = arith.mulf %197, %198 : vector<48x48xf32>
    %200 = arith.addf %199, %45 : vector<48x48xf32>
    %cst_88 = arith.constant dense<0xFF800000> : vector<48xf32>
    %201 = vector.multi_reduction <maximumf>, %200, %cst_88 [1] : vector<48x48xf32> to vector<48xf32>
    %202 = vector.shape_cast %201 : vector<48xf32> to vector<48x1xf32>
    %203 = vector.broadcast %202 : vector<48x1xf32> to vector<48x48xf32>
    %204 = arith.subf %200, %203 : vector<48x48xf32>
    %205 = math.exp %204 : vector<48x48xf32>
    %cst_89 = arith.constant dense<0.000000e+00> : vector<48xf32>
    %206 = vector.multi_reduction <add>, %205, %cst_89 [1] : vector<48x48xf32> to vector<48xf32>
    %207 = vector.shape_cast %206 : vector<48xf32> to vector<48x1xf32>
    %208 = tpu.reciprocal %207 {approx = true} : vector<48x1xf32> -> vector<48x1xf32>
    %209 = vector.broadcast %208 : vector<48x1xf32> to vector<48x48xf32>
    %210 = arith.mulf %205, %209 : vector<48x48xf32>
    %cst_90 = arith.constant dense<0.000000e+00> : vector<48x32xf32>
    %211 = tpu.matmul %210, %196, %cst_90 {dimension_numbers = #tpu.dot_dimension_numbers<[1], [0], [0], [1], [0, 0, 1, 1], [], []>} : vector<48x48xf32>, vector<48x32xf32>, vector<48x32xf32> -> vector<48x32xf32>
    %212 = tpu.concatenate %193, %211 in 1 : vector<48x32xf32>, vector<48x32xf32> -> vector<48x64xf32>
    %c1_91 = arith.constant 1 : index
    %c0_92 = arith.constant 0 : index
    %c0_93 = arith.constant 0 : index
    %213 = vector.load %arg4[%c1_91, %c0_92, %c0_93] : memref<2x64x64xf32, #tpu.memory_space<vmem>>, vector<1x64x64xf32>
    %214 = vector.shape_cast %213 : vector<1x64x64xf32> to vector<64x64xf32>
    %cst_94 = arith.constant dense<0.000000e+00> : vector<48x64xf32>
    %215 = tpu.matmul %212, %214, %cst_94 {dimension_numbers = #tpu.dot_dimension_numbers<[1], [0], [0], [1], [0, 0, 1, 1], [], []>} : vector<48x64xf32>, vector<64x64xf32>, vector<48x64xf32> -> vector<48x64xf32>
    %c1_95 = arith.constant 1 : index
    %c0_96 = arith.constant 0 : index
    %c0_97 = arith.constant 0 : index
    %216 = vector.load %arg5[%c1_95, %c0_96, %c0_97] : memref<2x1x64xf32, #tpu.memory_space<vmem>>, vector<1x1x64xf32>
    %217 = vector.shape_cast %216 : vector<1x1x64xf32> to vector<1x64xf32>
    %218 = vector.broadcast %217 : vector<1x64xf32> to vector<48x64xf32>
    %219 = arith.addf %215, %218 : vector<48x64xf32>
    %220 = arith.addf %168, %219 : vector<48x64xf32>
    %c1_98 = arith.constant 1 : index
    %c0_99 = arith.constant 0 : index
    %c0_100 = arith.constant 0 : index
    %221 = vector.load %arg6[%c1_98, %c0_99, %c0_100] : memref<2x1x64xf32, #tpu.memory_space<vmem>>, vector<1x1x64xf32>
    %222 = vector.shape_cast %221 : vector<1x1x64xf32> to vector<1x64xf32>
    %c1_101 = arith.constant 1 : index
    %c0_102 = arith.constant 0 : index
    %c0_103 = arith.constant 0 : index
    %223 = vector.load %arg7[%c1_101, %c0_102, %c0_103] : memref<2x1x64xf32, #tpu.memory_space<vmem>>, vector<1x1x64xf32>
    %224 = vector.shape_cast %223 : vector<1x1x64xf32> to vector<1x64xf32>
    %cst_104 = arith.constant dense<0.000000e+00> : vector<48xf32>
    %225 = vector.multi_reduction <add>, %220, %cst_104 [1] : vector<48x64xf32> to vector<48xf32>
    %226 = vector.shape_cast %225 : vector<48xf32> to vector<48x1xf32>
    %cst_105 = arith.constant 6.400000e+01 : f32
    %227 = vector.broadcast %cst_105 : f32 to vector<48x1xf32>
    %228 = arith.divf %226, %227 : vector<48x1xf32>
    %229 = vector.broadcast %228 : vector<48x1xf32> to vector<48x64xf32>
    %230 = arith.subf %220, %229 : vector<48x64xf32>
    %231 = arith.mulf %230, %230 : vector<48x64xf32>
    %cst_106 = arith.constant dense<0.000000e+00> : vector<48xf32>
    %232 = vector.multi_reduction <add>, %231, %cst_106 [1] : vector<48x64xf32> to vector<48xf32>
    %233 = vector.shape_cast %232 : vector<48xf32> to vector<48x1xf32>
    %cst_107 = arith.constant 6.400000e+01 : f32
    %234 = vector.broadcast %cst_107 : f32 to vector<48x1xf32>
    %235 = arith.divf %233, %234 : vector<48x1xf32>
    %236 = vector.broadcast %228 : vector<48x1xf32> to vector<48x64xf32>
    %237 = arith.subf %220, %236 : vector<48x64xf32>
    %cst_108 = arith.constant 9.99999974E-6 : f32
    %238 = vector.broadcast %cst_108 : f32 to vector<48x1xf32>
    %239 = arith.addf %235, %238 : vector<48x1xf32>
    %240 = math.rsqrt %239 : vector<48x1xf32>
    %241 = vector.broadcast %240 : vector<48x1xf32> to vector<48x64xf32>
    %242 = arith.mulf %237, %241 : vector<48x64xf32>
    %243 = vector.broadcast %222 : vector<1x64xf32> to vector<48x64xf32>
    %244 = arith.mulf %242, %243 : vector<48x64xf32>
    %245 = vector.broadcast %224 : vector<1x64xf32> to vector<48x64xf32>
    %246 = arith.addf %244, %245 : vector<48x64xf32>
    %247 = arith.truncf %246 : vector<48x64xf32> to vector<48x64xbf16>
    %c1_109 = arith.constant 1 : index
    %c0_110 = arith.constant 0 : index
    %c0_111 = arith.constant 0 : index
    %248 = vector.load %arg8[%c1_109, %c0_110, %c0_111] : memref<2x64x2048xbf16, #tpu.memory_space<vmem>>, vector<1x64x2048xbf16>
    %249 = vector.shape_cast %248 : vector<1x64x2048xbf16> to vector<64x2048xbf16>
    %cst_112 = arith.constant dense<0.000000e+00> : vector<48x2048xf32>
    %250 = tpu.matmul %247, %249, %cst_112 {dimension_numbers = #tpu.dot_dimension_numbers<[1], [0], [0], [1], [0, 0, 1, 1], [], []>} : vector<48x64xbf16>, vector<64x2048xbf16>, vector<48x2048xf32> -> vector<48x2048xf32>
    %c1_113 = arith.constant 1 : index
    %c0_114 = arith.constant 0 : index
    %c0_115 = arith.constant 0 : index
    %251 = vector.load %arg9[%c1_113, %c0_114, %c0_115] : memref<2x1x2048xf32, #tpu.memory_space<vmem>>, vector<1x1x2048xf32>
    %252 = vector.shape_cast %251 : vector<1x1x2048xf32> to vector<1x2048xf32>
    %253 = vector.broadcast %252 : vector<1x2048xf32> to vector<48x2048xf32>
    %254 = arith.addf %250, %253 : vector<48x2048xf32>
    %cst_116 = arith.constant 0.000000e+00 : f32
    %255 = vector.broadcast %cst_116 : f32 to vector<48x2048xf32>
    %256 = arith.maximumf %254, %255 : vector<48x2048xf32>
    %257 = arith.truncf %256 : vector<48x2048xf32> to vector<48x2048xbf16>
    %c1_117 = arith.constant 1 : index
    %c0_118 = arith.constant 0 : index
    %c0_119 = arith.constant 0 : index
    %258 = vector.load %arg10[%c1_117, %c0_118, %c0_119] : memref<2x2048x64xbf16, #tpu.memory_space<vmem>>, vector<1x2048x64xbf16>
    %259 = vector.shape_cast %258 : vector<1x2048x64xbf16> to vector<2048x64xbf16>
    %cst_120 = arith.constant dense<0.000000e+00> : vector<48x64xf32>
    %260 = tpu.matmul %257, %259, %cst_120 {dimension_numbers = #tpu.dot_dimension_numbers<[1], [0], [0], [1], [0, 0, 1, 1], [], []>} : vector<48x2048xbf16>, vector<2048x64xbf16>, vector<48x64xf32> -> vector<48x64xf32>
    %c1_121 = arith.constant 1 : index
    %c0_122 = arith.constant 0 : index
    %c0_123 = arith.constant 0 : index
    %261 = vector.load %arg11[%c1_121, %c0_122, %c0_123] : memref<2x1x64xf32, #tpu.memory_space<vmem>>, vector<1x1x64xf32>
    %262 = vector.shape_cast %261 : vector<1x1x64xf32> to vector<1x64xf32>
    %263 = vector.broadcast %262 : vector<1x64xf32> to vector<48x64xf32>
    %264 = arith.addf %260, %263 : vector<48x64xf32>
    %265 = arith.addf %246, %264 : vector<48x64xf32>
    %c1_124 = arith.constant 1 : index
    %c0_125 = arith.constant 0 : index
    %c0_126 = arith.constant 0 : index
    %266 = vector.load %arg12[%c1_124, %c0_125, %c0_126] : memref<2x1x64xf32, #tpu.memory_space<vmem>>, vector<1x1x64xf32>
    %267 = vector.shape_cast %266 : vector<1x1x64xf32> to vector<1x64xf32>
    %c1_127 = arith.constant 1 : index
    %c0_128 = arith.constant 0 : index
    %c0_129 = arith.constant 0 : index
    %268 = vector.load %arg13[%c1_127, %c0_128, %c0_129] : memref<2x1x64xf32, #tpu.memory_space<vmem>>, vector<1x1x64xf32>
    %269 = vector.shape_cast %268 : vector<1x1x64xf32> to vector<1x64xf32>
    %cst_130 = arith.constant dense<0.000000e+00> : vector<48xf32>
    %270 = vector.multi_reduction <add>, %265, %cst_130 [1] : vector<48x64xf32> to vector<48xf32>
    %271 = vector.shape_cast %270 : vector<48xf32> to vector<48x1xf32>
    %cst_131 = arith.constant 6.400000e+01 : f32
    %272 = vector.broadcast %cst_131 : f32 to vector<48x1xf32>
    %273 = arith.divf %271, %272 : vector<48x1xf32>
    %274 = vector.broadcast %273 : vector<48x1xf32> to vector<48x64xf32>
    %275 = arith.subf %265, %274 : vector<48x64xf32>
    %276 = arith.mulf %275, %275 : vector<48x64xf32>
    %cst_132 = arith.constant dense<0.000000e+00> : vector<48xf32>
    %277 = vector.multi_reduction <add>, %276, %cst_132 [1] : vector<48x64xf32> to vector<48xf32>
    %278 = vector.shape_cast %277 : vector<48xf32> to vector<48x1xf32>
    %cst_133 = arith.constant 6.400000e+01 : f32
    %279 = vector.broadcast %cst_133 : f32 to vector<48x1xf32>
    %280 = arith.divf %278, %279 : vector<48x1xf32>
    %281 = vector.broadcast %273 : vector<48x1xf32> to vector<48x64xf32>
    %282 = arith.subf %265, %281 : vector<48x64xf32>
    %cst_134 = arith.constant 9.99999974E-6 : f32
    %283 = vector.broadcast %cst_134 : f32 to vector<48x1xf32>
    %284 = arith.addf %280, %283 : vector<48x1xf32>
    %285 = math.rsqrt %284 : vector<48x1xf32>
    %286 = vector.broadcast %285 : vector<48x1xf32> to vector<48x64xf32>
    %287 = arith.mulf %282, %286 : vector<48x64xf32>
    %288 = vector.broadcast %267 : vector<1x64xf32> to vector<48x64xf32>
    %289 = arith.mulf %287, %288 : vector<48x64xf32>
    %290 = vector.broadcast %269 : vector<1x64xf32> to vector<48x64xf32>
    %291 = arith.addf %289, %290 : vector<48x64xf32>
    %cst_135 = arith.constant 0.000000e+00 : f32
    %292 = vector.broadcast %cst_135 : f32 to vector<8x64xf32>
    %293 = vector.extract_strided_slice %291 {offsets = [0, 0], sizes = [8, 64], strides = [1, 1]} : vector<48x64xf32> to vector<8x64xf32>
    %c0_136 = arith.constant 0 : index
    %c0_137 = arith.constant 0 : index
    %c0_138 = arith.constant 0 : index
    %294 = vector.load %arg14[%c0_136, %c0_137, %c0_138] : memref<6x64x64xf32, #tpu.memory_space<vmem>>, vector<1x64x64xf32>
    %295 = vector.shape_cast %294 : vector<1x64x64xf32> to vector<64x64xf32>
    %cst_139 = arith.constant dense<0.000000e+00> : vector<8x64xf32>
    %296 = tpu.matmul %293, %295, %cst_139 {dimension_numbers = #tpu.dot_dimension_numbers<[1], [0], [0], [1], [0, 0, 1, 1], [], []>} : vector<8x64xf32>, vector<64x64xf32>, vector<8x64xf32> -> vector<8x64xf32>
    %297 = arith.addf %292, %296 : vector<8x64xf32>
    %298 = vector.extract_strided_slice %291 {offsets = [8, 0], sizes = [8, 64], strides = [1, 1]} : vector<48x64xf32> to vector<8x64xf32>
    %c1_140 = arith.constant 1 : index
    %c0_141 = arith.constant 0 : index
    %c0_142 = arith.constant 0 : index
    %299 = vector.load %arg14[%c1_140, %c0_141, %c0_142] : memref<6x64x64xf32, #tpu.memory_space<vmem>>, vector<1x64x64xf32>
    %300 = vector.shape_cast %299 : vector<1x64x64xf32> to vector<64x64xf32>
    %cst_143 = arith.constant dense<0.000000e+00> : vector<8x64xf32>
    %301 = tpu.matmul %298, %300, %cst_143 {dimension_numbers = #tpu.dot_dimension_numbers<[1], [0], [0], [1], [0, 0, 1, 1], [], []>} : vector<8x64xf32>, vector<64x64xf32>, vector<8x64xf32> -> vector<8x64xf32>
    %302 = arith.addf %297, %301 : vector<8x64xf32>
    %303 = vector.extract_strided_slice %291 {offsets = [16, 0], sizes = [8, 64], strides = [1, 1]} : vector<48x64xf32> to vector<8x64xf32>
    %c2 = arith.constant 2 : index
    %c0_144 = arith.constant 0 : index
    %c0_145 = arith.constant 0 : index
    %304 = vector.load %arg14[%c2, %c0_144, %c0_145] : memref<6x64x64xf32, #tpu.memory_space<vmem>>, vector<1x64x64xf32>
    %305 = vector.shape_cast %304 : vector<1x64x64xf32> to vector<64x64xf32>
    %cst_146 = arith.constant dense<0.000000e+00> : vector<8x64xf32>
    %306 = tpu.matmul %303, %305, %cst_146 {dimension_numbers = #tpu.dot_dimension_numbers<[1], [0], [0], [1], [0, 0, 1, 1], [], []>} : vector<8x64xf32>, vector<64x64xf32>, vector<8x64xf32> -> vector<8x64xf32>
    %307 = arith.addf %302, %306 : vector<8x64xf32>
    %308 = vector.extract_strided_slice %291 {offsets = [24, 0], sizes = [8, 64], strides = [1, 1]} : vector<48x64xf32> to vector<8x64xf32>
    %c3 = arith.constant 3 : index
    %c0_147 = arith.constant 0 : index
    %c0_148 = arith.constant 0 : index
    %309 = vector.load %arg14[%c3, %c0_147, %c0_148] : memref<6x64x64xf32, #tpu.memory_space<vmem>>, vector<1x64x64xf32>
    %310 = vector.shape_cast %309 : vector<1x64x64xf32> to vector<64x64xf32>
    %cst_149 = arith.constant dense<0.000000e+00> : vector<8x64xf32>
    %311 = tpu.matmul %308, %310, %cst_149 {dimension_numbers = #tpu.dot_dimension_numbers<[1], [0], [0], [1], [0, 0, 1, 1], [], []>} : vector<8x64xf32>, vector<64x64xf32>, vector<8x64xf32> -> vector<8x64xf32>
    %312 = arith.addf %307, %311 : vector<8x64xf32>
    %313 = vector.extract_strided_slice %291 {offsets = [32, 0], sizes = [8, 64], strides = [1, 1]} : vector<48x64xf32> to vector<8x64xf32>
    %c4 = arith.constant 4 : index
    %c0_150 = arith.constant 0 : index
    %c0_151 = arith.constant 0 : index
    %314 = vector.load %arg14[%c4, %c0_150, %c0_151] : memref<6x64x64xf32, #tpu.memory_space<vmem>>, vector<1x64x64xf32>
    %315 = vector.shape_cast %314 : vector<1x64x64xf32> to vector<64x64xf32>
    %cst_152 = arith.constant dense<0.000000e+00> : vector<8x64xf32>
    %316 = tpu.matmul %313, %315, %cst_152 {dimension_numbers = #tpu.dot_dimension_numbers<[1], [0], [0], [1], [0, 0, 1, 1], [], []>} : vector<8x64xf32>, vector<64x64xf32>, vector<8x64xf32> -> vector<8x64xf32>
    %317 = arith.addf %312, %316 : vector<8x64xf32>
    %318 = vector.extract_strided_slice %291 {offsets = [40, 0], sizes = [8, 64], strides = [1, 1]} : vector<48x64xf32> to vector<8x64xf32>
    %c5 = arith.constant 5 : index
    %c0_153 = arith.constant 0 : index
    %c0_154 = arith.constant 0 : index
    %319 = vector.load %arg14[%c5, %c0_153, %c0_154] : memref<6x64x64xf32, #tpu.memory_space<vmem>>, vector<1x64x64xf32>
    %320 = vector.shape_cast %319 : vector<1x64x64xf32> to vector<64x64xf32>
    %cst_155 = arith.constant dense<0.000000e+00> : vector<8x64xf32>
    %321 = tpu.matmul %318, %320, %cst_155 {dimension_numbers = #tpu.dot_dimension_numbers<[1], [0], [0], [1], [0, 0, 1, 1], [], []>} : vector<8x64xf32>, vector<64x64xf32>, vector<8x64xf32> -> vector<8x64xf32>
    %322 = arith.addf %317, %321 : vector<8x64xf32>
    %c0_156 = arith.constant 0 : index
    %c0_157 = arith.constant 0 : index
    %323 = vector.load %arg15[%c0_156, %c0_157] : memref<1x64xf32, #tpu.memory_space<vmem>>, vector<1x64xf32>
    %324 = vector.broadcast %323 : vector<1x64xf32> to vector<8x64xf32>
    %325 = arith.addf %322, %324 : vector<8x64xf32>
    %c0_158 = arith.constant 0 : index
    %c0_159 = arith.constant 0 : index
    %326 = vector.load %arg16[%c0_158, %c0_159] : memref<8x64xf32, #tpu.memory_space<vmem>>, vector<8x64xf32>
    tpu.vector_store %arg16[%c0_158, %c0_159], %325 {strides = array<i32>} : memref<8x64xf32, #tpu.memory_space<vmem>>, vector<8x64xf32>,
    return
  }
}

</mosaic_0001>

<llo_original>
// kernel: forward_pallas.1
$region0: #{forward_pallas.1}
  #allocation0 [shape = 'u32[]', space=smem, size = 0x4, offset = 0x4, fixed_abs, tag = 'smem constant byte address 0x4 - core index']
  #allocation1 [shape = 'u32[144,128]{1,0:T(1,128)}', space=vmem, size = 0x12000, scoped, tag = 'internal scratch']
  %s0 = inlined_call_operand.vmem [shape: s32[48,1], index: 0, kind: input, shape index: {}]
  %s1 = inlined_call_operand.vmem [shape: f32[64,64], index: 1, kind: input, shape index: {}]
  %s2 = inlined_call_operand.vmem [shape: f32[2,64,192], index: 2, kind: input, shape index: {}]
  %s3 = inlined_call_operand.vmem [shape: f32[2,1,192], index: 3, kind: input, shape index: {}]
  %s4 = inlined_call_operand.vmem [shape: f32[2,64,64], index: 4, kind: input, shape index: {}]
  %s5 = inlined_call_operand.vmem [shape: f32[2,1,64], index: 5, kind: input, shape index: {}]
  %s6 = inlined_call_operand.vmem [shape: f32[2,1,64], index: 6, kind: input, shape index: {}]
  %s7 = inlined_call_operand.vmem [shape: f32[2,1,64], index: 7, kind: input, shape index: {}]
  %s8 = inlined_call_operand.vmem [shape: bf16[2,64,2048], index: 8, kind: input, shape index: {}]
  %s9 = inlined_call_operand.vmem [shape: f32[2,1,2048], index: 9, kind: input, shape index: {}]
  %s10 = inlined_call_operand.vmem [shape: bf16[2,2048,64], index: 10, kind: input, shape index: {}]
  %s11 = inlined_call_operand.vmem [shape: f32[2,1,64], index: 11, kind: input, shape index: {}]
  %s12 = inlined_call_operand.vmem [shape: f32[2,1,64], index: 12, kind: input, shape index: {}]
  %s13 = inlined_call_operand.vmem [shape: f32[2,1,64], index: 13, kind: input, shape index: {}]
  %s14 = inlined_call_operand.vmem [shape: f32[6,64,64], index: 14, kind: input, shape index: {}]
  %s15 = inlined_call_operand.vmem [shape: f32[1,64], index: 15, kind: input, shape index: {}]
  %s16 = inlined_call_operand.hbm [shape: f32[8,64], index: 16, kind: output, shape index: {}]
  %s17 = sld [smem:[#allocation0]]
  $region74: #{forward_pallas.1} parent=0
    _
  %s19 = ssub.s32 1, %s17
  %s20 = scalar_select 0, %s19, %s17
  $region1: #{forward_pallas.1} parent=0
    #allocation2 [shape = 'u8[4096]{0}', space=vmem, size = 0x1000, scoped, tag = 'output window, operand 0, single buffered']
    #allocation3 [shape = 's32[1]{0}', space=sflag, size = 0x4, scoped, tag = 'scoped memory for forward_pallas.1']
    %21 = vsyncpa [#allocation3], 0
    // Predicated region
    $region2: #{forward_pallas.1} parent=1 // pred_check
      _
    $region3: #{forward_pallas.1} parent=1 // pred_check_branch
      %23 = sbr.rel (0) target = $region5
    $region4: #{forward_pallas.1} parent=1 // pred_region
      _
    $region5: #{forward_pallas.1} parent=1 // pred_fallthru
      _
    // Predicated region
    $region6: #{forward_pallas.1} parent=1 // pred_check
      _
    $region7: #{forward_pallas.1} parent=1 // pred_check_branch
      %25 = sbr.rel (0) target = $region9
    $region8: #{forward_pallas.1} parent=1 // pred_region
      _
    $region9: #{forward_pallas.1} parent=1 // pred_fallthru
      _
    // Predicated region
    $region10: #{forward_pallas.1} parent=1 // pred_check
      _
    $region11: #{forward_pallas.1} parent=1 // pred_check_branch
      %27 = sbr.rel (0) target = $region13
    $region12: #{forward_pallas.1} parent=1 // pred_region
      _
    $region13: #{forward_pallas.1} parent=1 // pred_fallthru
      _
    // Predicated region
    $region14: #{forward_pallas.1} parent=1 // pred_check
      _
    $region15: #{forward_pallas.1} parent=1 // pred_check_branch
      %29 = sbr.rel (0) target = $region17
    $region16: #{forward_pallas.1} parent=1 // pred_region
      _
    $region17: #{forward_pallas.1} parent=1 // pred_fallthru
      _
    // Predicated region
    $region18: #{forward_pallas.1} parent=1 // pred_check
      _
    $region19: #{forward_pallas.1} parent=1 // pred_check_branch
      %31 = sbr.rel (0) target = $region21
    $region20: #{forward_pallas.1} parent=1 // pred_region
      _
    $region21: #{forward_pallas.1} parent=1 // pred_fallthru
      _
    // Predicated region
    $region22: #{forward_pallas.1} parent=1 // pred_check
      _
    $region23: #{forward_pallas.1} parent=1 // pred_check_branch
      %33 = sbr.rel (0) target = $region25
    $region24: #{forward_pallas.1} parent=1 // pred_region
      _
    $region25: #{forward_pallas.1} parent=1 // pred_fallthru
      _
    // Predicated region
    $region26: #{forward_pallas.1} parent=1 // pred_check
      _
    $region27: #{forward_pallas.1} parent=1 // pred_check_branch
      %35 = sbr.rel (0) target = $region29
    $region28: #{forward_pallas.1} parent=1 // pred_region
      _
    $region29: #{forward_pallas.1} parent=1 // pred_fallthru
      _
    // Predicated region
    $region30: #{forward_pallas.1} parent=1 // pred_check
      _
    $region31: #{forward_pallas.1} parent=1 // pred_check_branch
      %37 = sbr.rel (0) target = $region33
    $region32: #{forward_pallas.1} parent=1 // pred_region
      _
    $region33: #{forward_pallas.1} parent=1 // pred_fallthru
      _
    // Predicated region
    $region34: #{forward_pallas.1} parent=1 // pred_check
      _
    $region35: #{forward_pallas.1} parent=1 // pred_check_branch
      %39 = sbr.rel (0) target = $region37
    $region36: #{forward_pallas.1} parent=1 // pred_region
      _
    $region37: #{forward_pallas.1} parent=1 // pred_fallthru
      _
    // Predicated region
    $region38: #{forward_pallas.1} parent=1 // pred_check
      _
    $region39: #{forward_pallas.1} parent=1 // pred_check_branch
      %41 = sbr.rel (0) target = $region41
    $region40: #{forward_pallas.1} parent=1 // pred_region
      _
    $region41: #{forward_pallas.1} parent=1 // pred_fallthru
      _
    // Predicated region
    $region42: #{forward_pallas.1} parent=1 // pred_check
      _
    $region43: #{forward_pallas.1} parent=1 // pred_check_branch
      %43 = sbr.rel (0) target = $region45
    $region44: #{forward_pallas.1} parent=1 // pred_region
      _
    $region45: #{forward_pallas.1} parent=1 // pred_fallthru
      _
    // Predicated region
    $region46: #{forward_pallas.1} parent=1 // pred_check
      _
    $region47: #{forward_pallas.1} parent=1 // pred_check_branch
      %45 = sbr.rel (0) target = $region49
    $region48: #{forward_pallas.1} parent=1 // pred_region
      _
    $region49: #{forward_pallas.1} parent=1 // pred_fallthru
      _
    // Predicated region
    $region50: #{forward_pallas.1} parent=1 // pred_check
      _
    $region51: #{forward_pallas.1} parent=1 // pred_check_branch
      %47 = sbr.rel (0) target = $region53
    $region52: #{forward_pallas.1} parent=1 // pred_region
      _
    $region53: #{forward_pallas.1} parent=1 // pred_fallthru
      _
    // Predicated region
    $region54: #{forward_pallas.1} parent=1 // pred_check
      _
    $region55: #{forward_pallas.1} parent=1 // pred_check_branch
      %49 = sbr.rel (0) target = $region57
    $region56: #{forward_pallas.1} parent=1 // pred_region
      _
    $region57: #{forward_pallas.1} parent=1 // pred_fallthru
      _
    // Predicated region
    $region58: #{forward_pallas.1} parent=1 // pred_check
      _
    $region59: #{forward_pallas.1} parent=1 // pred_check_branch
      %51 = sbr.rel (0) target = $region61
    $region60: #{forward_pallas.1} parent=1 // pred_region
      _
    $region61: #{forward_pallas.1} parent=1 // pred_fallthru
      _
    // Predicated region
    $region62: #{forward_pallas.1} parent=1 // pred_check
      _
    $region63: #{forward_pallas.1} parent=1 // pred_check_branch
      %53 = sbr.rel (0) target = $region65
    $region64: #{forward_pallas.1} parent=1 // pred_region
      _
    $region65: #{forward_pallas.1} parent=1 // pred_fallthru
      _
    %v55 = vld [vmem:[%s0] sm:$0xff]
    %v56 = vld [vmem:[%s0 + $0x8] sm:$0xff]
    %v57 = vld [vmem:[%s0 + $0x10] sm:$0xff]
    %v58 = vld [vmem:[%s0 + $0x18] sm:$0xff]
    %v59 = vld [vmem:[%s0 + $0x20] sm:$0xff]
    %v60 = vld [vmem:[%s0 + $0x28] sm:$0xff]
    %v61 = vlaneseq
    %v62 = vand.u32 %v61, 127
    %63 = vset.pattern.permute.xlu0 0
    %64 = vperm.xlu0 %63, %v55
    %v65 = vpop.permute.xlu0 %64
    %66 = vset.pattern.permute.xlu0 0
    %67 = vperm.xlu0 %66, %v56
    %v68 = vpop.permute.xlu0 %67
    %69 = vset.pattern.permute.xlu0 0
    %70 = vperm.xlu0 %69, %v57
    %v71 = vpop.permute.xlu0 %70
    %72 = vset.pattern.permute.xlu0 0
    %73 = vperm.xlu0 %72, %v58
    %v74 = vpop.permute.xlu0 %73
    %75 = vset.pattern.permute.xlu0 0
    %76 = vperm.xlu0 %75, %v59
    %v77 = vpop.permute.xlu0 %76
    %78 = vset.pattern.permute.xlu0 0
    %79 = vperm.xlu0 %78, %v60
    %v80 = vpop.permute.xlu0 %79
    %vm81 = vcmp.eq.s32.totalorder %v65, %v62
    %vm82 = vcmp.eq.s32.totalorder %v68, %v62
    %vm83 = vcmp.eq.s32.totalorder %v71, %v62
    %vm84 = vcmp.eq.s32.totalorder %v74, %v62
    %vm85 = vcmp.eq.s32.totalorder %v77, %v62
    %vm86 = vcmp.eq.s32.totalorder %v80, %v62
    %v87 = vsel %vm81, 1, 0
    %v88 = vsel %vm82, 1, 0
    %v89 = vsel %vm83, 1, 0
    %v90 = vsel %vm84, 1, 0
    %v91 = vsel %vm85, 1, 0
    %v92 = vsel %vm86, 1, 0
    %v93 = vcvt.s32.f32 %v87
    %v94 = vcvt.s32.f32 %v88
    %v95 = vcvt.s32.f32 %v89
    %v96 = vcvt.s32.f32 %v90
    %v97 = vcvt.s32.f32 %v91
    %v98 = vcvt.s32.f32 %v92
    %v99 = vld [vmem:[%s1] sm:$0xff]
    %v100 = vld [vmem:[%s1 + $0x8] sm:$0xff]
    %v101 = vld [vmem:[%s1 + $0x10] sm:$0xff]
    %v102 = vld [vmem:[%s1 + $0x18] sm:$0xff]
    %v103 = vld [vmem:[%s1 + $0x20] sm:$0xff]
    %v104 = vld [vmem:[%s1 + $0x28] sm:$0xff]
    %v105 = vld [vmem:[%s1 + $0x30] sm:$0xff]
    %v106 = vld [vmem:[%s1 + $0x38] sm:$0xff]
    %vm107 = vcmask 523264
    %v109 = vsel %vm107, %v93, 0
    %v112 = vsel %vm107, %v94, 0
    %v115 = vsel %vm107, %v95, 0
    %v118 = vsel %vm107, %v96, 0
    %v121 = vsel %vm107, %v97, 0
    %v124 = vsel %vm107, %v98, 0
    %126 = vmatprep.subr.mxu0 0.0
    %127 = vmatpush1.msra.mxu0 %v99
    %128 = vmatprep.subr.mxu0 0.0
    %129 = vmatpush1.msra.mxu0 %v100
    %130 = vmatprep.subr.mxu0 0.0
    %131 = vmatpush1.msra.mxu0 %v101
    %132 = vmatprep.subr.mxu0 0.0
    %133 = vmatpush1.msra.mxu0 %v102
    %134 = vmatprep.subr.mxu0 0.0
    %135 = vmatpush1.msra.mxu0 %v103
    %136 = vmatprep.subr.mxu0 0.0
    %137 = vmatpush1.msra.mxu0 %v104
    %138 = vmatprep.subr.mxu0 0.0
    %139 = vmatpush1.msra.mxu0 %v105
    %140 = vmatprep.subr.mxu0 0.0
    %141 = vmatpush1.msra.mxu0 %v106
    %142 = vmatprep.subr.mxu0 0.0
    %143 = vmatpush1.msra.mxu0 0.0
    %144 = vmatprep.subr.mxu0 0.0
    %145 = vmatpush1.msra.mxu0 0.0
    %146 = vmatprep.subr.mxu0 0.0
    %147 = vmatpush1.msra.mxu0 0.0
    %148 = vmatprep.subr.mxu0 0.0
    %149 = vmatpush1.msra.mxu0 0.0
    %150 = vmatprep.subr.mxu0 0.0
    %151 = vmatpush1.msra.mxu0 0.0
    %152 = vmatprep.subr.mxu0 0.0
    %153 = vmatpush1.msra.mxu0 0.0
    %154 = vmatprep.subr.mxu0 0.0
    %155 = vmatpush1.msra.mxu0 0.0
    %156 = vmatprep.subr.mxu0 0.0
    %157 = vmatpush1.msra.mxu0 0.0
    %158 = vmatprep.subr.mxu0 0.0
    %159 = vmatpush1.msra.mxu0 0.0
    %160 = vmatprep.subr.mxu0 0.0
    %161 = vmatpush1.msra.mxu0 0.0
    %162 = vmatprep.subr.mxu0 0.0
    %163 = vmatpush1.msra.mxu0 0.0
    %164 = vmatprep.subr.mxu0 0.0
    %165 = vmatpush1.msra.mxu0 0.0
    %166 = vmatprep.subr.mxu0 0.0
    %167 = vmatpush1.msra.mxu0 0.0
    %168 = vmatprep.subr.mxu0 0.0
    %169 = vmatpush1.msra.mxu0 0.0
    %170 = vmatprep.subr.mxu0 0.0
    %171 = vmatpush1.msra.mxu0 0.0
    %172 = vmatprep.subr.mxu0 0.0
    %173 = vmatpush1.msra.mxu0 0.0
    %174 = vmatprep.subr.mxu0 0.0
    %175 = vmatpush1.msra.mxu0 0.0
    %176 = vmatprep.subr.mxu0 0.0
    %177 = vmatpush1.msra.mxu0 0.0
    %178 = vmatprep.subr.mxu0 0.0
    %179 = vmatpush1.msra.mxu0 0.0
    %180 = vmatprep.subr.mxu0 0.0
    %181 = vmatpush1.msra.mxu0 0.0
    %182 = vmatprep.subr.mxu0 0.0
    %183 = vmatpush1.msra.mxu0 0.0
    %184 = vmatprep.subr.mxu0 0.0
    %185 = vmatpush1.msra.mxu0 0.0
    %186 = vmatprep.subr.mxu0 0.0
    %187 = vmatpush1.msra.mxu0 0.0
    %188 = vmatprep.subr.mxu0 0.0
    %189 = vmatpush1.msra.mxu0 0.0
    %190 = vmatprep.mubr.f32.mxu0 0.0
    %191 = vmatmul.mubr.f32.gmra.mrb[0].mxu0 %v109
    %v192 = vpop.f32.mrb[0].mxu0
    %v193 = vadd.f32 0.0, %v192
    %v194 = vpop.f32.mrb[0].mxu0
    %195 = vmatprep.mubr.f32.mxu0 0.0
    %196 = vmatmul.mubr.f32.gmra.mrb[0].mxu0 %v112
    %v197 = vpop.f32.mrb[0].mxu0
    %v198 = vadd.f32 0.0, %v197
    %v199 = vpop.f32.mrb[0].mxu0
    %200 = vmatprep.mubr.f32.mxu0 0.0
    %201 = vmatmul.mubr.f32.gmra.mrb[0].mxu0 %v115
    %v202 = vpop.f32.mrb[0].mxu0
    %v203 = vadd.f32 0.0, %v202
    %v204 = vpop.f32.mrb[0].mxu0
    %205 = vmatprep.mubr.f32.mxu0 0.0
    %206 = vmatmul.mubr.f32.gmra.mrb[0].mxu0 %v118
    %v207 = vpop.f32.mrb[0].mxu0
    %v208 = vadd.f32 0.0, %v207
    %v209 = vpop.f32.mrb[0].mxu0
    %210 = vmatprep.mubr.f32.mxu0 0.0
    %211 = vmatmul.mubr.f32.gmra.mrb[0].mxu0 %v121
    %v212 = vpop.f32.mrb[0].mxu0
    %v213 = vadd.f32 0.0, %v212
    %v214 = vpop.f32.mrb[0].mxu0
    %215 = vmatprep.mubr.f32.mxu0 0.0
    %216 = vmatmul.mubr.f32.gmra.mrb[0].mxu0 %v124
    %v217 = vpop.f32.mrb[0].mxu0
    %v218 = vadd.f32 0.0, %v217
    %v219 = vpop.f32.mrb[0].mxu0
    %220 = vdwg.mxu0
    %v221 = vlaneseq
    %v222 = vshrl.u32 %v221, 7
    %v223 = vadd.s32 %v222, 8
    %v224 = vadd.s32 %v222, 16
    %v225 = vadd.s32 %v222, 24
    %v226 = vadd.s32 %v222, 32
    %v227 = vadd.s32 %v222, 40
    %vm228 = vcmp.lt.s32.totalorder %v222, 0
    %v229 = vsub.s32 0, %v222
    %v230 = vsel %vm228, %v229, %v222
    %v231 = vshrl.u32 %v230, 3
    %v232 = vand.u32 %v230, 7
    %v233 = vsub.s32 0, %v232
    %v234 = vsel %vm228, %v233, %v232
    %vm235 = vcmp.lt.s32.totalorder %v223, 0
    %v236 = vsub.s32 0, %v223
    %v237 = vsel %vm235, %v236, %v223
    %v238 = vshrl.u32 %v237, 3
    %v239 = vand.u32 %v237, 7
    %v240 = vsub.s32 0, %v239
    %v241 = vsel %vm235, %v240, %v239
    %vm242 = vcmp.lt.s32.totalorder %v224, 0
    %v243 = vsub.s32 0, %v224
    %v244 = vsel %vm242, %v243, %v224
    %v245 = vshrl.u32 %v244, 3
    %v246 = vand.u32 %v244, 7
    %v247 = vsub.s32 0, %v246
    %v248 = vsel %vm242, %v247, %v246
    %vm249 = vcmp.lt.s32.totalorder %v225, 0
    %v250 = vsub.s32 0, %v225
    %v251 = vsel %vm249, %v250, %v225
    %v252 = vshrl.u32 %v251, 3
    %v253 = vand.u32 %v251, 7
    %v254 = vsub.s32 0, %v253
    %v255 = vsel %vm249, %v254, %v253
    %vm256 = vcmp.lt.s32.totalorder %v226, 0
    %v257 = vsub.s32 0, %v226
    %v258 = vsel %vm256, %v257, %v226
    %v259 = vshrl.u32 %v258, 3
    %v260 = vand.u32 %v258, 7
    %v261 = vsub.s32 0, %v260
    %v262 = vsel %vm256, %v261, %v260
    %vm263 = vcmp.lt.s32.totalorder %v227, 0
    %v264 = vsub.s32 0, %v227
    %v265 = vsel %vm263, %v264, %v227
    %v266 = vshrl.u32 %v265, 3
    %v267 = vand.u32 %v265, 7
    %v268 = vsub.s32 0, %v267
    %v269 = vsel %vm263, %v268, %v267
    %vm270 = vcmp.ne.s32.totalorder %v234, 0
    %vm271 = vcmp.ne.s32.totalorder %v241, 0
    %vm272 = vcmp.ne.s32.totalorder %v248, 0
    %vm273 = vcmp.ne.s32.totalorder %v255, 0
    %vm274 = vcmp.ne.s32.totalorder %v262, 0
    %vm275 = vcmp.ne.s32.totalorder %v269, 0
    %vm276 = vcmp.lt.s32.totalorder %v234, 0
    %vm277 = vcmp.lt.s32.totalorder %v241, 0
    %vm278 = vcmp.lt.s32.totalorder %v248, 0
    %vm279 = vcmp.lt.s32.totalorder %v255, 0
    %vm280 = vcmp.lt.s32.totalorder %v262, 0
    %vm281 = vcmp.lt.s32.totalorder %v269, 0
    %vm282 = vmand %vm276, %vm270
    %vm283 = vmand %vm277, %vm271
    %vm284 = vmand %vm278, %vm272
    %vm285 = vmand %vm279, %vm273
    %vm286 = vmand %vm280, %vm274
    %vm287 = vmand %vm281, %vm275
    %v288 = vadd.s32 %v234, 8
    %v289 = vadd.s32 %v241, 8
    %v290 = vadd.s32 %v248, 8
    %v291 = vadd.s32 %v255, 8
    %v292 = vadd.s32 %v262, 8
    %v293 = vadd.s32 %v269, 8
    %v294 = vsel %vm282, %v288, %v234
    %v295 = vsel %vm283, %v289, %v241
    %v296 = vsel %vm284, %v290, %v248
    %v297 = vsel %vm285, %v291, %v255
    %v298 = vsel %vm286, %v292, %v262
    %v299 = vsel %vm287, %v293, %v269
    %vm300 = vcmp.lt.s32.totalorder %v62, 0
    %v301 = vsub.s32 0, %v62
    %v302 = vsel %vm300, %v301, %v62
    %v303 = vshrl.u32 %v302, 3
    %v304 = vand.u32 %v302, 7
    %v305 = vsub.s32 0, %v304
    %v306 = vsel %vm300, %v305, %v304
    %vm307 = vcmp.ne.s32.totalorder %v306, 0
    %vm308 = vcmp.lt.s32.totalorder %v306, 0
    %vm309 = vmand %vm308, %vm307
    %v310 = vadd.s32 %v306, 8
    %v311 = vsel %vm309, %v310, %v306
    %vm312 = vcmp.eq.s32.totalorder %v294, %v311
    %vm313 = vcmp.eq.s32.totalorder %v295, %v311
    %vm314 = vcmp.eq.s32.totalorder %v296, %v311
    %vm315 = vcmp.eq.s32.totalorder %v297, %v311
    %vm316 = vcmp.eq.s32.totalorder %v298, %v311
    %vm317 = vcmp.eq.s32.totalorder %v299, %v311
    %v318 = vsel %vm312, 0.0, -1e+30
    %v319 = vsel %vm313, 0.0, -1e+30
    %v320 = vsel %vm314, 0.0, -1e+30
    %v321 = vsel %vm315, 0.0, -1e+30
    %v322 = vsel %vm316, 0.0, -1e+30
    %v323 = vsel %vm317, 0.0, -1e+30
    %v324 = vld [vmem:[%s2] sm:$0xff]
    %v325 = vld [vmem:[%s2 + $0x8] sm:$0xff]
    %v326 = vld [vmem:[%s2 + $0x10] sm:$0xff]
    %v327 = vld [vmem:[%s2 + $0x18] sm:$0xff]
    %v328 = vld [vmem:[%s2 + $0x20] sm:$0xff]
    %v329 = vld [vmem:[%s2 + $0x28] sm:$0xff]
    %v330 = vld [vmem:[%s2 + $0x30] sm:$0xff]
    %v331 = vld [vmem:[%s2 + $0x38] sm:$0xff]
    %v332 = vld [vmem:[%s2 + $0x40] sm:$0xff]
    %v333 = vld [vmem:[%s2 + $0x48] sm:$0xff]
    %v334 = vld [vmem:[%s2 + $0x50] sm:$0xff]
    %v335 = vld [vmem:[%s2 + $0x58] sm:$0xff]
    %v336 = vld [vmem:[%s2 + $0x60] sm:$0xff]
    %v337 = vld [vmem:[%s2 + $0x68] sm:$0xff]
    %v338 = vld [vmem:[%s2 + $0x70] sm:$0xff]
    %v339 = vld [vmem:[%s2 + $0x78] sm:$0xff]
    %v340 = vld [vmem:[%s3] sm:$0x3]
    %v342 = vlaneseq
    %v343 = vshrl.u32 %v342, 7
    %v344 = vsub.s32 0, %v343
    %v345 = vrot.slane %v340, %v344
    %v346 = vlaneseq
    %v347 = vshrl.u32 %v346, 7
    %v348 = vsub.s32 1, %v347
    %v349 = vrot.slane %v340, %v348
    %v353 = vsel %vm107, %v193, 0
    %v356 = vsel %vm107, %v198, 0
    %v359 = vsel %vm107, %v203, 0
    %v362 = vsel %vm107, %v208, 0
    %v365 = vsel %vm107, %v213, 0
    %v368 = vsel %vm107, %v218, 0
    %370 = vmatprep.subr.mxu0 %v325
    %371 = vmatpush1.msra.mxu0 %v324
    %372 = vmatprep.subr.mxu0 %v327
    %373 = vmatpush1.msra.mxu0 %v326
    %374 = vmatprep.subr.mxu0 %v329
    %375 = vmatpush1.msra.mxu0 %v328
    %376 = vmatprep.subr.mxu0 %v331
    %377 = vmatpush1.msra.mxu0 %v330
    %378 = vmatprep.subr.mxu0 %v333
    %379 = vmatpush1.msra.mxu0 %v332
    %380 = vmatprep.subr.mxu0 %v335
    %381 = vmatpush1.msra.mxu0 %v334
    %382 = vmatprep.subr.mxu0 %v337
    %383 = vmatpush1.msra.mxu0 %v336
    %384 = vmatprep.subr.mxu0 %v339
    %385 = vmatpush1.msra.mxu0 %v338
    %386 = vmatprep.subr.mxu0 0.0
    %387 = vmatpush1.msra.mxu0 0.0
    %388 = vmatprep.subr.mxu0 0.0
    %389 = vmatpush1.msra.mxu0 0.0
    %390 = vmatprep.subr.mxu0 0.0
    %391 = vmatpush1.msra.mxu0 0.0
    %392 = vmatprep.subr.mxu0 0.0
    %393 = vmatpush1.msra.mxu0 0.0
    %394 = vmatprep.subr.mxu0 0.0
    %395 = vmatpush1.msra.mxu0 0.0
    %396 = vmatprep.subr.mxu0 0.0
    %397 = vmatpush1.msra.mxu0 0.0
    %398 = vmatprep.subr.mxu0 0.0
    %399 = vmatpush1.msra.mxu0 0.0
    %400 = vmatprep.subr.mxu0 0.0
    %401 = vmatpush1.msra.mxu0 0.0
    %402 = vmatprep.subr.mxu0 0.0
    %403 = vmatpush1.msra.mxu0 0.0
    %404 = vmatprep.subr.mxu0 0.0
    %405 = vmatpush1.msra.mxu0 0.0
    %406 = vmatprep.subr.mxu0 0.0
    %407 = vmatpush1.msra.mxu0 0.0
    %408 = vmatprep.subr.mxu0 0.0
    %409 = vmatpush1.msra.mxu0 0.0
    %410 = vmatprep.subr.mxu0 0.0
    %411 = vmatpush1.msra.mxu0 0.0
    %412 = vmatprep.subr.mxu0 0.0
    %413 = vmatpush1.msra.mxu0 0.0
    %414 = vmatprep.subr.mxu0 0.0
    %415 = vmatpush1.msra.mxu0 0.0
    %416 = vmatprep.subr.mxu0 0.0
    %417 = vmatpush1.msra.mxu0 0.0
    %418 = vmatprep.subr.mxu0 0.0
    %419 = vmatpush1.msra.mxu0 0.0
    %420 = vmatprep.subr.mxu0 0.0
    %421 = vmatpush1.msra.mxu0 0.0
    %422 = vmatprep.subr.mxu0 0.0
    %423 = vmatpush1.msra.mxu0 0.0
    %424 = vmatprep.subr.mxu0 0.0
    %425 = vmatpush1.msra.mxu0 0.0
    %426 = vmatprep.subr.mxu0 0.0
    %427 = vmatpush1.msra.mxu0 0.0
    %428 = vmatprep.subr.mxu0 0.0
    %429 = vmatpush1.msra.mxu0 0.0
    %430 = vmatprep.subr.mxu0 0.0
    %431 = vmatpush1.msra.mxu0 0.0
    %432 = vmatprep.subr.mxu0 0.0
    %433 = vmatpush1.msra.mxu0 0.0
    %434 = vmatprep.mubr.f32.mxu0 0.0
    %435 = vmatmul.mubr.f32.gmra.mrb[0].mxu0 %v353
    %v436 = vpop.f32.mrb[0].mxu0
    %v437 = vadd.f32 %v345, %v436
    %v438 = vpop.f32.mrb[0].mxu0
    %v439 = vadd.f32 %v349, %v438
    %440 = vmatprep.mubr.f32.mxu0 0.0
    %441 = vmatmul.mubr.f32.gmra.mrb[0].mxu0 %v356
    %v442 = vpop.f32.mrb[0].mxu0
    %v443 = vadd.f32 %v345, %v442
    %v444 = vpop.f32.mrb[0].mxu0
    %v445 = vadd.f32 %v349, %v444
    %446 = vmatprep.mubr.f32.mxu0 0.0
    %447 = vmatmul.mubr.f32.gmra.mrb[0].mxu0 %v359
    %v448 = vpop.f32.mrb[0].mxu0
    %v449 = vadd.f32 %v345, %v448
    %v450 = vpop.f32.mrb[0].mxu0
    %v451 = vadd.f32 %v349, %v450
    %452 = vmatprep.mubr.f32.mxu0 0.0
    %453 = vmatmul.mubr.f32.gmra.mrb[0].mxu0 %v362
    %v454 = vpop.f32.mrb[0].mxu0
    %v455 = vadd.f32 %v345, %v454
    %v456 = vpop.f32.mrb[0].mxu0
    %v457 = vadd.f32 %v349, %v456
    %458 = vmatprep.mubr.f32.mxu0 0.0
    %459 = vmatmul.mubr.f32.gmra.mrb[0].mxu0 %v365
    %v460 = vpop.f32.mrb[0].mxu0
    %v461 = vadd.f32 %v345, %v460
    %v462 = vpop.f32.mrb[0].mxu0
    %v463 = vadd.f32 %v349, %v462
    %464 = vmatprep.mubr.f32.mxu0 0.0
    %465 = vmatmul.mubr.f32.gmra.mrb[0].mxu0 %v368
    %v466 = vpop.f32.mrb[0].mxu0
    %v467 = vadd.f32 %v345, %v466
    %v468 = vpop.f32.mrb[0].mxu0
    %v469 = vadd.f32 %v349, %v468
    %470 = vdwg.mxu0
    %477 = vrot.lane.b32.xlu0 %v437, 64
    %v478 = vpop.permute.xlu0 %477
    %479 = vrot.lane.b32.xlu0 %v443, 64
    %v480 = vpop.permute.xlu0 %479
    %481 = vrot.lane.b32.xlu0 %v449, 64
    %v482 = vpop.permute.xlu0 %481
    %483 = vrot.lane.b32.xlu0 %v455, 64
    %v484 = vpop.permute.xlu0 %483
    %485 = vrot.lane.b32.xlu0 %v461, 64
    %v486 = vpop.permute.xlu0 %485
    %487 = vrot.lane.b32.xlu0 %v467, 64
    %v488 = vpop.permute.xlu0 %487
    %vm489 = vcmask 261120
    %v490 = vsel %vm489, %v437, 0
    %v492 = vsel %vm489, %v443, 0
    %v494 = vsel %vm489, %v449, 0
    %v496 = vsel %vm489, %v455, 0
    %v498 = vsel %vm489, %v461, 0
    %v500 = vsel %vm489, %v467, 0
    %v502 = vsel %vm489, %v478, 0
    %v504 = vsel %vm489, %v480, 0
    %v506 = vsel %vm489, %v482, 0
    %v508 = vsel %vm489, %v484, 0
    %v510 = vsel %vm489, %v486, 0
    %v512 = vsel %vm489, %v488, 0
    %514 = vmatprep.subr.mxu0 0.0
    %515 = vmatpush1.xpose.msra.mxu0 %v502
    %516 = vmatprep.subr.mxu0 0.0
    %517 = vmatpush1.xpose.msra.mxu0 %v504
    %518 = vmatprep.subr.mxu0 0.0
    %519 = vmatpush1.xpose.msra.mxu0 %v506
    %520 = vmatprep.subr.mxu0 0.0
    %521 = vmatpush1.xpose.msra.mxu0 %v508
    %522 = vmatprep.subr.mxu0 0.0
    %523 = vmatpush1.xpose.msra.mxu0 %v510
    %524 = vmatprep.subr.mxu0 0.0
    %525 = vmatpush1.xpose.msra.mxu0 %v512
    %526 = vmatprep.subr.mxu0 0.0
    %527 = vmatpush1.xpose.msra.mxu0 0.0
    %528 = vmatprep.subr.mxu0 0.0
    %529 = vmatpush1.xpose.msra.mxu0 0.0
    %530 = vmatprep.subr.mxu0 0.0
    %531 = vmatpush1.xpose.msra.mxu0 0.0
    %532 = vmatprep.subr.mxu0 0.0
    %533 = vmatpush1.xpose.msra.mxu0 0.0
    %534 = vmatprep.subr.mxu0 0.0
    %535 = vmatpush1.xpose.msra.mxu0 0.0
    %536 = vmatprep.subr.mxu0 0.0
    %537 = vmatpush1.xpose.msra.mxu0 0.0
    %538 = vmatprep.subr.mxu0 0.0
    %539 = vmatpush1.xpose.msra.mxu0 0.0
    %540 = vmatprep.subr.mxu0 0.0
    %541 = vmatpush1.xpose.msra.mxu0 0.0
    %542 = vmatprep.subr.mxu0 0.0
    %543 = vmatpush1.xpose.msra.mxu0 0.0
    %544 = vmatprep.subr.mxu0 0.0
    %545 = vmatpush1.xpose.msra.mxu0 0.0
    %546 = vmatprep.subr.mxu0 0.0
    %547 = vmatpush1.xpose.msra.mxu0 0.0
    %548 = vmatprep.subr.mxu0 0.0
    %549 = vmatpush1.xpose.msra.mxu0 0.0
    %550 = vmatprep.subr.mxu0 0.0
    %551 = vmatpush1.xpose.msra.mxu0 0.0
    %552 = vmatprep.subr.mxu0 0.0
    %553 = vmatpush1.xpose.msra.mxu0 0.0
    %554 = vmatprep.subr.mxu0 0.0
    %555 = vmatpush1.xpose.msra.mxu0 0.0
    %556 = vmatprep.subr.mxu0 0.0
    %557 = vmatpush1.xpose.msra.mxu0 0.0
    %558 = vmatprep.subr.mxu0 0.0
    %559 = vmatpush1.xpose.msra.mxu0 0.0
    %560 = vmatprep.subr.mxu0 0.0
    %561 = vmatpush1.xpose.msra.mxu0 0.0
    %562 = vmatprep.subr.mxu0 0.0
    %563 = vmatpush1.xpose.msra.mxu0 0.0
    %564 = vmatprep.subr.mxu0 0.0
    %565 = vmatpush1.xpose.msra.mxu0 0.0
    %566 = vmatprep.subr.mxu0 0.0
    %567 = vmatpush1.xpose.msra.mxu0 0.0
    %568 = vmatprep.subr.mxu0 0.0
    %569 = vmatpush1.xpose.msra.mxu0 0.0
    %570 = vmatprep.subr.mxu0 0.0
    %571 = vmatpush1.xpose.msra.mxu0 0.0
    %572 = vmatprep.subr.mxu0 0.0
    %573 = vmatpush1.xpose.msra.mxu0 0.0
    %574 = vmatprep.subr.mxu0 0.0
    %575 = vmatpush1.xpose.msra.mxu0 0.0
    %576 = vmatprep.subr.mxu0 0.0
    %577 = vmatpush1.xpose.msra.mxu0 0.0
    %578 = vmatprep.mubr.f32.mxu0 0.0
    %579 = vmatmul.mubr.f32.gmra.mrb[0].mxu0 %v490
    %v580 = vpop.f32.mrb[0].mxu0
    %v581 = vadd.f32 0.0, %v580
    %v582 = vpop.f32.mrb[0].mxu0
    %583 = vmatprep.mubr.f32.mxu0 0.0
    %584 = vmatmul.mubr.f32.gmra.mrb[0].mxu0 %v492
    %v585 = vpop.f32.mrb[0].mxu0
    %v586 = vadd.f32 0.0, %v585
    %v587 = vpop.f32.mrb[0].mxu0
    %588 = vmatprep.mubr.f32.mxu0 0.0
    %589 = vmatmul.mubr.f32.gmra.mrb[0].mxu0 %v494
    %v590 = vpop.f32.mrb[0].mxu0
    %v591 = vadd.f32 0.0, %v590
    %v592 = vpop.f32.mrb[0].mxu0
    %593 = vmatprep.mubr.f32.mxu0 0.0
    %594 = vmatmul.mubr.f32.gmra.mrb[0].mxu0 %v496
    %v595 = vpop.f32.mrb[0].mxu0
    %v596 = vadd.f32 0.0, %v595
    %v597 = vpop.f32.mrb[0].mxu0
    %598 = vmatprep.mubr.f32.mxu0 0.0
    %599 = vmatmul.mubr.f32.gmra.mrb[0].mxu0 %v498
    %v600 = vpop.f32.mrb[0].mxu0
    %v601 = vadd.f32 0.0, %v600
    %v602 = vpop.f32.mrb[0].mxu0
    %603 = vmatprep.mubr.f32.mxu0 0.0
    %604 = vmatmul.mubr.f32.gmra.mrb[0].mxu0 %v500
    %v605 = vpop.f32.mrb[0].mxu0
    %v606 = vadd.f32 0.0, %v605
    %v607 = vpop.f32.mrb[0].mxu0
    %608 = vdwg.mxu0
    %v609 = vmul.f32 %v581, 0.17677669
    %v610 = vmul.f32 %v586, 0.17677669
    %v611 = vmul.f32 %v591, 0.17677669
    %v612 = vmul.f32 %v596, 0.17677669
    %v613 = vmul.f32 %v601, 0.17677669
    %v614 = vmul.f32 %v606, 0.17677669
    %v615 = vadd.f32 %v609, %v318
    %v616 = vadd.f32 %v610, %v319
    %v617 = vadd.f32 %v611, %v320
    %v618 = vadd.f32 %v612, %v321
    %v619 = vadd.f32 %v613, %v322
    %v620 = vadd.f32 %v614, %v323
    %vm621 = vcmask 392192
    %v622 = vsel %vm621, %v615, -inf
    %623 = vmax.xlane.f32.xlu0 %v622
    %v624 = vpop.xlane.xlu0 %623
    %v625 = vsel %vm621, %v616, -inf
    %626 = vmax.xlane.f32.xlu0 %v625
    %v627 = vpop.xlane.xlu0 %626
    %v628 = vsel %vm621, %v617, -inf
    %629 = vmax.xlane.f32.xlu0 %v628
    %v630 = vpop.xlane.xlu0 %629
    %v631 = vsel %vm621, %v618, -inf
    %632 = vmax.xlane.f32.xlu0 %v631
    %v633 = vpop.xlane.xlu0 %632
    %v634 = vsel %vm621, %v619, -inf
    %635 = vmax.xlane.f32.xlu0 %v634
    %v636 = vpop.xlane.xlu0 %635
    %v637 = vsel %vm621, %v620, -inf
    %638 = vmax.xlane.f32.xlu0 %v637
    %v639 = vpop.xlane.xlu0 %638
    %v640 = vsub.f32 %v615, %v624
    %v641 = vsub.f32 %v616, %v627
    %v642 = vsub.f32 %v617, %v630
    %v643 = vsub.f32 %v618, %v633
    %v644 = vsub.f32 %v619, %v636
    %v645 = vsub.f32 %v620, %v639
    %v646 = vmul.f32 %v640, 1.442695
    %v647 = vpow.pop %v646
    %v648 = vmul.f32 %v641, 1.442695
    %v649 = vpow.pop %v648
    %v650 = vmul.f32 %v642, 1.442695
    %v651 = vpow.pop %v650
    %v652 = vmul.f32 %v643, 1.442695
    %v653 = vpow.pop %v652
    %v654 = vmul.f32 %v644, 1.442695
    %v655 = vpow.pop %v654
    %v656 = vmul.f32 %v645, 1.442695
    %v657 = vpow.pop %v656
    %v658 = vsel %vm621, %v647, 0.0
    %659 = vadd.xlane.f32.xlu0 %v658
    %v660 = vpop.xlane.xlu0 %659
    %v661 = vsel %vm621, %v649, 0.0
    %662 = vadd.xlane.f32.xlu0 %v661
    %v663 = vpop.xlane.xlu0 %662
    %v664 = vsel %vm621, %v651, 0.0
    %665 = vadd.xlane.f32.xlu0 %v664
    %v666 = vpop.xlane.xlu0 %665
    %v667 = vsel %vm621, %v653, 0.0
    %668 = vadd.xlane.f32.xlu0 %v667
    %v669 = vpop.xlane.xlu0 %668
    %v670 = vsel %vm621, %v655, 0.0
    %671 = vadd.xlane.f32.xlu0 %v670
    %v672 = vpop.xlane.xlu0 %671
    %v673 = vsel %vm621, %v657, 0.0
    %674 = vadd.xlane.f32.xlu0 %v673
    %v675 = vpop.xlane.xlu0 %674
    %v676 = vrcp.pop %v660
    %v677 = vrcp.pop %v663
    %v678 = vrcp.pop %v666
    %v679 = vrcp.pop %v669
    %v680 = vrcp.pop %v672
    %v681 = vrcp.pop %v675
    %v682 = vmul.f32 %v647, %v676
    %v683 = vmul.f32 %v649, %v677
    %v684 = vmul.f32 %v651, %v678
    %v685 = vmul.f32 %v653, %v679
    %v686 = vmul.f32 %v655, %v680
    %v687 = vmul.f32 %v657, %v681
    %v689 = vsel %vm621, %v682, 0
    %v692 = vsel %vm621, %v683, 0
    %v695 = vsel %vm621, %v684, 0
    %v698 = vsel %vm621, %v685, 0
    %v701 = vsel %vm621, %v686, 0
    %v704 = vsel %vm621, %v687, 0
    %706 = vmatprep.subr.mxu0 0.0
    %707 = vmatpush1.msra.mxu0 %v439
    %708 = vmatprep.subr.mxu0 0.0
    %709 = vmatpush1.msra.mxu0 %v445
    %710 = vmatprep.subr.mxu0 0.0
    %711 = vmatpush1.msra.mxu0 %v451
    %712 = vmatprep.subr.mxu0 0.0
    %713 = vmatpush1.msra.mxu0 %v457
    %714 = vmatprep.subr.mxu0 0.0
    %715 = vmatpush1.msra.mxu0 %v463
    %716 = vmatprep.subr.mxu0 0.0
    %717 = vmatpush1.msra.mxu0 %v469
    %718 = vmatprep.subr.mxu0 0.0
    %719 = vmatpush1.msra.mxu0 0.0
    %720 = vmatprep.subr.mxu0 0.0
    %721 = vmatpush1.msra.mxu0 0.0
    %722 = vmatprep.subr.mxu0 0.0
    %723 = vmatpush1.msra.mxu0 0.0
    %724 = vmatprep.subr.mxu0 0.0
    %725 = vmatpush1.msra.mxu0 0.0
    %726 = vmatprep.subr.mxu0 0.0
    %727 = vmatpush1.msra.mxu0 0.0
    %728 = vmatprep.subr.mxu0 0.0
    %729 = vmatpush1.msra.mxu0 0.0
    %730 = vmatprep.subr.mxu0 0.0
    %731 = vmatpush1.msra.mxu0 0.0
    %732 = vmatprep.subr.mxu0 0.0
    %733 = vmatpush1.msra.mxu0 0.0
    %734 = vmatprep.subr.mxu0 0.0
    %735 = vmatpush1.msra.mxu0 0.0
    %736 = vmatprep.subr.mxu0 0.0
    %737 = vmatpush1.msra.mxu0 0.0
    %738 = vmatprep.subr.mxu0 0.0
    %739 = vmatpush1.msra.mxu0 0.0
    %740 = vmatprep.subr.mxu0 0.0
    %741 = vmatpush1.msra.mxu0 0.0
    %742 = vmatprep.subr.mxu0 0.0
    %743 = vmatpush1.msra.mxu0 0.0
    %744 = vmatprep.subr.mxu0 0.0
    %745 = vmatpush1.msra.mxu0 0.0
    %746 = vmatprep.subr.mxu0 0.0
    %747 = vmatpush1.msra.mxu0 0.0
    %748 = vmatprep.subr.mxu0 0.0
    %749 = vmatpush1.msra.mxu0 0.0
    %750 = vmatprep.subr.mxu0 0.0
    %751 = vmatpush1.msra.mxu0 0.0
    %752 = vmatprep.subr.mxu0 0.0
    %753 = vmatpush1.msra.mxu0 0.0
    %754 = vmatprep.subr.mxu0 0.0
    %755 = vmatpush1.msra.mxu0 0.0
    %756 = vmatprep.subr.mxu0 0.0
    %757 = vmatpush1.msra.mxu0 0.0
    %758 = vmatprep.subr.mxu0 0.0
    %759 = vmatpush1.msra.mxu0 0.0
    %760 = vmatprep.subr.mxu0 0.0
    %761 = vmatpush1.msra.mxu0 0.0
    %762 = vmatprep.subr.mxu0 0.0
    %763 = vmatpush1.msra.mxu0 0.0
    %764 = vmatprep.subr.mxu0 0.0
    %765 = vmatpush1.msra.mxu0 0.0
    %766 = vmatprep.subr.mxu0 0.0
    %767 = vmatpush1.msra.mxu0 0.0
    %768 = vmatprep.subr.mxu0 0.0
    %769 = vmatpush1.msra.mxu0 0.0
    %770 = vmatprep.mubr.f32.mxu0 0.0
    %771 = vmatmul.mubr.f32.gmra.mrb[0].mxu0 %v689
    %v772 = vpop.f32.mrb[0].mxu0
    %v773 = vadd.f32 0.0, %v772
    %v774 = vpop.f32.mrb[0].mxu0
    %775 = vmatprep.mubr.f32.mxu0 0.0
    %776 = vmatmul.mubr.f32.gmra.mrb[0].mxu0 %v692
    %v777 = vpop.f32.mrb[0].mxu0
    %v778 = vadd.f32 0.0, %v777
    %v779 = vpop.f32.mrb[0].mxu0
    %780 = vmatprep.mubr.f32.mxu0 0.0
    %781 = vmatmul.mubr.f32.gmra.mrb[0].mxu0 %v695
    %v782 = vpop.f32.mrb[0].mxu0
    %v783 = vadd.f32 0.0, %v782
    %v784 = vpop.f32.mrb[0].mxu0
    %785 = vmatprep.mubr.f32.mxu0 0.0
    %786 = vmatmul.mubr.f32.gmra.mrb[0].mxu0 %v698
    %v787 = vpop.f32.mrb[0].mxu0
    %v788 = vadd.f32 0.0, %v787
    %v789 = vpop.f32.mrb[0].mxu0
    %790 = vmatprep.mubr.f32.mxu0 0.0
    %791 = vmatmul.mubr.f32.gmra.mrb[0].mxu0 %v701
    %v792 = vpop.f32.mrb[0].mxu0
    %v793 = vadd.f32 0.0, %v792
    %v794 = vpop.f32.mrb[0].mxu0
    %795 = vmatprep.mubr.f32.mxu0 0.0
    %796 = vmatmul.mubr.f32.gmra.mrb[0].mxu0 %v704
    %v797 = vpop.f32.mrb[0].mxu0
    %v798 = vadd.f32 0.0, %v797
    %v799 = vpop.f32.mrb[0].mxu0
    %800 = vdwg.mxu0
    %801 = vrot.lane.b32.xlu0 %v437, 96
    %v802 = vpop.permute.xlu0 %801
    %803 = vrot.lane.b32.xlu0 %v443, 96
    %v804 = vpop.permute.xlu0 %803
    %805 = vrot.lane.b32.xlu0 %v449, 96
    %v806 = vpop.permute.xlu0 %805
    %807 = vrot.lane.b32.xlu0 %v455, 96
    %v808 = vpop.permute.xlu0 %807
    %809 = vrot.lane.b32.xlu0 %v461, 96
    %v810 = vpop.permute.xlu0 %809
    %811 = vrot.lane.b32.xlu0 %v467, 96
    %v812 = vpop.permute.xlu0 %811
    %813 = vrot.lane.b32.xlu0 %v437, 32
    %v814 = vpop.permute.xlu0 %813
    %815 = vrot.lane.b32.xlu0 %v443, 32
    %v816 = vpop.permute.xlu0 %815
    %817 = vrot.lane.b32.xlu0 %v449, 32
    %v818 = vpop.permute.xlu0 %817
    %819 = vrot.lane.b32.xlu0 %v455, 32
    %v820 = vpop.permute.xlu0 %819
    %821 = vrot.lane.b32.xlu0 %v461, 32
    %v822 = vpop.permute.xlu0 %821
    %823 = vrot.lane.b32.xlu0 %v467, 32
    %v824 = vpop.permute.xlu0 %823
    %v825 = vsel %vm489, %v802, 0
    %v827 = vsel %vm489, %v804, 0
    %v829 = vsel %vm489, %v806, 0
    %v831 = vsel %vm489, %v808, 0
    %v833 = vsel %vm489, %v810, 0
    %v835 = vsel %vm489, %v812, 0
    %v837 = vsel %vm489, %v814, 0
    %v839 = vsel %vm489, %v816, 0
    %v841 = vsel %vm489, %v818, 0
    %v843 = vsel %vm489, %v820, 0
    %v845 = vsel %vm489, %v822, 0
    %v847 = vsel %vm489, %v824, 0
    %849 = vmatprep.subr.mxu0 0.0
    %850 = vmatpush1.xpose.msra.mxu0 %v837
    %851 = vmatprep.subr.mxu0 0.0
    %852 = vmatpush1.xpose.msra.mxu0 %v839
    %853 = vmatprep.subr.mxu0 0.0
    %854 = vmatpush1.xpose.msra.mxu0 %v841
    %855 = vmatprep.subr.mxu0 0.0
    %856 = vmatpush1.xpose.msra.mxu0 %v843
    %857 = vmatprep.subr.mxu0 0.0
    %858 = vmatpush1.xpose.msra.mxu0 %v845
    %859 = vmatprep.subr.mxu0 0.0
    %860 = vmatpush1.xpose.msra.mxu0 %v847
    %861 = vmatprep.subr.mxu0 0.0
    %862 = vmatpush1.xpose.msra.mxu0 0.0
    %863 = vmatprep.subr.mxu0 0.0
    %864 = vmatpush1.xpose.msra.mxu0 0.0
    %865 = vmatprep.subr.mxu0 0.0
    %866 = vmatpush1.xpose.msra.mxu0 0.0
    %867 = vmatprep.subr.mxu0 0.0
    %868 = vmatpush1.xpose.msra.mxu0 0.0
    %869 = vmatprep.subr.mxu0 0.0
    %870 = vmatpush1.xpose.msra.mxu0 0.0
    %871 = vmatprep.subr.mxu0 0.0
    %872 = vmatpush1.xpose.msra.mxu0 0.0
    %873 = vmatprep.subr.mxu0 0.0
    %874 = vmatpush1.xpose.msra.mxu0 0.0
    %875 = vmatprep.subr.mxu0 0.0
    %876 = vmatpush1.xpose.msra.mxu0 0.0
    %877 = vmatprep.subr.mxu0 0.0
    %878 = vmatpush1.xpose.msra.mxu0 0.0
    %879 = vmatprep.subr.mxu0 0.0
    %880 = vmatpush1.xpose.msra.mxu0 0.0
    %881 = vmatprep.subr.mxu0 0.0
    %882 = vmatpush1.xpose.msra.mxu0 0.0
    %883 = vmatprep.subr.mxu0 0.0
    %884 = vmatpush1.xpose.msra.mxu0 0.0
    %885 = vmatprep.subr.mxu0 0.0
    %886 = vmatpush1.xpose.msra.mxu0 0.0
    %887 = vmatprep.subr.mxu0 0.0
    %888 = vmatpush1.xpose.msra.mxu0 0.0
    %889 = vmatprep.subr.mxu0 0.0
    %890 = vmatpush1.xpose.msra.mxu0 0.0
    %891 = vmatprep.subr.mxu0 0.0
    %892 = vmatpush1.xpose.msra.mxu0 0.0
    %893 = vmatprep.subr.mxu0 0.0
    %894 = vmatpush1.xpose.msra.mxu0 0.0
    %895 = vmatprep.subr.mxu0 0.0
    %896 = vmatpush1.xpose.msra.mxu0 0.0
    %897 = vmatprep.subr.mxu0 0.0
    %898 = vmatpush1.xpose.msra.mxu0 0.0
    %899 = vmatprep.subr.mxu0 0.0
    %900 = vmatpush1.xpose.msra.mxu0 0.0
    %901 = vmatprep.subr.mxu0 0.0
    %902 = vmatpush1.xpose.msra.mxu0 0.0
    %903 = vmatprep.subr.mxu0 0.0
    %904 = vmatpush1.xpose.msra.mxu0 0.0
    %905 = vmatprep.subr.mxu0 0.0
    %906 = vmatpush1.xpose.msra.mxu0 0.0
    %907 = vmatprep.subr.mxu0 0.0
    %908 = vmatpush1.xpose.msra.mxu0 0.0
    %909 = vmatprep.subr.mxu0 0.0
    %910 = vmatpush1.xpose.msra.mxu0 0.0
    %911 = vmatprep.subr.mxu0 0.0
    %912 = vmatpush1.xpose.msra.mxu0 0.0
    %913 = vmatprep.mubr.f32.mxu0 0.0
    %914 = vmatmul.mubr.f32.gmra.mrb[0].mxu0 %v825
    %v915 = vpop.f32.mrb[0].mxu0
    %v916 = vadd.f32 0.0, %v915
    %v917 = vpop.f32.mrb[0].mxu0
    %918 = vmatprep.mubr.f32.mxu0 0.0
    %919 = vmatmul.mubr.f32.gmra.mrb[0].mxu0 %v827
    %v920 = vpop.f32.mrb[0].mxu0
    %v921 = vadd.f32 0.0, %v920
    %v922 = vpop.f32.mrb[0].mxu0
    %923 = vmatprep.mubr.f32.mxu0 0.0
    %924 = vmatmul.mubr.f32.gmra.mrb[0].mxu0 %v829
    %v925 = vpop.f32.mrb[0].mxu0
    %v926 = vadd.f32 0.0, %v925
    %v927 = vpop.f32.mrb[0].mxu0
    %928 = vmatprep.mubr.f32.mxu0 0.0
    %929 = vmatmul.mubr.f32.gmra.mrb[0].mxu0 %v831
    %v930 = vpop.f32.mrb[0].mxu0
    %v931 = vadd.f32 0.0, %v930
    %v932 = vpop.f32.mrb[0].mxu0
    %933 = vmatprep.mubr.f32.mxu0 0.0
    %934 = vmatmul.mubr.f32.gmra.mrb[0].mxu0 %v833
    %v935 = vpop.f32.mrb[0].mxu0
    %v936 = vadd.f32 0.0, %v935
    %v937 = vpop.f32.mrb[0].mxu0
    %938 = vmatprep.mubr.f32.mxu0 0.0
    %939 = vmatmul.mubr.f32.gmra.mrb[0].mxu0 %v835
    %v940 = vpop.f32.mrb[0].mxu0
    %v941 = vadd.f32 0.0, %v940
    %v942 = vpop.f32.mrb[0].mxu0
    %943 = vdwg.mxu0
    %v944 = vmul.f32 %v916, 0.17677669
    %v945 = vmul.f32 %v921, 0.17677669
    %v946 = vmul.f32 %v926, 0.17677669
    %v947 = vmul.f32 %v931, 0.17677669
    %v948 = vmul.f32 %v936, 0.17677669
    %v949 = vmul.f32 %v941, 0.17677669
    %v950 = vadd.f32 %v944, %v318
    %v951 = vadd.f32 %v945, %v319
    %v952 = vadd.f32 %v946, %v320
    %v953 = vadd.f32 %v947, %v321
    %v954 = vadd.f32 %v948, %v322
    %v955 = vadd.f32 %v949, %v323
    %v956 = vsel %vm621, %v950, -inf
    %957 = vmax.xlane.f32.xlu0 %v956
    %v958 = vpop.xlane.xlu0 %957
    %v959 = vsel %vm621, %v951, -inf
    %960 = vmax.xlane.f32.xlu0 %v959
    %v961 = vpop.xlane.xlu0 %960
    %v962 = vsel %vm621, %v952, -inf
    %963 = vmax.xlane.f32.xlu0 %v962
    %v964 = vpop.xlane.xlu0 %963
    %v965 = vsel %vm621, %v953, -inf
    %966 = vmax.xlane.f32.xlu0 %v965
    %v967 = vpop.xlane.xlu0 %966
    %v968 = vsel %vm621, %v954, -inf
    %969 = vmax.xlane.f32.xlu0 %v968
    %v970 = vpop.xlane.xlu0 %969
    %v971 = vsel %vm621, %v955, -inf
    %972 = vmax.xlane.f32.xlu0 %v971
    %v973 = vpop.xlane.xlu0 %972
    %v974 = vsub.f32 %v950, %v958
    %v975 = vsub.f32 %v951, %v961
    %v976 = vsub.f32 %v952, %v964
    %v977 = vsub.f32 %v953, %v967
    %v978 = vsub.f32 %v954, %v970
    %v979 = vsub.f32 %v955, %v973
    %v980 = vmul.f32 %v974, 1.442695
    %v981 = vpow.pop %v980
    %v982 = vmul.f32 %v975, 1.442695
    %v983 = vpow.pop %v982
    %v984 = vmul.f32 %v976, 1.442695
    %v985 = vpow.pop %v984
    %v986 = vmul.f32 %v977, 1.442695
    %v987 = vpow.pop %v986
    %v988 = vmul.f32 %v978, 1.442695
    %v989 = vpow.pop %v988
    %v990 = vmul.f32 %v979, 1.442695
    %v991 = vpow.pop %v990
    %v992 = vsel %vm621, %v981, 0.0
    %993 = vadd.xlane.f32.xlu0 %v992
    %v994 = vpop.xlane.xlu0 %993
    %v995 = vsel %vm621, %v983, 0.0
    %996 = vadd.xlane.f32.xlu0 %v995
    %v997 = vpop.xlane.xlu0 %996
    %v998 = vsel %vm621, %v985, 0.0
    %999 = vadd.xlane.f32.xlu0 %v998
    %v1000 = vpop.xlane.xlu0 %999
    %v1001 = vsel %vm621, %v987, 0.0
    %1002 = vadd.xlane.f32.xlu0 %v1001
    %v1003 = vpop.xlane.xlu0 %1002
    %v1004 = vsel %vm621, %v989, 0.0
    %1005 = vadd.xlane.f32.xlu0 %v1004
    %v1006 = vpop.xlane.xlu0 %1005
    %v1007 = vsel %vm621, %v991, 0.0
    %1008 = vadd.xlane.f32.xlu0 %v1007
    %v1009 = vpop.xlane.xlu0 %1008
    %v1010 = vrcp.pop %v994
    %v1011 = vrcp.pop %v997
    %v1012 = vrcp.pop %v1000
    %v1013 = vrcp.pop %v1003
    %v1014 = vrcp.pop %v1006
    %v1015 = vrcp.pop %v1009
    %v1016 = vmul.f32 %v981, %v1010
    %v1017 = vmul.f32 %v983, %v1011
    %v1018 = vmul.f32 %v985, %v1012
    %v1019 = vmul.f32 %v987, %v1013
    %v1020 = vmul.f32 %v989, %v1014
    %v1021 = vmul.f32 %v991, %v1015
    %1028 = vrot.lane.b32.xlu0 %v439, 96
    %v1029 = vpop.permute.xlu0 %1028
    %1030 = vrot.lane.b32.xlu0 %v445, 96
    %v1031 = vpop.permute.xlu0 %1030
    %1032 = vrot.lane.b32.xlu0 %v451, 96
    %v1033 = vpop.permute.xlu0 %1032
    %1034 = vrot.lane.b32.xlu0 %v457, 96
    %v1035 = vpop.permute.xlu0 %1034
    %1036 = vrot.lane.b32.xlu0 %v463, 96
    %v1037 = vpop.permute.xlu0 %1036
    %1038 = vrot.lane.b32.xlu0 %v469, 96
    %v1039 = vpop.permute.xlu0 %1038
    %v1047 = vsel %vm621, %v1016, 0
    %v1050 = vsel %vm621, %v1017, 0
    %v1053 = vsel %vm621, %v1018, 0
    %v1056 = vsel %vm621, %v1019, 0
    %v1059 = vsel %vm621, %v1020, 0
    %v1062 = vsel %vm621, %v1021, 0
    %1064 = vmatprep.subr.mxu0 0.0
    %1065 = vmatpush1.msra.mxu0 %v1029
    %1066 = vmatprep.subr.mxu0 0.0
    %1067 = vmatpush1.msra.mxu0 %v1031
    %1068 = vmatprep.subr.mxu0 0.0
    %1069 = vmatpush1.msra.mxu0 %v1033
    %1070 = vmatprep.subr.mxu0 0.0
    %1071 = vmatpush1.msra.mxu0 %v1035
    %1072 = vmatprep.subr.mxu0 0.0
    %1073 = vmatpush1.msra.mxu0 %v1037
    %1074 = vmatprep.subr.mxu0 0.0
    %1075 = vmatpush1.msra.mxu0 %v1039
    %1076 = vmatprep.subr.mxu0 0.0
    %1077 = vmatpush1.msra.mxu0 0.0
    %1078 = vmatprep.subr.mxu0 0.0
    %1079 = vmatpush1.msra.mxu0 0.0
    %1080 = vmatprep.subr.mxu0 0.0
    %1081 = vmatpush1.msra.mxu0 0.0
    %1082 = vmatprep.subr.mxu0 0.0
    %1083 = vmatpush1.msra.mxu0 0.0
    %1084 = vmatprep.subr.mxu0 0.0
    %1085 = vmatpush1.msra.mxu0 0.0
    %1086 = vmatprep.subr.mxu0 0.0
    %1087 = vmatpush1.msra.mxu0 0.0
    %1088 = vmatprep.subr.mxu0 0.0
    %1089 = vmatpush1.msra.mxu0 0.0
    %1090 = vmatprep.subr.mxu0 0.0
    %1091 = vmatpush1.msra.mxu0 0.0
    %1092 = vmatprep.subr.mxu0 0.0
    %1093 = vmatpush1.msra.mxu0 0.0
    %1094 = vmatprep.subr.mxu0 0.0
    %1095 = vmatpush1.msra.mxu0 0.0
    %1096 = vmatprep.subr.mxu0 0.0
    %1097 = vmatpush1.msra.mxu0 0.0
    %1098 = vmatprep.subr.mxu0 0.0
    %1099 = vmatpush1.msra.mxu0 0.0
    %1100 = vmatprep.subr.mxu0 0.0
    %1101 = vmatpush1.msra.mxu0 0.0
    %1102 = vmatprep.subr.mxu0 0.0
    %1103 = vmatpush1.msra.mxu0 0.0
    %1104 = vmatprep.subr.mxu0 0.0
    %1105 = vmatpush1.msra.mxu0 0.0
    %1106 = vmatprep.subr.mxu0 0.0
    %1107 = vmatpush1.msra.mxu0 0.0
    %1108 = vmatprep.subr.mxu0 0.0
    %1109 = vmatpush1.msra.mxu0 0.0
    %1110 = vmatprep.subr.mxu0 0.0
    %1111 = vmatpush1.msra.mxu0 0.0
    %1112 = vmatprep.subr.mxu0 0.0
    %1113 = vmatpush1.msra.mxu0 0.0
    %1114 = vmatprep.subr.mxu0 0.0
    %1115 = vmatpush1.msra.mxu0 0.0
    %1116 = vmatprep.subr.mxu0 0.0
    %1117 = vmatpush1.msra.mxu0 0.0
    %1118 = vmatprep.subr.mxu0 0.0
    %1119 = vmatpush1.msra.mxu0 0.0
    %1120 = vmatprep.subr.mxu0 0.0
    %1121 = vmatpush1.msra.mxu0 0.0
    %1122 = vmatprep.subr.mxu0 0.0
    %1123 = vmatpush1.msra.mxu0 0.0
    %1124 = vmatprep.subr.mxu0 0.0
    %1125 = vmatpush1.msra.mxu0 0.0
    %1126 = vmatprep.subr.mxu0 0.0
    %1127 = vmatpush1.msra.mxu0 0.0
    %1128 = vmatprep.mubr.f32.mxu0 0.0
    %1129 = vmatmul.mubr.f32.gmra.mrb[0].mxu0 %v1047
    %v1130 = vpop.f32.mrb[0].mxu0
    %v1131 = vadd.f32 0.0, %v1130
    %v1132 = vpop.f32.mrb[0].mxu0
    %1133 = vmatprep.mubr.f32.mxu0 0.0
    %1134 = vmatmul.mubr.f32.gmra.mrb[0].mxu0 %v1050
    %v1135 = vpop.f32.mrb[0].mxu0
    %v1136 = vadd.f32 0.0, %v1135
    %v1137 = vpop.f32.mrb[0].mxu0
    %1138 = vmatprep.mubr.f32.mxu0 0.0
    %1139 = vmatmul.mubr.f32.gmra.mrb[0].mxu0 %v1053
    %v1140 = vpop.f32.mrb[0].mxu0
    %v1141 = vadd.f32 0.0, %v1140
    %v1142 = vpop.f32.mrb[0].mxu0
    %1143 = vmatprep.mubr.f32.mxu0 0.0
    %1144 = vmatmul.mubr.f32.gmra.mrb[0].mxu0 %v1056
    %v1145 = vpop.f32.mrb[0].mxu0
    %v1146 = vadd.f32 0.0, %v1145
    %v1147 = vpop.f32.mrb[0].mxu0
    %1148 = vmatprep.mubr.f32.mxu0 0.0
    %1149 = vmatmul.mubr.f32.gmra.mrb[0].mxu0 %v1059
    %v1150 = vpop.f32.mrb[0].mxu0
    %v1151 = vadd.f32 0.0, %v1150
    %v1152 = vpop.f32.mrb[0].mxu0
    %1153 = vmatprep.mubr.f32.mxu0 0.0
    %1154 = vmatmul.mubr.f32.gmra.mrb[0].mxu0 %v1062
    %v1155 = vpop.f32.mrb[0].mxu0
    %v1156 = vadd.f32 0.0, %v1155
    %v1157 = vpop.f32.mrb[0].mxu0
    %1158 = vdwg.mxu0
    %1165 = vrot.lane.b32.xlu0 %v1131, 32
    %v1166 = vpop.permute.xlu0 %1165
    %1167 = vrot.lane.b32.xlu0 %v1136, 32
    %v1168 = vpop.permute.xlu0 %1167
    %1169 = vrot.lane.b32.xlu0 %v1141, 32
    %v1170 = vpop.permute.xlu0 %1169
    %1171 = vrot.lane.b32.xlu0 %v1146, 32
    %v1172 = vpop.permute.xlu0 %1171
    %1173 = vrot.lane.b32.xlu0 %v1151, 32
    %v1174 = vpop.permute.xlu0 %1173
    %1175 = vrot.lane.b32.xlu0 %v1156, 32
    %v1176 = vpop.permute.xlu0 %1175
    %v1183 = vsel %vm489, %v773, %v1166
    %v1184 = vsel %vm489, %v778, %v1168
    %v1185 = vsel %vm489, %v783, %v1170
    %v1186 = vsel %vm489, %v788, %v1172
    %v1187 = vsel %vm489, %v793, %v1174
    %v1188 = vsel %vm489, %v798, %v1176
    %v1189 = vld [vmem:[%s4] sm:$0xff]
    %v1190 = vld [vmem:[%s4 + $0x8] sm:$0xff]
    %v1191 = vld [vmem:[%s4 + $0x10] sm:$0xff]
    %v1192 = vld [vmem:[%s4 + $0x18] sm:$0xff]
    %v1193 = vld [vmem:[%s4 + $0x20] sm:$0xff]
    %v1194 = vld [vmem:[%s4 + $0x28] sm:$0xff]
    %v1195 = vld [vmem:[%s4 + $0x30] sm:$0xff]
    %v1196 = vld [vmem:[%s4 + $0x38] sm:$0xff]
    %v1197 = vld [vmem:[%s5] sm:$0x1]
    %v1199 = vlaneseq
    %v1200 = vshrl.u32 %v1199, 7
    %v1201 = vsub.s32 0, %v1200
    %v1202 = vrot.slane %v1197, %v1201
    %v1205 = vsel %vm107, %v1183, 0
    %v1208 = vsel %vm107, %v1184, 0
    %v1211 = vsel %vm107, %v1185, 0
    %v1214 = vsel %vm107, %v1186, 0
    %v1217 = vsel %vm107, %v1187, 0
    %v1220 = vsel %vm107, %v1188, 0
    %1222 = vmatprep.subr.mxu0 0.0
    %1223 = vmatpush1.msra.mxu0 %v1189
    %1224 = vmatprep.subr.mxu0 0.0
    %1225 = vmatpush1.msra.mxu0 %v1190
    %1226 = vmatprep.subr.mxu0 0.0
    %1227 = vmatpush1.msra.mxu0 %v1191
    %1228 = vmatprep.subr.mxu0 0.0
    %1229 = vmatpush1.msra.mxu0 %v1192
    %1230 = vmatprep.subr.mxu0 0.0
    %1231 = vmatpush1.msra.mxu0 %v1193
    %1232 = vmatprep.subr.mxu0 0.0
    %1233 = vmatpush1.msra.mxu0 %v1194
    %1234 = vmatprep.subr.mxu0 0.0
    %1235 = vmatpush1.msra.mxu0 %v1195
    %1236 = vmatprep.subr.mxu0 0.0
    %1237 = vmatpush1.msra.mxu0 %v1196
    %1238 = vmatprep.subr.mxu0 0.0
    %1239 = vmatpush1.msra.mxu0 0.0
    %1240 = vmatprep.subr.mxu0 0.0
    %1241 = vmatpush1.msra.mxu0 0.0
    %1242 = vmatprep.subr.mxu0 0.0
    %1243 = vmatpush1.msra.mxu0 0.0
    %1244 = vmatprep.subr.mxu0 0.0
    %1245 = vmatpush1.msra.mxu0 0.0
    %1246 = vmatprep.subr.mxu0 0.0
    %1247 = vmatpush1.msra.mxu0 0.0
    %1248 = vmatprep.subr.mxu0 0.0
    %1249 = vmatpush1.msra.mxu0 0.0
    %1250 = vmatprep.subr.mxu0 0.0
    %1251 = vmatpush1.msra.mxu0 0.0
    %1252 = vmatprep.subr.mxu0 0.0
    %1253 = vmatpush1.msra.mxu0 0.0
    %1254 = vmatprep.subr.mxu0 0.0
    %1255 = vmatpush1.msra.mxu0 0.0
    %1256 = vmatprep.subr.mxu0 0.0
    %1257 = vmatpush1.msra.mxu0 0.0
    %1258 = vmatprep.subr.mxu0 0.0
    %1259 = vmatpush1.msra.mxu0 0.0
    %1260 = vmatprep.subr.mxu0 0.0
    %1261 = vmatpush1.msra.mxu0 0.0
    %1262 = vmatprep.subr.mxu0 0.0
    %1263 = vmatpush1.msra.mxu0 0.0
    %1264 = vmatprep.subr.mxu0 0.0
    %1265 = vmatpush1.msra.mxu0 0.0
    %1266 = vmatprep.subr.mxu0 0.0
    %1267 = vmatpush1.msra.mxu0 0.0
    %1268 = vmatprep.subr.mxu0 0.0
    %1269 = vmatpush1.msra.mxu0 0.0
    %1270 = vmatprep.subr.mxu0 0.0
    %1271 = vmatpush1.msra.mxu0 0.0
    %1272 = vmatprep.subr.mxu0 0.0
    %1273 = vmatpush1.msra.mxu0 0.0
    %1274 = vmatprep.subr.mxu0 0.0
    %1275 = vmatpush1.msra.mxu0 0.0
    %1276 = vmatprep.subr.mxu0 0.0
    %1277 = vmatpush1.msra.mxu0 0.0
    %1278 = vmatprep.subr.mxu0 0.0
    %1279 = vmatpush1.msra.mxu0 0.0
    %1280 = vmatprep.subr.mxu0 0.0
    %1281 = vmatpush1.msra.mxu0 0.0
    %1282 = vmatprep.subr.mxu0 0.0
    %1283 = vmatpush1.msra.mxu0 0.0
    %1284 = vmatprep.subr.mxu0 0.0
    %1285 = vmatpush1.msra.mxu0 0.0
    %1286 = vmatprep.mubr.f32.mxu0 0.0
    %1287 = vmatmul.mubr.f32.gmra.mrb[0].mxu0 %v1205
    %v1288 = vpop.f32.mrb[0].mxu0
    %v1289 = vadd.f32 %v1202, %v1288
    %v1290 = vpop.f32.mrb[0].mxu0
    %1291 = vmatprep.mubr.f32.mxu0 0.0
    %1292 = vmatmul.mubr.f32.gmra.mrb[0].mxu0 %v1208
    %v1293 = vpop.f32.mrb[0].mxu0
    %v1294 = vadd.f32 %v1202, %v1293
    %v1295 = vpop.f32.mrb[0].mxu0
    %1296 = vmatprep.mubr.f32.mxu0 0.0
    %1297 = vmatmul.mubr.f32.gmra.mrb[0].mxu0 %v1211
    %v1298 = vpop.f32.mrb[0].mxu0
    %v1299 = vadd.f32 %v1202, %v1298
    %v1300 = vpop.f32.mrb[0].mxu0
    %1301 = vmatprep.mubr.f32.mxu0 0.0
    %1302 = vmatmul.mubr.f32.gmra.mrb[0].mxu0 %v1214
    %v1303 = vpop.f32.mrb[0].mxu0
    %v1304 = vadd.f32 %v1202, %v1303
    %v1305 = vpop.f32.mrb[0].mxu0
    %1306 = vmatprep.mubr.f32.mxu0 0.0
    %1307 = vmatmul.mubr.f32.gmra.mrb[0].mxu0 %v1217
    %v1308 = vpop.f32.mrb[0].mxu0
    %v1309 = vadd.f32 %v1202, %v1308
    %v1310 = vpop.f32.mrb[0].mxu0
    %1311 = vmatprep.mubr.f32.mxu0 0.0
    %1312 = vmatmul.mubr.f32.gmra.mrb[0].mxu0 %v1220
    %v1313 = vpop.f32.mrb[0].mxu0
    %v1314 = vadd.f32 %v1202, %v1313
    %v1315 = vpop.f32.mrb[0].mxu0
    %1316 = vdwg.mxu0
    %v1317 = vadd.f32 %v193, %v1289
    %v1318 = vadd.f32 %v198, %v1294
    %v1319 = vadd.f32 %v203, %v1299
    %v1320 = vadd.f32 %v208, %v1304
    %v1321 = vadd.f32 %v213, %v1309
    %v1322 = vadd.f32 %v218, %v1314
    %v1323 = vld [vmem:[%s6] sm:$0x1]
    %v1324 = vld [vmem:[%s7] sm:$0x1]
    %v1325 = vsel %vm107, %v1317, 0.0
    %1326 = vadd.xlane.f32.xlu0 %v1325
    %v1327 = vpop.xlane.xlu0 %1326
    %v1328 = vsel %vm107, %v1318, 0.0
    %1329 = vadd.xlane.f32.xlu0 %v1328
    %v1330 = vpop.xlane.xlu0 %1329
    %v1331 = vsel %vm107, %v1319, 0.0
    %1332 = vadd.xlane.f32.xlu0 %v1331
    %v1333 = vpop.xlane.xlu0 %1332
    %v1334 = vsel %vm107, %v1320, 0.0
    %1335 = vadd.xlane.f32.xlu0 %v1334
    %v1336 = vpop.xlane.xlu0 %1335
    %v1337 = vsel %vm107, %v1321, 0.0
    %1338 = vadd.xlane.f32.xlu0 %v1337
    %v1339 = vpop.xlane.xlu0 %1338
    %v1340 = vsel %vm107, %v1322, 0.0
    %1341 = vadd.xlane.f32.xlu0 %v1340
    %v1342 = vpop.xlane.xlu0 %1341
    %v1343 = vrcp.pop 64.0
    %v1344 = vmul.f32 %v1327, %v1343
    %v1345 = vmul.f32 %v1330, %v1343
    %v1346 = vmul.f32 %v1333, %v1343
    %v1347 = vmul.f32 %v1336, %v1343
    %v1348 = vmul.f32 %v1339, %v1343
    %v1349 = vmul.f32 %v1342, %v1343
    %v1350 = vsub.f32 %v1317, %v1344
    %v1351 = vsub.f32 %v1318, %v1345
    %v1352 = vsub.f32 %v1319, %v1346
    %v1353 = vsub.f32 %v1320, %v1347
    %v1354 = vsub.f32 %v1321, %v1348
    %v1355 = vsub.f32 %v1322, %v1349
    %v1356 = vmul.f32 %v1350, %v1350
    %v1357 = vmul.f32 %v1351, %v1351
    %v1358 = vmul.f32 %v1352, %v1352
    %v1359 = vmul.f32 %v1353, %v1353
    %v1360 = vmul.f32 %v1354, %v1354
    %v1361 = vmul.f32 %v1355, %v1355
    %v1362 = vsel %vm107, %v1356, 0.0
    %1363 = vadd.xlane.f32.xlu0 %v1362
    %v1364 = vpop.xlane.xlu0 %1363
    %v1365 = vsel %vm107, %v1357, 0.0
    %1366 = vadd.xlane.f32.xlu0 %v1365
    %v1367 = vpop.xlane.xlu0 %1366
    %v1368 = vsel %vm107, %v1358, 0.0
    %1369 = vadd.xlane.f32.xlu0 %v1368
    %v1370 = vpop.xlane.xlu0 %1369
    %v1371 = vsel %vm107, %v1359, 0.0
    %1372 = vadd.xlane.f32.xlu0 %v1371
    %v1373 = vpop.xlane.xlu0 %1372
    %v1374 = vsel %vm107, %v1360, 0.0
    %1375 = vadd.xlane.f32.xlu0 %v1374
    %v1376 = vpop.xlane.xlu0 %1375
    %v1377 = vsel %vm107, %v1361, 0.0
    %1378 = vadd.xlane.f32.xlu0 %v1377
    %v1379 = vpop.xlane.xlu0 %1378
    %v1380 = vmul.f32 %v1364, %v1343
    %v1381 = vmul.f32 %v1367, %v1343
    %v1382 = vmul.f32 %v1370, %v1343
    %v1383 = vmul.f32 %v1373, %v1343
    %v1384 = vmul.f32 %v1376, %v1343
    %v1385 = vmul.f32 %v1379, %v1343
    %v1386 = vadd.f32 %v1380, 1e-05
    %v1387 = vadd.f32 %v1381, 1e-05
    %v1388 = vadd.f32 %v1382, 1e-05
    %v1389 = vadd.f32 %v1383, 1e-05
    %v1390 = vadd.f32 %v1384, 1e-05
    %v1391 = vadd.f32 %v1385, 1e-05
    %v1392 = vrsqrt.pop %v1386
    %v1393 = vrsqrt.pop %v1387
    %v1394 = vrsqrt.pop %v1388
    %v1395 = vrsqrt.pop %v1389
    %v1396 = vrsqrt.pop %v1390
    %v1397 = vrsqrt.pop %v1391
    %v1398 = vmul.f32 %v1350, %v1392
    %v1399 = vmul.f32 %v1351, %v1393
    %v1400 = vmul.f32 %v1352, %v1394
    %v1401 = vmul.f32 %v1353, %v1395
    %v1402 = vmul.f32 %v1354, %v1396
    %v1403 = vmul.f32 %v1355, %v1397
    %v1405 = vlaneseq
    %v1406 = vshrl.u32 %v1405, 7
    %v1407 = vsub.s32 0, %v1406
    %v1408 = vrot.slane %v1323, %v1407
    %v1410 = vmul.f32 %v1398, %v1408
    %v1411 = vmul.f32 %v1399, %v1408
    %v1412 = vmul.f32 %v1400, %v1408
    %v1413 = vmul.f32 %v1401, %v1408
    %v1414 = vmul.f32 %v1402, %v1408
    %v1415 = vmul.f32 %v1403, %v1408
    %v1417 = vlaneseq
    %v1418 = vshrl.u32 %v1417, 7
    %v1419 = vsub.s32 0, %v1418
    %v1420 = vrot.slane %v1324, %v1419
    %v1422 = vadd.f32 %v1410, %v1420
    %v1423 = vadd.f32 %v1411, %v1420
    %v1424 = vadd.f32 %v1412, %v1420
    %v1425 = vadd.f32 %v1413, %v1420
    %v1426 = vadd.f32 %v1414, %v1420
    %v1427 = vadd.f32 %v1415, %v1420
    %v1428 = vpack.c.bf16 %v1423, %v1422
    %v1429 = vpack.c.bf16 %v1425, %v1424
    %v1430 = vpack.c.bf16 %v1427, %v1426
    %v1431 = vld [vmem:[%s8] sm:$0xff]
    %v1432 = vld [vmem:[%s8 + $0x8] sm:$0xff]
    %v1433 = vld [vmem:[%s8 + $0x10] sm:$0xff]
    %v1434 = vld [vmem:[%s8 + $0x18] sm:$0xff]
    %v1435 = vld [vmem:[%s8 + $0x20] sm:$0xff]
    %v1436 = vld [vmem:[%s8 + $0x28] sm:$0xff]
    %v1437 = vld [vmem:[%s8 + $0x30] sm:$0xff]
    %v1438 = vld [vmem:[%s8 + $0x38] sm:$0xff]
    %v1439 = vld [vmem:[%s8 + $0x40] sm:$0xff]
    %v1440 = vld [vmem:[%s8 + $0x48] sm:$0xff]
    %v1441 = vld [vmem:[%s8 + $0x50] sm:$0xff]
    %v1442 = vld [vmem:[%s8 + $0x58] sm:$0xff]
    %v1443 = vld [vmem:[%s8 + $0x60] sm:$0xff]
    %v1444 = vld [vmem:[%s8 + $0x68] sm:$0xff]
    %v1445 = vld [vmem:[%s8 + $0x70] sm:$0xff]
    %v1446 = vld [vmem:[%s8 + $0x78] sm:$0xff]
    %v1447 = vld [vmem:[%s8 + $0x80] sm:$0xff]
    %v1448 = vld [vmem:[%s8 + $0x88] sm:$0xff]
    %v1449 = vld [vmem:[%s8 + $0x90] sm:$0xff]
    %v1450 = vld [vmem:[%s8 + $0x98] sm:$0xff]
    %v1451 = vld [vmem:[%s8 + $0xa0] sm:$0xff]
    %v1452 = vld [vmem:[%s8 + $0xa8] sm:$0xff]
    %v1453 = vld [vmem:[%s8 + $0xb0] sm:$0xff]
    %v1454 = vld [vmem:[%s8 + $0xb8] sm:$0xff]
    %v1455 = vld [vmem:[%s8 + $0xc0] sm:$0xff]
    %v1456 = vld [vmem:[%s8 + $0xc8] sm:$0xff]
    %v1457 = vld [vmem:[%s8 + $0xd0] sm:$0xff]
    %v1458 = vld [vmem:[%s8 + $0xd8] sm:$0xff]
    %v1459 = vld [vmem:[%s8 + $0xe0] sm:$0xff]
    %v1460 = vld [vmem:[%s8 + $0xe8] sm:$0xff]
    %v1461 = vld [vmem:[%s8 + $0xf0] sm:$0xff]
    %v1462 = vld [vmem:[%s8 + $0xf8] sm:$0xff]
    %v1463 = vld [vmem:[%s8 + $0x100] sm:$0xff]
    %v1464 = vld [vmem:[%s8 + $0x108] sm:$0xff]
    %v1465 = vld [vmem:[%s8 + $0x110] sm:$0xff]
    %v1466 = vld [vmem:[%s8 + $0x118] sm:$0xff]
    %v1467 = vld [vmem:[%s8 + $0x120] sm:$0xff]
    %v1468 = vld [vmem:[%s8 + $0x128] sm:$0xff]
    %v1469 = vld [vmem:[%s8 + $0x130] sm:$0xff]
    %v1470 = vld [vmem:[%s8 + $0x138] sm:$0xff]
    %v1471 = vld [vmem:[%s8 + $0x140] sm:$0xff]
    %v1472 = vld [vmem:[%s8 + $0x148] sm:$0xff]
    %v1473 = vld [vmem:[%s8 + $0x150] sm:$0xff]
    %v1474 = vld [vmem:[%s8 + $0x158] sm:$0xff]
    %v1475 = vld [vmem:[%s8 + $0x160] sm:$0xff]
    %v1476 = vld [vmem:[%s8 + $0x168] sm:$0xff]
    %v1477 = vld [vmem:[%s8 + $0x170] sm:$0xff]
    %v1478 = vld [vmem:[%s8 + $0x178] sm:$0xff]
    %v1479 = vld [vmem:[%s8 + $0x180] sm:$0xff]
    %v1480 = vld [vmem:[%s8 + $0x188] sm:$0xff]
    %v1481 = vld [vmem:[%s8 + $0x190] sm:$0xff]
    %v1482 = vld [vmem:[%s8 + $0x198] sm:$0xff]
    %v1483 = vld [vmem:[%s8 + $0x1a0] sm:$0xff]
    %v1484 = vld [vmem:[%s8 + $0x1a8] sm:$0xff]
    %v1485 = vld [vmem:[%s8 + $0x1b0] sm:$0xff]
    %v1486 = vld [vmem:[%s8 + $0x1b8] sm:$0xff]
    %v1487 = vld [vmem:[%s8 + $0x1c0] sm:$0xff]
    %v1488 = vld [vmem:[%s8 + $0x1c8] sm:$0xff]
    %v1489 = vld [vmem:[%s8 + $0x1d0] sm:$0xff]
    %v1490 = vld [vmem:[%s8 + $0x1d8] sm:$0xff]
    %v1491 = vld [vmem:[%s8 + $0x1e0] sm:$0xff]
    %v1492 = vld [vmem:[%s8 + $0x1e8] sm:$0xff]
    %v1493 = vld [vmem:[%s8 + $0x1f0] sm:$0xff]
    %v1494 = vld [vmem:[%s8 + $0x1f8] sm:$0xff]
    %v1495 = vld [vmem:[%s9] sm:$0xff]
    %v1496 = vld [vmem:[%s9 + $0x8] sm:$0xff]
    %v1499 = vlaneseq
    %v1500 = vshrl.u32 %v1499, 7
    %v1501 = vsub.s32 0, %v1500
    %v1502 = vrot.slane %v1495, %v1501
    %v1503 = vlaneseq
    %v1504 = vshrl.u32 %v1503, 7
    %v1505 = vsub.s32 1, %v1504
    %v1506 = vrot.slane %v1495, %v1505
    %v1507 = vlaneseq
    %v1508 = vshrl.u32 %v1507, 7
    %v1509 = vsub.s32 2, %v1508
    %v1510 = vrot.slane %v1495, %v1509
    %v1511 = vlaneseq
    %v1512 = vshrl.u32 %v1511, 7
    %v1513 = vsub.s32 3, %v1512
    %v1514 = vrot.slane %v1495, %v1513
    %v1515 = vlaneseq
    %v1516 = vshrl.u32 %v1515, 7
    %v1517 = vsub.s32 4, %v1516
    %v1518 = vrot.slane %v1495, %v1517
    %v1519 = vlaneseq
    %v1520 = vshrl.u32 %v1519, 7
    %v1521 = vsub.s32 5, %v1520
    %v1522 = vrot.slane %v1495, %v1521
    %v1523 = vlaneseq
    %v1524 = vshrl.u32 %v1523, 7
    %v1525 = vsub.s32 6, %v1524
    %v1526 = vrot.slane %v1495, %v1525
    %v1527 = vlaneseq
    %v1528 = vshrl.u32 %v1527, 7
    %v1529 = vsub.s32 7, %v1528
    %v1530 = vrot.slane %v1495, %v1529
    %v1531 = vlaneseq
    %v1532 = vshrl.u32 %v1531, 7
    %v1533 = vsub.s32 0, %v1532
    %v1534 = vrot.slane %v1496, %v1533
    %v1535 = vlaneseq
    %v1536 = vshrl.u32 %v1535, 7
    %v1537 = vsub.s32 1, %v1536
    %v1538 = vrot.slane %v1496, %v1537
    %v1539 = vlaneseq
    %v1540 = vshrl.u32 %v1539, 7
    %v1541 = vsub.s32 2, %v1540
    %v1542 = vrot.slane %v1496, %v1541
    %v1543 = vlaneseq
    %v1544 = vshrl.u32 %v1543, 7
    %v1545 = vsub.s32 3, %v1544
    %v1546 = vrot.slane %v1496, %v1545
    %v1547 = vlaneseq
    %v1548 = vshrl.u32 %v1547, 7
    %v1549 = vsub.s32 4, %v1548
    %v1550 = vrot.slane %v1496, %v1549
    %v1551 = vlaneseq
    %v1552 = vshrl.u32 %v1551, 7
    %v1553 = vsub.s32 5, %v1552
    %v1554 = vrot.slane %v1496, %v1553
    %v1555 = vlaneseq
    %v1556 = vshrl.u32 %v1555, 7
    %v1557 = vsub.s32 6, %v1556
    %v1558 = vrot.slane %v1496, %v1557
    %v1559 = vlaneseq
    %v1560 = vshrl.u32 %v1559, 7
    %v1561 = vsub.s32 7, %v1560
    %v1562 = vrot.slane %v1496, %v1561
    %v1643 = vunpack.c.l.b16 %v1431
    %v1644 = vunpack.c.h.b16 %v1431
    %v1645 = vunpack.c.l.b16 %v1432
    %v1646 = vunpack.c.h.b16 %v1432
    %v1647 = vunpack.c.l.b16 %v1433
    %v1648 = vunpack.c.h.b16 %v1433
    %v1649 = vunpack.c.l.b16 %v1434
    %v1650 = vunpack.c.h.b16 %v1434
    %v1651 = vunpack.c.l.b16 %v1435
    %v1652 = vunpack.c.h.b16 %v1435
    %v1653 = vunpack.c.l.b16 %v1436
    %v1654 = vunpack.c.h.b16 %v1436
    %v1655 = vunpack.c.l.b16 %v1437
    %v1656 = vunpack.c.h.b16 %v1437
    %v1657 = vunpack.c.l.b16 %v1438
    %v1658 = vunpack.c.h.b16 %v1438
    %v1659 = vunpack.c.l.b16 %v1439
    %v1660 = vunpack.c.h.b16 %v1439
    %v1661 = vunpack.c.l.b16 %v1440
    %v1662 = vunpack.c.h.b16 %v1440
    %v1663 = vunpack.c.l.b16 %v1441
    %v1664 = vunpack.c.h.b16 %v1441
    %v1665 = vunpack.c.l.b16 %v1442
    %v1666 = vunpack.c.h.b16 %v1442
    %v1667 = vunpack.c.l.b16 %v1443
    %v1668 = vunpack.c.h.b16 %v1443
    %v1669 = vunpack.c.l.b16 %v1444
    %v1670 = vunpack.c.h.b16 %v1444
    %v1671 = vunpack.c.l.b16 %v1445
    %v1672 = vunpack.c.h.b16 %v1445
    %v1673 = vunpack.c.l.b16 %v1446
    %v1674 = vunpack.c.h.b16 %v1446
    %v1675 = vunpack.c.l.b16 %v1447
    %v1676 = vunpack.c.h.b16 %v1447
    %v1677 = vunpack.c.l.b16 %v1448
    %v1678 = vunpack.c.h.b16 %v1448
    %v1679 = vunpack.c.l.b16 %v1449
    %v1680 = vunpack.c.h.b16 %v1449
    %v1681 = vunpack.c.l.b16 %v1450
    %v1682 = vunpack.c.h.b16 %v1450
    %v1683 = vunpack.c.l.b16 %v1451
    %v1684 = vunpack.c.h.b16 %v1451
    %v1685 = vunpack.c.l.b16 %v1452
    %v1686 = vunpack.c.h.b16 %v1452
    %v1687 = vunpack.c.l.b16 %v1453
    %v1688 = vunpack.c.h.b16 %v1453
    %v1689 = vunpack.c.l.b16 %v1454
    %v1690 = vunpack.c.h.b16 %v1454
    %v1691 = vunpack.c.l.b16 %v1455
    %v1692 = vunpack.c.h.b16 %v1455
    %v1693 = vunpack.c.l.b16 %v1456
    %v1694 = vunpack.c.h.b16 %v1456
    %v1695 = vunpack.c.l.b16 %v1457
    %v1696 = vunpack.c.h.b16 %v1457
    %v1697 = vunpack.c.l.b16 %v1458
    %v1698 = vunpack.c.h.b16 %v1458
    %v1699 = vunpack.c.l.b16 %v1459
    %v1700 = vunpack.c.h.b16 %v1459
    %v1701 = vunpack.c.l.b16 %v1460
    %v1702 = vunpack.c.h.b16 %v1460
    %v1703 = vunpack.c.l.b16 %v1461
    %v1704 = vunpack.c.h.b16 %v1461
    %v1705 = vunpack.c.l.b16 %v1462
    %v1706 = vunpack.c.h.b16 %v1462
    %v1707 = vunpack.c.l.b16 %v1463
    %v1708 = vunpack.c.h.b16 %v1463
    %v1709 = vunpack.c.l.b16 %v1464
    %v1710 = vunpack.c.h.b16 %v1464
    %v1711 = vunpack.c.l.b16 %v1465
    %v1712 = vunpack.c.h.b16 %v1465
    %v1713 = vunpack.c.l.b16 %v1466
    %v1714 = vunpack.c.h.b16 %v1466
    %v1715 = vunpack.c.l.b16 %v1467
    %v1716 = vunpack.c.h.b16 %v1467
    %v1717 = vunpack.c.l.b16 %v1468
    %v1718 = vunpack.c.h.b16 %v1468
    %v1719 = vunpack.c.l.b16 %v1469
    %v1720 = vunpack.c.h.b16 %v1469
    %v1721 = vunpack.c.l.b16 %v1470
    %v1722 = vunpack.c.h.b16 %v1470
    %v1723 = vunpack.c.l.b16 %v1471
    %v1724 = vunpack.c.h.b16 %v1471
    %v1725 = vunpack.c.l.b16 %v1472
    %v1726 = vunpack.c.h.b16 %v1472
    %v1727 = vunpack.c.l.b16 %v1473
    %v1728 = vunpack.c.h.b16 %v1473
    %v1729 = vunpack.c.l.b16 %v1474
    %v1730 = vunpack.c.h.b16 %v1474
    %v1731 = vunpack.c.l.b16 %v1475
    %v1732 = vunpack.c.h.b16 %v1475
    %v1733 = vunpack.c.l.b16 %v1476
    %v1734 = vunpack.c.h.b16 %v1476
    %v1735 = vunpack.c.l.b16 %v1477
    %v1736 = vunpack.c.h.b16 %v1477
    %v1737 = vunpack.c.l.b16 %v1478
    %v1738 = vunpack.c.h.b16 %v1478
    %v1739 = vunpack.c.l.b16 %v1479
    %v1740 = vunpack.c.h.b16 %v1479
    %v1741 = vunpack.c.l.b16 %v1480
    %v1742 = vunpack.c.h.b16 %v1480
    %v1743 = vunpack.c.l.b16 %v1481
    %v1744 = vunpack.c.h.b16 %v1481
    %v1745 = vunpack.c.l.b16 %v1482
    %v1746 = vunpack.c.h.b16 %v1482
    %v1747 = vunpack.c.l.b16 %v1483
    %v1748 = vunpack.c.h.b16 %v1483
    %v1749 = vunpack.c.l.b16 %v1484
    %v1750 = vunpack.c.h.b16 %v1484
    %v1751 = vunpack.c.l.b16 %v1485
    %v1752 = vunpack.c.h.b16 %v1485
    %v1753 = vunpack.c.l.b16 %v1486
    %v1754 = vunpack.c.h.b16 %v1486
    %v1755 = vunpack.c.l.b16 %v1487
    %v1756 = vunpack.c.h.b16 %v1487
    %v1757 = vunpack.c.l.b16 %v1488
    %v1758 = vunpack.c.h.b16 %v1488
    %v1759 = vunpack.c.l.b16 %v1489
    %v1760 = vunpack.c.h.b16 %v1489
    %v1761 = vunpack.c.l.b16 %v1490
    %v1762 = vunpack.c.h.b16 %v1490
    %v1763 = vunpack.c.l.b16 %v1491
    %v1764 = vunpack.c.h.b16 %v1491
    %v1765 = vunpack.c.l.b16 %v1492
    %v1766 = vunpack.c.h.b16 %v1492
    %v1767 = vunpack.c.l.b16 %v1493
    %v1768 = vunpack.c.h.b16 %v1493
    %v1769 = vunpack.c.l.b16 %v1494
    %v1770 = vunpack.c.h.b16 %v1494
    %v1771 = vpack.c.b16 %v1659, %v1643
    %v1772 = vpack.c.b16 %v1660, %v1644
    %v1773 = vpack.c.b16 %v1661, %v1645
    %v1774 = vpack.c.b16 %v1662, %v1646
    %v1775 = vpack.c.b16 %v1663, %v1647
    %v1776 = vpack.c.b16 %v1664, %v1648
    %v1777 = vpack.c.b16 %v1665, %v1649
    %v1778 = vpack.c.b16 %v1666, %v1650
    %v1779 = vpack.c.b16 %v1667, %v1651
    %v1780 = vpack.c.b16 %v1668, %v1652
    %v1781 = vpack.c.b16 %v1669, %v1653
    %v1782 = vpack.c.b16 %v1670, %v1654
    %v1783 = vpack.c.b16 %v1671, %v1655
    %v1784 = vpack.c.b16 %v1672, %v1656
    %v1785 = vpack.c.b16 %v1673, %v1657
    %v1786 = vpack.c.b16 %v1674, %v1658
    %v1787 = vpack.c.b16 %v1691, %v1675
    %v1788 = vpack.c.b16 %v1692, %v1676
    %v1789 = vpack.c.b16 %v1693, %v1677
    %v1790 = vpack.c.b16 %v1694, %v1678
    %v1791 = vpack.c.b16 %v1695, %v1679
    %v1792 = vpack.c.b16 %v1696, %v1680
    %v1793 = vpack.c.b16 %v1697, %v1681
    %v1794 = vpack.c.b16 %v1698, %v1682
    %v1795 = vpack.c.b16 %v1699, %v1683
    %v1796 = vpack.c.b16 %v1700, %v1684
    %v1797 = vpack.c.b16 %v1701, %v1685
    %v1798 = vpack.c.b16 %v1702, %v1686
    %v1799 = vpack.c.b16 %v1703, %v1687
    %v1800 = vpack.c.b16 %v1704, %v1688
    %v1801 = vpack.c.b16 %v1705, %v1689
    %v1802 = vpack.c.b16 %v1706, %v1690
    %v1803 = vpack.c.b16 %v1723, %v1707
    %v1804 = vpack.c.b16 %v1724, %v1708
    %v1805 = vpack.c.b16 %v1725, %v1709
    %v1806 = vpack.c.b16 %v1726, %v1710
    %v1807 = vpack.c.b16 %v1727, %v1711
    %v1808 = vpack.c.b16 %v1728, %v1712
    %v1809 = vpack.c.b16 %v1729, %v1713
    %v1810 = vpack.c.b16 %v1730, %v1714
    %v1811 = vpack.c.b16 %v1731, %v1715
    %v1812 = vpack.c.b16 %v1732, %v1716
    %v1813 = vpack.c.b16 %v1733, %v1717
    %v1814 = vpack.c.b16 %v1734, %v1718
    %v1815 = vpack.c.b16 %v1735, %v1719
    %v1816 = vpack.c.b16 %v1736, %v1720
    %v1817 = vpack.c.b16 %v1737, %v1721
    %v1818 = vpack.c.b16 %v1738, %v1722
    %v1819 = vpack.c.b16 %v1755, %v1739
    %v1820 = vpack.c.b16 %v1756, %v1740
    %v1821 = vpack.c.b16 %v1757, %v1741
    %v1822 = vpack.c.b16 %v1758, %v1742
    %v1823 = vpack.c.b16 %v1759, %v1743
    %v1824 = vpack.c.b16 %v1760, %v1744
    %v1825 = vpack.c.b16 %v1761, %v1745
    %v1826 = vpack.c.b16 %v1762, %v1746
    %v1827 = vpack.c.b16 %v1763, %v1747
    %v1828 = vpack.c.b16 %v1764, %v1748
    %v1829 = vpack.c.b16 %v1765, %v1749
    %v1830 = vpack.c.b16 %v1766, %v1750
    %v1831 = vpack.c.b16 %v1767, %v1751
    %v1832 = vpack.c.b16 %v1768, %v1752
    %v1833 = vpack.c.b16 %v1769, %v1753
    %v1834 = vpack.c.b16 %v1770, %v1754
    %v1900 = vsel %vm107, %v1428, 0
    %v1903 = vsel %vm107, %v1429, 0
    %v1906 = vsel %vm107, %v1430, 0
    %1908 = vmatprep.subr.bf16.mxu0 %v1772
    %1909 = vmatpush1.bf16.msra.mxu0 %v1771
    %1910 = vmatprep.subr.bf16.mxu0 %v1788
    %1911 = vmatpush1.bf16.msra.mxu0 %v1787
    %1912 = vmatprep.subr.bf16.mxu0 %v1804
    %1913 = vmatpush1.bf16.msra.mxu0 %v1803
    %1914 = vmatprep.subr.bf16.mxu0 %v1820
    %1915 = vmatpush1.bf16.msra.mxu0 %v1819
    %1916 = vmatprep.subr.bf16.mxu0 0
    %1917 = vmatpush1.bf16.msra.mxu0 0
    %1918 = vmatprep.subr.bf16.mxu0 0
    %1919 = vmatpush1.bf16.msra.mxu0 0
    %1920 = vmatprep.subr.bf16.mxu0 0
    %1921 = vmatpush1.bf16.msra.mxu0 0
    %1922 = vmatprep.subr.bf16.mxu0 0
    %1923 = vmatpush1.bf16.msra.mxu0 0
    %1924 = vmatprep.subr.bf16.mxu0 0
    %1925 = vmatpush1.bf16.msra.mxu0 0
    %1926 = vmatprep.subr.bf16.mxu0 0
    %1927 = vmatpush1.bf16.msra.mxu0 0
    %1928 = vmatprep.subr.bf16.mxu0 0
    %1929 = vmatpush1.bf16.msra.mxu0 0
    %1930 = vmatprep.subr.bf16.mxu0 0
    %1931 = vmatpush1.bf16.msra.mxu0 0
    %1932 = vmatprep.subr.bf16.mxu0 0
    %1933 = vmatpush1.bf16.msra.mxu0 0
    %1934 = vmatprep.subr.bf16.mxu0 0
    %1935 = vmatpush1.bf16.msra.mxu0 0
    %1936 = vmatprep.subr.bf16.mxu0 0
    %1937 = vmatpush1.bf16.msra.mxu0 0
    %1938 = vmatprep.subr.bf16.mxu0 0
    %1939 = vmatpush1.bf16.msra.mxu0 0
    %1940 = vmatprep.mubr.bf16.mxu0 0
    %1941 = vmatmul.mubr.bf16.gmra.mrb[0].mxu0 %v1900
    %v1942 = vpop.f32.mrb[0].mxu0
    %v1943 = vadd.f32 %v1502, %v1942
    %v1944 = vpop.f32.mrb[0].mxu0
    %v1945 = vadd.f32 %v1506, %v1944
    %v1946 = vpop.f32.mrb[0].mxu0
    %v1947 = vadd.f32 %v1502, %v1946
    %v1948 = vpop.f32.mrb[0].mxu0
    %v1949 = vadd.f32 %v1506, %v1948
    %1950 = vmatprep.mubr.bf16.mxu0 0
    %1951 = vmatmul.mubr.bf16.gmra.mrb[0].mxu0 %v1903
    %v1952 = vpop.f32.mrb[0].mxu0
    %v1953 = vadd.f32 %v1502, %v1952
    %v1954 = vpop.f32.mrb[0].mxu0
    %v1955 = vadd.f32 %v1506, %v1954
    %v1956 = vpop.f32.mrb[0].mxu0
    %v1957 = vadd.f32 %v1502, %v1956
    %v1958 = vpop.f32.mrb[0].mxu0
    %v1959 = vadd.f32 %v1506, %v1958
    %1960 = vmatprep.mubr.bf16.mxu0 0
    %1961 = vmatmul.mubr.bf16.gmra.mrb[0].mxu0 %v1906
    %v1962 = vpop.f32.mrb[0].mxu0
    %v1963 = vadd.f32 %v1502, %v1962
    %v1964 = vpop.f32.mrb[0].mxu0
    %v1965 = vadd.f32 %v1506, %v1964
    %v1966 = vpop.f32.mrb[0].mxu0
    %v1967 = vadd.f32 %v1502, %v1966
    %v1968 = vpop.f32.mrb[0].mxu0
    %v1969 = vadd.f32 %v1506, %v1968
    %1970 = vdwg.mxu0
    %1971 = vmatprep.subr.bf16.mxu0 %v1774
    %1972 = vmatpush1.bf16.msra.mxu0 %v1773
    %1973 = vmatprep.subr.bf16.mxu0 %v1790
    %1974 = vmatpush1.bf16.msra.mxu0 %v1789
    %1975 = vmatprep.subr.bf16.mxu0 %v1806
    %1976 = vmatpush1.bf16.msra.mxu0 %v1805
    %1977 = vmatprep.subr.bf16.mxu0 %v1822
    %1978 = vmatpush1.bf16.msra.mxu0 %v1821
    %1979 = vmatprep.subr.bf16.mxu0 0
    %1980 = vmatpush1.bf16.msra.mxu0 0
    %1981 = vmatprep.subr.bf16.mxu0 0
    %1982 = vmatpush1.bf16.msra.mxu0 0
    %1983 = vmatprep.subr.bf16.mxu0 0
    %1984 = vmatpush1.bf16.msra.mxu0 0
    %1985 = vmatprep.subr.bf16.mxu0 0
    %1986 = vmatpush1.bf16.msra.mxu0 0
    %1987 = vmatprep.subr.bf16.mxu0 0
    %1988 = vmatpush1.bf16.msra.mxu0 0
    %1989 = vmatprep.subr.bf16.mxu0 0
    %1990 = vmatpush1.bf16.msra.mxu0 0
    %1991 = vmatprep.subr.bf16.mxu0 0
    %1992 = vmatpush1.bf16.msra.mxu0 0
    %1993 = vmatprep.subr.bf16.mxu0 0
    %1994 = vmatpush1.bf16.msra.mxu0 0
    %1995 = vmatprep.subr.bf16.mxu0 0
    %1996 = vmatpush1.bf16.msra.mxu0 0
    %1997 = vmatprep.subr.bf16.mxu0 0
    %1998 = vmatpush1.bf16.msra.mxu0 0
    %1999 = vmatprep.subr.bf16.mxu0 0
    %2000 = vmatpush1.bf16.msra.mxu0 0
    %2001 = vmatprep.subr.bf16.mxu0 0
    %2002 = vmatpush1.bf16.msra.mxu0 0
    %2003 = vmatprep.mubr.bf16.mxu0 0
    %2004 = vmatmul.mubr.bf16.gmra.mrb[0].mxu0 %v1900
    %v2005 = vpop.f32.mrb[0].mxu0
    %v2006 = vadd.f32 %v1510, %v2005
    %v2007 = vpop.f32.mrb[0].mxu0
    %v2008 = vadd.f32 %v1514, %v2007
    %v2009 = vpop.f32.mrb[0].mxu0
    %v2010 = vadd.f32 %v1510, %v2009
    %v2011 = vpop.f32.mrb[0].mxu0
    %v2012 = vadd.f32 %v1514, %v2011
    %2013 = vmatprep.mubr.bf16.mxu0 0
    %2014 = vmatmul.mubr.bf16.gmra.mrb[0].mxu0 %v1903
    %v2015 = vpop.f32.mrb[0].mxu0
    %v2016 = vadd.f32 %v1510, %v2015
    %v2017 = vpop.f32.mrb[0].mxu0
    %v2018 = vadd.f32 %v1514, %v2017
    %v2019 = vpop.f32.mrb[0].mxu0
    %v2020 = vadd.f32 %v1510, %v2019
    %v2021 = vpop.f32.mrb[0].mxu0
    %v2022 = vadd.f32 %v1514, %v2021
    %2023 = vmatprep.mubr.bf16.mxu0 0
    %2024 = vmatmul.mubr.bf16.gmra.mrb[0].mxu0 %v1906
    %v2025 = vpop.f32.mrb[0].mxu0
    %v2026 = vadd.f32 %v1510, %v2025
    %v2027 = vpop.f32.mrb[0].mxu0
    %v2028 = vadd.f32 %v1514, %v2027
    %v2029 = vpop.f32.mrb[0].mxu0
    %v2030 = vadd.f32 %v1510, %v2029
    %v2031 = vpop.f32.mrb[0].mxu0
    %v2032 = vadd.f32 %v1514, %v2031
    %2033 = vdwg.mxu0
    %2034 = vmatprep.subr.bf16.mxu0 %v1776
    %2035 = vmatpush1.bf16.msra.mxu0 %v1775
    %2036 = vmatprep.subr.bf16.mxu0 %v1792
    %2037 = vmatpush1.bf16.msra.mxu0 %v1791
    %2038 = vmatprep.subr.bf16.mxu0 %v1808
    %2039 = vmatpush1.bf16.msra.mxu0 %v1807
    %2040 = vmatprep.subr.bf16.mxu0 %v1824
    %2041 = vmatpush1.bf16.msra.mxu0 %v1823
    %2042 = vmatprep.subr.bf16.mxu0 0
    %2043 = vmatpush1.bf16.msra.mxu0 0
    %2044 = vmatprep.subr.bf16.mxu0 0
    %2045 = vmatpush1.bf16.msra.mxu0 0
    %2046 = vmatprep.subr.bf16.mxu0 0
    %2047 = vmatpush1.bf16.msra.mxu0 0
    %2048 = vmatprep.subr.bf16.mxu0 0
    %2049 = vmatpush1.bf16.msra.mxu0 0
    %2050 = vmatprep.subr.bf16.mxu0 0
    %2051 = vmatpush1.bf16.msra.mxu0 0
    %2052 = vmatprep.subr.bf16.mxu0 0
    %2053 = vmatpush1.bf16.msra.mxu0 0
    %2054 = vmatprep.subr.bf16.mxu0 0
    %2055 = vmatpush1.bf16.msra.mxu0 0
    %2056 = vmatprep.subr.bf16.mxu0 0
    %2057 = vmatpush1.bf16.msra.mxu0 0
    %2058 = vmatprep.subr.bf16.mxu0 0
    %2059 = vmatpush1.bf16.msra.mxu0 0
    %2060 = vmatprep.subr.bf16.mxu0 0
    %2061 = vmatpush1.bf16.msra.mxu0 0
    %2062 = vmatprep.subr.bf16.mxu0 0
    %2063 = vmatpush1.bf16.msra.mxu0 0
    %2064 = vmatprep.subr.bf16.mxu0 0
    %2065 = vmatpush1.bf16.msra.mxu0 0
    %2066 = vmatprep.mubr.bf16.mxu0 0
    %2067 = vmatmul.mubr.bf16.gmra.mrb[0].mxu0 %v1900
    %v2068 = vpop.f32.mrb[0].mxu0
    %v2069 = vadd.f32 %v1518, %v2068
    %v2070 = vpop.f32.mrb[0].mxu0
    %v2071 = vadd.f32 %v1522, %v2070
    %v2072 = vpop.f32.mrb[0].mxu0
    %v2073 = vadd.f32 %v1518, %v2072
    %v2074 = vpop.f32.mrb[0].mxu0
    %v2075 = vadd.f32 %v1522, %v2074
    %2076 = vmatprep.mubr.bf16.mxu0 0
    %2077 = vmatmul.mubr.bf16.gmra.mrb[0].mxu0 %v1903
    %v2078 = vpop.f32.mrb[0].mxu0
    %v2079 = vadd.f32 %v1518, %v2078
    %v2080 = vpop.f32.mrb[0].mxu0
    %v2081 = vadd.f32 %v1522, %v2080
    %v2082 = vpop.f32.mrb[0].mxu0
    %v2083 = vadd.f32 %v1518, %v2082
    %v2084 = vpop.f32.mrb[0].mxu0
    %v2085 = vadd.f32 %v1522, %v2084
    %2086 = vmatprep.mubr.bf16.mxu0 0
    %2087 = vmatmul.mubr.bf16.gmra.mrb[0].mxu0 %v1906
    %v2088 = vpop.f32.mrb[0].mxu0
    %v2089 = vadd.f32 %v1518, %v2088
    %v2090 = vpop.f32.mrb[0].mxu0
    %v2091 = vadd.f32 %v1522, %v2090
    %v2092 = vpop.f32.mrb[0].mxu0
    %v2093 = vadd.f32 %v1518, %v2092
    %v2094 = vpop.f32.mrb[0].mxu0
    %v2095 = vadd.f32 %v1522, %v2094
    %2096 = vdwg.mxu0
    %2097 = vmatprep.subr.bf16.mxu0 %v1778
    %2098 = vmatpush1.bf16.msra.mxu0 %v1777
    %2099 = vmatprep.subr.bf16.mxu0 %v1794
    %2100 = vmatpush1.bf16.msra.mxu0 %v1793
    %2101 = vmatprep.subr.bf16.mxu0 %v1810
    %2102 = vmatpush1.bf16.msra.mxu0 %v1809
    %2103 = vmatprep.subr.bf16.mxu0 %v1826
    %2104 = vmatpush1.bf16.msra.mxu0 %v1825
    %2105 = vmatprep.subr.bf16.mxu0 0
    %2106 = vmatpush1.bf16.msra.mxu0 0
    %2107 = vmatprep.subr.bf16.mxu0 0
    %2108 = vmatpush1.bf16.msra.mxu0 0
    %2109 = vmatprep.subr.bf16.mxu0 0
    %2110 = vmatpush1.bf16.msra.mxu0 0
    %2111 = vmatprep.subr.bf16.mxu0 0
    %2112 = vmatpush1.bf16.msra.mxu0 0
    %2113 = vmatprep.subr.bf16.mxu0 0
    %2114 = vmatpush1.bf16.msra.mxu0 0
    %2115 = vmatprep.subr.bf16.mxu0 0
    %2116 = vmatpush1.bf16.msra.mxu0 0
    %2117 = vmatprep.subr.bf16.mxu0 0
    %2118 = vmatpush1.bf16.msra.mxu0 0
    %2119 = vmatprep.subr.bf16.mxu0 0
    %2120 = vmatpush1.bf16.msra.mxu0 0
    %2121 = vmatprep.subr.bf16.mxu0 0
    %2122 = vmatpush1.bf16.msra.mxu0 0
    %2123 = vmatprep.subr.bf16.mxu0 0
    %2124 = vmatpush1.bf16.msra.mxu0 0
    %2125 = vmatprep.subr.bf16.mxu0 0
    %2126 = vmatpush1.bf16.msra.mxu0 0
    %2127 = vmatprep.subr.bf16.mxu0 0
    %2128 = vmatpush1.bf16.msra.mxu0 0
    %2129 = vmatprep.mubr.bf16.mxu0 0
    %2130 = vmatmul.mubr.bf16.gmra.mrb[0].mxu0 %v1900
    %v2131 = vpop.f32.mrb[0].mxu0
    %v2132 = vadd.f32 %v1526, %v2131
    %v2133 = vpop.f32.mrb[0].mxu0
    %v2134 = vadd.f32 %v1530, %v2133
    %v2135 = vpop.f32.mrb[0].mxu0
    %v2136 = vadd.f32 %v1526, %v2135
    %v2137 = vpop.f32.mrb[0].mxu0
    %v2138 = vadd.f32 %v1530, %v2137
    %2139 = vmatprep.mubr.bf16.mxu0 0
    %2140 = vmatmul.mubr.bf16.gmra.mrb[0].mxu0 %v1903
    %v2141 = vpop.f32.mrb[0].mxu0
    %v2142 = vadd.f32 %v1526, %v2141
    %v2143 = vpop.f32.mrb[0].mxu0
    %v2144 = vadd.f32 %v1530, %v2143
    %v2145 = vpop.f32.mrb[0].mxu0
    %v2146 = vadd.f32 %v1526, %v2145
    %v2147 = vpop.f32.mrb[0].mxu0
    %v2148 = vadd.f32 %v1530, %v2147
    %2149 = vmatprep.mubr.bf16.mxu0 0
    %2150 = vmatmul.mubr.bf16.gmra.mrb[0].mxu0 %v1906
    %v2151 = vpop.f32.mrb[0].mxu0
    %v2152 = vadd.f32 %v1526, %v2151
    %v2153 = vpop.f32.mrb[0].mxu0
    %v2154 = vadd.f32 %v1530, %v2153
    %v2155 = vpop.f32.mrb[0].mxu0
    %v2156 = vadd.f32 %v1526, %v2155
    %v2157 = vpop.f32.mrb[0].mxu0
    %v2158 = vadd.f32 %v1530, %v2157
    %2159 = vdwg.mxu0
    %2160 = vmatprep.subr.bf16.mxu0 %v1780
    %2161 = vmatpush1.bf16.msra.mxu0 %v1779
    %2162 = vmatprep.subr.bf16.mxu0 %v1796
    %2163 = vmatpush1.bf16.msra.mxu0 %v1795
    %2164 = vmatprep.subr.bf16.mxu0 %v1812
    %2165 = vmatpush1.bf16.msra.mxu0 %v1811
    %2166 = vmatprep.subr.bf16.mxu0 %v1828
    %2167 = vmatpush1.bf16.msra.mxu0 %v1827
    %2168 = vmatprep.subr.bf16.mxu0 0
    %2169 = vmatpush1.bf16.msra.mxu0 0
    %2170 = vmatprep.subr.bf16.mxu0 0
    %2171 = vmatpush1.bf16.msra.mxu0 0
    %2172 = vmatprep.subr.bf16.mxu0 0
    %2173 = vmatpush1.bf16.msra.mxu0 0
    %2174 = vmatprep.subr.bf16.mxu0 0
    %2175 = vmatpush1.bf16.msra.mxu0 0
    %2176 = vmatprep.subr.bf16.mxu0 0
    %2177 = vmatpush1.bf16.msra.mxu0 0
    %2178 = vmatprep.subr.bf16.mxu0 0
    %2179 = vmatpush1.bf16.msra.mxu0 0
    %2180 = vmatprep.subr.bf16.mxu0 0
    %2181 = vmatpush1.bf16.msra.mxu0 0
    %2182 = vmatprep.subr.bf16.mxu0 0
    %2183 = vmatpush1.bf16.msra.mxu0 0
    %2184 = vmatprep.subr.bf16.mxu0 0
    %2185 = vmatpush1.bf16.msra.mxu0 0
    %2186 = vmatprep.subr.bf16.mxu0 0
    %2187 = vmatpush1.bf16.msra.mxu0 0
    %2188 = vmatprep.subr.bf16.mxu0 0
    %2189 = vmatpush1.bf16.msra.mxu0 0
    %2190 = vmatprep.subr.bf16.mxu0 0
    %2191 = vmatpush1.bf16.msra.mxu0 0
    %2192 = vmatprep.mubr.bf16.mxu0 0
    %2193 = vmatmul.mubr.bf16.gmra.mrb[0].mxu0 %v1900
    %v2194 = vpop.f32.mrb[0].mxu0
    %v2195 = vadd.f32 %v1534, %v2194
    %v2196 = vpop.f32.mrb[0].mxu0
    %v2197 = vadd.f32 %v1538, %v2196
    %v2198 = vpop.f32.mrb[0].mxu0
    %v2199 = vadd.f32 %v1534, %v2198
    %v2200 = vpop.f32.mrb[0].mxu0
    %v2201 = vadd.f32 %v1538, %v2200
    %2202 = vmatprep.mubr.bf16.mxu0 0
    %2203 = vmatmul.mubr.bf16.gmra.mrb[0].mxu0 %v1903
    %v2204 = vpop.f32.mrb[0].mxu0
    %v2205 = vadd.f32 %v1534, %v2204
    %v2206 = vpop.f32.mrb[0].mxu0
    %v2207 = vadd.f32 %v1538, %v2206
    %v2208 = vpop.f32.mrb[0].mxu0
    %v2209 = vadd.f32 %v1534, %v2208
    %v2210 = vpop.f32.mrb[0].mxu0
    %v2211 = vadd.f32 %v1538, %v2210
    %2212 = vmatprep.mubr.bf16.mxu0 0
    %2213 = vmatmul.mubr.bf16.gmra.mrb[0].mxu0 %v1906
    %v2214 = vpop.f32.mrb[0].mxu0
    %v2215 = vadd.f32 %v1534, %v2214
    %v2216 = vpop.f32.mrb[0].mxu0
    %v2217 = vadd.f32 %v1538, %v2216
    %v2218 = vpop.f32.mrb[0].mxu0
    %v2219 = vadd.f32 %v1534, %v2218
    %v2220 = vpop.f32.mrb[0].mxu0
    %v2221 = vadd.f32 %v1538, %v2220
    %2222 = vdwg.mxu0
    %2223 = vmatprep.subr.bf16.mxu0 %v1782
    %2224 = vmatpush1.bf16.msra.mxu0 %v1781
    %2225 = vmatprep.subr.bf16.mxu0 %v1798
    %2226 = vmatpush1.bf16.msra.mxu0 %v1797
    %2227 = vmatprep.subr.bf16.mxu0 %v1814
    %2228 = vmatpush1.bf16.msra.mxu0 %v1813
    %2229 = vmatprep.subr.bf16.mxu0 %v1830
    %2230 = vmatpush1.bf16.msra.mxu0 %v1829
    %2231 = vmatprep.subr.bf16.mxu0 0
    %2232 = vmatpush1.bf16.msra.mxu0 0
    %2233 = vmatprep.subr.bf16.mxu0 0
    %2234 = vmatpush1.bf16.msra.mxu0 0
    %2235 = vmatprep.subr.bf16.mxu0 0
    %2236 = vmatpush1.bf16.msra.mxu0 0
    %2237 = vmatprep.subr.bf16.mxu0 0
    %2238 = vmatpush1.bf16.msra.mxu0 0
    %2239 = vmatprep.subr.bf16.mxu0 0
    %2240 = vmatpush1.bf16.msra.mxu0 0
    %2241 = vmatprep.subr.bf16.mxu0 0
    %2242 = vmatpush1.bf16.msra.mxu0 0
    %2243 = vmatprep.subr.bf16.mxu0 0
    %2244 = vmatpush1.bf16.msra.mxu0 0
    %2245 = vmatprep.subr.bf16.mxu0 0
    %2246 = vmatpush1.bf16.msra.mxu0 0
    %2247 = vmatprep.subr.bf16.mxu0 0
    %2248 = vmatpush1.bf16.msra.mxu0 0
    %2249 = vmatprep.subr.bf16.mxu0 0
    %2250 = vmatpush1.bf16.msra.mxu0 0
    %2251 = vmatprep.subr.bf16.mxu0 0
    %2252 = vmatpush1.bf16.msra.mxu0 0
    %2253 = vmatprep.subr.bf16.mxu0 0
    %2254 = vmatpush1.bf16.msra.mxu0 0
    %2255 = vmatprep.mubr.bf16.mxu0 0
    %2256 = vmatmul.mubr.bf16.gmra.mrb[0].mxu0 %v1900
    %v2257 = vpop.f32.mrb[0].mxu0
    %v2258 = vadd.f32 %v1542, %v2257
    %v2259 = vpop.f32.mrb[0].mxu0
    %v2260 = vadd.f32 %v1546, %v2259
    %v2261 = vpop.f32.mrb[0].mxu0
    %v2262 = vadd.f32 %v1542, %v2261
    %v2263 = vpop.f32.mrb[0].mxu0
    %v2264 = vadd.f32 %v1546, %v2263
    %2265 = vmatprep.mubr.bf16.mxu0 0
    %2266 = vmatmul.mubr.bf16.gmra.mrb[0].mxu0 %v1903
    %v2267 = vpop.f32.mrb[0].mxu0
    %v2268 = vadd.f32 %v1542, %v2267
    %v2269 = vpop.f32.mrb[0].mxu0
    %v2270 = vadd.f32 %v1546, %v2269
    %v2271 = vpop.f32.mrb[0].mxu0
    %v2272 = vadd.f32 %v1542, %v2271
    %v2273 = vpop.f32.mrb[0].mxu0
    %v2274 = vadd.f32 %v1546, %v2273
    %2275 = vmatprep.mubr.bf16.mxu0 0
    %2276 = vmatmul.mubr.bf16.gmra.mrb[0].mxu0 %v1906
    %v2277 = vpop.f32.mrb[0].mxu0
    %v2278 = vadd.f32 %v1542, %v2277
    %v2279 = vpop.f32.mrb[0].mxu0
    %v2280 = vadd.f32 %v1546, %v2279
    %v2281 = vpop.f32.mrb[0].mxu0
    %v2282 = vadd.f32 %v1542, %v2281
    %v2283 = vpop.f32.mrb[0].mxu0
    %v2284 = vadd.f32 %v1546, %v2283
    %2285 = vdwg.mxu0
    %2286 = vmatprep.subr.bf16.mxu0 %v1784
    %2287 = vmatpush1.bf16.msra.mxu0 %v1783
    %2288 = vmatprep.subr.bf16.mxu0 %v1800
    %2289 = vmatpush1.bf16.msra.mxu0 %v1799
    %2290 = vmatprep.subr.bf16.mxu0 %v1816
    %2291 = vmatpush1.bf16.msra.mxu0 %v1815
    %2292 = vmatprep.subr.bf16.mxu0 %v1832
    %2293 = vmatpush1.bf16.msra.mxu0 %v1831
    %2294 = vmatprep.subr.bf16.mxu0 0
    %2295 = vmatpush1.bf16.msra.mxu0 0
    %2296 = vmatprep.subr.bf16.mxu0 0
    %2297 = vmatpush1.bf16.msra.mxu0 0
    %2298 = vmatprep.subr.bf16.mxu0 0
    %2299 = vmatpush1.bf16.msra.mxu0 0
    %2300 = vmatprep.subr.bf16.mxu0 0
    %2301 = vmatpush1.bf16.msra.mxu0 0
    %2302 = vmatprep.subr.bf16.mxu0 0
    %2303 = vmatpush1.bf16.msra.mxu0 0
    %2304 = vmatprep.subr.bf16.mxu0 0
    %2305 = vmatpush1.bf16.msra.mxu0 0
    %2306 = vmatprep.subr.bf16.mxu0 0
    %2307 = vmatpush1.bf16.msra.mxu0 0
    %2308 = vmatprep.subr.bf16.mxu0 0
    %2309 = vmatpush1.bf16.msra.mxu0 0
    %2310 = vmatprep.subr.bf16.mxu0 0
    %2311 = vmatpush1.bf16.msra.mxu0 0
    %2312 = vmatprep.subr.bf16.mxu0 0
    %2313 = vmatpush1.bf16.msra.mxu0 0
    %2314 = vmatprep.subr.bf16.mxu0 0
    %2315 = vmatpush1.bf16.msra.mxu0 0
    %2316 = vmatprep.subr.bf16.mxu0 0
    %2317 = vmatpush1.bf16.msra.mxu0 0
    %2318 = vmatprep.mubr.bf16.mxu0 0
    %2319 = vmatmul.mubr.bf16.gmra.mrb[0].mxu0 %v1900
    %v2320 = vpop.f32.mrb[0].mxu0
    %v2321 = vadd.f32 %v1550, %v2320
    %v2322 = vpop.f32.mrb[0].mxu0
    %v2323 = vadd.f32 %v1554, %v2322
    %v2324 = vpop.f32.mrb[0].mxu0
    %v2325 = vadd.f32 %v1550, %v2324
    %v2326 = vpop.f32.mrb[0].mxu0
    %v2327 = vadd.f32 %v1554, %v2326
    %2328 = vmatprep.mubr.bf16.mxu0 0
    %2329 = vmatmul.mubr.bf16.gmra.mrb[0].mxu0 %v1903
    %v2330 = vpop.f32.mrb[0].mxu0
    %v2331 = vadd.f32 %v1550, %v2330
    %v2332 = vpop.f32.mrb[0].mxu0
    %v2333 = vadd.f32 %v1554, %v2332
    %v2334 = vpop.f32.mrb[0].mxu0
    %v2335 = vadd.f32 %v1550, %v2334
    %v2336 = vpop.f32.mrb[0].mxu0
    %v2337 = vadd.f32 %v1554, %v2336
    %2338 = vmatprep.mubr.bf16.mxu0 0
    %2339 = vmatmul.mubr.bf16.gmra.mrb[0].mxu0 %v1906
    %v2340 = vpop.f32.mrb[0].mxu0
    %v2341 = vadd.f32 %v1550, %v2340
    %v2342 = vpop.f32.mrb[0].mxu0
    %v2343 = vadd.f32 %v1554, %v2342
    %v2344 = vpop.f32.mrb[0].mxu0
    %v2345 = vadd.f32 %v1550, %v2344
    %v2346 = vpop.f32.mrb[0].mxu0
    %v2347 = vadd.f32 %v1554, %v2346
    %2348 = vdwg.mxu0
    %2349 = vmatprep.subr.bf16.mxu0 %v1786
    %2350 = vmatpush1.bf16.msra.mxu0 %v1785
    %2351 = vmatprep.subr.bf16.mxu0 %v1802
    %2352 = vmatpush1.bf16.msra.mxu0 %v1801
    %2353 = vmatprep.subr.bf16.mxu0 %v1818
    %2354 = vmatpush1.bf16.msra.mxu0 %v1817
    %2355 = vmatprep.subr.bf16.mxu0 %v1834
    %2356 = vmatpush1.bf16.msra.mxu0 %v1833
    %2357 = vmatprep.subr.bf16.mxu0 0
    %2358 = vmatpush1.bf16.msra.mxu0 0
    %2359 = vmatprep.subr.bf16.mxu0 0
    %2360 = vmatpush1.bf16.msra.mxu0 0
    %2361 = vmatprep.subr.bf16.mxu0 0
    %2362 = vmatpush1.bf16.msra.mxu0 0
    %2363 = vmatprep.subr.bf16.mxu0 0
    %2364 = vmatpush1.bf16.msra.mxu0 0
    %2365 = vmatprep.subr.bf16.mxu0 0
    %2366 = vmatpush1.bf16.msra.mxu0 0
    %2367 = vmatprep.subr.bf16.mxu0 0
    %2368 = vmatpush1.bf16.msra.mxu0 0
    %2369 = vmatprep.subr.bf16.mxu0 0
    %2370 = vmatpush1.bf16.msra.mxu0 0
    %2371 = vmatprep.subr.bf16.mxu0 0
    %2372 = vmatpush1.bf16.msra.mxu0 0
    %2373 = vmatprep.subr.bf16.mxu0 0
    %2374 = vmatpush1.bf16.msra.mxu0 0
    %2375 = vmatprep.subr.bf16.mxu0 0
    %2376 = vmatpush1.bf16.msra.mxu0 0
    %2377 = vmatprep.subr.bf16.mxu0 0
    %2378 = vmatpush1.bf16.msra.mxu0 0
    %2379 = vmatprep.subr.bf16.mxu0 0
    %2380 = vmatpush1.bf16.msra.mxu0 0
    %2381 = vmatprep.mubr.bf16.mxu0 0
    %2382 = vmatmul.mubr.bf16.gmra.mrb[0].mxu0 %v1900
    %v2383 = vpop.f32.mrb[0].mxu0
    %v2384 = vadd.f32 %v1558, %v2383
    %v2385 = vpop.f32.mrb[0].mxu0
    %v2386 = vadd.f32 %v1562, %v2385
    %v2387 = vpop.f32.mrb[0].mxu0
    %v2388 = vadd.f32 %v1558, %v2387
    %v2389 = vpop.f32.mrb[0].mxu0
    %v2390 = vadd.f32 %v1562, %v2389
    %2391 = vmatprep.mubr.bf16.mxu0 0
    %2392 = vmatmul.mubr.bf16.gmra.mrb[0].mxu0 %v1903
    %v2393 = vpop.f32.mrb[0].mxu0
    %v2394 = vadd.f32 %v1558, %v2393
    %v2395 = vpop.f32.mrb[0].mxu0
    %v2396 = vadd.f32 %v1562, %v2395
    %v2397 = vpop.f32.mrb[0].mxu0
    %v2398 = vadd.f32 %v1558, %v2397
    %v2399 = vpop.f32.mrb[0].mxu0
    %v2400 = vadd.f32 %v1562, %v2399
    %2401 = vmatprep.mubr.bf16.mxu0 0
    %2402 = vmatmul.mubr.bf16.gmra.mrb[0].mxu0 %v1906
    %v2403 = vpop.f32.mrb[0].mxu0
    %v2404 = vadd.f32 %v1558, %v2403
    %v2405 = vpop.f32.mrb[0].mxu0
    %v2406 = vadd.f32 %v1562, %v2405
    %v2407 = vpop.f32.mrb[0].mxu0
    %v2408 = vadd.f32 %v1558, %v2407
    %v2409 = vpop.f32.mrb[0].mxu0
    %v2410 = vadd.f32 %v1562, %v2409
    %2411 = vdwg.mxu0
    %v2412 = vmax.f32 %v1943, 0.0
    %v2413 = vmax.f32 %v1945, 0.0
    %v2414 = vmax.f32 %v2006, 0.0
    %v2415 = vmax.f32 %v2008, 0.0
    %v2416 = vmax.f32 %v2069, 0.0
    %v2417 = vmax.f32 %v2071, 0.0
    %v2418 = vmax.f32 %v2132, 0.0
    %v2419 = vmax.f32 %v2134, 0.0
    %v2420 = vmax.f32 %v2195, 0.0
    %v2421 = vmax.f32 %v2197, 0.0
    %v2422 = vmax.f32 %v2258, 0.0
    %v2423 = vmax.f32 %v2260, 0.0
    %v2424 = vmax.f32 %v2321, 0.0
    %v2425 = vmax.f32 %v2323, 0.0
    %v2426 = vmax.f32 %v2384, 0.0
    %v2427 = vmax.f32 %v2386, 0.0
    %v2428 = vmax.f32 %v1947, 0.0
    %v2429 = vmax.f32 %v1949, 0.0
    %v2430 = vmax.f32 %v2010, 0.0
    %v2431 = vmax.f32 %v2012, 0.0
    %v2432 = vmax.f32 %v2073, 0.0
    %v2433 = vmax.f32 %v2075, 0.0
    %v2434 = vmax.f32 %v2136, 0.0
    %v2435 = vmax.f32 %v2138, 0.0
    %v2436 = vmax.f32 %v2199, 0.0
    %v2437 = vmax.f32 %v2201, 0.0
    %v2438 = vmax.f32 %v2262, 0.0
    %v2439 = vmax.f32 %v2264, 0.0
    %v2440 = vmax.f32 %v2325, 0.0
    %v2441 = vmax.f32 %v2327, 0.0
    %v2442 = vmax.f32 %v2388, 0.0
    %v2443 = vmax.f32 %v2390, 0.0
    %v2444 = vmax.f32 %v1953, 0.0
    %v2445 = vmax.f32 %v1955, 0.0
    %v2446 = vmax.f32 %v2016, 0.0
    %v2447 = vmax.f32 %v2018, 0.0
    %v2448 = vmax.f32 %v2079, 0.0
    %v2449 = vmax.f32 %v2081, 0.0
    %v2450 = vmax.f32 %v2142, 0.0
    %v2451 = vmax.f32 %v2144, 0.0
    %v2452 = vmax.f32 %v2205, 0.0
    %v2453 = vmax.f32 %v2207, 0.0
    %v2454 = vmax.f32 %v2268, 0.0
    %v2455 = vmax.f32 %v2270, 0.0
    %v2456 = vmax.f32 %v2331, 0.0
    %v2457 = vmax.f32 %v2333, 0.0
    %v2458 = vmax.f32 %v2394, 0.0
    %v2459 = vmax.f32 %v2396, 0.0
    %v2460 = vmax.f32 %v1957, 0.0
    %v2461 = vmax.f32 %v1959, 0.0
    %v2462 = vmax.f32 %v2020, 0.0
    %v2463 = vmax.f32 %v2022, 0.0
    %v2464 = vmax.f32 %v2083, 0.0
    %v2465 = vmax.f32 %v2085, 0.0
    %v2466 = vmax.f32 %v2146, 0.0
    %v2467 = vmax.f32 %v2148, 0.0
    %v2468 = vmax.f32 %v2209, 0.0
    %v2469 = vmax.f32 %v2211, 0.0
    %v2470 = vmax.f32 %v2272, 0.0
    %v2471 = vmax.f32 %v2274, 0.0
    %v2472 = vmax.f32 %v2335, 0.0
    %v2473 = vmax.f32 %v2337, 0.0
    %v2474 = vmax.f32 %v2398, 0.0
    %v2475 = vmax.f32 %v2400, 0.0
    %v2476 = vmax.f32 %v1963, 0.0
    %v2477 = vmax.f32 %v1965, 0.0
    %v2478 = vmax.f32 %v2026, 0.0
    %v2479 = vmax.f32 %v2028, 0.0
    %v2480 = vmax.f32 %v2089, 0.0
    %v2481 = vmax.f32 %v2091, 0.0
    %v2482 = vmax.f32 %v2152, 0.0
    %v2483 = vmax.f32 %v2154, 0.0
    %v2484 = vmax.f32 %v2215, 0.0
    %v2485 = vmax.f32 %v2217, 0.0
    %v2486 = vmax.f32 %v2278, 0.0
    %v2487 = vmax.f32 %v2280, 0.0
    %v2488 = vmax.f32 %v2341, 0.0
    %v2489 = vmax.f32 %v2343, 0.0
    %v2490 = vmax.f32 %v2404, 0.0
    %v2491 = vmax.f32 %v2406, 0.0
    %v2492 = vmax.f32 %v1967, 0.0
    %v2493 = vmax.f32 %v1969, 0.0
    %v2494 = vmax.f32 %v2030, 0.0
    %v2495 = vmax.f32 %v2032, 0.0
    %v2496 = vmax.f32 %v2093, 0.0
    %v2497 = vmax.f32 %v2095, 0.0
    %v2498 = vmax.f32 %v2156, 0.0
    %v2499 = vmax.f32 %v2158, 0.0
    %v2500 = vmax.f32 %v2219, 0.0
    %v2501 = vmax.f32 %v2221, 0.0
    %v2502 = vmax.f32 %v2282, 0.0
    %v2503 = vmax.f32 %v2284, 0.0
    %v2504 = vmax.f32 %v2345, 0.0
    %v2505 = vmax.f32 %v2347, 0.0
    %v2506 = vmax.f32 %v2408, 0.0
    %v2507 = vmax.f32 %v2410, 0.0
    %v2508 = vpack.c.bf16 %v2428, %v2412
    %v2509 = vpack.c.bf16 %v2429, %v2413
    %v2510 = vpack.c.bf16 %v2430, %v2414
    %v2511 = vpack.c.bf16 %v2431, %v2415
    %v2512 = vpack.c.bf16 %v2432, %v2416
    %v2513 = vpack.c.bf16 %v2433, %v2417
    %v2514 = vpack.c.bf16 %v2434, %v2418
    %v2515 = vpack.c.bf16 %v2435, %v2419
    %v2516 = vpack.c.bf16 %v2436, %v2420
    %v2517 = vpack.c.bf16 %v2437, %v2421
    %v2518 = vpack.c.bf16 %v2438, %v2422
    %v2519 = vpack.c.bf16 %v2439, %v2423
    %v2520 = vpack.c.bf16 %v2440, %v2424
    %v2521 = vpack.c.bf16 %v2441, %v2425
    %v2522 = vpack.c.bf16 %v2442, %v2426
    %v2523 = vpack.c.bf16 %v2443, %v2427
    %v2524 = vpack.c.bf16 %v2460, %v2444
    %v2525 = vpack.c.bf16 %v2461, %v2445
    %v2526 = vpack.c.bf16 %v2462, %v2446
    %v2527 = vpack.c.bf16 %v2463, %v2447
    %v2528 = vpack.c.bf16 %v2464, %v2448
    %v2529 = vpack.c.bf16 %v2465, %v2449
    %v2530 = vpack.c.bf16 %v2466, %v2450
    %v2531 = vpack.c.bf16 %v2467, %v2451
    %v2532 = vpack.c.bf16 %v2468, %v2452
    %v2533 = vpack.c.bf16 %v2469, %v2453
    %v2534 = vpack.c.bf16 %v2470, %v2454
    %v2535 = vpack.c.bf16 %v2471, %v2455
    %v2536 = vpack.c.bf16 %v2472, %v2456
    %v2537 = vpack.c.bf16 %v2473, %v2457
    %v2538 = vpack.c.bf16 %v2474, %v2458
    %v2539 = vpack.c.bf16 %v2475, %v2459
    %v2540 = vpack.c.bf16 %v2492, %v2476
    %v2541 = vpack.c.bf16 %v2493, %v2477
    %v2542 = vpack.c.bf16 %v2494, %v2478
    %v2543 = vpack.c.bf16 %v2495, %v2479
    %v2544 = vpack.c.bf16 %v2496, %v2480
    %v2545 = vpack.c.bf16 %v2497, %v2481
    %v2546 = vpack.c.bf16 %v2498, %v2482
    %v2547 = vpack.c.bf16 %v2499, %v2483
    %v2548 = vpack.c.bf16 %v2500, %v2484
    %v2549 = vpack.c.bf16 %v2501, %v2485
    %v2550 = vpack.c.bf16 %v2502, %v2486
    %v2551 = vpack.c.bf16 %v2503, %v2487
    %v2552 = vpack.c.bf16 %v2504, %v2488
    %v2553 = vpack.c.bf16 %v2505, %v2489
    %v2554 = vpack.c.bf16 %v2506, %v2490
    %v2555 = vpack.c.bf16 %v2507, %v2491
    %v2556 = vld [vmem:[%s10] sm:$0xf]
    %v2557 = vld [vmem:[%s10 + $0x4] sm:$0xf]
    %v2558 = vld [vmem:[%s10 + $0x8] sm:$0xf]
    %v2559 = vld [vmem:[%s10 + $0xc] sm:$0xf]
    %v2560 = vld [vmem:[%s10 + $0x10] sm:$0xf]
    %v2561 = vld [vmem:[%s10 + $0x14] sm:$0xf]
    %v2562 = vld [vmem:[%s10 + $0x18] sm:$0xf]
    %v2563 = vld [vmem:[%s10 + $0x1c] sm:$0xf]
    %v2564 = vld [vmem:[%s10 + $0x20] sm:$0xf]
    %v2565 = vld [vmem:[%s10 + $0x24] sm:$0xf]
    %v2566 = vld [vmem:[%s10 + $0x28] sm:$0xf]
    %v2567 = vld [vmem:[%s10 + $0x2c] sm:$0xf]
    %v2568 = vld [vmem:[%s10 + $0x30] sm:$0xf]
    %v2569 = vld [vmem:[%s10 + $0x34] sm:$0xf]
    %v2570 = vld [vmem:[%s10 + $0x38] sm:$0xf]
    %v2571 = vld [vmem:[%s10 + $0x3c] sm:$0xf]
    %v2572 = vld [vmem:[%s10 + $0x40] sm:$0xf]
    %v2573 = vld [vmem:[%s10 + $0x44] sm:$0xf]
    %v2574 = vld [vmem:[%s10 + $0x48] sm:$0xf]
    %v2575 = vld [vmem:[%s10 + $0x4c] sm:$0xf]
    %v2576 = vld [vmem:[%s10 + $0x50] sm:$0xf]
    %v2577 = vld [vmem:[%s10 + $0x54] sm:$0xf]
    %v2578 = vld [vmem:[%s10 + $0x58] sm:$0xf]
    %v2579 = vld [vmem:[%s10 + $0x5c] sm:$0xf]
    %v2580 = vld [vmem:[%s10 + $0x60] sm:$0xf]
    %v2581 = vld [vmem:[%s10 + $0x64] sm:$0xf]
    %v2582 = vld [vmem:[%s10 + $0x68] sm:$0xf]
    %v2583 = vld [vmem:[%s10 + $0x6c] sm:$0xf]
    %v2584 = vld [vmem:[%s10 + $0x70] sm:$0xf]
    %v2585 = vld [vmem:[%s10 + $0x74] sm:$0xf]
    %v2586 = vld [vmem:[%s10 + $0x78] sm:$0xf]
    %v2587 = vld [vmem:[%s10 + $0x7c] sm:$0xf]
    %v2588 = vld [vmem:[%s10 + $0x80] sm:$0xf]
    %v2589 = vld [vmem:[%s10 + $0x84] sm:$0xf]
    %v2590 = vld [vmem:[%s10 + $0x88] sm:$0xf]
    %v2591 = vld [vmem:[%s10 + $0x8c] sm:$0xf]
    %v2592 = vld [vmem:[%s10 + $0x90] sm:$0xf]
    %v2593 = vld [vmem:[%s10 + $0x94] sm:$0xf]
    %v2594 = vld [vmem:[%s10 + $0x98] sm:$0xf]
    %v2595 = vld [vmem:[%s10 + $0x9c] sm:$0xf]
    %v2596 = vld [vmem:[%s10 + $0xa0] sm:$0xf]
    %v2597 = vld [vmem:[%s10 + $0xa4] sm:$0xf]
    %v2598 = vld [vmem:[%s10 + $0xa8] sm:$0xf]
    %v2599 = vld [vmem:[%s10 + $0xac] sm:$0xf]
    %v2600 = vld [vmem:[%s10 + $0xb0] sm:$0xf]
    %v2601 = vld [vmem:[%s10 + $0xb4] sm:$0xf]
    %v2602 = vld [vmem:[%s10 + $0xb8] sm:$0xf]
    %v2603 = vld [vmem:[%s10 + $0xbc] sm:$0xf]
    %v2604 = vld [vmem:[%s10 + $0xc0] sm:$0xf]
    %v2605 = vld [vmem:[%s10 + $0xc4] sm:$0xf]
    %v2606 = vld [vmem:[%s10 + $0xc8] sm:$0xf]
    %v2607 = vld [vmem:[%s10 + $0xcc] sm:$0xf]
    %v2608 = vld [vmem:[%s10 + $0xd0] sm:$0xf]
    %v2609 = vld [vmem:[%s10 + $0xd4] sm:$0xf]
    %v2610 = vld [vmem:[%s10 + $0xd8] sm:$0xf]
    %v2611 = vld [vmem:[%s10 + $0xdc] sm:$0xf]
    %v2612 = vld [vmem:[%s10 + $0xe0] sm:$0xf]
    %v2613 = vld [vmem:[%s10 + $0xe4] sm:$0xf]
    %v2614 = vld [vmem:[%s10 + $0xe8] sm:$0xf]
    %v2615 = vld [vmem:[%s10 + $0xec] sm:$0xf]
    %v2616 = vld [vmem:[%s10 + $0xf0] sm:$0xf]
    %v2617 = vld [vmem:[%s10 + $0xf4] sm:$0xf]
    %v2618 = vld [vmem:[%s10 + $0xf8] sm:$0xf]
    %v2619 = vld [vmem:[%s10 + $0xfc] sm:$0xf]
    %v2620 = vld [vmem:[%s10 + $0x100] sm:$0xf]
    %v2621 = vld [vmem:[%s10 + $0x104] sm:$0xf]
    %v2622 = vld [vmem:[%s10 + $0x108] sm:$0xf]
    %v2623 = vld [vmem:[%s10 + $0x10c] sm:$0xf]
    %v2624 = vld [vmem:[%s10 + $0x110] sm:$0xf]
    %v2625 = vld [vmem:[%s10 + $0x114] sm:$0xf]
    %v2626 = vld [vmem:[%s10 + $0x118] sm:$0xf]
    %v2627 = vld [vmem:[%s10 + $0x11c] sm:$0xf]
    %v2628 = vld [vmem:[%s10 + $0x120] sm:$0xf]
    %v2629 = vld [vmem:[%s10 + $0x124] sm:$0xf]
    %v2630 = vld [vmem:[%s10 + $0x128] sm:$0xf]
    %v2631 = vld [vmem:[%s10 + $0x12c] sm:$0xf]
    %v2632 = vld [vmem:[%s10 + $0x130] sm:$0xf]
    %v2633 = vld [vmem:[%s10 + $0x134] sm:$0xf]
    %v2634 = vld [vmem:[%s10 + $0x138] sm:$0xf]
    %v2635 = vld [vmem:[%s10 + $0x13c] sm:$0xf]
    %v2636 = vld [vmem:[%s10 + $0x140] sm:$0xf]
    %v2637 = vld [vmem:[%s10 + $0x144] sm:$0xf]
    %v2638 = vld [vmem:[%s10 + $0x148] sm:$0xf]
    %v2639 = vld [vmem:[%s10 + $0x14c] sm:$0xf]
    %v2640 = vld [vmem:[%s10 + $0x150] sm:$0xf]
    %v2641 = vld [vmem:[%s10 + $0x154] sm:$0xf]
    %v2642 = vld [vmem:[%s10 + $0x158] sm:$0xf]
    %v2643 = vld [vmem:[%s10 + $0x15c] sm:$0xf]
    %v2644 = vld [vmem:[%s10 + $0x160] sm:$0xf]
    %v2645 = vld [vmem:[%s10 + $0x164] sm:$0xf]
    %v2646 = vld [vmem:[%s10 + $0x168] sm:$0xf]
    %v2647 = vld [vmem:[%s10 + $0x16c] sm:$0xf]
    %v2648 = vld [vmem:[%s10 + $0x170] sm:$0xf]
    %v2649 = vld [vmem:[%s10 + $0x174] sm:$0xf]
    %v2650 = vld [vmem:[%s10 + $0x178] sm:$0xf]
    %v2651 = vld [vmem:[%s10 + $0x17c] sm:$0xf]
    %v2652 = vld [vmem:[%s10 + $0x180] sm:$0xf]
    %v2653 = vld [vmem:[%s10 + $0x184] sm:$0xf]
    %v2654 = vld [vmem:[%s10 + $0x188] sm:$0xf]
    %v2655 = vld [vmem:[%s10 + $0x18c] sm:$0xf]
    %v2656 = vld [vmem:[%s10 + $0x190] sm:$0xf]
    %v2657 = vld [vmem:[%s10 + $0x194] sm:$0xf]
    %v2658 = vld [vmem:[%s10 + $0x198] sm:$0xf]
    %v2659 = vld [vmem:[%s10 + $0x19c] sm:$0xf]
    %v2660 = vld [vmem:[%s10 + $0x1a0] sm:$0xf]
    %v2661 = vld [vmem:[%s10 + $0x1a4] sm:$0xf]
    %v2662 = vld [vmem:[%s10 + $0x1a8] sm:$0xf]
    %v2663 = vld [vmem:[%s10 + $0x1ac] sm:$0xf]
    %v2664 = vld [vmem:[%s10 + $0x1b0] sm:$0xf]
    %v2665 = vld [vmem:[%s10 + $0x1b4] sm:$0xf]
    %v2666 = vld [vmem:[%s10 + $0x1b8] sm:$0xf]
    %v2667 = vld [vmem:[%s10 + $0x1bc] sm:$0xf]
    %v2668 = vld [vmem:[%s10 + $0x1c0] sm:$0xf]
    %v2669 = vld [vmem:[%s10 + $0x1c4] sm:$0xf]
    %v2670 = vld [vmem:[%s10 + $0x1c8] sm:$0xf]
    %v2671 = vld [vmem:[%s10 + $0x1cc] sm:$0xf]
    %v2672 = vld [vmem:[%s10 + $0x1d0] sm:$0xf]
    %v2673 = vld [vmem:[%s10 + $0x1d4] sm:$0xf]
    %v2674 = vld [vmem:[%s10 + $0x1d8] sm:$0xf]
    %v2675 = vld [vmem:[%s10 + $0x1dc] sm:$0xf]
    %v2676 = vld [vmem:[%s10 + $0x1e0] sm:$0xf]
    %v2677 = vld [vmem:[%s10 + $0x1e4] sm:$0xf]
    %v2678 = vld [vmem:[%s10 + $0x1e8] sm:$0xf]
    %v2679 = vld [vmem:[%s10 + $0x1ec] sm:$0xf]
    %v2680 = vld [vmem:[%s10 + $0x1f0] sm:$0xf]
    %v2681 = vld [vmem:[%s10 + $0x1f4] sm:$0xf]
    %v2682 = vld [vmem:[%s10 + $0x1f8] sm:$0xf]
    %v2683 = vld [vmem:[%s10 + $0x1fc] sm:$0xf]
    %v2684 = vld [vmem:[%s10 + $0x200] sm:$0xf]
    %v2685 = vld [vmem:[%s10 + $0x204] sm:$0xf]
    %v2686 = vld [vmem:[%s10 + $0x208] sm:$0xf]
    %v2687 = vld [vmem:[%s10 + $0x20c] sm:$0xf]
    %v2688 = vld [vmem:[%s10 + $0x210] sm:$0xf]
    %v2689 = vld [vmem:[%s10 + $0x214] sm:$0xf]
    %v2690 = vld [vmem:[%s10 + $0x218] sm:$0xf]
    %v2691 = vld [vmem:[%s10 + $0x21c] sm:$0xf]
    %v2692 = vld [vmem:[%s10 + $0x220] sm:$0xf]
    %v2693 = vld [vmem:[%s10 + $0x224] sm:$0xf]
    %v2694 = vld [vmem:[%s10 + $0x228] sm:$0xf]
    %v2695 = vld [vmem:[%s10 + $0x22c] sm:$0xf]
    %v2696 = vld [vmem:[%s10 + $0x230] sm:$0xf]
    %v2697 = vld [vmem:[%s10 + $0x234] sm:$0xf]
    %v2698 = vld [vmem:[%s10 + $0x238] sm:$0xf]
    %v2699 = vld [vmem:[%s10 + $0x23c] sm:$0xf]
    %v2700 = vld [vmem:[%s10 + $0x240] sm:$0xf]
    %v2701 = vld [vmem:[%s10 + $0x244] sm:$0xf]
    %v2702 = vld [vmem:[%s10 + $0x248] sm:$0xf]
    %v2703 = vld [vmem:[%s10 + $0x24c] sm:$0xf]
    %v2704 = vld [vmem:[%s10 + $0x250] sm:$0xf]
    %v2705 = vld [vmem:[%s10 + $0x254] sm:$0xf]
    %v2706 = vld [vmem:[%s10 + $0x258] sm:$0xf]
    %v2707 = vld [vmem:[%s10 + $0x25c] sm:$0xf]
    %v2708 = vld [vmem:[%s10 + $0x260] sm:$0xf]
    %v2709 = vld [vmem:[%s10 + $0x264] sm:$0xf]
    %v2710 = vld [vmem:[%s10 + $0x268] sm:$0xf]
    %v2711 = vld [vmem:[%s10 + $0x26c] sm:$0xf]
    %v2712 = vld [vmem:[%s10 + $0x270] sm:$0xf]
    %v2713 = vld [vmem:[%s10 + $0x274] sm:$0xf]
    %v2714 = vld [vmem:[%s10 + $0x278] sm:$0xf]
    %v2715 = vld [vmem:[%s10 + $0x27c] sm:$0xf]
    %v2716 = vld [vmem:[%s10 + $0x280] sm:$0xf]
    %v2717 = vld [vmem:[%s10 + $0x284] sm:$0xf]
    %v2718 = vld [vmem:[%s10 + $0x288] sm:$0xf]
    %v2719 = vld [vmem:[%s10 + $0x28c] sm:$0xf]
    %v2720 = vld [vmem:[%s10 + $0x290] sm:$0xf]
    %v2721 = vld [vmem:[%s10 + $0x294] sm:$0xf]
    %v2722 = vld [vmem:[%s10 + $0x298] sm:$0xf]
    %v2723 = vld [vmem:[%s10 + $0x29c] sm:$0xf]
    %v2724 = vld [vmem:[%s10 + $0x2a0] sm:$0xf]
    %v2725 = vld [vmem:[%s10 + $0x2a4] sm:$0xf]
    %v2726 = vld [vmem:[%s10 + $0x2a8] sm:$0xf]
    %v2727 = vld [vmem:[%s10 + $0x2ac] sm:$0xf]
    %v2728 = vld [vmem:[%s10 + $0x2b0] sm:$0xf]
    %v2729 = vld [vmem:[%s10 + $0x2b4] sm:$0xf]
    %v2730 = vld [vmem:[%s10 + $0x2b8] sm:$0xf]
    %v2731 = vld [vmem:[%s10 + $0x2bc] sm:$0xf]
    %v2732 = vld [vmem:[%s10 + $0x2c0] sm:$0xf]
    %v2733 = vld [vmem:[%s10 + $0x2c4] sm:$0xf]
    %v2734 = vld [vmem:[%s10 + $0x2c8] sm:$0xf]
    %v2735 = vld [vmem:[%s10 + $0x2cc] sm:$0xf]
    %v2736 = vld [vmem:[%s10 + $0x2d0] sm:$0xf]
    %v2737 = vld [vmem:[%s10 + $0x2d4] sm:$0xf]
    %v2738 = vld [vmem:[%s10 + $0x2d8] sm:$0xf]
    %v2739 = vld [vmem:[%s10 + $0x2dc] sm:$0xf]
    %v2740 = vld [vmem:[%s10 + $0x2e0] sm:$0xf]
    %v2741 = vld [vmem:[%s10 + $0x2e4] sm:$0xf]
    %v2742 = vld [vmem:[%s10 + $0x2e8] sm:$0xf]
    %v2743 = vld [vmem:[%s10 + $0x2ec] sm:$0xf]
    %v2744 = vld [vmem:[%s10 + $0x2f0] sm:$0xf]
    %v2745 = vld [vmem:[%s10 + $0x2f4] sm:$0xf]
    %v2746 = vld [vmem:[%s10 + $0x2f8] sm:$0xf]
    %v2747 = vld [vmem:[%s10 + $0x2fc] sm:$0xf]
    %v2748 = vld [vmem:[%s10 + $0x300] sm:$0xf]
    %v2749 = vld [vmem:[%s10 + $0x304] sm:$0xf]
    %v2750 = vld [vmem:[%s10 + $0x308] sm:$0xf]
    %v2751 = vld [vmem:[%s10 + $0x30c] sm:$0xf]
    %v2752 = vld [vmem:[%s10 + $0x310] sm:$0xf]
    %v2753 = vld [vmem:[%s10 + $0x314] sm:$0xf]
    %v2754 = vld [vmem:[%s10 + $0x318] sm:$0xf]
    %v2755 = vld [vmem:[%s10 + $0x31c] sm:$0xf]
    %v2756 = vld [vmem:[%s10 + $0x320] sm:$0xf]
    %v2757 = vld [vmem:[%s10 + $0x324] sm:$0xf]
    %v2758 = vld [vmem:[%s10 + $0x328] sm:$0xf]
    %v2759 = vld [vmem:[%s10 + $0x32c] sm:$0xf]
    %v2760 = vld [vmem:[%s10 + $0x330] sm:$0xf]
    %v2761 = vld [vmem:[%s10 + $0x334] sm:$0xf]
    %v2762 = vld [vmem:[%s10 + $0x338] sm:$0xf]
    %v2763 = vld [vmem:[%s10 + $0x33c] sm:$0xf]
    %v2764 = vld [vmem:[%s10 + $0x340] sm:$0xf]
    %v2765 = vld [vmem:[%s10 + $0x344] sm:$0xf]
    %v2766 = vld [vmem:[%s10 + $0x348] sm:$0xf]
    %v2767 = vld [vmem:[%s10 + $0x34c] sm:$0xf]
    %v2768 = vld [vmem:[%s10 + $0x350] sm:$0xf]
    %v2769 = vld [vmem:[%s10 + $0x354] sm:$0xf]
    %v2770 = vld [vmem:[%s10 + $0x358] sm:$0xf]
    %v2771 = vld [vmem:[%s10 + $0x35c] sm:$0xf]
    %v2772 = vld [vmem:[%s10 + $0x360] sm:$0xf]
    %v2773 = vld [vmem:[%s10 + $0x364] sm:$0xf]
    %v2774 = vld [vmem:[%s10 + $0x368] sm:$0xf]
    %v2775 = vld [vmem:[%s10 + $0x36c] sm:$0xf]
    %v2776 = vld [vmem:[%s10 + $0x370] sm:$0xf]
    %v2777 = vld [vmem:[%s10 + $0x374] sm:$0xf]
    %v2778 = vld [vmem:[%s10 + $0x378] sm:$0xf]
    %v2779 = vld [vmem:[%s10 + $0x37c] sm:$0xf]
    %v2780 = vld [vmem:[%s10 + $0x380] sm:$0xf]
    %v2781 = vld [vmem:[%s10 + $0x384] sm:$0xf]
    %v2782 = vld [vmem:[%s10 + $0x388] sm:$0xf]
    %v2783 = vld [vmem:[%s10 + $0x38c] sm:$0xf]
    %v2784 = vld [vmem:[%s10 + $0x390] sm:$0xf]
    %v2785 = vld [vmem:[%s10 + $0x394] sm:$0xf]
    %v2786 = vld [vmem:[%s10 + $0x398] sm:$0xf]
    %v2787 = vld [vmem:[%s10 + $0x39c] sm:$0xf]
    %v2788 = vld [vmem:[%s10 + $0x3a0] sm:$0xf]
    %v2789 = vld [vmem:[%s10 + $0x3a4] sm:$0xf]
    %v2790 = vld [vmem:[%s10 + $0x3a8] sm:$0xf]
    %v2791 = vld [vmem:[%s10 + $0x3ac] sm:$0xf]
    %v2792 = vld [vmem:[%s10 + $0x3b0] sm:$0xf]
    %v2793 = vld [vmem:[%s10 + $0x3b4] sm:$0xf]
    %v2794 = vld [vmem:[%s10 + $0x3b8] sm:$0xf]
    %v2795 = vld [vmem:[%s10 + $0x3bc] sm:$0xf]
    %v2796 = vld [vmem:[%s10 + $0x3c0] sm:$0xf]
    %v2797 = vld [vmem:[%s10 + $0x3c4] sm:$0xf]
    %v2798 = vld [vmem:[%s10 + $0x3c8] sm:$0xf]
    %v2799 = vld [vmem:[%s10 + $0x3cc] sm:$0xf]
    %v2800 = vld [vmem:[%s10 + $0x3d0] sm:$0xf]
    %v2801 = vld [vmem:[%s10 + $0x3d4] sm:$0xf]
    %v2802 = vld [vmem:[%s10 + $0x3d8] sm:$0xf]
    %v2803 = vld [vmem:[%s10 + $0x3dc] sm:$0xf]
    %v2804 = vld [vmem:[%s10 + $0x3e0] sm:$0xf]
    %v2805 = vld [vmem:[%s10 + $0x3e4] sm:$0xf]
    %v2806 = vld [vmem:[%s10 + $0x3e8] sm:$0xf]
    %v2807 = vld [vmem:[%s10 + $0x3ec] sm:$0xf]
    %v2808 = vld [vmem:[%s10 + $0x3f0] sm:$0xf]
    %v2809 = vld [vmem:[%s10 + $0x3f4] sm:$0xf]
    %v2810 = vld [vmem:[%s10 + $0x3f8] sm:$0xf]
    %v2811 = vld [vmem:[%s10 + $0x3fc] sm:$0xf]
    %v2812 = vld [vmem:[%s11] sm:$0x1]
    %v2814 = vlaneseq
    %v2815 = vshrl.u32 %v2814, 7
    %v2816 = vsub.s32 0, %v2815
    %v2817 = vrot.slane %v2812, %v2816
    %v3075 = vunpack.c.l.b16 %v2556
    %v3076 = vunpack.c.l.b16 %v2557
    %v3077 = vunpack.c.l.b16 %v2558
    %v3078 = vunpack.c.l.b16 %v2559
    %v3079 = vunpack.c.l.b16 %v2560
    %v3080 = vunpack.c.l.b16 %v2561
    %v3081 = vunpack.c.l.b16 %v2562
    %v3082 = vunpack.c.l.b16 %v2563
    %v3083 = vunpack.c.l.b16 %v2564
    %v3084 = vunpack.c.l.b16 %v2565
    %v3085 = vunpack.c.l.b16 %v2566
    %v3086 = vunpack.c.l.b16 %v2567
    %v3087 = vunpack.c.l.b16 %v2568
    %v3088 = vunpack.c.l.b16 %v2569
    %v3089 = vunpack.c.l.b16 %v2570
    %v3090 = vunpack.c.l.b16 %v2571
    %v3091 = vunpack.c.l.b16 %v2572
    %v3092 = vunpack.c.l.b16 %v2573
    %v3093 = vunpack.c.l.b16 %v2574
    %v3094 = vunpack.c.l.b16 %v2575
    %v3095 = vunpack.c.l.b16 %v2576
    %v3096 = vunpack.c.l.b16 %v2577
    %v3097 = vunpack.c.l.b16 %v2578
    %v3098 = vunpack.c.l.b16 %v2579
    %v3099 = vunpack.c.l.b16 %v2580
    %v3100 = vunpack.c.l.b16 %v2581
    %v3101 = vunpack.c.l.b16 %v2582
    %v3102 = vunpack.c.l.b16 %v2583
    %v3103 = vunpack.c.l.b16 %v2584
    %v3104 = vunpack.c.l.b16 %v2585
    %v3105 = vunpack.c.l.b16 %v2586
    %v3106 = vunpack.c.l.b16 %v2587
    %v3107 = vunpack.c.l.b16 %v2588
    %v3108 = vunpack.c.l.b16 %v2589
    %v3109 = vunpack.c.l.b16 %v2590
    %v3110 = vunpack.c.l.b16 %v2591
    %v3111 = vunpack.c.l.b16 %v2592
    %v3112 = vunpack.c.l.b16 %v2593
    %v3113 = vunpack.c.l.b16 %v2594
    %v3114 = vunpack.c.l.b16 %v2595
    %v3115 = vunpack.c.l.b16 %v2596
    %v3116 = vunpack.c.l.b16 %v2597
    %v3117 = vunpack.c.l.b16 %v2598
    %v3118 = vunpack.c.l.b16 %v2599
    %v3119 = vunpack.c.l.b16 %v2600
    %v3120 = vunpack.c.l.b16 %v2601
    %v3121 = vunpack.c.l.b16 %v2602
    %v3122 = vunpack.c.l.b16 %v2603
    %v3123 = vunpack.c.l.b16 %v2604
    %v3124 = vunpack.c.l.b16 %v2605
    %v3125 = vunpack.c.l.b16 %v2606
    %v3126 = vunpack.c.l.b16 %v2607
    %v3127 = vunpack.c.l.b16 %v2608
    %v3128 = vunpack.c.l.b16 %v2609
    %v3129 = vunpack.c.l.b16 %v2610
    %v3130 = vunpack.c.l.b16 %v2611
    %v3131 = vunpack.c.l.b16 %v2612
    %v3132 = vunpack.c.l.b16 %v2613
    %v3133 = vunpack.c.l.b16 %v2614
    %v3134 = vunpack.c.l.b16 %v2615
    %v3135 = vunpack.c.l.b16 %v2616
    %v3136 = vunpack.c.l.b16 %v2617
    %v3137 = vunpack.c.l.b16 %v2618
    %v3138 = vunpack.c.l.b16 %v2619
    %v3139 = vunpack.c.l.b16 %v2620
    %v3140 = vunpack.c.l.b16 %v2621
    %v3141 = vunpack.c.l.b16 %v2622
    %v3142 = vunpack.c.l.b16 %v2623
    %v3143 = vunpack.c.l.b16 %v2624
    %v3144 = vunpack.c.l.b16 %v2625
    %v3145 = vunpack.c.l.b16 %v2626
    %v3146 = vunpack.c.l.b16 %v2627
    %v3147 = vunpack.c.l.b16 %v2628
    %v3148 = vunpack.c.l.b16 %v2629
    %v3149 = vunpack.c.l.b16 %v2630
    %v3150 = vunpack.c.l.b16 %v2631
    %v3151 = vunpack.c.l.b16 %v2632
    %v3152 = vunpack.c.l.b16 %v2633
    %v3153 = vunpack.c.l.b16 %v2634
    %v3154 = vunpack.c.l.b16 %v2635
    %v3155 = vunpack.c.l.b16 %v2636
    %v3156 = vunpack.c.l.b16 %v2637
    %v3157 = vunpack.c.l.b16 %v2638
    %v3158 = vunpack.c.l.b16 %v2639
    %v3159 = vunpack.c.l.b16 %v2640
    %v3160 = vunpack.c.l.b16 %v2641
    %v3161 = vunpack.c.l.b16 %v2642
    %v3162 = vunpack.c.l.b16 %v2643
    %v3163 = vunpack.c.l.b16 %v2644
    %v3164 = vunpack.c.l.b16 %v2645
    %v3165 = vunpack.c.l.b16 %v2646
    %v3166 = vunpack.c.l.b16 %v2647
    %v3167 = vunpack.c.l.b16 %v2648
    %v3168 = vunpack.c.l.b16 %v2649
    %v3169 = vunpack.c.l.b16 %v2650
    %v3170 = vunpack.c.l.b16 %v2651
    %v3171 = vunpack.c.l.b16 %v2652
    %v3172 = vunpack.c.l.b16 %v2653
    %v3173 = vunpack.c.l.b16 %v2654
    %v3174 = vunpack.c.l.b16 %v2655
    %v3175 = vunpack.c.l.b16 %v2656
    %v3176 = vunpack.c.l.b16 %v2657
    %v3177 = vunpack.c.l.b16 %v2658
    %v3178 = vunpack.c.l.b16 %v2659
    %v3179 = vunpack.c.l.b16 %v2660
    %v3180 = vunpack.c.l.b16 %v2661
    %v3181 = vunpack.c.l.b16 %v2662
    %v3182 = vunpack.c.l.b16 %v2663
    %v3183 = vunpack.c.l.b16 %v2664
    %v3184 = vunpack.c.l.b16 %v2665
    %v3185 = vunpack.c.l.b16 %v2666
    %v3186 = vunpack.c.l.b16 %v2667
    %v3187 = vunpack.c.l.b16 %v2668
    %v3188 = vunpack.c.l.b16 %v2669
    %v3189 = vunpack.c.l.b16 %v2670
    %v3190 = vunpack.c.l.b16 %v2671
    %v3191 = vunpack.c.l.b16 %v2672
    %v3192 = vunpack.c.l.b16 %v2673
    %v3193 = vunpack.c.l.b16 %v2674
    %v3194 = vunpack.c.l.b16 %v2675
    %v3195 = vunpack.c.l.b16 %v2676
    %v3196 = vunpack.c.l.b16 %v2677
    %v3197 = vunpack.c.l.b16 %v2678
    %v3198 = vunpack.c.l.b16 %v2679
    %v3199 = vunpack.c.l.b16 %v2680
    %v3200 = vunpack.c.l.b16 %v2681
    %v3201 = vunpack.c.l.b16 %v2682
    %v3202 = vunpack.c.l.b16 %v2683
    %v3203 = vunpack.c.l.b16 %v2684
    %v3204 = vunpack.c.l.b16 %v2685
    %v3205 = vunpack.c.l.b16 %v2686
    %v3206 = vunpack.c.l.b16 %v2687
    %v3207 = vunpack.c.l.b16 %v2688
    %v3208 = vunpack.c.l.b16 %v2689
    %v3209 = vunpack.c.l.b16 %v2690
    %v3210 = vunpack.c.l.b16 %v2691
    %v3211 = vunpack.c.l.b16 %v2692
    %v3212 = vunpack.c.l.b16 %v2693
    %v3213 = vunpack.c.l.b16 %v2694
    %v3214 = vunpack.c.l.b16 %v2695
    %v3215 = vunpack.c.l.b16 %v2696
    %v3216 = vunpack.c.l.b16 %v2697
    %v3217 = vunpack.c.l.b16 %v2698
    %v3218 = vunpack.c.l.b16 %v2699
    %v3219 = vunpack.c.l.b16 %v2700
    %v3220 = vunpack.c.l.b16 %v2701
    %v3221 = vunpack.c.l.b16 %v2702
    %v3222 = vunpack.c.l.b16 %v2703
    %v3223 = vunpack.c.l.b16 %v2704
    %v3224 = vunpack.c.l.b16 %v2705
    %v3225 = vunpack.c.l.b16 %v2706
    %v3226 = vunpack.c.l.b16 %v2707
    %v3227 = vunpack.c.l.b16 %v2708
    %v3228 = vunpack.c.l.b16 %v2709
    %v3229 = vunpack.c.l.b16 %v2710
    %v3230 = vunpack.c.l.b16 %v2711
    %v3231 = vunpack.c.l.b16 %v2712
    %v3232 = vunpack.c.l.b16 %v2713
    %v3233 = vunpack.c.l.b16 %v2714
    %v3234 = vunpack.c.l.b16 %v2715
    %v3235 = vunpack.c.l.b16 %v2716
    %v3236 = vunpack.c.l.b16 %v2717
    %v3237 = vunpack.c.l.b16 %v2718
    %v3238 = vunpack.c.l.b16 %v2719
    %v3239 = vunpack.c.l.b16 %v2720
    %v3240 = vunpack.c.l.b16 %v2721
    %v3241 = vunpack.c.l.b16 %v2722
    %v3242 = vunpack.c.l.b16 %v2723
    %v3243 = vunpack.c.l.b16 %v2724
    %v3244 = vunpack.c.l.b16 %v2725
    %v3245 = vunpack.c.l.b16 %v2726
    %v3246 = vunpack.c.l.b16 %v2727
    %v3247 = vunpack.c.l.b16 %v2728
    %v3248 = vunpack.c.l.b16 %v2729
    %v3249 = vunpack.c.l.b16 %v2730
    %v3250 = vunpack.c.l.b16 %v2731
    %v3251 = vunpack.c.l.b16 %v2732
    %v3252 = vunpack.c.l.b16 %v2733
    %v3253 = vunpack.c.l.b16 %v2734
    %v3254 = vunpack.c.l.b16 %v2735
    %v3255 = vunpack.c.l.b16 %v2736
    %v3256 = vunpack.c.l.b16 %v2737
    %v3257 = vunpack.c.l.b16 %v2738
    %v3258 = vunpack.c.l.b16 %v2739
    %v3259 = vunpack.c.l.b16 %v2740
    %v3260 = vunpack.c.l.b16 %v2741
    %v3261 = vunpack.c.l.b16 %v2742
    %v3262 = vunpack.c.l.b16 %v2743
    %v3263 = vunpack.c.l.b16 %v2744
    %v3264 = vunpack.c.l.b16 %v2745
    %v3265 = vunpack.c.l.b16 %v2746
    %v3266 = vunpack.c.l.b16 %v2747
    %v3267 = vunpack.c.l.b16 %v2748
    %v3268 = vunpack.c.l.b16 %v2749
    %v3269 = vunpack.c.l.b16 %v2750
    %v3270 = vunpack.c.l.b16 %v2751
    %v3271 = vunpack.c.l.b16 %v2752
    %v3272 = vunpack.c.l.b16 %v2753
    %v3273 = vunpack.c.l.b16 %v2754
    %v3274 = vunpack.c.l.b16 %v2755
    %v3275 = vunpack.c.l.b16 %v2756
    %v3276 = vunpack.c.l.b16 %v2757
    %v3277 = vunpack.c.l.b16 %v2758
    %v3278 = vunpack.c.l.b16 %v2759
    %v3279 = vunpack.c.l.b16 %v2760
    %v3280 = vunpack.c.l.b16 %v2761
    %v3281 = vunpack.c.l.b16 %v2762
    %v3282 = vunpack.c.l.b16 %v2763
    %v3283 = vunpack.c.l.b16 %v2764
    %v3284 = vunpack.c.l.b16 %v2765
    %v3285 = vunpack.c.l.b16 %v2766
    %v3286 = vunpack.c.l.b16 %v2767
    %v3287 = vunpack.c.l.b16 %v2768
    %v3288 = vunpack.c.l.b16 %v2769
    %v3289 = vunpack.c.l.b16 %v2770
    %v3290 = vunpack.c.l.b16 %v2771
    %v3291 = vunpack.c.l.b16 %v2772
    %v3292 = vunpack.c.l.b16 %v2773
    %v3293 = vunpack.c.l.b16 %v2774
    %v3294 = vunpack.c.l.b16 %v2775
    %v3295 = vunpack.c.l.b16 %v2776
    %v3296 = vunpack.c.l.b16 %v2777
    %v3297 = vunpack.c.l.b16 %v2778
    %v3298 = vunpack.c.l.b16 %v2779
    %v3299 = vunpack.c.l.b16 %v2780
    %v3300 = vunpack.c.l.b16 %v2781
    %v3301 = vunpack.c.l.b16 %v2782
    %v3302 = vunpack.c.l.b16 %v2783
    %v3303 = vunpack.c.l.b16 %v2784
    %v3304 = vunpack.c.l.b16 %v2785
    %v3305 = vunpack.c.l.b16 %v2786
    %v3306 = vunpack.c.l.b16 %v2787
    %v3307 = vunpack.c.l.b16 %v2788
    %v3308 = vunpack.c.l.b16 %v2789
    %v3309 = vunpack.c.l.b16 %v2790
    %v3310 = vunpack.c.l.b16 %v2791
    %v3311 = vunpack.c.l.b16 %v2792
    %v3312 = vunpack.c.l.b16 %v2793
    %v3313 = vunpack.c.l.b16 %v2794
    %v3314 = vunpack.c.l.b16 %v2795
    %v3315 = vunpack.c.l.b16 %v2796
    %v3316 = vunpack.c.l.b16 %v2797
    %v3317 = vunpack.c.l.b16 %v2798
    %v3318 = vunpack.c.l.b16 %v2799
    %v3319 = vunpack.c.l.b16 %v2800
    %v3320 = vunpack.c.l.b16 %v2801
    %v3321 = vunpack.c.l.b16 %v2802
    %v3322 = vunpack.c.l.b16 %v2803
    %v3323 = vunpack.c.l.b16 %v2804
    %v3324 = vunpack.c.l.b16 %v2805
    %v3325 = vunpack.c.l.b16 %v2806
    %v3326 = vunpack.c.l.b16 %v2807
    %v3327 = vunpack.c.l.b16 %v2808
    %v3328 = vunpack.c.l.b16 %v2809
    %v3329 = vunpack.c.l.b16 %v2810
    %v3330 = vunpack.c.l.b16 %v2811
    %v3331 = vpack.c.b16 %v3076, %v3075
    %v3332 = vpack.c.b16 %v3078, %v3077
    %v3333 = vpack.c.b16 %v3080, %v3079
    %v3334 = vpack.c.b16 %v3082, %v3081
    %v3335 = vpack.c.b16 %v3084, %v3083
    %v3336 = vpack.c.b16 %v3086, %v3085
    %v3337 = vpack.c.b16 %v3088, %v3087
    %v3338 = vpack.c.b16 %v3090, %v3089
    %v3339 = vpack.c.b16 %v3092, %v3091
    %v3340 = vpack.c.b16 %v3094, %v3093
    %v3341 = vpack.c.b16 %v3096, %v3095
    %v3342 = vpack.c.b16 %v3098, %v3097
    %v3343 = vpack.c.b16 %v3100, %v3099
    %v3344 = vpack.c.b16 %v3102, %v3101
    %v3345 = vpack.c.b16 %v3104, %v3103
    %v3346 = vpack.c.b16 %v3106, %v3105
    %v3347 = vpack.c.b16 %v3108, %v3107
    %v3348 = vpack.c.b16 %v3110, %v3109
    %v3349 = vpack.c.b16 %v3112, %v3111
    %v3350 = vpack.c.b16 %v3114, %v3113
    %v3351 = vpack.c.b16 %v3116, %v3115
    %v3352 = vpack.c.b16 %v3118, %v3117
    %v3353 = vpack.c.b16 %v3120, %v3119
    %v3354 = vpack.c.b16 %v3122, %v3121
    %v3355 = vpack.c.b16 %v3124, %v3123
    %v3356 = vpack.c.b16 %v3126, %v3125
    %v3357 = vpack.c.b16 %v3128, %v3127
    %v3358 = vpack.c.b16 %v3130, %v3129
    %v3359 = vpack.c.b16 %v3132, %v3131
    %v3360 = vpack.c.b16 %v3134, %v3133
    %v3361 = vpack.c.b16 %v3136, %v3135
    %v3362 = vpack.c.b16 %v3138, %v3137
    %v3363 = vpack.c.b16 %v3140, %v3139
    %v3364 = vpack.c.b16 %v3142, %v3141
    %v3365 = vpack.c.b16 %v3144, %v3143
    %v3366 = vpack.c.b16 %v3146, %v3145
    %v3367 = vpack.c.b16 %v3148, %v3147
    %v3368 = vpack.c.b16 %v3150, %v3149
    %v3369 = vpack.c.b16 %v3152, %v3151
    %v3370 = vpack.c.b16 %v3154, %v3153
    %v3371 = vpack.c.b16 %v3156, %v3155
    %v3372 = vpack.c.b16 %v3158, %v3157
    %v3373 = vpack.c.b16 %v3160, %v3159
    %v3374 = vpack.c.b16 %v3162, %v3161
    %v3375 = vpack.c.b16 %v3164, %v3163
    %v3376 = vpack.c.b16 %v3166, %v3165
    %v3377 = vpack.c.b16 %v3168, %v3167
    %v3378 = vpack.c.b16 %v3170, %v3169
    %v3379 = vpack.c.b16 %v3172, %v3171
    %v3380 = vpack.c.b16 %v3174, %v3173
    %v3381 = vpack.c.b16 %v3176, %v3175
    %v3382 = vpack.c.b16 %v3178, %v3177
    %v3383 = vpack.c.b16 %v3180, %v3179
    %v3384 = vpack.c.b16 %v3182, %v3181
    %v3385 = vpack.c.b16 %v3184, %v3183
    %v3386 = vpack.c.b16 %v3186, %v3185
    %v3387 = vpack.c.b16 %v3188, %v3187
    %v3388 = vpack.c.b16 %v3190, %v3189
    %v3389 = vpack.c.b16 %v3192, %v3191
    %v3390 = vpack.c.b16 %v3194, %v3193
    %v3391 = vpack.c.b16 %v3196, %v3195
    %v3392 = vpack.c.b16 %v3198, %v3197
    %v3393 = vpack.c.b16 %v3200, %v3199
    %v3394 = vpack.c.b16 %v3202, %v3201
    %v3395 = vpack.c.b16 %v3204, %v3203
    %v3396 = vpack.c.b16 %v3206, %v3205
    %v3397 = vpack.c.b16 %v3208, %v3207
    %v3398 = vpack.c.b16 %v3210, %v3209
    %v3399 = vpack.c.b16 %v3212, %v3211
    %v3400 = vpack.c.b16 %v3214, %v3213
    %v3401 = vpack.c.b16 %v3216, %v3215
    %v3402 = vpack.c.b16 %v3218, %v3217
    %v3403 = vpack.c.b16 %v3220, %v3219
    %v3404 = vpack.c.b16 %v3222, %v3221
    %v3405 = vpack.c.b16 %v3224, %v3223
    %v3406 = vpack.c.b16 %v3226, %v3225
    %v3407 = vpack.c.b16 %v3228, %v3227
    %v3408 = vpack.c.b16 %v3230, %v3229
    %v3409 = vpack.c.b16 %v3232, %v3231
    %v3410 = vpack.c.b16 %v3234, %v3233
    %v3411 = vpack.c.b16 %v3236, %v3235
    %v3412 = vpack.c.b16 %v3238, %v3237
    %v3413 = vpack.c.b16 %v3240, %v3239
    %v3414 = vpack.c.b16 %v3242, %v3241
    %v3415 = vpack.c.b16 %v3244, %v3243
    %v3416 = vpack.c.b16 %v3246, %v3245
    %v3417 = vpack.c.b16 %v3248, %v3247
    %v3418 = vpack.c.b16 %v3250, %v3249
    %v3419 = vpack.c.b16 %v3252, %v3251
    %v3420 = vpack.c.b16 %v3254, %v3253
    %v3421 = vpack.c.b16 %v3256, %v3255
    %v3422 = vpack.c.b16 %v3258, %v3257
    %v3423 = vpack.c.b16 %v3260, %v3259
    %v3424 = vpack.c.b16 %v3262, %v3261
    %v3425 = vpack.c.b16 %v3264, %v3263
    %v3426 = vpack.c.b16 %v3266, %v3265
    %v3427 = vpack.c.b16 %v3268, %v3267
    %v3428 = vpack.c.b16 %v3270, %v3269
    %v3429 = vpack.c.b16 %v3272, %v3271
    %v3430 = vpack.c.b16 %v3274, %v3273
    %v3431 = vpack.c.b16 %v3276, %v3275
    %v3432 = vpack.c.b16 %v3278, %v3277
    %v3433 = vpack.c.b16 %v3280, %v3279
    %v3434 = vpack.c.b16 %v3282, %v3281
    %v3435 = vpack.c.b16 %v3284, %v3283
    %v3436 = vpack.c.b16 %v3286, %v3285
    %v3437 = vpack.c.b16 %v3288, %v3287
    %v3438 = vpack.c.b16 %v3290, %v3289
    %v3439 = vpack.c.b16 %v3292, %v3291
    %v3440 = vpack.c.b16 %v3294, %v3293
    %v3441 = vpack.c.b16 %v3296, %v3295
    %v3442 = vpack.c.b16 %v3298, %v3297
    %v3443 = vpack.c.b16 %v3300, %v3299
    %v3444 = vpack.c.b16 %v3302, %v3301
    %v3445 = vpack.c.b16 %v3304, %v3303
    %v3446 = vpack.c.b16 %v3306, %v3305
    %v3447 = vpack.c.b16 %v3308, %v3307
    %v3448 = vpack.c.b16 %v3310, %v3309
    %v3449 = vpack.c.b16 %v3312, %v3311
    %v3450 = vpack.c.b16 %v3314, %v3313
    %v3451 = vpack.c.b16 %v3316, %v3315
    %v3452 = vpack.c.b16 %v3318, %v3317
    %v3453 = vpack.c.b16 %v3320, %v3319
    %v3454 = vpack.c.b16 %v3322, %v3321
    %v3455 = vpack.c.b16 %v3324, %v3323
    %v3456 = vpack.c.b16 %v3326, %v3325
    %v3457 = vpack.c.b16 %v3328, %v3327
    %v3458 = vpack.c.b16 %v3330, %v3329
    %3587 = vmatprep.subr.bf16.mxu0 0
    %3588 = vmatpush1.bf16.msra.mxu0 %v3331
    %3589 = vmatprep.subr.bf16.mxu0 0
    %3590 = vmatpush1.bf16.msra.mxu0 %v3332
    %3591 = vmatprep.subr.bf16.mxu0 0
    %3592 = vmatpush1.bf16.msra.mxu0 %v3333
    %3593 = vmatprep.subr.bf16.mxu0 0
    %3594 = vmatpush1.bf16.msra.mxu0 %v3334
    %3595 = vmatprep.subr.bf16.mxu0 0
    %3596 = vmatpush1.bf16.msra.mxu0 %v3335
    %3597 = vmatprep.subr.bf16.mxu0 0
    %3598 = vmatpush1.bf16.msra.mxu0 %v3336
    %3599 = vmatprep.subr.bf16.mxu0 0
    %3600 = vmatpush1.bf16.msra.mxu0 %v3337
    %3601 = vmatprep.subr.bf16.mxu0 0
    %3602 = vmatpush1.bf16.msra.mxu0 %v3338
    %3603 = vmatprep.subr.bf16.mxu0 0
    %3604 = vmatpush1.bf16.msra.mxu0 %v3339
    %3605 = vmatprep.subr.bf16.mxu0 0
    %3606 = vmatpush1.bf16.msra.mxu0 %v3340
    %3607 = vmatprep.subr.bf16.mxu0 0
    %3608 = vmatpush1.bf16.msra.mxu0 %v3341
    %3609 = vmatprep.subr.bf16.mxu0 0
    %3610 = vmatpush1.bf16.msra.mxu0 %v3342
    %3611 = vmatprep.subr.bf16.mxu0 0
    %3612 = vmatpush1.bf16.msra.mxu0 %v3343
    %3613 = vmatprep.subr.bf16.mxu0 0
    %3614 = vmatpush1.bf16.msra.mxu0 %v3344
    %3615 = vmatprep.subr.bf16.mxu0 0
    %3616 = vmatpush1.bf16.msra.mxu0 %v3345
    %3617 = vmatprep.subr.bf16.mxu0 0
    %3618 = vmatpush1.bf16.msra.mxu0 %v3346
    %3619 = vmatprep.mubr.bf16.mxu0 %v2509
    %3620 = vmatmul.mubr.bf16.gmra.mrb[0].mxu0 %v2508
    %v3621 = vpop.f32.mrb[0].mxu0
    %v3622 = vadd.f32 %v2817, %v3621
    %v3623 = vpop.f32.mrb[0].mxu0
    %v3624 = vpop.f32.mrb[0].mxu0
    %v3625 = vadd.f32 %v2817, %v3624
    %v3626 = vpop.f32.mrb[0].mxu0
    %3627 = vmatprep.mubr.bf16.mxu0 %v2525
    %3628 = vmatmul.mubr.bf16.gmra.mrb[0].mxu0 %v2524
    %v3629 = vpop.f32.mrb[0].mxu0
    %v3630 = vadd.f32 %v2817, %v3629
    %v3631 = vpop.f32.mrb[0].mxu0
    %v3632 = vpop.f32.mrb[0].mxu0
    %v3633 = vadd.f32 %v2817, %v3632
    %v3634 = vpop.f32.mrb[0].mxu0
    %3635 = vmatprep.mubr.bf16.mxu0 %v2541
    %3636 = vmatmul.mubr.bf16.gmra.mrb[0].mxu0 %v2540
    %v3637 = vpop.f32.mrb[0].mxu0
    %v3638 = vadd.f32 %v2817, %v3637
    %v3639 = vpop.f32.mrb[0].mxu0
    %v3640 = vpop.f32.mrb[0].mxu0
    %v3641 = vadd.f32 %v2817, %v3640
    %v3642 = vpop.f32.mrb[0].mxu0
    %3643 = vdwg.mxu0
    %3644 = vmatprep.subr.bf16.mxu0 0
    %3645 = vmatpush1.bf16.msra.mxu0 %v3347
    %3646 = vmatprep.subr.bf16.mxu0 0
    %3647 = vmatpush1.bf16.msra.mxu0 %v3348
    %3648 = vmatprep.subr.bf16.mxu0 0
    %3649 = vmatpush1.bf16.msra.mxu0 %v3349
    %3650 = vmatprep.subr.bf16.mxu0 0
    %3651 = vmatpush1.bf16.msra.mxu0 %v3350
    %3652 = vmatprep.subr.bf16.mxu0 0
    %3653 = vmatpush1.bf16.msra.mxu0 %v3351
    %3654 = vmatprep.subr.bf16.mxu0 0
    %3655 = vmatpush1.bf16.msra.mxu0 %v3352
    %3656 = vmatprep.subr.bf16.mxu0 0
    %3657 = vmatpush1.bf16.msra.mxu0 %v3353
    %3658 = vmatprep.subr.bf16.mxu0 0
    %3659 = vmatpush1.bf16.msra.mxu0 %v3354
    %3660 = vmatprep.subr.bf16.mxu0 0
    %3661 = vmatpush1.bf16.msra.mxu0 %v3355
    %3662 = vmatprep.subr.bf16.mxu0 0
    %3663 = vmatpush1.bf16.msra.mxu0 %v3356
    %3664 = vmatprep.subr.bf16.mxu0 0
    %3665 = vmatpush1.bf16.msra.mxu0 %v3357
    %3666 = vmatprep.subr.bf16.mxu0 0
    %3667 = vmatpush1.bf16.msra.mxu0 %v3358
    %3668 = vmatprep.subr.bf16.mxu0 0
    %3669 = vmatpush1.bf16.msra.mxu0 %v3359
    %3670 = vmatprep.subr.bf16.mxu0 0
    %3671 = vmatpush1.bf16.msra.mxu0 %v3360
    %3672 = vmatprep.subr.bf16.mxu0 0
    %3673 = vmatpush1.bf16.msra.mxu0 %v3361
    %3674 = vmatprep.subr.bf16.mxu0 0
    %3675 = vmatpush1.bf16.msra.mxu0 %v3362
    %3676 = vmatprep.mubr.bf16.mxu0 %v2511
    %3677 = vmatmul.mubr.bf16.gmra.mrb[0].mxu0 %v2510
    %v3678 = vpop.f32.mrb[0].mxu0
    %v3679 = vadd.f32 %v3622, %v3678
    %v3680 = vpop.f32.mrb[0].mxu0
    %v3681 = vpop.f32.mrb[0].mxu0
    %v3682 = vadd.f32 %v3625, %v3681
    %v3683 = vpop.f32.mrb[0].mxu0
    %3684 = vmatprep.mubr.bf16.mxu0 %v2527
    %3685 = vmatmul.mubr.bf16.gmra.mrb[0].mxu0 %v2526
    %v3686 = vpop.f32.mrb[0].mxu0
    %v3687 = vadd.f32 %v3630, %v3686
    %v3688 = vpop.f32.mrb[0].mxu0
    %v3689 = vpop.f32.mrb[0].mxu0
    %v3690 = vadd.f32 %v3633, %v3689
    %v3691 = vpop.f32.mrb[0].mxu0
    %3692 = vmatprep.mubr.bf16.mxu0 %v2543
    %3693 = vmatmul.mubr.bf16.gmra.mrb[0].mxu0 %v2542
    %v3694 = vpop.f32.mrb[0].mxu0
    %v3695 = vadd.f32 %v3638, %v3694
    %v3696 = vpop.f32.mrb[0].mxu0
    %v3697 = vpop.f32.mrb[0].mxu0
    %v3698 = vadd.f32 %v3641, %v3697
    %v3699 = vpop.f32.mrb[0].mxu0
    %3700 = vdwg.mxu0
    %3701 = vmatprep.subr.bf16.mxu0 0
    %3702 = vmatpush1.bf16.msra.mxu0 %v3363
    %3703 = vmatprep.subr.bf16.mxu0 0
    %3704 = vmatpush1.bf16.msra.mxu0 %v3364
    %3705 = vmatprep.subr.bf16.mxu0 0
    %3706 = vmatpush1.bf16.msra.mxu0 %v3365
    %3707 = vmatprep.subr.bf16.mxu0 0
    %3708 = vmatpush1.bf16.msra.mxu0 %v3366
    %3709 = vmatprep.subr.bf16.mxu0 0
    %3710 = vmatpush1.bf16.msra.mxu0 %v3367
    %3711 = vmatprep.subr.bf16.mxu0 0
    %3712 = vmatpush1.bf16.msra.mxu0 %v3368
    %3713 = vmatprep.subr.bf16.mxu0 0
    %3714 = vmatpush1.bf16.msra.mxu0 %v3369
    %3715 = vmatprep.subr.bf16.mxu0 0
    %3716 = vmatpush1.bf16.msra.mxu0 %v3370
    %3717 = vmatprep.subr.bf16.mxu0 0
    %3718 = vmatpush1.bf16.msra.mxu0 %v3371
    %3719 = vmatprep.subr.bf16.mxu0 0
    %3720 = vmatpush1.bf16.msra.mxu0 %v3372
    %3721 = vmatprep.subr.bf16.mxu0 0
    %3722 = vmatpush1.bf16.msra.mxu0 %v3373
    %3723 = vmatprep.subr.bf16.mxu0 0
    %3724 = vmatpush1.bf16.msra.mxu0 %v3374
    %3725 = vmatprep.subr.bf16.mxu0 0
    %3726 = vmatpush1.bf16.msra.mxu0 %v3375
    %3727 = vmatprep.subr.bf16.mxu0 0
    %3728 = vmatpush1.bf16.msra.mxu0 %v3376
    %3729 = vmatprep.subr.bf16.mxu0 0
    %3730 = vmatpush1.bf16.msra.mxu0 %v3377
    %3731 = vmatprep.subr.bf16.mxu0 0
    %3732 = vmatpush1.bf16.msra.mxu0 %v3378
    %3733 = vmatprep.mubr.bf16.mxu0 %v2513
    %3734 = vmatmul.mubr.bf16.gmra.mrb[0].mxu0 %v2512
    %v3735 = vpop.f32.mrb[0].mxu0
    %v3736 = vadd.f32 %v3679, %v3735
    %v3737 = vpop.f32.mrb[0].mxu0
    %v3738 = vpop.f32.mrb[0].mxu0
    %v3739 = vadd.f32 %v3682, %v3738
    %v3740 = vpop.f32.mrb[0].mxu0
    %3741 = vmatprep.mubr.bf16.mxu0 %v2529
    %3742 = vmatmul.mubr.bf16.gmra.mrb[0].mxu0 %v2528
    %v3743 = vpop.f32.mrb[0].mxu0
    %v3744 = vadd.f32 %v3687, %v3743
    %v3745 = vpop.f32.mrb[0].mxu0
    %v3746 = vpop.f32.mrb[0].mxu0
    %v3747 = vadd.f32 %v3690, %v3746
    %v3748 = vpop.f32.mrb[0].mxu0
    %3749 = vmatprep.mubr.bf16.mxu0 %v2545
    %3750 = vmatmul.mubr.bf16.gmra.mrb[0].mxu0 %v2544
    %v3751 = vpop.f32.mrb[0].mxu0
    %v3752 = vadd.f32 %v3695, %v3751
    %v3753 = vpop.f32.mrb[0].mxu0
    %v3754 = vpop.f32.mrb[0].mxu0
    %v3755 = vadd.f32 %v3698, %v3754
    %v3756 = vpop.f32.mrb[0].mxu0
    %3757 = vdwg.mxu0
    %3758 = vmatprep.subr.bf16.mxu0 0
    %3759 = vmatpush1.bf16.msra.mxu0 %v3379
    %3760 = vmatprep.subr.bf16.mxu0 0
    %3761 = vmatpush1.bf16.msra.mxu0 %v3380
    %3762 = vmatprep.subr.bf16.mxu0 0
    %3763 = vmatpush1.bf16.msra.mxu0 %v3381
    %3764 = vmatprep.subr.bf16.mxu0 0
    %3765 = vmatpush1.bf16.msra.mxu0 %v3382
    %3766 = vmatprep.subr.bf16.mxu0 0
    %3767 = vmatpush1.bf16.msra.mxu0 %v3383
    %3768 = vmatprep.subr.bf16.mxu0 0
    %3769 = vmatpush1.bf16.msra.mxu0 %v3384
    %3770 = vmatprep.subr.bf16.mxu0 0
    %3771 = vmatpush1.bf16.msra.mxu0 %v3385
    %3772 = vmatprep.subr.bf16.mxu0 0
    %3773 = vmatpush1.bf16.msra.mxu0 %v3386
    %3774 = vmatprep.subr.bf16.mxu0 0
    %3775 = vmatpush1.bf16.msra.mxu0 %v3387
    %3776 = vmatprep.subr.bf16.mxu0 0
    %3777 = vmatpush1.bf16.msra.mxu0 %v3388
    %3778 = vmatprep.subr.bf16.mxu0 0
    %3779 = vmatpush1.bf16.msra.mxu0 %v3389
    %3780 = vmatprep.subr.bf16.mxu0 0
    %3781 = vmatpush1.bf16.msra.mxu0 %v3390
    %3782 = vmatprep.subr.bf16.mxu0 0
    %3783 = vmatpush1.bf16.msra.mxu0 %v3391
    %3784 = vmatprep.subr.bf16.mxu0 0
    %3785 = vmatpush1.bf16.msra.mxu0 %v3392
    %3786 = vmatprep.subr.bf16.mxu0 0
    %3787 = vmatpush1.bf16.msra.mxu0 %v3393
    %3788 = vmatprep.subr.bf16.mxu0 0
    %3789 = vmatpush1.bf16.msra.mxu0 %v3394
    %3790 = vmatprep.mubr.bf16.mxu0 %v2515
    %3791 = vmatmul.mubr.bf16.gmra.mrb[0].mxu0 %v2514
    %v3792 = vpop.f32.mrb[0].mxu0
    %v3793 = vadd.f32 %v3736, %v3792
    %v3794 = vpop.f32.mrb[0].mxu0
    %v3795 = vpop.f32.mrb[0].mxu0
    %v3796 = vadd.f32 %v3739, %v3795
    %v3797 = vpop.f32.mrb[0].mxu0
    %3798 = vmatprep.mubr.bf16.mxu0 %v2531
    %3799 = vmatmul.mubr.bf16.gmra.mrb[0].mxu0 %v2530
    %v3800 = vpop.f32.mrb[0].mxu0
    %v3801 = vadd.f32 %v3744, %v3800
    %v3802 = vpop.f32.mrb[0].mxu0
    %v3803 = vpop.f32.mrb[0].mxu0
    %v3804 = vadd.f32 %v3747, %v3803
    %v3805 = vpop.f32.mrb[0].mxu0
    %3806 = vmatprep.mubr.bf16.mxu0 %v2547
    %3807 = vmatmul.mubr.bf16.gmra.mrb[0].mxu0 %v2546
    %v3808 = vpop.f32.mrb[0].mxu0
    %v3809 = vadd.f32 %v3752, %v3808
    %v3810 = vpop.f32.mrb[0].mxu0
    %v3811 = vpop.f32.mrb[0].mxu0
    %v3812 = vadd.f32 %v3755, %v3811
    %v3813 = vpop.f32.mrb[0].mxu0
    %3814 = vdwg.mxu0
    %3815 = vmatprep.subr.bf16.mxu0 0
    %3816 = vmatpush1.bf16.msra.mxu0 %v3395
    %3817 = vmatprep.subr.bf16.mxu0 0
    %3818 = vmatpush1.bf16.msra.mxu0 %v3396
    %3819 = vmatprep.subr.bf16.mxu0 0
    %3820 = vmatpush1.bf16.msra.mxu0 %v3397
    %3821 = vmatprep.subr.bf16.mxu0 0
    %3822 = vmatpush1.bf16.msra.mxu0 %v3398
    %3823 = vmatprep.subr.bf16.mxu0 0
    %3824 = vmatpush1.bf16.msra.mxu0 %v3399
    %3825 = vmatprep.subr.bf16.mxu0 0
    %3826 = vmatpush1.bf16.msra.mxu0 %v3400
    %3827 = vmatprep.subr.bf16.mxu0 0
    %3828 = vmatpush1.bf16.msra.mxu0 %v3401
    %3829 = vmatprep.subr.bf16.mxu0 0
    %3830 = vmatpush1.bf16.msra.mxu0 %v3402
    %3831 = vmatprep.subr.bf16.mxu0 0
    %3832 = vmatpush1.bf16.msra.mxu0 %v3403
    %3833 = vmatprep.subr.bf16.mxu0 0
    %3834 = vmatpush1.bf16.msra.mxu0 %v3404
    %3835 = vmatprep.subr.bf16.mxu0 0
    %3836 = vmatpush1.bf16.msra.mxu0 %v3405
    %3837 = vmatprep.subr.bf16.mxu0 0
    %3838 = vmatpush1.bf16.msra.mxu0 %v3406
    %3839 = vmatprep.subr.bf16.mxu0 0
    %3840 = vmatpush1.bf16.msra.mxu0 %v3407
    %3841 = vmatprep.subr.bf16.mxu0 0
    %3842 = vmatpush1.bf16.msra.mxu0 %v3408
    %3843 = vmatprep.subr.bf16.mxu0 0
    %3844 = vmatpush1.bf16.msra.mxu0 %v3409
    %3845 = vmatprep.subr.bf16.mxu0 0
    %3846 = vmatpush1.bf16.msra.mxu0 %v3410
    %3847 = vmatprep.mubr.bf16.mxu0 %v2517
    %3848 = vmatmul.mubr.bf16.gmra.mrb[0].mxu0 %v2516
    %v3849 = vpop.f32.mrb[0].mxu0
    %v3850 = vadd.f32 %v3793, %v3849
    %v3851 = vpop.f32.mrb[0].mxu0
    %v3852 = vpop.f32.mrb[0].mxu0
    %v3853 = vadd.f32 %v3796, %v3852
    %v3854 = vpop.f32.mrb[0].mxu0
    %3855 = vmatprep.mubr.bf16.mxu0 %v2533
    %3856 = vmatmul.mubr.bf16.gmra.mrb[0].mxu0 %v2532
    %v3857 = vpop.f32.mrb[0].mxu0
    %v3858 = vadd.f32 %v3801, %v3857
    %v3859 = vpop.f32.mrb[0].mxu0
    %v3860 = vpop.f32.mrb[0].mxu0
    %v3861 = vadd.f32 %v3804, %v3860
    %v3862 = vpop.f32.mrb[0].mxu0
    %3863 = vmatprep.mubr.bf16.mxu0 %v2549
    %3864 = vmatmul.mubr.bf16.gmra.mrb[0].mxu0 %v2548
    %v3865 = vpop.f32.mrb[0].mxu0
    %v3866 = vadd.f32 %v3809, %v3865
    %v3867 = vpop.f32.mrb[0].mxu0
    %v3868 = vpop.f32.mrb[0].mxu0
    %v3869 = vadd.f32 %v3812, %v3868
    %v3870 = vpop.f32.mrb[0].mxu0
    %3871 = vdwg.mxu0
    %3872 = vmatprep.subr.bf16.mxu0 0
    %3873 = vmatpush1.bf16.msra.mxu0 %v3411
    %3874 = vmatprep.subr.bf16.mxu0 0
    %3875 = vmatpush1.bf16.msra.mxu0 %v3412
    %3876 = vmatprep.subr.bf16.mxu0 0
    %3877 = vmatpush1.bf16.msra.mxu0 %v3413
    %3878 = vmatprep.subr.bf16.mxu0 0
    %3879 = vmatpush1.bf16.msra.mxu0 %v3414
    %3880 = vmatprep.subr.bf16.mxu0 0
    %3881 = vmatpush1.bf16.msra.mxu0 %v3415
    %3882 = vmatprep.subr.bf16.mxu0 0
    %3883 = vmatpush1.bf16.msra.mxu0 %v3416
    %3884 = vmatprep.subr.bf16.mxu0 0
    %3885 = vmatpush1.bf16.msra.mxu0 %v3417
    %3886 = vmatprep.subr.bf16.mxu0 0
    %3887 = vmatpush1.bf16.msra.mxu0 %v3418
    %3888 = vmatprep.subr.bf16.mxu0 0
    %3889 = vmatpush1.bf16.msra.mxu0 %v3419
    %3890 = vmatprep.subr.bf16.mxu0 0
    %3891 = vmatpush1.bf16.msra.mxu0 %v3420
    %3892 = vmatprep.subr.bf16.mxu0 0
    %3893 = vmatpush1.bf16.msra.mxu0 %v3421
    %3894 = vmatprep.subr.bf16.mxu0 0
    %3895 = vmatpush1.bf16.msra.mxu0 %v3422
    %3896 = vmatprep.subr.bf16.mxu0 0
    %3897 = vmatpush1.bf16.msra.mxu0 %v3423
    %3898 = vmatprep.subr.bf16.mxu0 0
    %3899 = vmatpush1.bf16.msra.mxu0 %v3424
    %3900 = vmatprep.subr.bf16.mxu0 0
    %3901 = vmatpush1.bf16.msra.mxu0 %v3425
    %3902 = vmatprep.subr.bf16.mxu0 0
    %3903 = vmatpush1.bf16.msra.mxu0 %v3426
    %3904 = vmatprep.mubr.bf16.mxu0 %v2519
    %3905 = vmatmul.mubr.bf16.gmra.mrb[0].mxu0 %v2518
    %v3906 = vpop.f32.mrb[0].mxu0
    %v3907 = vadd.f32 %v3850, %v3906
    %v3908 = vpop.f32.mrb[0].mxu0
    %v3909 = vpop.f32.mrb[0].mxu0
    %v3910 = vadd.f32 %v3853, %v3909
    %v3911 = vpop.f32.mrb[0].mxu0
    %3912 = vmatprep.mubr.bf16.mxu0 %v2535
    %3913 = vmatmul.mubr.bf16.gmra.mrb[0].mxu0 %v2534
    %v3914 = vpop.f32.mrb[0].mxu0
    %v3915 = vadd.f32 %v3858, %v3914
    %v3916 = vpop.f32.mrb[0].mxu0
    %v3917 = vpop.f32.mrb[0].mxu0
    %v3918 = vadd.f32 %v3861, %v3917
    %v3919 = vpop.f32.mrb[0].mxu0
    %3920 = vmatprep.mubr.bf16.mxu0 %v2551
    %3921 = vmatmul.mubr.bf16.gmra.mrb[0].mxu0 %v2550
    %v3922 = vpop.f32.mrb[0].mxu0
    %v3923 = vadd.f32 %v3866, %v3922
    %v3924 = vpop.f32.mrb[0].mxu0
    %v3925 = vpop.f32.mrb[0].mxu0
    %v3926 = vadd.f32 %v3869, %v3925
    %v3927 = vpop.f32.mrb[0].mxu0
    %3928 = vdwg.mxu0
    %3929 = vmatprep.subr.bf16.mxu0 0
    %3930 = vmatpush1.bf16.msra.mxu0 %v3427
    %3931 = vmatprep.subr.bf16.mxu0 0
    %3932 = vmatpush1.bf16.msra.mxu0 %v3428
    %3933 = vmatprep.subr.bf16.mxu0 0
    %3934 = vmatpush1.bf16.msra.mxu0 %v3429
    %3935 = vmatprep.subr.bf16.mxu0 0
    %3936 = vmatpush1.bf16.msra.mxu0 %v3430
    %3937 = vmatprep.subr.bf16.mxu0 0
    %3938 = vmatpush1.bf16.msra.mxu0 %v3431
    %3939 = vmatprep.subr.bf16.mxu0 0
    %3940 = vmatpush1.bf16.msra.mxu0 %v3432
    %3941 = vmatprep.subr.bf16.mxu0 0
    %3942 = vmatpush1.bf16.msra.mxu0 %v3433
    %3943 = vmatprep.subr.bf16.mxu0 0
    %3944 = vmatpush1.bf16.msra.mxu0 %v3434
    %3945 = vmatprep.subr.bf16.mxu0 0
    %3946 = vmatpush1.bf16.msra.mxu0 %v3435
    %3947 = vmatprep.subr.bf16.mxu0 0
    %3948 = vmatpush1.bf16.msra.mxu0 %v3436
    %3949 = vmatprep.subr.bf16.mxu0 0
    %3950 = vmatpush1.bf16.msra.mxu0 %v3437
    %3951 = vmatprep.subr.bf16.mxu0 0
    %3952 = vmatpush1.bf16.msra.mxu0 %v3438
    %3953 = vmatprep.subr.bf16.mxu0 0
    %3954 = vmatpush1.bf16.msra.mxu0 %v3439
    %3955 = vmatprep.subr.bf16.mxu0 0
    %3956 = vmatpush1.bf16.msra.mxu0 %v3440
    %3957 = vmatprep.subr.bf16.mxu0 0
    %3958 = vmatpush1.bf16.msra.mxu0 %v3441
    %3959 = vmatprep.subr.bf16.mxu0 0
    %3960 = vmatpush1.bf16.msra.mxu0 %v3442
    %3961 = vmatprep.mubr.bf16.mxu0 %v2521
    %3962 = vmatmul.mubr.bf16.gmra.mrb[0].mxu0 %v2520
    %v3963 = vpop.f32.mrb[0].mxu0
    %v3964 = vadd.f32 %v3907, %v3963
    %v3965 = vpop.f32.mrb[0].mxu0
    %v3966 = vpop.f32.mrb[0].mxu0
    %v3967 = vadd.f32 %v3910, %v3966
    %v3968 = vpop.f32.mrb[0].mxu0
    %3969 = vmatprep.mubr.bf16.mxu0 %v2537
    %3970 = vmatmul.mubr.bf16.gmra.mrb[0].mxu0 %v2536
    %v3971 = vpop.f32.mrb[0].mxu0
    %v3972 = vadd.f32 %v3915, %v3971
    %v3973 = vpop.f32.mrb[0].mxu0
    %v3974 = vpop.f32.mrb[0].mxu0
    %v3975 = vadd.f32 %v3918, %v3974
    %v3976 = vpop.f32.mrb[0].mxu0
    %3977 = vmatprep.mubr.bf16.mxu0 %v2553
    %3978 = vmatmul.mubr.bf16.gmra.mrb[0].mxu0 %v2552
    %v3979 = vpop.f32.mrb[0].mxu0
    %v3980 = vadd.f32 %v3923, %v3979
    %v3981 = vpop.f32.mrb[0].mxu0
    %v3982 = vpop.f32.mrb[0].mxu0
    %v3983 = vadd.f32 %v3926, %v3982
    %v3984 = vpop.f32.mrb[0].mxu0
    %3985 = vdwg.mxu0
    %3986 = vmatprep.subr.bf16.mxu0 0
    %3987 = vmatpush1.bf16.msra.mxu0 %v3443
    %3988 = vmatprep.subr.bf16.mxu0 0
    %3989 = vmatpush1.bf16.msra.mxu0 %v3444
    %3990 = vmatprep.subr.bf16.mxu0 0
    %3991 = vmatpush1.bf16.msra.mxu0 %v3445
    %3992 = vmatprep.subr.bf16.mxu0 0
    %3993 = vmatpush1.bf16.msra.mxu0 %v3446
    %3994 = vmatprep.subr.bf16.mxu0 0
    %3995 = vmatpush1.bf16.msra.mxu0 %v3447
    %3996 = vmatprep.subr.bf16.mxu0 0
    %3997 = vmatpush1.bf16.msra.mxu0 %v3448
    %3998 = vmatprep.subr.bf16.mxu0 0
    %3999 = vmatpush1.bf16.msra.mxu0 %v3449
    %4000 = vmatprep.subr.bf16.mxu0 0
    %4001 = vmatpush1.bf16.msra.mxu0 %v3450
    %4002 = vmatprep.subr.bf16.mxu0 0
    %4003 = vmatpush1.bf16.msra.mxu0 %v3451
    %4004 = vmatprep.subr.bf16.mxu0 0
    %4005 = vmatpush1.bf16.msra.mxu0 %v3452
    %4006 = vmatprep.subr.bf16.mxu0 0
    %4007 = vmatpush1.bf16.msra.mxu0 %v3453
    %4008 = vmatprep.subr.bf16.mxu0 0
    %4009 = vmatpush1.bf16.msra.mxu0 %v3454
    %4010 = vmatprep.subr.bf16.mxu0 0
    %4011 = vmatpush1.bf16.msra.mxu0 %v3455
    %4012 = vmatprep.subr.bf16.mxu0 0
    %4013 = vmatpush1.bf16.msra.mxu0 %v3456
    %4014 = vmatprep.subr.bf16.mxu0 0
    %4015 = vmatpush1.bf16.msra.mxu0 %v3457
    %4016 = vmatprep.subr.bf16.mxu0 0
    %4017 = vmatpush1.bf16.msra.mxu0 %v3458
    %4018 = vmatprep.mubr.bf16.mxu0 %v2523
    %4019 = vmatmul.mubr.bf16.gmra.mrb[0].mxu0 %v2522
    %v4020 = vpop.f32.mrb[0].mxu0
    %v4021 = vadd.f32 %v3964, %v4020
    %v4022 = vpop.f32.mrb[0].mxu0
    %v4023 = vpop.f32.mrb[0].mxu0
    %v4024 = vadd.f32 %v3967, %v4023
    %v4025 = vpop.f32.mrb[0].mxu0
    %4026 = vmatprep.mubr.bf16.mxu0 %v2539
    %4027 = vmatmul.mubr.bf16.gmra.mrb[0].mxu0 %v2538
    %v4028 = vpop.f32.mrb[0].mxu0
    %v4029 = vadd.f32 %v3972, %v4028
    %v4030 = vpop.f32.mrb[0].mxu0
    %v4031 = vpop.f32.mrb[0].mxu0
    %v4032 = vadd.f32 %v3975, %v4031
    %v4033 = vpop.f32.mrb[0].mxu0
    %4034 = vmatprep.mubr.bf16.mxu0 %v2555
    %4035 = vmatmul.mubr.bf16.gmra.mrb[0].mxu0 %v2554
    %v4036 = vpop.f32.mrb[0].mxu0
    %v4037 = vadd.f32 %v3980, %v4036
    %v4038 = vpop.f32.mrb[0].mxu0
    %v4039 = vpop.f32.mrb[0].mxu0
    %v4040 = vadd.f32 %v3983, %v4039
    %v4041 = vpop.f32.mrb[0].mxu0
    %4042 = vdwg.mxu0
    %v4043 = vadd.f32 %v1422, %v4021
    %v4044 = vadd.f32 %v1423, %v4024
    %v4045 = vadd.f32 %v1424, %v4029
    %v4046 = vadd.f32 %v1425, %v4032
    %v4047 = vadd.f32 %v1426, %v4037
    %v4048 = vadd.f32 %v1427, %v4040
    %v4049 = vld [vmem:[%s12] sm:$0x1]
    %v4050 = vld [vmem:[%s13] sm:$0x1]
    %v4051 = vsel %vm107, %v4043, 0.0
    %4052 = vadd.xlane.f32.xlu0 %v4051
    %v4053 = vpop.xlane.xlu0 %4052
    %v4054 = vsel %vm107, %v4044, 0.0
    %4055 = vadd.xlane.f32.xlu0 %v4054
    %v4056 = vpop.xlane.xlu0 %4055
    %v4057 = vsel %vm107, %v4045, 0.0
    %4058 = vadd.xlane.f32.xlu0 %v4057
    %v4059 = vpop.xlane.xlu0 %4058
    %v4060 = vsel %vm107, %v4046, 0.0
    %4061 = vadd.xlane.f32.xlu0 %v4060
    %v4062 = vpop.xlane.xlu0 %4061
    %v4063 = vsel %vm107, %v4047, 0.0
    %4064 = vadd.xlane.f32.xlu0 %v4063
    %v4065 = vpop.xlane.xlu0 %4064
    %v4066 = vsel %vm107, %v4048, 0.0
    %4067 = vadd.xlane.f32.xlu0 %v4066
    %v4068 = vpop.xlane.xlu0 %4067
    %v4069 = vmul.f32 %v4053, %v1343
    %v4070 = vmul.f32 %v4056, %v1343
    %v4071 = vmul.f32 %v4059, %v1343
    %v4072 = vmul.f32 %v4062, %v1343
    %v4073 = vmul.f32 %v4065, %v1343
    %v4074 = vmul.f32 %v4068, %v1343
    %v4075 = vsub.f32 %v4043, %v4069
    %v4076 = vsub.f32 %v4044, %v4070
    %v4077 = vsub.f32 %v4045, %v4071
    %v4078 = vsub.f32 %v4046, %v4072
    %v4079 = vsub.f32 %v4047, %v4073
    %v4080 = vsub.f32 %v4048, %v4074
    %v4081 = vmul.f32 %v4075, %v4075
    %v4082 = vmul.f32 %v4076, %v4076
    %v4083 = vmul.f32 %v4077, %v4077
    %v4084 = vmul.f32 %v4078, %v4078
    %v4085 = vmul.f32 %v4079, %v4079
    %v4086 = vmul.f32 %v4080, %v4080
    %v4087 = vsel %vm107, %v4081, 0.0
    %4088 = vadd.xlane.f32.xlu0 %v4087
    %v4089 = vpop.xlane.xlu0 %4088
    %v4090 = vsel %vm107, %v4082, 0.0
    %4091 = vadd.xlane.f32.xlu0 %v4090
    %v4092 = vpop.xlane.xlu0 %4091
    %v4093 = vsel %vm107, %v4083, 0.0
    %4094 = vadd.xlane.f32.xlu0 %v4093
    %v4095 = vpop.xlane.xlu0 %4094
    %v4096 = vsel %vm107, %v4084, 0.0
    %4097 = vadd.xlane.f32.xlu0 %v4096
    %v4098 = vpop.xlane.xlu0 %4097
    %v4099 = vsel %vm107, %v4085, 0.0
    %4100 = vadd.xlane.f32.xlu0 %v4099
    %v4101 = vpop.xlane.xlu0 %4100
    %v4102 = vsel %vm107, %v4086, 0.0
    %4103 = vadd.xlane.f32.xlu0 %v4102
    %v4104 = vpop.xlane.xlu0 %4103
    %v4105 = vmul.f32 %v4089, %v1343
    %v4106 = vmul.f32 %v4092, %v1343
    %v4107 = vmul.f32 %v4095, %v1343
    %v4108 = vmul.f32 %v4098, %v1343
    %v4109 = vmul.f32 %v4101, %v1343
    %v4110 = vmul.f32 %v4104, %v1343
    %v4111 = vadd.f32 %v4105, 1e-05
    %v4112 = vadd.f32 %v4106, 1e-05
    %v4113 = vadd.f32 %v4107, 1e-05
    %v4114 = vadd.f32 %v4108, 1e-05
    %v4115 = vadd.f32 %v4109, 1e-05
    %v4116 = vadd.f32 %v4110, 1e-05
    %v4117 = vrsqrt.pop %v4111
    %v4118 = vrsqrt.pop %v4112
    %v4119 = vrsqrt.pop %v4113
    %v4120 = vrsqrt.pop %v4114
    %v4121 = vrsqrt.pop %v4115
    %v4122 = vrsqrt.pop %v4116
    %v4123 = vmul.f32 %v4075, %v4117
    %v4124 = vmul.f32 %v4076, %v4118
    %v4125 = vmul.f32 %v4077, %v4119
    %v4126 = vmul.f32 %v4078, %v4120
    %v4127 = vmul.f32 %v4079, %v4121
    %v4128 = vmul.f32 %v4080, %v4122
    %v4130 = vlaneseq
    %v4131 = vshrl.u32 %v4130, 7
    %v4132 = vsub.s32 0, %v4131
    %v4133 = vrot.slane %v4049, %v4132
    %v4135 = vmul.f32 %v4123, %v4133
    %v4136 = vmul.f32 %v4124, %v4133
    %v4137 = vmul.f32 %v4125, %v4133
    %v4138 = vmul.f32 %v4126, %v4133
    %v4139 = vmul.f32 %v4127, %v4133
    %v4140 = vmul.f32 %v4128, %v4133
    %v4142 = vlaneseq
    %v4143 = vshrl.u32 %v4142, 7
    %v4144 = vsub.s32 0, %v4143
    %v4145 = vrot.slane %v4050, %v4144
    %v4147 = vadd.f32 %v4135, %v4145
    %v4148 = vadd.f32 %v4136, %v4145
    %v4149 = vadd.f32 %v4137, %v4145
    %v4150 = vadd.f32 %v4138, %v4145
    %v4151 = vadd.f32 %v4139, %v4145
    %v4152 = vadd.f32 %v4140, %v4145
    %s4153 = scalar_lea.vmem %s2, 128
    %v4154 = vld [vmem:[%s4153] sm:$0xff]
    %v4155 = vld [vmem:[%s4153 + $0x8] sm:$0xff]
    %v4156 = vld [vmem:[%s4153 + $0x10] sm:$0xff]
    %v4157 = vld [vmem:[%s4153 + $0x18] sm:$0xff]
    %v4158 = vld [vmem:[%s4153 + $0x20] sm:$0xff]
    %v4159 = vld [vmem:[%s4153 + $0x28] sm:$0xff]
    %v4160 = vld [vmem:[%s4153 + $0x30] sm:$0xff]
    %v4161 = vld [vmem:[%s4153 + $0x38] sm:$0xff]
    %v4162 = vld [vmem:[%s4153 + $0x40] sm:$0xff]
    %v4163 = vld [vmem:[%s4153 + $0x48] sm:$0xff]
    %v4164 = vld [vmem:[%s4153 + $0x50] sm:$0xff]
    %v4165 = vld [vmem:[%s4153 + $0x58] sm:$0xff]
    %v4166 = vld [vmem:[%s4153 + $0x60] sm:$0xff]
    %v4167 = vld [vmem:[%s4153 + $0x68] sm:$0xff]
    %v4168 = vld [vmem:[%s4153 + $0x70] sm:$0xff]
    %v4169 = vld [vmem:[%s4153 + $0x78] sm:$0xff]
    %s4170 = scalar_lea.vmem %s3, 2
    %v4171 = vld [vmem:[%s4170] sm:$0x3]
    %v4173 = vlaneseq
    %v4174 = vshrl.u32 %v4173, 7
    %v4175 = vsub.s32 0, %v4174
    %v4176 = vrot.slane %v4171, %v4175
    %v4177 = vlaneseq
    %v4178 = vshrl.u32 %v4177, 7
    %v4179 = vsub.s32 1, %v4178
    %v4180 = vrot.slane %v4171, %v4179
    %v4184 = vsel %vm107, %v4147, 0
    %v4187 = vsel %vm107, %v4148, 0
    %v4190 = vsel %vm107, %v4149, 0
    %v4193 = vsel %vm107, %v4150, 0
    %v4196 = vsel %vm107, %v4151, 0
    %v4199 = vsel %vm107, %v4152, 0
    %4201 = vmatprep.subr.mxu0 %v4155
    %4202 = vmatpush1.msra.mxu0 %v4154
    %4203 = vmatprep.subr.mxu0 %v4157
    %4204 = vmatpush1.msra.mxu0 %v4156
    %4205 = vmatprep.subr.mxu0 %v4159
    %4206 = vmatpush1.msra.mxu0 %v4158
    %4207 = vmatprep.subr.mxu0 %v4161
    %4208 = vmatpush1.msra.mxu0 %v4160
    %4209 = vmatprep.subr.mxu0 %v4163
    %4210 = vmatpush1.msra.mxu0 %v4162
    %4211 = vmatprep.subr.mxu0 %v4165
    %4212 = vmatpush1.msra.mxu0 %v4164
    %4213 = vmatprep.subr.mxu0 %v4167
    %4214 = vmatpush1.msra.mxu0 %v4166
    %4215 = vmatprep.subr.mxu0 %v4169
    %4216 = vmatpush1.msra.mxu0 %v4168
    %4217 = vmatprep.subr.mxu0 0.0
    %4218 = vmatpush1.msra.mxu0 0.0
    %4219 = vmatprep.subr.mxu0 0.0
    %4220 = vmatpush1.msra.mxu0 0.0
    %4221 = vmatprep.subr.mxu0 0.0
    %4222 = vmatpush1.msra.mxu0 0.0
    %4223 = vmatprep.subr.mxu0 0.0
    %4224 = vmatpush1.msra.mxu0 0.0
    %4225 = vmatprep.subr.mxu0 0.0
    %4226 = vmatpush1.msra.mxu0 0.0
    %4227 = vmatprep.subr.mxu0 0.0
    %4228 = vmatpush1.msra.mxu0 0.0
    %4229 = vmatprep.subr.mxu0 0.0
    %4230 = vmatpush1.msra.mxu0 0.0
    %4231 = vmatprep.subr.mxu0 0.0
    %4232 = vmatpush1.msra.mxu0 0.0
    %4233 = vmatprep.subr.mxu0 0.0
    %4234 = vmatpush1.msra.mxu0 0.0
    %4235 = vmatprep.subr.mxu0 0.0
    %4236 = vmatpush1.msra.mxu0 0.0
    %4237 = vmatprep.subr.mxu0 0.0
    %4238 = vmatpush1.msra.mxu0 0.0
    %4239 = vmatprep.subr.mxu0 0.0
    %4240 = vmatpush1.msra.mxu0 0.0
    %4241 = vmatprep.subr.mxu0 0.0
    %4242 = vmatpush1.msra.mxu0 0.0
    %4243 = vmatprep.subr.mxu0 0.0
    %4244 = vmatpush1.msra.mxu0 0.0
    %4245 = vmatprep.subr.mxu0 0.0
    %4246 = vmatpush1.msra.mxu0 0.0
    %4247 = vmatprep.subr.mxu0 0.0
    %4248 = vmatpush1.msra.mxu0 0.0
    %4249 = vmatprep.subr.mxu0 0.0
    %4250 = vmatpush1.msra.mxu0 0.0
    %4251 = vmatprep.subr.mxu0 0.0
    %4252 = vmatpush1.msra.mxu0 0.0
    %4253 = vmatprep.subr.mxu0 0.0
    %4254 = vmatpush1.msra.mxu0 0.0
    %4255 = vmatprep.subr.mxu0 0.0
    %4256 = vmatpush1.msra.mxu0 0.0
    %4257 = vmatprep.subr.mxu0 0.0
    %4258 = vmatpush1.msra.mxu0 0.0
    %4259 = vmatprep.subr.mxu0 0.0
    %4260 = vmatpush1.msra.mxu0 0.0
    %4261 = vmatprep.subr.mxu0 0.0
    %4262 = vmatpush1.msra.mxu0 0.0
    %4263 = vmatprep.subr.mxu0 0.0
    %4264 = vmatpush1.msra.mxu0 0.0
    %4265 = vmatprep.mubr.f32.mxu0 0.0
    %4266 = vmatmul.mubr.f32.gmra.mrb[0].mxu0 %v4184
    %v4267 = vpop.f32.mrb[0].mxu0
    %v4268 = vadd.f32 %v4176, %v4267
    %v4269 = vpop.f32.mrb[0].mxu0
    %v4270 = vadd.f32 %v4180, %v4269
    %4271 = vmatprep.mubr.f32.mxu0 0.0
    %4272 = vmatmul.mubr.f32.gmra.mrb[0].mxu0 %v4187
    %v4273 = vpop.f32.mrb[0].mxu0
    %v4274 = vadd.f32 %v4176, %v4273
    %v4275 = vpop.f32.mrb[0].mxu0
    %v4276 = vadd.f32 %v4180, %v4275
    %4277 = vmatprep.mubr.f32.mxu0 0.0
    %4278 = vmatmul.mubr.f32.gmra.mrb[0].mxu0 %v4190
    %v4279 = vpop.f32.mrb[0].mxu0
    %v4280 = vadd.f32 %v4176, %v4279
    %v4281 = vpop.f32.mrb[0].mxu0
    %v4282 = vadd.f32 %v4180, %v4281
    %4283 = vmatprep.mubr.f32.mxu0 0.0
    %4284 = vmatmul.mubr.f32.gmra.mrb[0].mxu0 %v4193
    %v4285 = vpop.f32.mrb[0].mxu0
    %v4286 = vadd.f32 %v4176, %v4285
    %v4287 = vpop.f32.mrb[0].mxu0
    %v4288 = vadd.f32 %v4180, %v4287
    %4289 = vmatprep.mubr.f32.mxu0 0.0
    %4290 = vmatmul.mubr.f32.gmra.mrb[0].mxu0 %v4196
    %v4291 = vpop.f32.mrb[0].mxu0
    %v4292 = vadd.f32 %v4176, %v4291
    %v4293 = vpop.f32.mrb[0].mxu0
    %v4294 = vadd.f32 %v4180, %v4293
    %4295 = vmatprep.mubr.f32.mxu0 0.0
    %4296 = vmatmul.mubr.f32.gmra.mrb[0].mxu0 %v4199
    %v4297 = vpop.f32.mrb[0].mxu0
    %v4298 = vadd.f32 %v4176, %v4297
    %v4299 = vpop.f32.mrb[0].mxu0
    %v4300 = vadd.f32 %v4180, %v4299
    %4301 = vdwg.mxu0
    %4308 = vrot.lane.b32.xlu0 %v4268, 64
    %v4309 = vpop.permute.xlu0 %4308
    %4310 = vrot.lane.b32.xlu0 %v4274, 64
    %v4311 = vpop.permute.xlu0 %4310
    %4312 = vrot.lane.b32.xlu0 %v4280, 64
    %v4313 = vpop.permute.xlu0 %4312
    %4314 = vrot.lane.b32.xlu0 %v4286, 64
    %v4315 = vpop.permute.xlu0 %4314
    %4316 = vrot.lane.b32.xlu0 %v4292, 64
    %v4317 = vpop.permute.xlu0 %4316
    %4318 = vrot.lane.b32.xlu0 %v4298, 64
    %v4319 = vpop.permute.xlu0 %4318
    %v4320 = vsel %vm489, %v4268, 0
    %v4322 = vsel %vm489, %v4274, 0
    %v4324 = vsel %vm489, %v4280, 0
    %v4326 = vsel %vm489, %v4286, 0
    %v4328 = vsel %vm489, %v4292, 0
    %v4330 = vsel %vm489, %v4298, 0
    %v4332 = vsel %vm489, %v4309, 0
    %v4334 = vsel %vm489, %v4311, 0
    %v4336 = vsel %vm489, %v4313, 0
    %v4338 = vsel %vm489, %v4315, 0
    %v4340 = vsel %vm489, %v4317, 0
    %v4342 = vsel %vm489, %v4319, 0
    %4344 = vmatprep.subr.mxu0 0.0
    %4345 = vmatpush1.xpose.msra.mxu0 %v4332
    %4346 = vmatprep.subr.mxu0 0.0
    %4347 = vmatpush1.xpose.msra.mxu0 %v4334
    %4348 = vmatprep.subr.mxu0 0.0
    %4349 = vmatpush1.xpose.msra.mxu0 %v4336
    %4350 = vmatprep.subr.mxu0 0.0
    %4351 = vmatpush1.xpose.msra.mxu0 %v4338
    %4352 = vmatprep.subr.mxu0 0.0
    %4353 = vmatpush1.xpose.msra.mxu0 %v4340
    %4354 = vmatprep.subr.mxu0 0.0
    %4355 = vmatpush1.xpose.msra.mxu0 %v4342
    %4356 = vmatprep.subr.mxu0 0.0
    %4357 = vmatpush1.xpose.msra.mxu0 0.0
    %4358 = vmatprep.subr.mxu0 0.0
    %4359 = vmatpush1.xpose.msra.mxu0 0.0
    %4360 = vmatprep.subr.mxu0 0.0
    %4361 = vmatpush1.xpose.msra.mxu0 0.0
    %4362 = vmatprep.subr.mxu0 0.0
    %4363 = vmatpush1.xpose.msra.mxu0 0.0
    %4364 = vmatprep.subr.mxu0 0.0
    %4365 = vmatpush1.xpose.msra.mxu0 0.0
    %4366 = vmatprep.subr.mxu0 0.0
    %4367 = vmatpush1.xpose.msra.mxu0 0.0
    %4368 = vmatprep.subr.mxu0 0.0
    %4369 = vmatpush1.xpose.msra.mxu0 0.0
    %4370 = vmatprep.subr.mxu0 0.0
    %4371 = vmatpush1.xpose.msra.mxu0 0.0
    %4372 = vmatprep.subr.mxu0 0.0
    %4373 = vmatpush1.xpose.msra.mxu0 0.0
    %4374 = vmatprep.subr.mxu0 0.0
    %4375 = vmatpush1.xpose.msra.mxu0 0.0
    %4376 = vmatprep.subr.mxu0 0.0
    %4377 = vmatpush1.xpose.msra.mxu0 0.0
    %4378 = vmatprep.subr.mxu0 0.0
    %4379 = vmatpush1.xpose.msra.mxu0 0.0
    %4380 = vmatprep.subr.mxu0 0.0
    %4381 = vmatpush1.xpose.msra.mxu0 0.0
    %4382 = vmatprep.subr.mxu0 0.0
    %4383 = vmatpush1.xpose.msra.mxu0 0.0
    %4384 = vmatprep.subr.mxu0 0.0
    %4385 = vmatpush1.xpose.msra.mxu0 0.0
    %4386 = vmatprep.subr.mxu0 0.0
    %4387 = vmatpush1.xpose.msra.mxu0 0.0
    %4388 = vmatprep.subr.mxu0 0.0
    %4389 = vmatpush1.xpose.msra.mxu0 0.0
    %4390 = vmatprep.subr.mxu0 0.0
    %4391 = vmatpush1.xpose.msra.mxu0 0.0
    %4392 = vmatprep.subr.mxu0 0.0
    %4393 = vmatpush1.xpose.msra.mxu0 0.0
    %4394 = vmatprep.subr.mxu0 0.0
    %4395 = vmatpush1.xpose.msra.mxu0 0.0
    %4396 = vmatprep.subr.mxu0 0.0
    %4397 = vmatpush1.xpose.msra.mxu0 0.0
    %4398 = vmatprep.subr.mxu0 0.0
    %4399 = vmatpush1.xpose.msra.mxu0 0.0
    %4400 = vmatprep.subr.mxu0 0.0
    %4401 = vmatpush1.xpose.msra.mxu0 0.0
    %4402 = vmatprep.subr.mxu0 0.0
    %4403 = vmatpush1.xpose.msra.mxu0 0.0
    %4404 = vmatprep.subr.mxu0 0.0
    %4405 = vmatpush1.xpose.msra.mxu0 0.0
    %4406 = vmatprep.subr.mxu0 0.0
    %4407 = vmatpush1.xpose.msra.mxu0 0.0
    %4408 = vmatprep.mubr.f32.mxu0 0.0
    %4409 = vmatmul.mubr.f32.gmra.mrb[0].mxu0 %v4320
    %v4410 = vpop.f32.mrb[0].mxu0
    %v4411 = vadd.f32 0.0, %v4410
    %v4412 = vpop.f32.mrb[0].mxu0
    %4413 = vmatprep.mubr.f32.mxu0 0.0
    %4414 = vmatmul.mubr.f32.gmra.mrb[0].mxu0 %v4322
    %v4415 = vpop.f32.mrb[0].mxu0
    %v4416 = vadd.f32 0.0, %v4415
    %v4417 = vpop.f32.mrb[0].mxu0
    %4418 = vmatprep.mubr.f32.mxu0 0.0
    %4419 = vmatmul.mubr.f32.gmra.mrb[0].mxu0 %v4324
    %v4420 = vpop.f32.mrb[0].mxu0
    %v4421 = vadd.f32 0.0, %v4420
    %v4422 = vpop.f32.mrb[0].mxu0
    %4423 = vmatprep.mubr.f32.mxu0 0.0
    %4424 = vmatmul.mubr.f32.gmra.mrb[0].mxu0 %v4326
    %v4425 = vpop.f32.mrb[0].mxu0
    %v4426 = vadd.f32 0.0, %v4425
    %v4427 = vpop.f32.mrb[0].mxu0
    %4428 = vmatprep.mubr.f32.mxu0 0.0
    %4429 = vmatmul.mubr.f32.gmra.mrb[0].mxu0 %v4328
    %v4430 = vpop.f32.mrb[0].mxu0
    %v4431 = vadd.f32 0.0, %v4430
    %v4432 = vpop.f32.mrb[0].mxu0
    %4433 = vmatprep.mubr.f32.mxu0 0.0
    %4434 = vmatmul.mubr.f32.gmra.mrb[0].mxu0 %v4330
    %v4435 = vpop.f32.mrb[0].mxu0
    %v4436 = vadd.f32 0.0, %v4435
    %v4437 = vpop.f32.mrb[0].mxu0
    %4438 = vdwg.mxu0
    %v4439 = vmul.f32 %v4411, 0.17677669
    %v4440 = vmul.f32 %v4416, 0.17677669
    %v4441 = vmul.f32 %v4421, 0.17677669
    %v4442 = vmul.f32 %v4426, 0.17677669
    %v4443 = vmul.f32 %v4431, 0.17677669
    %v4444 = vmul.f32 %v4436, 0.17677669
    %v4445 = vadd.f32 %v4439, %v318
    %v4446 = vadd.f32 %v4440, %v319
    %v4447 = vadd.f32 %v4441, %v320
    %v4448 = vadd.f32 %v4442, %v321
    %v4449 = vadd.f32 %v4443, %v322
    %v4450 = vadd.f32 %v4444, %v323
    %v4451 = vsel %vm621, %v4445, -inf
    %4452 = vmax.xlane.f32.xlu0 %v4451
    %v4453 = vpop.xlane.xlu0 %4452
    %v4454 = vsel %vm621, %v4446, -inf
    %4455 = vmax.xlane.f32.xlu0 %v4454
    %v4456 = vpop.xlane.xlu0 %4455
    %v4457 = vsel %vm621, %v4447, -inf
    %4458 = vmax.xlane.f32.xlu0 %v4457
    %v4459 = vpop.xlane.xlu0 %4458
    %v4460 = vsel %vm621, %v4448, -inf
    %4461 = vmax.xlane.f32.xlu0 %v4460
    %v4462 = vpop.xlane.xlu0 %4461
    %v4463 = vsel %vm621, %v4449, -inf
    %4464 = vmax.xlane.f32.xlu0 %v4463
    %v4465 = vpop.xlane.xlu0 %4464
    %v4466 = vsel %vm621, %v4450, -inf
    %4467 = vmax.xlane.f32.xlu0 %v4466
    %v4468 = vpop.xlane.xlu0 %4467
    %v4469 = vsub.f32 %v4445, %v4453
    %v4470 = vsub.f32 %v4446, %v4456
    %v4471 = vsub.f32 %v4447, %v4459
    %v4472 = vsub.f32 %v4448, %v4462
    %v4473 = vsub.f32 %v4449, %v4465
    %v4474 = vsub.f32 %v4450, %v4468
    %v4475 = vmul.f32 %v4469, 1.442695
    %v4476 = vpow.pop %v4475
    %v4477 = vmul.f32 %v4470, 1.442695
    %v4478 = vpow.pop %v4477
    %v4479 = vmul.f32 %v4471, 1.442695
    %v4480 = vpow.pop %v4479
    %v4481 = vmul.f32 %v4472, 1.442695
    %v4482 = vpow.pop %v4481
    %v4483 = vmul.f32 %v4473, 1.442695
    %v4484 = vpow.pop %v4483
    %v4485 = vmul.f32 %v4474, 1.442695
    %v4486 = vpow.pop %v4485
    %v4487 = vsel %vm621, %v4476, 0.0
    %4488 = vadd.xlane.f32.xlu0 %v4487
    %v4489 = vpop.xlane.xlu0 %4488
    %v4490 = vsel %vm621, %v4478, 0.0
    %4491 = vadd.xlane.f32.xlu0 %v4490
    %v4492 = vpop.xlane.xlu0 %4491
    %v4493 = vsel %vm621, %v4480, 0.0
    %4494 = vadd.xlane.f32.xlu0 %v4493
    %v4495 = vpop.xlane.xlu0 %4494
    %v4496 = vsel %vm621, %v4482, 0.0
    %4497 = vadd.xlane.f32.xlu0 %v4496
    %v4498 = vpop.xlane.xlu0 %4497
    %v4499 = vsel %vm621, %v4484, 0.0
    %4500 = vadd.xlane.f32.xlu0 %v4499
    %v4501 = vpop.xlane.xlu0 %4500
    %v4502 = vsel %vm621, %v4486, 0.0
    %4503 = vadd.xlane.f32.xlu0 %v4502
    %v4504 = vpop.xlane.xlu0 %4503
    %v4505 = vrcp.pop %v4489
    %v4506 = vrcp.pop %v4492
    %v4507 = vrcp.pop %v4495
    %v4508 = vrcp.pop %v4498
    %v4509 = vrcp.pop %v4501
    %v4510 = vrcp.pop %v4504
    %v4511 = vmul.f32 %v4476, %v4505
    %v4512 = vmul.f32 %v4478, %v4506
    %v4513 = vmul.f32 %v4480, %v4507
    %v4514 = vmul.f32 %v4482, %v4508
    %v4515 = vmul.f32 %v4484, %v4509
    %v4516 = vmul.f32 %v4486, %v4510
    %v4518 = vsel %vm621, %v4511, 0
    %v4521 = vsel %vm621, %v4512, 0
    %v4524 = vsel %vm621, %v4513, 0
    %v4527 = vsel %vm621, %v4514, 0
    %v4530 = vsel %vm621, %v4515, 0
    %v4533 = vsel %vm621, %v4516, 0
    %4535 = vmatprep.subr.mxu0 0.0
    %4536 = vmatpush1.msra.mxu0 %v4270
    %4537 = vmatprep.subr.mxu0 0.0
    %4538 = vmatpush1.msra.mxu0 %v4276
    %4539 = vmatprep.subr.mxu0 0.0
    %4540 = vmatpush1.msra.mxu0 %v4282
    %4541 = vmatprep.subr.mxu0 0.0
    %4542 = vmatpush1.msra.mxu0 %v4288
    %4543 = vmatprep.subr.mxu0 0.0
    %4544 = vmatpush1.msra.mxu0 %v4294
    %4545 = vmatprep.subr.mxu0 0.0
    %4546 = vmatpush1.msra.mxu0 %v4300
    %4547 = vmatprep.subr.mxu0 0.0
    %4548 = vmatpush1.msra.mxu0 0.0
    %4549 = vmatprep.subr.mxu0 0.0
    %4550 = vmatpush1.msra.mxu0 0.0
    %4551 = vmatprep.subr.mxu0 0.0
    %4552 = vmatpush1.msra.mxu0 0.0
    %4553 = vmatprep.subr.mxu0 0.0
    %4554 = vmatpush1.msra.mxu0 0.0
    %4555 = vmatprep.subr.mxu0 0.0
    %4556 = vmatpush1.msra.mxu0 0.0
    %4557 = vmatprep.subr.mxu0 0.0
    %4558 = vmatpush1.msra.mxu0 0.0
    %4559 = vmatprep.subr.mxu0 0.0
    %4560 = vmatpush1.msra.mxu0 0.0
    %4561 = vmatprep.subr.mxu0 0.0
    %4562 = vmatpush1.msra.mxu0 0.0
    %4563 = vmatprep.subr.mxu0 0.0
    %4564 = vmatpush1.msra.mxu0 0.0
    %4565 = vmatprep.subr.mxu0 0.0
    %4566 = vmatpush1.msra.mxu0 0.0
    %4567 = vmatprep.subr.mxu0 0.0
    %4568 = vmatpush1.msra.mxu0 0.0
    %4569 = vmatprep.subr.mxu0 0.0
    %4570 = vmatpush1.msra.mxu0 0.0
    %4571 = vmatprep.subr.mxu0 0.0
    %4572 = vmatpush1.msra.mxu0 0.0
    %4573 = vmatprep.subr.mxu0 0.0
    %4574 = vmatpush1.msra.mxu0 0.0
    %4575 = vmatprep.subr.mxu0 0.0
    %4576 = vmatpush1.msra.mxu0 0.0
    %4577 = vmatprep.subr.mxu0 0.0
    %4578 = vmatpush1.msra.mxu0 0.0
    %4579 = vmatprep.subr.mxu0 0.0
    %4580 = vmatpush1.msra.mxu0 0.0
    %4581 = vmatprep.subr.mxu0 0.0
    %4582 = vmatpush1.msra.mxu0 0.0
    %4583 = vmatprep.subr.mxu0 0.0
    %4584 = vmatpush1.msra.mxu0 0.0
    %4585 = vmatprep.subr.mxu0 0.0
    %4586 = vmatpush1.msra.mxu0 0.0
    %4587 = vmatprep.subr.mxu0 0.0
    %4588 = vmatpush1.msra.mxu0 0.0
    %4589 = vmatprep.subr.mxu0 0.0
    %4590 = vmatpush1.msra.mxu0 0.0
    %4591 = vmatprep.subr.mxu0 0.0
    %4592 = vmatpush1.msra.mxu0 0.0
    %4593 = vmatprep.subr.mxu0 0.0
    %4594 = vmatpush1.msra.mxu0 0.0
    %4595 = vmatprep.subr.mxu0 0.0
    %4596 = vmatpush1.msra.mxu0 0.0
    %4597 = vmatprep.subr.mxu0 0.0
    %4598 = vmatpush1.msra.mxu0 0.0
    %4599 = vmatprep.mubr.f32.mxu0 0.0
    %4600 = vmatmul.mubr.f32.gmra.mrb[0].mxu0 %v4518
    %v4601 = vpop.f32.mrb[0].mxu0
    %v4602 = vadd.f32 0.0, %v4601
    %v4603 = vpop.f32.mrb[0].mxu0
    %4604 = vmatprep.mubr.f32.mxu0 0.0
    %4605 = vmatmul.mubr.f32.gmra.mrb[0].mxu0 %v4521
    %v4606 = vpop.f32.mrb[0].mxu0
    %v4607 = vadd.f32 0.0, %v4606
    %v4608 = vpop.f32.mrb[0].mxu0
    %4609 = vmatprep.mubr.f32.mxu0 0.0
    %4610 = vmatmul.mubr.f32.gmra.mrb[0].mxu0 %v4524
    %v4611 = vpop.f32.mrb[0].mxu0
    %v4612 = vadd.f32 0.0, %v4611
    %v4613 = vpop.f32.mrb[0].mxu0
    %4614 = vmatprep.mubr.f32.mxu0 0.0
    %4615 = vmatmul.mubr.f32.gmra.mrb[0].mxu0 %v4527
    %v4616 = vpop.f32.mrb[0].mxu0
    %v4617 = vadd.f32 0.0, %v4616
    %v4618 = vpop.f32.mrb[0].mxu0
    %4619 = vmatprep.mubr.f32.mxu0 0.0
    %4620 = vmatmul.mubr.f32.gmra.mrb[0].mxu0 %v4530
    %v4621 = vpop.f32.mrb[0].mxu0
    %v4622 = vadd.f32 0.0, %v4621
    %v4623 = vpop.f32.mrb[0].mxu0
    %4624 = vmatprep.mubr.f32.mxu0 0.0
    %4625 = vmatmul.mubr.f32.gmra.mrb[0].mxu0 %v4533
    %v4626 = vpop.f32.mrb[0].mxu0
    %v4627 = vadd.f32 0.0, %v4626
    %v4628 = vpop.f32.mrb[0].mxu0
    %4629 = vdwg.mxu0
    %4630 = vrot.lane.b32.xlu0 %v4268, 96
    %v4631 = vpop.permute.xlu0 %4630
    %4632 = vrot.lane.b32.xlu0 %v4274, 96
    %v4633 = vpop.permute.xlu0 %4632
    %4634 = vrot.lane.b32.xlu0 %v4280, 96
    %v4635 = vpop.permute.xlu0 %4634
    %4636 = vrot.lane.b32.xlu0 %v4286, 96
    %v4637 = vpop.permute.xlu0 %4636
    %4638 = vrot.lane.b32.xlu0 %v4292, 96
    %v4639 = vpop.permute.xlu0 %4638
    %4640 = vrot.lane.b32.xlu0 %v4298, 96
    %v4641 = vpop.permute.xlu0 %4640
    %4642 = vrot.lane.b32.xlu0 %v4268, 32
    %v4643 = vpop.permute.xlu0 %4642
    %4644 = vrot.lane.b32.xlu0 %v4274, 32
    %v4645 = vpop.permute.xlu0 %4644
    %4646 = vrot.lane.b32.xlu0 %v4280, 32
    %v4647 = vpop.permute.xlu0 %4646
    %4648 = vrot.lane.b32.xlu0 %v4286, 32
    %v4649 = vpop.permute.xlu0 %4648
    %4650 = vrot.lane.b32.xlu0 %v4292, 32
    %v4651 = vpop.permute.xlu0 %4650
    %4652 = vrot.lane.b32.xlu0 %v4298, 32
    %v4653 = vpop.permute.xlu0 %4652
    %v4654 = vsel %vm489, %v4631, 0
    %v4656 = vsel %vm489, %v4633, 0
    %v4658 = vsel %vm489, %v4635, 0
    %v4660 = vsel %vm489, %v4637, 0
    %v4662 = vsel %vm489, %v4639, 0
    %v4664 = vsel %vm489, %v4641, 0
    %v4666 = vsel %vm489, %v4643, 0
    %v4668 = vsel %vm489, %v4645, 0
    %v4670 = vsel %vm489, %v4647, 0
    %v4672 = vsel %vm489, %v4649, 0
    %v4674 = vsel %vm489, %v4651, 0
    %v4676 = vsel %vm489, %v4653, 0
    %4678 = vmatprep.subr.mxu0 0.0
    %4679 = vmatpush1.xpose.msra.mxu0 %v4666
    %4680 = vmatprep.subr.mxu0 0.0
    %4681 = vmatpush1.xpose.msra.mxu0 %v4668
    %4682 = vmatprep.subr.mxu0 0.0
    %4683 = vmatpush1.xpose.msra.mxu0 %v4670
    %4684 = vmatprep.subr.mxu0 0.0
    %4685 = vmatpush1.xpose.msra.mxu0 %v4672
    %4686 = vmatprep.subr.mxu0 0.0
    %4687 = vmatpush1.xpose.msra.mxu0 %v4674
    %4688 = vmatprep.subr.mxu0 0.0
    %4689 = vmatpush1.xpose.msra.mxu0 %v4676
    %4690 = vmatprep.subr.mxu0 0.0
    %4691 = vmatpush1.xpose.msra.mxu0 0.0
    %4692 = vmatprep.subr.mxu0 0.0
    %4693 = vmatpush1.xpose.msra.mxu0 0.0
    %4694 = vmatprep.subr.mxu0 0.0
    %4695 = vmatpush1.xpose.msra.mxu0 0.0
    %4696 = vmatprep.subr.mxu0 0.0
    %4697 = vmatpush1.xpose.msra.mxu0 0.0
    %4698 = vmatprep.subr.mxu0 0.0
    %4699 = vmatpush1.xpose.msra.mxu0 0.0
    %4700 = vmatprep.subr.mxu0 0.0
    %4701 = vmatpush1.xpose.msra.mxu0 0.0
    %4702 = vmatprep.subr.mxu0 0.0
    %4703 = vmatpush1.xpose.msra.mxu0 0.0
    %4704 = vmatprep.subr.mxu0 0.0
    %4705 = vmatpush1.xpose.msra.mxu0 0.0
    %4706 = vmatprep.subr.mxu0 0.0
    %4707 = vmatpush1.xpose.msra.mxu0 0.0
    %4708 = vmatprep.subr.mxu0 0.0
    %4709 = vmatpush1.xpose.msra.mxu0 0.0
    %4710 = vmatprep.subr.mxu0 0.0
    %4711 = vmatpush1.xpose.msra.mxu0 0.0
    %4712 = vmatprep.subr.mxu0 0.0
    %4713 = vmatpush1.xpose.msra.mxu0 0.0
    %4714 = vmatprep.subr.mxu0 0.0
    %4715 = vmatpush1.xpose.msra.mxu0 0.0
    %4716 = vmatprep.subr.mxu0 0.0
    %4717 = vmatpush1.xpose.msra.mxu0 0.0
    %4718 = vmatprep.subr.mxu0 0.0
    %4719 = vmatpush1.xpose.msra.mxu0 0.0
    %4720 = vmatprep.subr.mxu0 0.0
    %4721 = vmatpush1.xpose.msra.mxu0 0.0
    %4722 = vmatprep.subr.mxu0 0.0
    %4723 = vmatpush1.xpose.msra.mxu0 0.0
    %4724 = vmatprep.subr.mxu0 0.0
    %4725 = vmatpush1.xpose.msra.mxu0 0.0
    %4726 = vmatprep.subr.mxu0 0.0
    %4727 = vmatpush1.xpose.msra.mxu0 0.0
    %4728 = vmatprep.subr.mxu0 0.0
    %4729 = vmatpush1.xpose.msra.mxu0 0.0
    %4730 = vmatprep.subr.mxu0 0.0
    %4731 = vmatpush1.xpose.msra.mxu0 0.0
    %4732 = vmatprep.subr.mxu0 0.0
    %4733 = vmatpush1.xpose.msra.mxu0 0.0
    %4734 = vmatprep.subr.mxu0 0.0
    %4735 = vmatpush1.xpose.msra.mxu0 0.0
    %4736 = vmatprep.subr.mxu0 0.0
    %4737 = vmatpush1.xpose.msra.mxu0 0.0
    %4738 = vmatprep.subr.mxu0 0.0
    %4739 = vmatpush1.xpose.msra.mxu0 0.0
    %4740 = vmatprep.subr.mxu0 0.0
    %4741 = vmatpush1.xpose.msra.mxu0 0.0
    %4742 = vmatprep.mubr.f32.mxu0 0.0
    %4743 = vmatmul.mubr.f32.gmra.mrb[0].mxu0 %v4654
    %v4744 = vpop.f32.mrb[0].mxu0
    %v4745 = vadd.f32 0.0, %v4744
    %v4746 = vpop.f32.mrb[0].mxu0
    %4747 = vmatprep.mubr.f32.mxu0 0.0
    %4748 = vmatmul.mubr.f32.gmra.mrb[0].mxu0 %v4656
    %v4749 = vpop.f32.mrb[0].mxu0
    %v4750 = vadd.f32 0.0, %v4749
    %v4751 = vpop.f32.mrb[0].mxu0
    %4752 = vmatprep.mubr.f32.mxu0 0.0
    %4753 = vmatmul.mubr.f32.gmra.mrb[0].mxu0 %v4658
    %v4754 = vpop.f32.mrb[0].mxu0
    %v4755 = vadd.f32 0.0, %v4754
    %v4756 = vpop.f32.mrb[0].mxu0
    %4757 = vmatprep.mubr.f32.mxu0 0.0
    %4758 = vmatmul.mubr.f32.gmra.mrb[0].mxu0 %v4660
    %v4759 = vpop.f32.mrb[0].mxu0
    %v4760 = vadd.f32 0.0, %v4759
    %v4761 = vpop.f32.mrb[0].mxu0
    %4762 = vmatprep.mubr.f32.mxu0 0.0
    %4763 = vmatmul.mubr.f32.gmra.mrb[0].mxu0 %v4662
    %v4764 = vpop.f32.mrb[0].mxu0
    %v4765 = vadd.f32 0.0, %v4764
    %v4766 = vpop.f32.mrb[0].mxu0
    %4767 = vmatprep.mubr.f32.mxu0 0.0
    %4768 = vmatmul.mubr.f32.gmra.mrb[0].mxu0 %v4664
    %v4769 = vpop.f32.mrb[0].mxu0
    %v4770 = vadd.f32 0.0, %v4769
    %v4771 = vpop.f32.mrb[0].mxu0
    %4772 = vdwg.mxu0
    %v4773 = vmul.f32 %v4745, 0.17677669
    %v4774 = vmul.f32 %v4750, 0.17677669
    %v4775 = vmul.f32 %v4755, 0.17677669
    %v4776 = vmul.f32 %v4760, 0.17677669
    %v4777 = vmul.f32 %v4765, 0.17677669
    %v4778 = vmul.f32 %v4770, 0.17677669
    %v4779 = vadd.f32 %v4773, %v318
    %v4780 = vadd.f32 %v4774, %v319
    %v4781 = vadd.f32 %v4775, %v320
    %v4782 = vadd.f32 %v4776, %v321
    %v4783 = vadd.f32 %v4777, %v322
    %v4784 = vadd.f32 %v4778, %v323
    %v4785 = vsel %vm621, %v4779, -inf
    %4786 = vmax.xlane.f32.xlu0 %v4785
    %v4787 = vpop.xlane.xlu0 %4786
    %v4788 = vsel %vm621, %v4780, -inf
    %4789 = vmax.xlane.f32.xlu0 %v4788
    %v4790 = vpop.xlane.xlu0 %4789
    %v4791 = vsel %vm621, %v4781, -inf
    %4792 = vmax.xlane.f32.xlu0 %v4791
    %v4793 = vpop.xlane.xlu0 %4792
    %v4794 = vsel %vm621, %v4782, -inf
    %4795 = vmax.xlane.f32.xlu0 %v4794
    %v4796 = vpop.xlane.xlu0 %4795
    %v4797 = vsel %vm621, %v4783, -inf
    %4798 = vmax.xlane.f32.xlu0 %v4797
    %v4799 = vpop.xlane.xlu0 %4798
    %v4800 = vsel %vm621, %v4784, -inf
    %4801 = vmax.xlane.f32.xlu0 %v4800
    %v4802 = vpop.xlane.xlu0 %4801
    %v4803 = vsub.f32 %v4779, %v4787
    %v4804 = vsub.f32 %v4780, %v4790
    %v4805 = vsub.f32 %v4781, %v4793
    %v4806 = vsub.f32 %v4782, %v4796
    %v4807 = vsub.f32 %v4783, %v4799
    %v4808 = vsub.f32 %v4784, %v4802
    %v4809 = vmul.f32 %v4803, 1.442695
    %v4810 = vpow.pop %v4809
    %v4811 = vmul.f32 %v4804, 1.442695
    %v4812 = vpow.pop %v4811
    %v4813 = vmul.f32 %v4805, 1.442695
    %v4814 = vpow.pop %v4813
    %v4815 = vmul.f32 %v4806, 1.442695
    %v4816 = vpow.pop %v4815
    %v4817 = vmul.f32 %v4807, 1.442695
    %v4818 = vpow.pop %v4817
    %v4819 = vmul.f32 %v4808, 1.442695
    %v4820 = vpow.pop %v4819
    %v4821 = vsel %vm621, %v4810, 0.0
    %4822 = vadd.xlane.f32.xlu0 %v4821
    %v4823 = vpop.xlane.xlu0 %4822
    %v4824 = vsel %vm621, %v4812, 0.0
    %4825 = vadd.xlane.f32.xlu0 %v4824
    %v4826 = vpop.xlane.xlu0 %4825
    %v4827 = vsel %vm621, %v4814, 0.0
    %4828 = vadd.xlane.f32.xlu0 %v4827
    %v4829 = vpop.xlane.xlu0 %4828
    %v4830 = vsel %vm621, %v4816, 0.0
    %4831 = vadd.xlane.f32.xlu0 %v4830
    %v4832 = vpop.xlane.xlu0 %4831
    %v4833 = vsel %vm621, %v4818, 0.0
    %4834 = vadd.xlane.f32.xlu0 %v4833
    %v4835 = vpop.xlane.xlu0 %4834
    %v4836 = vsel %vm621, %v4820, 0.0
    %4837 = vadd.xlane.f32.xlu0 %v4836
    %v4838 = vpop.xlane.xlu0 %4837
    %v4839 = vrcp.pop %v4823
    %v4840 = vrcp.pop %v4826
    %v4841 = vrcp.pop %v4829
    %v4842 = vrcp.pop %v4832
    %v4843 = vrcp.pop %v4835
    %v4844 = vrcp.pop %v4838
    %v4845 = vmul.f32 %v4810, %v4839
    %v4846 = vmul.f32 %v4812, %v4840
    %v4847 = vmul.f32 %v4814, %v4841
    %v4848 = vmul.f32 %v4816, %v4842
    %v4849 = vmul.f32 %v4818, %v4843
    %v4850 = vmul.f32 %v4820, %v4844
    %4857 = vrot.lane.b32.xlu0 %v4270, 96
    %v4858 = vpop.permute.xlu0 %4857
    %4859 = vrot.lane.b32.xlu0 %v4276, 96
    %v4860 = vpop.permute.xlu0 %4859
    %4861 = vrot.lane.b32.xlu0 %v4282, 96
    %v4862 = vpop.permute.xlu0 %4861
    %4863 = vrot.lane.b32.xlu0 %v4288, 96
    %v4864 = vpop.permute.xlu0 %4863
    %4865 = vrot.lane.b32.xlu0 %v4294, 96
    %v4866 = vpop.permute.xlu0 %4865
    %4867 = vrot.lane.b32.xlu0 %v4300, 96
    %v4868 = vpop.permute.xlu0 %4867
    %v4876 = vsel %vm621, %v4845, 0
    %v4879 = vsel %vm621, %v4846, 0
    %v4882 = vsel %vm621, %v4847, 0
    %v4885 = vsel %vm621, %v4848, 0
    %v4888 = vsel %vm621, %v4849, 0
    %v4891 = vsel %vm621, %v4850, 0
    %4893 = vmatprep.subr.mxu0 0.0
    %4894 = vmatpush1.msra.mxu0 %v4858
    %4895 = vmatprep.subr.mxu0 0.0
    %4896 = vmatpush1.msra.mxu0 %v4860
    %4897 = vmatprep.subr.mxu0 0.0
    %4898 = vmatpush1.msra.mxu0 %v4862
    %4899 = vmatprep.subr.mxu0 0.0
    %4900 = vmatpush1.msra.mxu0 %v4864
    %4901 = vmatprep.subr.mxu0 0.0
    %4902 = vmatpush1.msra.mxu0 %v4866
    %4903 = vmatprep.subr.mxu0 0.0
    %4904 = vmatpush1.msra.mxu0 %v4868
    %4905 = vmatprep.subr.mxu0 0.0
    %4906 = vmatpush1.msra.mxu0 0.0
    %4907 = vmatprep.subr.mxu0 0.0
    %4908 = vmatpush1.msra.mxu0 0.0
    %4909 = vmatprep.subr.mxu0 0.0
    %4910 = vmatpush1.msra.mxu0 0.0
    %4911 = vmatprep.subr.mxu0 0.0
    %4912 = vmatpush1.msra.mxu0 0.0
    %4913 = vmatprep.subr.mxu0 0.0
    %4914 = vmatpush1.msra.mxu0 0.0
    %4915 = vmatprep.subr.mxu0 0.0
    %4916 = vmatpush1.msra.mxu0 0.0
    %4917 = vmatprep.subr.mxu0 0.0
    %4918 = vmatpush1.msra.mxu0 0.0
    %4919 = vmatprep.subr.mxu0 0.0
    %4920 = vmatpush1.msra.mxu0 0.0
    %4921 = vmatprep.subr.mxu0 0.0
    %4922 = vmatpush1.msra.mxu0 0.0
    %4923 = vmatprep.subr.mxu0 0.0
    %4924 = vmatpush1.msra.mxu0 0.0
    %4925 = vmatprep.subr.mxu0 0.0
    %4926 = vmatpush1.msra.mxu0 0.0
    %4927 = vmatprep.subr.mxu0 0.0
    %4928 = vmatpush1.msra.mxu0 0.0
    %4929 = vmatprep.subr.mxu0 0.0
    %4930 = vmatpush1.msra.mxu0 0.0
    %4931 = vmatprep.subr.mxu0 0.0
    %4932 = vmatpush1.msra.mxu0 0.0
    %4933 = vmatprep.subr.mxu0 0.0
    %4934 = vmatpush1.msra.mxu0 0.0
    %4935 = vmatprep.subr.mxu0 0.0
    %4936 = vmatpush1.msra.mxu0 0.0
    %4937 = vmatprep.subr.mxu0 0.0
    %4938 = vmatpush1.msra.mxu0 0.0
    %4939 = vmatprep.subr.mxu0 0.0
    %4940 = vmatpush1.msra.mxu0 0.0
    %4941 = vmatprep.subr.mxu0 0.0
    %4942 = vmatpush1.msra.mxu0 0.0
    %4943 = vmatprep.subr.mxu0 0.0
    %4944 = vmatpush1.msra.mxu0 0.0
    %4945 = vmatprep.subr.mxu0 0.0
    %4946 = vmatpush1.msra.mxu0 0.0
    %4947 = vmatprep.subr.mxu0 0.0
    %4948 = vmatpush1.msra.mxu0 0.0
    %4949 = vmatprep.subr.mxu0 0.0
    %4950 = vmatpush1.msra.mxu0 0.0
    %4951 = vmatprep.subr.mxu0 0.0
    %4952 = vmatpush1.msra.mxu0 0.0
    %4953 = vmatprep.subr.mxu0 0.0
    %4954 = vmatpush1.msra.mxu0 0.0
    %4955 = vmatprep.subr.mxu0 0.0
    %4956 = vmatpush1.msra.mxu0 0.0
    %4957 = vmatprep.mubr.f32.mxu0 0.0
    %4958 = vmatmul.mubr.f32.gmra.mrb[0].mxu0 %v4876
    %v4959 = vpop.f32.mrb[0].mxu0
    %v4960 = vadd.f32 0.0, %v4959
    %v4961 = vpop.f32.mrb[0].mxu0
    %4962 = vmatprep.mubr.f32.mxu0 0.0
    %4963 = vmatmul.mubr.f32.gmra.mrb[0].mxu0 %v4879
    %v4964 = vpop.f32.mrb[0].mxu0
    %v4965 = vadd.f32 0.0, %v4964
    %v4966 = vpop.f32.mrb[0].mxu0
    %4967 = vmatprep.mubr.f32.mxu0 0.0
    %4968 = vmatmul.mubr.f32.gmra.mrb[0].mxu0 %v4882
    %v4969 = vpop.f32.mrb[0].mxu0
    %v4970 = vadd.f32 0.0, %v4969
    %v4971 = vpop.f32.mrb[0].mxu0
    %4972 = vmatprep.mubr.f32.mxu0 0.0
    %4973 = vmatmul.mubr.f32.gmra.mrb[0].mxu0 %v4885
    %v4974 = vpop.f32.mrb[0].mxu0
    %v4975 = vadd.f32 0.0, %v4974
    %v4976 = vpop.f32.mrb[0].mxu0
    %4977 = vmatprep.mubr.f32.mxu0 0.0
    %4978 = vmatmul.mubr.f32.gmra.mrb[0].mxu0 %v4888
    %v4979 = vpop.f32.mrb[0].mxu0
    %v4980 = vadd.f32 0.0, %v4979
    %v4981 = vpop.f32.mrb[0].mxu0
    %4982 = vmatprep.mubr.f32.mxu0 0.0
    %4983 = vmatmul.mubr.f32.gmra.mrb[0].mxu0 %v4891
    %v4984 = vpop.f32.mrb[0].mxu0
    %v4985 = vadd.f32 0.0, %v4984
    %v4986 = vpop.f32.mrb[0].mxu0
    %4987 = vdwg.mxu0
    %4994 = vrot.lane.b32.xlu0 %v4960, 32
    %v4995 = vpop.permute.xlu0 %4994
    %4996 = vrot.lane.b32.xlu0 %v4965, 32
    %v4997 = vpop.permute.xlu0 %4996
    %4998 = vrot.lane.b32.xlu0 %v4970, 32
    %v4999 = vpop.permute.xlu0 %4998
    %5000 = vrot.lane.b32.xlu0 %v4975, 32
    %v5001 = vpop.permute.xlu0 %5000
    %5002 = vrot.lane.b32.xlu0 %v4980, 32
    %v5003 = vpop.permute.xlu0 %5002
    %5004 = vrot.lane.b32.xlu0 %v4985, 32
    %v5005 = vpop.permute.xlu0 %5004
    %v5012 = vsel %vm489, %v4602, %v4995
    %v5013 = vsel %vm489, %v4607, %v4997
    %v5014 = vsel %vm489, %v4612, %v4999
    %v5015 = vsel %vm489, %v4617, %v5001
    %v5016 = vsel %vm489, %v4622, %v5003
    %v5017 = vsel %vm489, %v4627, %v5005
    %s5018 = scalar_lea.vmem %s4, 64
    %v5019 = vld [vmem:[%s5018] sm:$0xff]
    %v5020 = vld [vmem:[%s5018 + $0x8] sm:$0xff]
    %v5021 = vld [vmem:[%s5018 + $0x10] sm:$0xff]
    %v5022 = vld [vmem:[%s5018 + $0x18] sm:$0xff]
    %v5023 = vld [vmem:[%s5018 + $0x20] sm:$0xff]
    %v5024 = vld [vmem:[%s5018 + $0x28] sm:$0xff]
    %v5025 = vld [vmem:[%s5018 + $0x30] sm:$0xff]
    %v5026 = vld [vmem:[%s5018 + $0x38] sm:$0xff]
    %s5027 = scalar_lea.vmem %s5, 1
    %v5028 = vld [vmem:[%s5027] sm:$0x1]
    %v5030 = vlaneseq
    %v5031 = vshrl.u32 %v5030, 7
    %v5032 = vsub.s32 0, %v5031
    %v5033 = vrot.slane %v5028, %v5032
    %v5036 = vsel %vm107, %v5012, 0
    %v5039 = vsel %vm107, %v5013, 0
    %v5042 = vsel %vm107, %v5014, 0
    %v5045 = vsel %vm107, %v5015, 0
    %v5048 = vsel %vm107, %v5016, 0
    %v5051 = vsel %vm107, %v5017, 0
    %5053 = vmatprep.subr.mxu0 0.0
    %5054 = vmatpush1.msra.mxu0 %v5019
    %5055 = vmatprep.subr.mxu0 0.0
    %5056 = vmatpush1.msra.mxu0 %v5020
    %5057 = vmatprep.subr.mxu0 0.0
    %5058 = vmatpush1.msra.mxu0 %v5021
    %5059 = vmatprep.subr.mxu0 0.0
    %5060 = vmatpush1.msra.mxu0 %v5022
    %5061 = vmatprep.subr.mxu0 0.0
    %5062 = vmatpush1.msra.mxu0 %v5023
    %5063 = vmatprep.subr.mxu0 0.0
    %5064 = vmatpush1.msra.mxu0 %v5024
    %5065 = vmatprep.subr.mxu0 0.0
    %5066 = vmatpush1.msra.mxu0 %v5025
    %5067 = vmatprep.subr.mxu0 0.0
    %5068 = vmatpush1.msra.mxu0 %v5026
    %5069 = vmatprep.subr.mxu0 0.0
    %5070 = vmatpush1.msra.mxu0 0.0
    %5071 = vmatprep.subr.mxu0 0.0
    %5072 = vmatpush1.msra.mxu0 0.0
    %5073 = vmatprep.subr.mxu0 0.0
    %5074 = vmatpush1.msra.mxu0 0.0
    %5075 = vmatprep.subr.mxu0 0.0
    %5076 = vmatpush1.msra.mxu0 0.0
    %5077 = vmatprep.subr.mxu0 0.0
    %5078 = vmatpush1.msra.mxu0 0.0
    %5079 = vmatprep.subr.mxu0 0.0
    %5080 = vmatpush1.msra.mxu0 0.0
    %5081 = vmatprep.subr.mxu0 0.0
    %5082 = vmatpush1.msra.mxu0 0.0
    %5083 = vmatprep.subr.mxu0 0.0
    %5084 = vmatpush1.msra.mxu0 0.0
    %5085 = vmatprep.subr.mxu0 0.0
    %5086 = vmatpush1.msra.mxu0 0.0
    %5087 = vmatprep.subr.mxu0 0.0
    %5088 = vmatpush1.msra.mxu0 0.0
    %5089 = vmatprep.subr.mxu0 0.0
    %5090 = vmatpush1.msra.mxu0 0.0
    %5091 = vmatprep.subr.mxu0 0.0
    %5092 = vmatpush1.msra.mxu0 0.0
    %5093 = vmatprep.subr.mxu0 0.0
    %5094 = vmatpush1.msra.mxu0 0.0
    %5095 = vmatprep.subr.mxu0 0.0
    %5096 = vmatpush1.msra.mxu0 0.0
    %5097 = vmatprep.subr.mxu0 0.0
    %5098 = vmatpush1.msra.mxu0 0.0
    %5099 = vmatprep.subr.mxu0 0.0
    %5100 = vmatpush1.msra.mxu0 0.0
    %5101 = vmatprep.subr.mxu0 0.0
    %5102 = vmatpush1.msra.mxu0 0.0
    %5103 = vmatprep.subr.mxu0 0.0
    %5104 = vmatpush1.msra.mxu0 0.0
    %5105 = vmatprep.subr.mxu0 0.0
    %5106 = vmatpush1.msra.mxu0 0.0
    %5107 = vmatprep.subr.mxu0 0.0
    %5108 = vmatpush1.msra.mxu0 0.0
    %5109 = vmatprep.subr.mxu0 0.0
    %5110 = vmatpush1.msra.mxu0 0.0
    %5111 = vmatprep.subr.mxu0 0.0
    %5112 = vmatpush1.msra.mxu0 0.0
    %5113 = vmatprep.subr.mxu0 0.0
    %5114 = vmatpush1.msra.mxu0 0.0
    %5115 = vmatprep.subr.mxu0 0.0
    %5116 = vmatpush1.msra.mxu0 0.0
    %5117 = vmatprep.mubr.f32.mxu0 0.0
    %5118 = vmatmul.mubr.f32.gmra.mrb[0].mxu0 %v5036
    %v5119 = vpop.f32.mrb[0].mxu0
    %v5120 = vadd.f32 %v5033, %v5119
    %v5121 = vpop.f32.mrb[0].mxu0
    %5122 = vmatprep.mubr.f32.mxu0 0.0
    %5123 = vmatmul.mubr.f32.gmra.mrb[0].mxu0 %v5039
    %v5124 = vpop.f32.mrb[0].mxu0
    %v5125 = vadd.f32 %v5033, %v5124
    %v5126 = vpop.f32.mrb[0].mxu0
    %5127 = vmatprep.mubr.f32.mxu0 0.0
    %5128 = vmatmul.mubr.f32.gmra.mrb[0].mxu0 %v5042
    %v5129 = vpop.f32.mrb[0].mxu0
    %v5130 = vadd.f32 %v5033, %v5129
    %v5131 = vpop.f32.mrb[0].mxu0
    %5132 = vmatprep.mubr.f32.mxu0 0.0
    %5133 = vmatmul.mubr.f32.gmra.mrb[0].mxu0 %v5045
    %v5134 = vpop.f32.mrb[0].mxu0
    %v5135 = vadd.f32 %v5033, %v5134
    %v5136 = vpop.f32.mrb[0].mxu0
    %5137 = vmatprep.mubr.f32.mxu0 0.0
    %5138 = vmatmul.mubr.f32.gmra.mrb[0].mxu0 %v5048
    %v5139 = vpop.f32.mrb[0].mxu0
    %v5140 = vadd.f32 %v5033, %v5139
    %v5141 = vpop.f32.mrb[0].mxu0
    %5142 = vmatprep.mubr.f32.mxu0 0.0
    %5143 = vmatmul.mubr.f32.gmra.mrb[0].mxu0 %v5051
    %v5144 = vpop.f32.mrb[0].mxu0
    %v5145 = vadd.f32 %v5033, %v5144
    %v5146 = vpop.f32.mrb[0].mxu0
    %5147 = vdwg.mxu0
    %v5148 = vadd.f32 %v4147, %v5120
    %v5149 = vadd.f32 %v4148, %v5125
    %v5150 = vadd.f32 %v4149, %v5130
    %v5151 = vadd.f32 %v4150, %v5135
    %v5152 = vadd.f32 %v4151, %v5140
    %v5153 = vadd.f32 %v4152, %v5145
    %s5154 = scalar_lea.vmem %s6, 1
    %v5155 = vld [vmem:[%s5154] sm:$0x1]
    %s5156 = scalar_lea.vmem %s7, 1
    %v5157 = vld [vmem:[%s5156] sm:$0x1]
    %v5158 = vsel %vm107, %v5148, 0.0
    %5159 = vadd.xlane.f32.xlu0 %v5158
    %v5160 = vpop.xlane.xlu0 %5159
    %v5161 = vsel %vm107, %v5149, 0.0
    %5162 = vadd.xlane.f32.xlu0 %v5161
    %v5163 = vpop.xlane.xlu0 %5162
    %v5164 = vsel %vm107, %v5150, 0.0
    %5165 = vadd.xlane.f32.xlu0 %v5164
    %v5166 = vpop.xlane.xlu0 %5165
    %v5167 = vsel %vm107, %v5151, 0.0
    %5168 = vadd.xlane.f32.xlu0 %v5167
    %v5169 = vpop.xlane.xlu0 %5168
    %v5170 = vsel %vm107, %v5152, 0.0
    %5171 = vadd.xlane.f32.xlu0 %v5170
    %v5172 = vpop.xlane.xlu0 %5171
    %v5173 = vsel %vm107, %v5153, 0.0
    %5174 = vadd.xlane.f32.xlu0 %v5173
    %v5175 = vpop.xlane.xlu0 %5174
    %v5176 = vmul.f32 %v5160, %v1343
    %v5177 = vmul.f32 %v5163, %v1343
    %v5178 = vmul.f32 %v5166, %v1343
    %v5179 = vmul.f32 %v5169, %v1343
    %v5180 = vmul.f32 %v5172, %v1343
    %v5181 = vmul.f32 %v5175, %v1343
    %v5182 = vsub.f32 %v5148, %v5176
    %v5183 = vsub.f32 %v5149, %v5177
    %v5184 = vsub.f32 %v5150, %v5178
    %v5185 = vsub.f32 %v5151, %v5179
    %v5186 = vsub.f32 %v5152, %v5180
    %v5187 = vsub.f32 %v5153, %v5181
    %v5188 = vmul.f32 %v5182, %v5182
    %v5189 = vmul.f32 %v5183, %v5183
    %v5190 = vmul.f32 %v5184, %v5184
    %v5191 = vmul.f32 %v5185, %v5185
    %v5192 = vmul.f32 %v5186, %v5186
    %v5193 = vmul.f32 %v5187, %v5187
    %v5194 = vsel %vm107, %v5188, 0.0
    %5195 = vadd.xlane.f32.xlu0 %v5194
    %v5196 = vpop.xlane.xlu0 %5195
    %v5197 = vsel %vm107, %v5189, 0.0
    %5198 = vadd.xlane.f32.xlu0 %v5197
    %v5199 = vpop.xlane.xlu0 %5198
    %v5200 = vsel %vm107, %v5190, 0.0
    %5201 = vadd.xlane.f32.xlu0 %v5200
    %v5202 = vpop.xlane.xlu0 %5201
    %v5203 = vsel %vm107, %v5191, 0.0
    %5204 = vadd.xlane.f32.xlu0 %v5203
    %v5205 = vpop.xlane.xlu0 %5204
    %v5206 = vsel %vm107, %v5192, 0.0
    %5207 = vadd.xlane.f32.xlu0 %v5206
    %v5208 = vpop.xlane.xlu0 %5207
    %v5209 = vsel %vm107, %v5193, 0.0
    %5210 = vadd.xlane.f32.xlu0 %v5209
    %v5211 = vpop.xlane.xlu0 %5210
    %v5212 = vmul.f32 %v5196, %v1343
    %v5213 = vmul.f32 %v5199, %v1343
    %v5214 = vmul.f32 %v5202, %v1343
    %v5215 = vmul.f32 %v5205, %v1343
    %v5216 = vmul.f32 %v5208, %v1343
    %v5217 = vmul.f32 %v5211, %v1343
    %v5218 = vadd.f32 %v5212, 1e-05
    %v5219 = vadd.f32 %v5213, 1e-05
    %v5220 = vadd.f32 %v5214, 1e-05
    %v5221 = vadd.f32 %v5215, 1e-05
    %v5222 = vadd.f32 %v5216, 1e-05
    %v5223 = vadd.f32 %v5217, 1e-05
    %v5224 = vrsqrt.pop %v5218
    %v5225 = vrsqrt.pop %v5219
    %v5226 = vrsqrt.pop %v5220
    %v5227 = vrsqrt.pop %v5221
    %v5228 = vrsqrt.pop %v5222
    %v5229 = vrsqrt.pop %v5223
    %v5230 = vmul.f32 %v5182, %v5224
    %v5231 = vmul.f32 %v5183, %v5225
    %v5232 = vmul.f32 %v5184, %v5226
    %v5233 = vmul.f32 %v5185, %v5227
    %v5234 = vmul.f32 %v5186, %v5228
    %v5235 = vmul.f32 %v5187, %v5229
    %v5237 = vlaneseq
    %v5238 = vshrl.u32 %v5237, 7
    %v5239 = vsub.s32 0, %v5238
    %v5240 = vrot.slane %v5155, %v5239
    %v5242 = vmul.f32 %v5230, %v5240
    %v5243 = vmul.f32 %v5231, %v5240
    %v5244 = vmul.f32 %v5232, %v5240
    %v5245 = vmul.f32 %v5233, %v5240
    %v5246 = vmul.f32 %v5234, %v5240
    %v5247 = vmul.f32 %v5235, %v5240
    %v5249 = vlaneseq
    %v5250 = vshrl.u32 %v5249, 7
    %v5251 = vsub.s32 0, %v5250
    %v5252 = vrot.slane %v5157, %v5251
    %v5254 = vadd.f32 %v5242, %v5252
    %v5255 = vadd.f32 %v5243, %v5252
    %v5256 = vadd.f32 %v5244, %v5252
    %v5257 = vadd.f32 %v5245, %v5252
    %v5258 = vadd.f32 %v5246, %v5252
    %v5259 = vadd.f32 %v5247, %v5252
    %v5260 = vpack.c.bf16 %v5255, %v5254
    %v5261 = vpack.c.bf16 %v5257, %v5256
    %v5262 = vpack.c.bf16 %v5259, %v5258
    %s5263 = scalar_lea.vmem %s8, 512
    %v5264 = vld [vmem:[%s5263] sm:$0xff]
    %v5265 = vld [vmem:[%s5263 + $0x8] sm:$0xff]
    %v5266 = vld [vmem:[%s5263 + $0x10] sm:$0xff]
    %v5267 = vld [vmem:[%s5263 + $0x18] sm:$0xff]
    %v5268 = vld [vmem:[%s5263 + $0x20] sm:$0xff]
    %v5269 = vld [vmem:[%s5263 + $0x28] sm:$0xff]
    %v5270 = vld [vmem:[%s5263 + $0x30] sm:$0xff]
    %v5271 = vld [vmem:[%s5263 + $0x38] sm:$0xff]
    %v5272 = vld [vmem:[%s5263 + $0x40] sm:$0xff]
    %v5273 = vld [vmem:[%s5263 + $0x48] sm:$0xff]
    %v5274 = vld [vmem:[%s5263 + $0x50] sm:$0xff]
    %v5275 = vld [vmem:[%s5263 + $0x58] sm:$0xff]
    %v5276 = vld [vmem:[%s5263 + $0x60] sm:$0xff]
    %v5277 = vld [vmem:[%s5263 + $0x68] sm:$0xff]
    %v5278 = vld [vmem:[%s5263 + $0x70] sm:$0xff]
    %v5279 = vld [vmem:[%s5263 + $0x78] sm:$0xff]
    %v5280 = vld [vmem:[%s5263 + $0x80] sm:$0xff]
    %v5281 = vld [vmem:[%s5263 + $0x88] sm:$0xff]
    %v5282 = vld [vmem:[%s5263 + $0x90] sm:$0xff]
    %v5283 = vld [vmem:[%s5263 + $0x98] sm:$0xff]
    %v5284 = vld [vmem:[%s5263 + $0xa0] sm:$0xff]
    %v5285 = vld [vmem:[%s5263 + $0xa8] sm:$0xff]
    %v5286 = vld [vmem:[%s5263 + $0xb0] sm:$0xff]
    %v5287 = vld [vmem:[%s5263 + $0xb8] sm:$0xff]
    %v5288 = vld [vmem:[%s5263 + $0xc0] sm:$0xff]
    %v5289 = vld [vmem:[%s5263 + $0xc8] sm:$0xff]
    %v5290 = vld [vmem:[%s5263 + $0xd0] sm:$0xff]
    %v5291 = vld [vmem:[%s5263 + $0xd8] sm:$0xff]
    %v5292 = vld [vmem:[%s5263 + $0xe0] sm:$0xff]
    %v5293 = vld [vmem:[%s5263 + $0xe8] sm:$0xff]
    %v5294 = vld [vmem:[%s5263 + $0xf0] sm:$0xff]
    %v5295 = vld [vmem:[%s5263 + $0xf8] sm:$0xff]
    %v5296 = vld [vmem:[%s5263 + $0x100] sm:$0xff]
    %v5297 = vld [vmem:[%s5263 + $0x108] sm:$0xff]
    %v5298 = vld [vmem:[%s5263 + $0x110] sm:$0xff]
    %v5299 = vld [vmem:[%s5263 + $0x118] sm:$0xff]
    %v5300 = vld [vmem:[%s5263 + $0x120] sm:$0xff]
    %v5301 = vld [vmem:[%s5263 + $0x128] sm:$0xff]
    %v5302 = vld [vmem:[%s5263 + $0x130] sm:$0xff]
    %v5303 = vld [vmem:[%s5263 + $0x138] sm:$0xff]
    %v5304 = vld [vmem:[%s5263 + $0x140] sm:$0xff]
    %v5305 = vld [vmem:[%s5263 + $0x148] sm:$0xff]
    %v5306 = vld [vmem:[%s5263 + $0x150] sm:$0xff]
    %v5307 = vld [vmem:[%s5263 + $0x158] sm:$0xff]
    %v5308 = vld [vmem:[%s5263 + $0x160] sm:$0xff]
    %v5309 = vld [vmem:[%s5263 + $0x168] sm:$0xff]
    %v5310 = vld [vmem:[%s5263 + $0x170] sm:$0xff]
    %v5311 = vld [vmem:[%s5263 + $0x178] sm:$0xff]
    %v5312 = vld [vmem:[%s5263 + $0x180] sm:$0xff]
    %v5313 = vld [vmem:[%s5263 + $0x188] sm:$0xff]
    %v5314 = vld [vmem:[%s5263 + $0x190] sm:$0xff]
    %v5315 = vld [vmem:[%s5263 + $0x198] sm:$0xff]
    %v5316 = vld [vmem:[%s5263 + $0x1a0] sm:$0xff]
    %v5317 = vld [vmem:[%s5263 + $0x1a8] sm:$0xff]
    %v5318 = vld [vmem:[%s5263 + $0x1b0] sm:$0xff]
    %v5319 = vld [vmem:[%s5263 + $0x1b8] sm:$0xff]
    %v5320 = vld [vmem:[%s5263 + $0x1c0] sm:$0xff]
    %v5321 = vld [vmem:[%s5263 + $0x1c8] sm:$0xff]
    %v5322 = vld [vmem:[%s5263 + $0x1d0] sm:$0xff]
    %v5323 = vld [vmem:[%s5263 + $0x1d8] sm:$0xff]
    %v5324 = vld [vmem:[%s5263 + $0x1e0] sm:$0xff]
    %v5325 = vld [vmem:[%s5263 + $0x1e8] sm:$0xff]
    %v5326 = vld [vmem:[%s5263 + $0x1f0] sm:$0xff]
    %v5327 = vld [vmem:[%s5263 + $0x1f8] sm:$0xff]
    %s5328 = scalar_lea.vmem %s9, 16
    %v5329 = vld [vmem:[%s5328] sm:$0xff]
    %v5330 = vld [vmem:[%s5328 + $0x8] sm:$0xff]
    %v5333 = vlaneseq
    %v5334 = vshrl.u32 %v5333, 7
    %v5335 = vsub.s32 0, %v5334
    %v5336 = vrot.slane %v5329, %v5335
    %v5337 = vlaneseq
    %v5338 = vshrl.u32 %v5337, 7
    %v5339 = vsub.s32 1, %v5338
    %v5340 = vrot.slane %v5329, %v5339
    %v5341 = vlaneseq
    %v5342 = vshrl.u32 %v5341, 7
    %v5343 = vsub.s32 2, %v5342
    %v5344 = vrot.slane %v5329, %v5343
    %v5345 = vlaneseq
    %v5346 = vshrl.u32 %v5345, 7
    %v5347 = vsub.s32 3, %v5346
    %v5348 = vrot.slane %v5329, %v5347
    %v5349 = vlaneseq
    %v5350 = vshrl.u32 %v5349, 7
    %v5351 = vsub.s32 4, %v5350
    %v5352 = vrot.slane %v5329, %v5351
    %v5353 = vlaneseq
    %v5354 = vshrl.u32 %v5353, 7
    %v5355 = vsub.s32 5, %v5354
    %v5356 = vrot.slane %v5329, %v5355
    %v5357 = vlaneseq
    %v5358 = vshrl.u32 %v5357, 7
    %v5359 = vsub.s32 6, %v5358
    %v5360 = vrot.slane %v5329, %v5359
    %v5361 = vlaneseq
    %v5362 = vshrl.u32 %v5361, 7
    %v5363 = vsub.s32 7, %v5362
    %v5364 = vrot.slane %v5329, %v5363
    %v5365 = vlaneseq
    %v5366 = vshrl.u32 %v5365, 7
    %v5367 = vsub.s32 0, %v5366
    %v5368 = vrot.slane %v5330, %v5367
    %v5369 = vlaneseq
    %v5370 = vshrl.u32 %v5369, 7
    %v5371 = vsub.s32 1, %v5370
    %v5372 = vrot.slane %v5330, %v5371
    %v5373 = vlaneseq
    %v5374 = vshrl.u32 %v5373, 7
    %v5375 = vsub.s32 2, %v5374
    %v5376 = vrot.slane %v5330, %v5375
    %v5377 = vlaneseq
    %v5378 = vshrl.u32 %v5377, 7
    %v5379 = vsub.s32 3, %v5378
    %v5380 = vrot.slane %v5330, %v5379
    %v5381 = vlaneseq
    %v5382 = vshrl.u32 %v5381, 7
    %v5383 = vsub.s32 4, %v5382
    %v5384 = vrot.slane %v5330, %v5383
    %v5385 = vlaneseq
    %v5386 = vshrl.u32 %v5385, 7
    %v5387 = vsub.s32 5, %v5386
    %v5388 = vrot.slane %v5330, %v5387
    %v5389 = vlaneseq
    %v5390 = vshrl.u32 %v5389, 7
    %v5391 = vsub.s32 6, %v5390
    %v5392 = vrot.slane %v5330, %v5391
    %v5393 = vlaneseq
    %v5394 = vshrl.u32 %v5393, 7
    %v5395 = vsub.s32 7, %v5394
    %v5396 = vrot.slane %v5330, %v5395
    %v5477 = vunpack.c.l.b16 %v5264
    %v5478 = vunpack.c.h.b16 %v5264
    %v5479 = vunpack.c.l.b16 %v5265
    %v5480 = vunpack.c.h.b16 %v5265
    %v5481 = vunpack.c.l.b16 %v5266
    %v5482 = vunpack.c.h.b16 %v5266
    %v5483 = vunpack.c.l.b16 %v5267
    %v5484 = vunpack.c.h.b16 %v5267
    %v5485 = vunpack.c.l.b16 %v5268
    %v5486 = vunpack.c.h.b16 %v5268
    %v5487 = vunpack.c.l.b16 %v5269
    %v5488 = vunpack.c.h.b16 %v5269
    %v5489 = vunpack.c.l.b16 %v5270
    %v5490 = vunpack.c.h.b16 %v5270
    %v5491 = vunpack.c.l.b16 %v5271
    %v5492 = vunpack.c.h.b16 %v5271
    %v5493 = vunpack.c.l.b16 %v5272
    %v5494 = vunpack.c.h.b16 %v5272
    %v5495 = vunpack.c.l.b16 %v5273
    %v5496 = vunpack.c.h.b16 %v5273
    %v5497 = vunpack.c.l.b16 %v5274
    %v5498 = vunpack.c.h.b16 %v5274
    %v5499 = vunpack.c.l.b16 %v5275
    %v5500 = vunpack.c.h.b16 %v5275
    %v5501 = vunpack.c.l.b16 %v5276
    %v5502 = vunpack.c.h.b16 %v5276
    %v5503 = vunpack.c.l.b16 %v5277
    %v5504 = vunpack.c.h.b16 %v5277
    %v5505 = vunpack.c.l.b16 %v5278
    %v5506 = vunpack.c.h.b16 %v5278
    %v5507 = vunpack.c.l.b16 %v5279
    %v5508 = vunpack.c.h.b16 %v5279
    %v5509 = vunpack.c.l.b16 %v5280
    %v5510 = vunpack.c.h.b16 %v5280
    %v5511 = vunpack.c.l.b16 %v5281
    %v5512 = vunpack.c.h.b16 %v5281
    %v5513 = vunpack.c.l.b16 %v5282
    %v5514 = vunpack.c.h.b16 %v5282
    %v5515 = vunpack.c.l.b16 %v5283
    %v5516 = vunpack.c.h.b16 %v5283
    %v5517 = vunpack.c.l.b16 %v5284
    %v5518 = vunpack.c.h.b16 %v5284
    %v5519 = vunpack.c.l.b16 %v5285
    %v5520 = vunpack.c.h.b16 %v5285
    %v5521 = vunpack.c.l.b16 %v5286
    %v5522 = vunpack.c.h.b16 %v5286
    %v5523 = vunpack.c.l.b16 %v5287
    %v5524 = vunpack.c.h.b16 %v5287
    %v5525 = vunpack.c.l.b16 %v5288
    %v5526 = vunpack.c.h.b16 %v5288
    %v5527 = vunpack.c.l.b16 %v5289
    %v5528 = vunpack.c.h.b16 %v5289
    %v5529 = vunpack.c.l.b16 %v5290
    %v5530 = vunpack.c.h.b16 %v5290
    %v5531 = vunpack.c.l.b16 %v5291
    %v5532 = vunpack.c.h.b16 %v5291
    %v5533 = vunpack.c.l.b16 %v5292
    %v5534 = vunpack.c.h.b16 %v5292
    %v5535 = vunpack.c.l.b16 %v5293
    %v5536 = vunpack.c.h.b16 %v5293
    %v5537 = vunpack.c.l.b16 %v5294
    %v5538 = vunpack.c.h.b16 %v5294
    %v5539 = vunpack.c.l.b16 %v5295
    %v5540 = vunpack.c.h.b16 %v5295
    %v5541 = vunpack.c.l.b16 %v5296
    %v5542 = vunpack.c.h.b16 %v5296
    %v5543 = vunpack.c.l.b16 %v5297
    %v5544 = vunpack.c.h.b16 %v5297
    %v5545 = vunpack.c.l.b16 %v5298
    %v5546 = vunpack.c.h.b16 %v5298
    %v5547 = vunpack.c.l.b16 %v5299
    %v5548 = vunpack.c.h.b16 %v5299
    %v5549 = vunpack.c.l.b16 %v5300
    %v5550 = vunpack.c.h.b16 %v5300
    %v5551 = vunpack.c.l.b16 %v5301
    %v5552 = vunpack.c.h.b16 %v5301
    %v5553 = vunpack.c.l.b16 %v5302
    %v5554 = vunpack.c.h.b16 %v5302
    %v5555 = vunpack.c.l.b16 %v5303
    %v5556 = vunpack.c.h.b16 %v5303
    %v5557 = vunpack.c.l.b16 %v5304
    %v5558 = vunpack.c.h.b16 %v5304
    %v5559 = vunpack.c.l.b16 %v5305
    %v5560 = vunpack.c.h.b16 %v5305
    %v5561 = vunpack.c.l.b16 %v5306
    %v5562 = vunpack.c.h.b16 %v5306
    %v5563 = vunpack.c.l.b16 %v5307
    %v5564 = vunpack.c.h.b16 %v5307
    %v5565 = vunpack.c.l.b16 %v5308
    %v5566 = vunpack.c.h.b16 %v5308
    %v5567 = vunpack.c.l.b16 %v5309
    %v5568 = vunpack.c.h.b16 %v5309
    %v5569 = vunpack.c.l.b16 %v5310
    %v5570 = vunpack.c.h.b16 %v5310
    %v5571 = vunpack.c.l.b16 %v5311
    %v5572 = vunpack.c.h.b16 %v5311
    %v5573 = vunpack.c.l.b16 %v5312
    %v5574 = vunpack.c.h.b16 %v5312
    %v5575 = vunpack.c.l.b16 %v5313
    %v5576 = vunpack.c.h.b16 %v5313
    %v5577 = vunpack.c.l.b16 %v5314
    %v5578 = vunpack.c.h.b16 %v5314
    %v5579 = vunpack.c.l.b16 %v5315
    %v5580 = vunpack.c.h.b16 %v5315
    %v5581 = vunpack.c.l.b16 %v5316
    %v5582 = vunpack.c.h.b16 %v5316
    %v5583 = vunpack.c.l.b16 %v5317
    %v5584 = vunpack.c.h.b16 %v5317
    %v5585 = vunpack.c.l.b16 %v5318
    %v5586 = vunpack.c.h.b16 %v5318
    %v5587 = vunpack.c.l.b16 %v5319
    %v5588 = vunpack.c.h.b16 %v5319
    %v5589 = vunpack.c.l.b16 %v5320
    %v5590 = vunpack.c.h.b16 %v5320
    %v5591 = vunpack.c.l.b16 %v5321
    %v5592 = vunpack.c.h.b16 %v5321
    %v5593 = vunpack.c.l.b16 %v5322
    %v5594 = vunpack.c.h.b16 %v5322
    %v5595 = vunpack.c.l.b16 %v5323
    %v5596 = vunpack.c.h.b16 %v5323
    %v5597 = vunpack.c.l.b16 %v5324
    %v5598 = vunpack.c.h.b16 %v5324
    %v5599 = vunpack.c.l.b16 %v5325
    %v5600 = vunpack.c.h.b16 %v5325
    %v5601 = vunpack.c.l.b16 %v5326
    %v5602 = vunpack.c.h.b16 %v5326
    %v5603 = vunpack.c.l.b16 %v5327
    %v5604 = vunpack.c.h.b16 %v5327
    %v5605 = vpack.c.b16 %v5493, %v5477
    %v5606 = vpack.c.b16 %v5494, %v5478
    %v5607 = vpack.c.b16 %v5495, %v5479
    %v5608 = vpack.c.b16 %v5496, %v5480
    %v5609 = vpack.c.b16 %v5497, %v5481
    %v5610 = vpack.c.b16 %v5498, %v5482
    %v5611 = vpack.c.b16 %v5499, %v5483
    %v5612 = vpack.c.b16 %v5500, %v5484
    %v5613 = vpack.c.b16 %v5501, %v5485
    %v5614 = vpack.c.b16 %v5502, %v5486
    %v5615 = vpack.c.b16 %v5503, %v5487
    %v5616 = vpack.c.b16 %v5504, %v5488
    %v5617 = vpack.c.b16 %v5505, %v5489
    %v5618 = vpack.c.b16 %v5506, %v5490
    %v5619 = vpack.c.b16 %v5507, %v5491
    %v5620 = vpack.c.b16 %v5508, %v5492
    %v5621 = vpack.c.b16 %v5525, %v5509
    %v5622 = vpack.c.b16 %v5526, %v5510
    %v5623 = vpack.c.b16 %v5527, %v5511
    %v5624 = vpack.c.b16 %v5528, %v5512
    %v5625 = vpack.c.b16 %v5529, %v5513
    %v5626 = vpack.c.b16 %v5530, %v5514
    %v5627 = vpack.c.b16 %v5531, %v5515
    %v5628 = vpack.c.b16 %v5532, %v5516
    %v5629 = vpack.c.b16 %v5533, %v5517
    %v5630 = vpack.c.b16 %v5534, %v5518
    %v5631 = vpack.c.b16 %v5535, %v5519
    %v5632 = vpack.c.b16 %v5536, %v5520
    %v5633 = vpack.c.b16 %v5537, %v5521
    %v5634 = vpack.c.b16 %v5538, %v5522
    %v5635 = vpack.c.b16 %v5539, %v5523
    %v5636 = vpack.c.b16 %v5540, %v5524
    %v5637 = vpack.c.b16 %v5557, %v5541
    %v5638 = vpack.c.b16 %v5558, %v5542
    %v5639 = vpack.c.b16 %v5559, %v5543
    %v5640 = vpack.c.b16 %v5560, %v5544
    %v5641 = vpack.c.b16 %v5561, %v5545
    %v5642 = vpack.c.b16 %v5562, %v5546
    %v5643 = vpack.c.b16 %v5563, %v5547
    %v5644 = vpack.c.b16 %v5564, %v5548
    %v5645 = vpack.c.b16 %v5565, %v5549
    %v5646 = vpack.c.b16 %v5566, %v5550
    %v5647 = vpack.c.b16 %v5567, %v5551
    %v5648 = vpack.c.b16 %v5568, %v5552
    %v5649 = vpack.c.b16 %v5569, %v5553
    %v5650 = vpack.c.b16 %v5570, %v5554
    %v5651 = vpack.c.b16 %v5571, %v5555
    %v5652 = vpack.c.b16 %v5572, %v5556
    %v5653 = vpack.c.b16 %v5589, %v5573
    %v5654 = vpack.c.b16 %v5590, %v5574
    %v5655 = vpack.c.b16 %v5591, %v5575
    %v5656 = vpack.c.b16 %v5592, %v5576
    %v5657 = vpack.c.b16 %v5593, %v5577
    %v5658 = vpack.c.b16 %v5594, %v5578
    %v5659 = vpack.c.b16 %v5595, %v5579
    %v5660 = vpack.c.b16 %v5596, %v5580
    %v5661 = vpack.c.b16 %v5597, %v5581
    %v5662 = vpack.c.b16 %v5598, %v5582
    %v5663 = vpack.c.b16 %v5599, %v5583
    %v5664 = vpack.c.b16 %v5600, %v5584
    %v5665 = vpack.c.b16 %v5601, %v5585
    %v5666 = vpack.c.b16 %v5602, %v5586
    %v5667 = vpack.c.b16 %v5603, %v5587
    %v5668 = vpack.c.b16 %v5604, %v5588
    %v5734 = vsel %vm107, %v5260, 0
    %v5737 = vsel %vm107, %v5261, 0
    %v5740 = vsel %vm107, %v5262, 0
    %5742 = vmatprep.subr.bf16.mxu0 %v5606
    %5743 = vmatpush1.bf16.msra.mxu0 %v5605
    %5744 = vmatprep.subr.bf16.mxu0 %v5622
    %5745 = vmatpush1.bf16.msra.mxu0 %v5621
    %5746 = vmatprep.subr.bf16.mxu0 %v5638
    %5747 = vmatpush1.bf16.msra.mxu0 %v5637
    %5748 = vmatprep.subr.bf16.mxu0 %v5654
    %5749 = vmatpush1.bf16.msra.mxu0 %v5653
    %5750 = vmatprep.subr.bf16.mxu0 0
    %5751 = vmatpush1.bf16.msra.mxu0 0
    %5752 = vmatprep.subr.bf16.mxu0 0
    %5753 = vmatpush1.bf16.msra.mxu0 0
    %5754 = vmatprep.subr.bf16.mxu0 0
    %5755 = vmatpush1.bf16.msra.mxu0 0
    %5756 = vmatprep.subr.bf16.mxu0 0
    %5757 = vmatpush1.bf16.msra.mxu0 0
    %5758 = vmatprep.subr.bf16.mxu0 0
    %5759 = vmatpush1.bf16.msra.mxu0 0
    %5760 = vmatprep.subr.bf16.mxu0 0
    %5761 = vmatpush1.bf16.msra.mxu0 0
    %5762 = vmatprep.subr.bf16.mxu0 0
    %5763 = vmatpush1.bf16.msra.mxu0 0
    %5764 = vmatprep.subr.bf16.mxu0 0
    %5765 = vmatpush1.bf16.msra.mxu0 0
    %5766 = vmatprep.subr.bf16.mxu0 0
    %5767 = vmatpush1.bf16.msra.mxu0 0
    %5768 = vmatprep.subr.bf16.mxu0 0
    %5769 = vmatpush1.bf16.msra.mxu0 0
    %5770 = vmatprep.subr.bf16.mxu0 0
    %5771 = vmatpush1.bf16.msra.mxu0 0
    %5772 = vmatprep.subr.bf16.mxu0 0
    %5773 = vmatpush1.bf16.msra.mxu0 0
    %5774 = vmatprep.mubr.bf16.mxu0 0
    %5775 = vmatmul.mubr.bf16.gmra.mrb[0].mxu0 %v5734
    %v5776 = vpop.f32.mrb[0].mxu0
    %v5777 = vadd.f32 %v5336, %v5776
    %v5778 = vpop.f32.mrb[0].mxu0
    %v5779 = vadd.f32 %v5340, %v5778
    %v5780 = vpop.f32.mrb[0].mxu0
    %v5781 = vadd.f32 %v5336, %v5780
    %v5782 = vpop.f32.mrb[0].mxu0
    %v5783 = vadd.f32 %v5340, %v5782
    %5784 = vmatprep.mubr.bf16.mxu0 0
    %5785 = vmatmul.mubr.bf16.gmra.mrb[0].mxu0 %v5737
    %v5786 = vpop.f32.mrb[0].mxu0
    %v5787 = vadd.f32 %v5336, %v5786
    %v5788 = vpop.f32.mrb[0].mxu0
    %v5789 = vadd.f32 %v5340, %v5788
    %v5790 = vpop.f32.mrb[0].mxu0
    %v5791 = vadd.f32 %v5336, %v5790
    %v5792 = vpop.f32.mrb[0].mxu0
    %v5793 = vadd.f32 %v5340, %v5792
    %5794 = vmatprep.mubr.bf16.mxu0 0
    %5795 = vmatmul.mubr.bf16.gmra.mrb[0].mxu0 %v5740
    %v5796 = vpop.f32.mrb[0].mxu0
    %v5797 = vadd.f32 %v5336, %v5796
    %v5798 = vpop.f32.mrb[0].mxu0
    %v5799 = vadd.f32 %v5340, %v5798
    %v5800 = vpop.f32.mrb[0].mxu0
    %v5801 = vadd.f32 %v5336, %v5800
    %v5802 = vpop.f32.mrb[0].mxu0
    %v5803 = vadd.f32 %v5340, %v5802
    %5804 = vdwg.mxu0
    %5805 = vmatprep.subr.bf16.mxu0 %v5608
    %5806 = vmatpush1.bf16.msra.mxu0 %v5607
    %5807 = vmatprep.subr.bf16.mxu0 %v5624
    %5808 = vmatpush1.bf16.msra.mxu0 %v5623
    %5809 = vmatprep.subr.bf16.mxu0 %v5640
    %5810 = vmatpush1.bf16.msra.mxu0 %v5639
    %5811 = vmatprep.subr.bf16.mxu0 %v5656
    %5812 = vmatpush1.bf16.msra.mxu0 %v5655
    %5813 = vmatprep.subr.bf16.mxu0 0
    %5814 = vmatpush1.bf16.msra.mxu0 0
    %5815 = vmatprep.subr.bf16.mxu0 0
    %5816 = vmatpush1.bf16.msra.mxu0 0
    %5817 = vmatprep.subr.bf16.mxu0 0
    %5818 = vmatpush1.bf16.msra.mxu0 0
    %5819 = vmatprep.subr.bf16.mxu0 0
    %5820 = vmatpush1.bf16.msra.mxu0 0
    %5821 = vmatprep.subr.bf16.mxu0 0
    %5822 = vmatpush1.bf16.msra.mxu0 0
    %5823 = vmatprep.subr.bf16.mxu0 0
    %5824 = vmatpush1.bf16.msra.mxu0 0
    %5825 = vmatprep.subr.bf16.mxu0 0
    %5826 = vmatpush1.bf16.msra.mxu0 0
    %5827 = vmatprep.subr.bf16.mxu0 0
    %5828 = vmatpush1.bf16.msra.mxu0 0
    %5829 = vmatprep.subr.bf16.mxu0 0
    %5830 = vmatpush1.bf16.msra.mxu0 0
    %5831 = vmatprep.subr.bf16.mxu0 0
    %5832 = vmatpush1.bf16.msra.mxu0 0
    %5833 = vmatprep.subr.bf16.mxu0 0
    %5834 = vmatpush1.bf16.msra.mxu0 0
    %5835 = vmatprep.subr.bf16.mxu0 0
    %5836 = vmatpush1.bf16.msra.mxu0 0
    %5837 = vmatprep.mubr.bf16.mxu0 0
    %5838 = vmatmul.mubr.bf16.gmra.mrb[0].mxu0 %v5734
    %v5839 = vpop.f32.mrb[0].mxu0
    %v5840 = vadd.f32 %v5344, %v5839
    %v5841 = vpop.f32.mrb[0].mxu0
    %v5842 = vadd.f32 %v5348, %v5841
    %v5843 = vpop.f32.mrb[0].mxu0
    %v5844 = vadd.f32 %v5344, %v5843
    %v5845 = vpop.f32.mrb[0].mxu0
    %v5846 = vadd.f32 %v5348, %v5845
    %5847 = vmatprep.mubr.bf16.mxu0 0
    %5848 = vmatmul.mubr.bf16.gmra.mrb[0].mxu0 %v5737
    %v5849 = vpop.f32.mrb[0].mxu0
    %v5850 = vadd.f32 %v5344, %v5849
    %v5851 = vpop.f32.mrb[0].mxu0
    %v5852 = vadd.f32 %v5348, %v5851
    %v5853 = vpop.f32.mrb[0].mxu0
    %v5854 = vadd.f32 %v5344, %v5853
    %v5855 = vpop.f32.mrb[0].mxu0
    %v5856 = vadd.f32 %v5348, %v5855
    %5857 = vmatprep.mubr.bf16.mxu0 0
    %5858 = vmatmul.mubr.bf16.gmra.mrb[0].mxu0 %v5740
    %v5859 = vpop.f32.mrb[0].mxu0
    %v5860 = vadd.f32 %v5344, %v5859
    %v5861 = vpop.f32.mrb[0].mxu0
    %v5862 = vadd.f32 %v5348, %v5861
    %v5863 = vpop.f32.mrb[0].mxu0
    %v5864 = vadd.f32 %v5344, %v5863
    %v5865 = vpop.f32.mrb[0].mxu0
    %v5866 = vadd.f32 %v5348, %v5865
    %5867 = vdwg.mxu0
    %5868 = vmatprep.subr.bf16.mxu0 %v5610
    %5869 = vmatpush1.bf16.msra.mxu0 %v5609
    %5870 = vmatprep.subr.bf16.mxu0 %v5626
    %5871 = vmatpush1.bf16.msra.mxu0 %v5625
    %5872 = vmatprep.subr.bf16.mxu0 %v5642
    %5873 = vmatpush1.bf16.msra.mxu0 %v5641
    %5874 = vmatprep.subr.bf16.mxu0 %v5658
    %5875 = vmatpush1.bf16.msra.mxu0 %v5657
    %5876 = vmatprep.subr.bf16.mxu0 0
    %5877 = vmatpush1.bf16.msra.mxu0 0
    %5878 = vmatprep.subr.bf16.mxu0 0
    %5879 = vmatpush1.bf16.msra.mxu0 0
    %5880 = vmatprep.subr.bf16.mxu0 0
    %5881 = vmatpush1.bf16.msra.mxu0 0
    %5882 = vmatprep.subr.bf16.mxu0 0
    %5883 = vmatpush1.bf16.msra.mxu0 0
    %5884 = vmatprep.subr.bf16.mxu0 0
    %5885 = vmatpush1.bf16.msra.mxu0 0
    %5886 = vmatprep.subr.bf16.mxu0 0
    %5887 = vmatpush1.bf16.msra.mxu0 0
    %5888 = vmatprep.subr.bf16.mxu0 0
    %5889 = vmatpush1.bf16.msra.mxu0 0
    %5890 = vmatprep.subr.bf16.mxu0 0
    %5891 = vmatpush1.bf16.msra.mxu0 0
    %5892 = vmatprep.subr.bf16.mxu0 0
    %5893 = vmatpush1.bf16.msra.mxu0 0
    %5894 = vmatprep.subr.bf16.mxu0 0
    %5895 = vmatpush1.bf16.msra.mxu0 0
    %5896 = vmatprep.subr.bf16.mxu0 0
    %5897 = vmatpush1.bf16.msra.mxu0 0
    %5898 = vmatprep.subr.bf16.mxu0 0
    %5899 = vmatpush1.bf16.msra.mxu0 0
    %5900 = vmatprep.mubr.bf16.mxu0 0
    %5901 = vmatmul.mubr.bf16.gmra.mrb[0].mxu0 %v5734
    %v5902 = vpop.f32.mrb[0].mxu0
    %v5903 = vadd.f32 %v5352, %v5902
    %v5904 = vpop.f32.mrb[0].mxu0
    %v5905 = vadd.f32 %v5356, %v5904
    %v5906 = vpop.f32.mrb[0].mxu0
    %v5907 = vadd.f32 %v5352, %v5906
    %v5908 = vpop.f32.mrb[0].mxu0
    %v5909 = vadd.f32 %v5356, %v5908
    %5910 = vmatprep.mubr.bf16.mxu0 0
    %5911 = vmatmul.mubr.bf16.gmra.mrb[0].mxu0 %v5737
    %v5912 = vpop.f32.mrb[0].mxu0
    %v5913 = vadd.f32 %v5352, %v5912
    %v5914 = vpop.f32.mrb[0].mxu0
    %v5915 = vadd.f32 %v5356, %v5914
    %v5916 = vpop.f32.mrb[0].mxu0
    %v5917 = vadd.f32 %v5352, %v5916
    %v5918 = vpop.f32.mrb[0].mxu0
    %v5919 = vadd.f32 %v5356, %v5918
    %5920 = vmatprep.mubr.bf16.mxu0 0
    %5921 = vmatmul.mubr.bf16.gmra.mrb[0].mxu0 %v5740
    %v5922 = vpop.f32.mrb[0].mxu0
    %v5923 = vadd.f32 %v5352, %v5922
    %v5924 = vpop.f32.mrb[0].mxu0
    %v5925 = vadd.f32 %v5356, %v5924
    %v5926 = vpop.f32.mrb[0].mxu0
    %v5927 = vadd.f32 %v5352, %v5926
    %v5928 = vpop.f32.mrb[0].mxu0
    %v5929 = vadd.f32 %v5356, %v5928
    %5930 = vdwg.mxu0
    %5931 = vmatprep.subr.bf16.mxu0 %v5612
    %5932 = vmatpush1.bf16.msra.mxu0 %v5611
    %5933 = vmatprep.subr.bf16.mxu0 %v5628
    %5934 = vmatpush1.bf16.msra.mxu0 %v5627
    %5935 = vmatprep.subr.bf16.mxu0 %v5644
    %5936 = vmatpush1.bf16.msra.mxu0 %v5643
    %5937 = vmatprep.subr.bf16.mxu0 %v5660
    %5938 = vmatpush1.bf16.msra.mxu0 %v5659
    %5939 = vmatprep.subr.bf16.mxu0 0
    %5940 = vmatpush1.bf16.msra.mxu0 0
    %5941 = vmatprep.subr.bf16.mxu0 0
    %5942 = vmatpush1.bf16.msra.mxu0 0
    %5943 = vmatprep.subr.bf16.mxu0 0
    %5944 = vmatpush1.bf16.msra.mxu0 0
    %5945 = vmatprep.subr.bf16.mxu0 0
    %5946 = vmatpush1.bf16.msra.mxu0 0
    %5947 = vmatprep.subr.bf16.mxu0 0
    %5948 = vmatpush1.bf16.msra.mxu0 0
    %5949 = vmatprep.subr.bf16.mxu0 0
    %5950 = vmatpush1.bf16.msra.mxu0 0
    %5951 = vmatprep.subr.bf16.mxu0 0
    %5952 = vmatpush1.bf16.msra.mxu0 0
    %5953 = vmatprep.subr.bf16.mxu0 0
    %5954 = vmatpush1.bf16.msra.mxu0 0
    %5955 = vmatprep.subr.bf16.mxu0 0
    %5956 = vmatpush1.bf16.msra.mxu0 0
    %5957 = vmatprep.subr.bf16.mxu0 0
    %5958 = vmatpush1.bf16.msra.mxu0 0
    %5959 = vmatprep.subr.bf16.mxu0 0
    %5960 = vmatpush1.bf16.msra.mxu0 0
    %5961 = vmatprep.subr.bf16.mxu0 0
    %5962 = vmatpush1.bf16.msra.mxu0 0
    %5963 = vmatprep.mubr.bf16.mxu0 0
    %5964 = vmatmul.mubr.bf16.gmra.mrb[0].mxu0 %v5734
    %v5965 = vpop.f32.mrb[0].mxu0
    %v5966 = vadd.f32 %v5360, %v5965
    %v5967 = vpop.f32.mrb[0].mxu0
    %v5968 = vadd.f32 %v5364, %v5967
    %v5969 = vpop.f32.mrb[0].mxu0
    %v5970 = vadd.f32 %v5360, %v5969
    %v5971 = vpop.f32.mrb[0].mxu0
    %v5972 = vadd.f32 %v5364, %v5971
    %5973 = vmatprep.mubr.bf16.mxu0 0
    %5974 = vmatmul.mubr.bf16.gmra.mrb[0].mxu0 %v5737
    %v5975 = vpop.f32.mrb[0].mxu0
    %v5976 = vadd.f32 %v5360, %v5975
    %v5977 = vpop.f32.mrb[0].mxu0
    %v5978 = vadd.f32 %v5364, %v5977
    %v5979 = vpop.f32.mrb[0].mxu0
    %v5980 = vadd.f32 %v5360, %v5979
    %v5981 = vpop.f32.mrb[0].mxu0
    %v5982 = vadd.f32 %v5364, %v5981
    %5983 = vmatprep.mubr.bf16.mxu0 0
    %5984 = vmatmul.mubr.bf16.gmra.mrb[0].mxu0 %v5740
    %v5985 = vpop.f32.mrb[0].mxu0
    %v5986 = vadd.f32 %v5360, %v5985
    %v5987 = vpop.f32.mrb[0].mxu0
    %v5988 = vadd.f32 %v5364, %v5987
    %v5989 = vpop.f32.mrb[0].mxu0
    %v5990 = vadd.f32 %v5360, %v5989
    %v5991 = vpop.f32.mrb[0].mxu0
    %v5992 = vadd.f32 %v5364, %v5991
    %5993 = vdwg.mxu0
    %5994 = vmatprep.subr.bf16.mxu0 %v5614
    %5995 = vmatpush1.bf16.msra.mxu0 %v5613
    %5996 = vmatprep.subr.bf16.mxu0 %v5630
    %5997 = vmatpush1.bf16.msra.mxu0 %v5629
    %5998 = vmatprep.subr.bf16.mxu0 %v5646
    %5999 = vmatpush1.bf16.msra.mxu0 %v5645
    %6000 = vmatprep.subr.bf16.mxu0 %v5662
    %6001 = vmatpush1.bf16.msra.mxu0 %v5661
    %6002 = vmatprep.subr.bf16.mxu0 0
    %6003 = vmatpush1.bf16.msra.mxu0 0
    %6004 = vmatprep.subr.bf16.mxu0 0
    %6005 = vmatpush1.bf16.msra.mxu0 0
    %6006 = vmatprep.subr.bf16.mxu0 0
    %6007 = vmatpush1.bf16.msra.mxu0 0
    %6008 = vmatprep.subr.bf16.mxu0 0
    %6009 = vmatpush1.bf16.msra.mxu0 0
    %6010 = vmatprep.subr.bf16.mxu0 0
    %6011 = vmatpush1.bf16.msra.mxu0 0
    %6012 = vmatprep.subr.bf16.mxu0 0
    %6013 = vmatpush1.bf16.msra.mxu0 0
    %6014 = vmatprep.subr.bf16.mxu0 0
    %6015 = vmatpush1.bf16.msra.mxu0 0
    %6016 = vmatprep.subr.bf16.mxu0 0
    %6017 = vmatpush1.bf16.msra.mxu0 0
    %6018 = vmatprep.subr.bf16.mxu0 0
    %6019 = vmatpush1.bf16.msra.mxu0 0
    %6020 = vmatprep.subr.bf16.mxu0 0
    %6021 = vmatpush1.bf16.msra.mxu0 0
    %6022 = vmatprep.subr.bf16.mxu0 0
    %6023 = vmatpush1.bf16.msra.mxu0 0
    %6024 = vmatprep.subr.bf16.mxu0 0
    %6025 = vmatpush1.bf16.msra.mxu0 0
    %6026 = vmatprep.mubr.bf16.mxu0 0
    %6027 = vmatmul.mubr.bf16.gmra.mrb[0].mxu0 %v5734
    %v6028 = vpop.f32.mrb[0].mxu0
    %v6029 = vadd.f32 %v5368, %v6028
    %v6030 = vpop.f32.mrb[0].mxu0
    %v6031 = vadd.f32 %v5372, %v6030
    %v6032 = vpop.f32.mrb[0].mxu0
    %v6033 = vadd.f32 %v5368, %v6032
    %v6034 = vpop.f32.mrb[0].mxu0
    %v6035 = vadd.f32 %v5372, %v6034
    %6036 = vmatprep.mubr.bf16.mxu0 0
    %6037 = vmatmul.mubr.bf16.gmra.mrb[0].mxu0 %v5737
    %v6038 = vpop.f32.mrb[0].mxu0
    %v6039 = vadd.f32 %v5368, %v6038
    %v6040 = vpop.f32.mrb[0].mxu0
    %v6041 = vadd.f32 %v5372, %v6040
    %v6042 = vpop.f32.mrb[0].mxu0
    %v6043 = vadd.f32 %v5368, %v6042
    %v6044 = vpop.f32.mrb[0].mxu0
    %v6045 = vadd.f32 %v5372, %v6044
    %6046 = vmatprep.mubr.bf16.mxu0 0
    %6047 = vmatmul.mubr.bf16.gmra.mrb[0].mxu0 %v5740
    %v6048 = vpop.f32.mrb[0].mxu0
    %v6049 = vadd.f32 %v5368, %v6048
    %v6050 = vpop.f32.mrb[0].mxu0
    %v6051 = vadd.f32 %v5372, %v6050
    %v6052 = vpop.f32.mrb[0].mxu0
    %v6053 = vadd.f32 %v5368, %v6052
    %v6054 = vpop.f32.mrb[0].mxu0
    %v6055 = vadd.f32 %v5372, %v6054
    %6056 = vdwg.mxu0
    %6057 = vmatprep.subr.bf16.mxu0 %v5616
    %6058 = vmatpush1.bf16.msra.mxu0 %v5615
    %6059 = vmatprep.subr.bf16.mxu0 %v5632
    %6060 = vmatpush1.bf16.msra.mxu0 %v5631
    %6061 = vmatprep.subr.bf16.mxu0 %v5648
    %6062 = vmatpush1.bf16.msra.mxu0 %v5647
    %6063 = vmatprep.subr.bf16.mxu0 %v5664
    %6064 = vmatpush1.bf16.msra.mxu0 %v5663
    %6065 = vmatprep.subr.bf16.mxu0 0
    %6066 = vmatpush1.bf16.msra.mxu0 0
    %6067 = vmatprep.subr.bf16.mxu0 0
    %6068 = vmatpush1.bf16.msra.mxu0 0
    %6069 = vmatprep.subr.bf16.mxu0 0
    %6070 = vmatpush1.bf16.msra.mxu0 0
    %6071 = vmatprep.subr.bf16.mxu0 0
    %6072 = vmatpush1.bf16.msra.mxu0 0
    %6073 = vmatprep.subr.bf16.mxu0 0
    %6074 = vmatpush1.bf16.msra.mxu0 0
    %6075 = vmatprep.subr.bf16.mxu0 0
    %6076 = vmatpush1.bf16.msra.mxu0 0
    %6077 = vmatprep.subr.bf16.mxu0 0
    %6078 = vmatpush1.bf16.msra.mxu0 0
    %6079 = vmatprep.subr.bf16.mxu0 0
    %6080 = vmatpush1.bf16.msra.mxu0 0
    %6081 = vmatprep.subr.bf16.mxu0 0
    %6082 = vmatpush1.bf16.msra.mxu0 0
    %6083 = vmatprep.subr.bf16.mxu0 0
    %6084 = vmatpush1.bf16.msra.mxu0 0
    %6085 = vmatprep.subr.bf16.mxu0 0
    %6086 = vmatpush1.bf16.msra.mxu0 0
    %6087 = vmatprep.subr.bf16.mxu0 0
    %6088 = vmatpush1.bf16.msra.mxu0 0
    %6089 = vmatprep.mubr.bf16.mxu0 0
    %6090 = vmatmul.mubr.bf16.gmra.mrb[0].mxu0 %v5734
    %v6091 = vpop.f32.mrb[0].mxu0
    %v6092 = vadd.f32 %v5376, %v6091
    %v6093 = vpop.f32.mrb[0].mxu0
    %v6094 = vadd.f32 %v5380, %v6093
    %v6095 = vpop.f32.mrb[0].mxu0
    %v6096 = vadd.f32 %v5376, %v6095
    %v6097 = vpop.f32.mrb[0].mxu0
    %v6098 = vadd.f32 %v5380, %v6097
    %6099 = vmatprep.mubr.bf16.mxu0 0
    %6100 = vmatmul.mubr.bf16.gmra.mrb[0].mxu0 %v5737
    %v6101 = vpop.f32.mrb[0].mxu0
    %v6102 = vadd.f32 %v5376, %v6101
    %v6103 = vpop.f32.mrb[0].mxu0
    %v6104 = vadd.f32 %v5380, %v6103
    %v6105 = vpop.f32.mrb[0].mxu0
    %v6106 = vadd.f32 %v5376, %v6105
    %v6107 = vpop.f32.mrb[0].mxu0
    %v6108 = vadd.f32 %v5380, %v6107
    %6109 = vmatprep.mubr.bf16.mxu0 0
    %6110 = vmatmul.mubr.bf16.gmra.mrb[0].mxu0 %v5740
    %v6111 = vpop.f32.mrb[0].mxu0
    %v6112 = vadd.f32 %v5376, %v6111
    %v6113 = vpop.f32.mrb[0].mxu0
    %v6114 = vadd.f32 %v5380, %v6113
    %v6115 = vpop.f32.mrb[0].mxu0
    %v6116 = vadd.f32 %v5376, %v6115
    %v6117 = vpop.f32.mrb[0].mxu0
    %v6118 = vadd.f32 %v5380, %v6117
    %6119 = vdwg.mxu0
    %6120 = vmatprep.subr.bf16.mxu0 %v5618
    %6121 = vmatpush1.bf16.msra.mxu0 %v5617
    %6122 = vmatprep.subr.bf16.mxu0 %v5634
    %6123 = vmatpush1.bf16.msra.mxu0 %v5633
    %6124 = vmatprep.subr.bf16.mxu0 %v5650
    %6125 = vmatpush1.bf16.msra.mxu0 %v5649
    %6126 = vmatprep.subr.bf16.mxu0 %v5666
    %6127 = vmatpush1.bf16.msra.mxu0 %v5665
    %6128 = vmatprep.subr.bf16.mxu0 0
    %6129 = vmatpush1.bf16.msra.mxu0 0
    %6130 = vmatprep.subr.bf16.mxu0 0
    %6131 = vmatpush1.bf16.msra.mxu0 0
    %6132 = vmatprep.subr.bf16.mxu0 0
    %6133 = vmatpush1.bf16.msra.mxu0 0
    %6134 = vmatprep.subr.bf16.mxu0 0
    %6135 = vmatpush1.bf16.msra.mxu0 0
    %6136 = vmatprep.subr.bf16.mxu0 0
    %6137 = vmatpush1.bf16.msra.mxu0 0
    %6138 = vmatprep.subr.bf16.mxu0 0
    %6139 = vmatpush1.bf16.msra.mxu0 0
    %6140 = vmatprep.subr.bf16.mxu0 0
    %6141 = vmatpush1.bf16.msra.mxu0 0
    %6142 = vmatprep.subr.bf16.mxu0 0
    %6143 = vmatpush1.bf16.msra.mxu0 0
    %6144 = vmatprep.subr.bf16.mxu0 0
    %6145 = vmatpush1.bf16.msra.mxu0 0
    %6146 = vmatprep.subr.bf16.mxu0 0
    %6147 = vmatpush1.bf16.msra.mxu0 0
    %6148 = vmatprep.subr.bf16.mxu0 0
    %6149 = vmatpush1.bf16.msra.mxu0 0
    %6150 = vmatprep.subr.bf16.mxu0 0
    %6151 = vmatpush1.bf16.msra.mxu0 0
    %6152 = vmatprep.mubr.bf16.mxu0 0
    %6153 = vmatmul.mubr.bf16.gmra.mrb[0].mxu0 %v5734
    %v6154 = vpop.f32.mrb[0].mxu0
    %v6155 = vadd.f32 %v5384, %v6154
    %v6156 = vpop.f32.mrb[0].mxu0
    %v6157 = vadd.f32 %v5388, %v6156
    %v6158 = vpop.f32.mrb[0].mxu0
    %v6159 = vadd.f32 %v5384, %v6158
    %v6160 = vpop.f32.mrb[0].mxu0
    %v6161 = vadd.f32 %v5388, %v6160
    %6162 = vmatprep.mubr.bf16.mxu0 0
    %6163 = vmatmul.mubr.bf16.gmra.mrb[0].mxu0 %v5737
    %v6164 = vpop.f32.mrb[0].mxu0
    %v6165 = vadd.f32 %v5384, %v6164
    %v6166 = vpop.f32.mrb[0].mxu0
    %v6167 = vadd.f32 %v5388, %v6166
    %v6168 = vpop.f32.mrb[0].mxu0
    %v6169 = vadd.f32 %v5384, %v6168
    %v6170 = vpop.f32.mrb[0].mxu0
    %v6171 = vadd.f32 %v5388, %v6170
    %6172 = vmatprep.mubr.bf16.mxu0 0
    %6173 = vmatmul.mubr.bf16.gmra.mrb[0].mxu0 %v5740
    %v6174 = vpop.f32.mrb[0].mxu0
    %v6175 = vadd.f32 %v5384, %v6174
    %v6176 = vpop.f32.mrb[0].mxu0
    %v6177 = vadd.f32 %v5388, %v6176
    %v6178 = vpop.f32.mrb[0].mxu0
    %v6179 = vadd.f32 %v5384, %v6178
    %v6180 = vpop.f32.mrb[0].mxu0
    %v6181 = vadd.f32 %v5388, %v6180
    %6182 = vdwg.mxu0
    %6183 = vmatprep.subr.bf16.mxu0 %v5620
    %6184 = vmatpush1.bf16.msra.mxu0 %v5619
    %6185 = vmatprep.subr.bf16.mxu0 %v5636
    %6186 = vmatpush1.bf16.msra.mxu0 %v5635
    %6187 = vmatprep.subr.bf16.mxu0 %v5652
    %6188 = vmatpush1.bf16.msra.mxu0 %v5651
    %6189 = vmatprep.subr.bf16.mxu0 %v5668
    %6190 = vmatpush1.bf16.msra.mxu0 %v5667
    %6191 = vmatprep.subr.bf16.mxu0 0
    %6192 = vmatpush1.bf16.msra.mxu0 0
    %6193 = vmatprep.subr.bf16.mxu0 0
    %6194 = vmatpush1.bf16.msra.mxu0 0
    %6195 = vmatprep.subr.bf16.mxu0 0
    %6196 = vmatpush1.bf16.msra.mxu0 0
    %6197 = vmatprep.subr.bf16.mxu0 0
    %6198 = vmatpush1.bf16.msra.mxu0 0
    %6199 = vmatprep.subr.bf16.mxu0 0
    %6200 = vmatpush1.bf16.msra.mxu0 0
    %6201 = vmatprep.subr.bf16.mxu0 0
    %6202 = vmatpush1.bf16.msra.mxu0 0
    %6203 = vmatprep.subr.bf16.mxu0 0
    %6204 = vmatpush1.bf16.msra.mxu0 0
    %6205 = vmatprep.subr.bf16.mxu0 0
    %6206 = vmatpush1.bf16.msra.mxu0 0
    %6207 = vmatprep.subr.bf16.mxu0 0
    %6208 = vmatpush1.bf16.msra.mxu0 0
    %6209 = vmatprep.subr.bf16.mxu0 0
    %6210 = vmatpush1.bf16.msra.mxu0 0
    %6211 = vmatprep.subr.bf16.mxu0 0
    %6212 = vmatpush1.bf16.msra.mxu0 0
    %6213 = vmatprep.subr.bf16.mxu0 0
    %6214 = vmatpush1.bf16.msra.mxu0 0
    %6215 = vmatprep.mubr.bf16.mxu0 0
    %6216 = vmatmul.mubr.bf16.gmra.mrb[0].mxu0 %v5734
    %v6217 = vpop.f32.mrb[0].mxu0
    %v6218 = vadd.f32 %v5392, %v6217
    %v6219 = vpop.f32.mrb[0].mxu0
    %v6220 = vadd.f32 %v5396, %v6219
    %v6221 = vpop.f32.mrb[0].mxu0
    %v6222 = vadd.f32 %v5392, %v6221
    %v6223 = vpop.f32.mrb[0].mxu0
    %v6224 = vadd.f32 %v5396, %v6223
    %6225 = vmatprep.mubr.bf16.mxu0 0
    %6226 = vmatmul.mubr.bf16.gmra.mrb[0].mxu0 %v5737
    %v6227 = vpop.f32.mrb[0].mxu0
    %v6228 = vadd.f32 %v5392, %v6227
    %v6229 = vpop.f32.mrb[0].mxu0
    %v6230 = vadd.f32 %v5396, %v6229
    %v6231 = vpop.f32.mrb[0].mxu0
    %v6232 = vadd.f32 %v5392, %v6231
    %v6233 = vpop.f32.mrb[0].mxu0
    %v6234 = vadd.f32 %v5396, %v6233
    %6235 = vmatprep.mubr.bf16.mxu0 0
    %6236 = vmatmul.mubr.bf16.gmra.mrb[0].mxu0 %v5740
    %v6237 = vpop.f32.mrb[0].mxu0
    %v6238 = vadd.f32 %v5392, %v6237
    %v6239 = vpop.f32.mrb[0].mxu0
    %v6240 = vadd.f32 %v5396, %v6239
    %v6241 = vpop.f32.mrb[0].mxu0
    %v6242 = vadd.f32 %v5392, %v6241
    %v6243 = vpop.f32.mrb[0].mxu0
    %v6244 = vadd.f32 %v5396, %v6243
    %6245 = vdwg.mxu0
    %v6246 = vmax.f32 %v5777, 0.0
    %v6247 = vmax.f32 %v5779, 0.0
    %v6248 = vmax.f32 %v5840, 0.0
    %v6249 = vmax.f32 %v5842, 0.0
    %v6250 = vmax.f32 %v5903, 0.0
    %v6251 = vmax.f32 %v5905, 0.0
    %v6252 = vmax.f32 %v5966, 0.0
    %v6253 = vmax.f32 %v5968, 0.0
    %v6254 = vmax.f32 %v6029, 0.0
    %v6255 = vmax.f32 %v6031, 0.0
    %v6256 = vmax.f32 %v6092, 0.0
    %v6257 = vmax.f32 %v6094, 0.0
    %v6258 = vmax.f32 %v6155, 0.0
    %v6259 = vmax.f32 %v6157, 0.0
    %v6260 = vmax.f32 %v6218, 0.0
    %v6261 = vmax.f32 %v6220, 0.0
    %v6262 = vmax.f32 %v5781, 0.0
    %v6263 = vmax.f32 %v5783, 0.0
    %v6264 = vmax.f32 %v5844, 0.0
    %v6265 = vmax.f32 %v5846, 0.0
    %v6266 = vmax.f32 %v5907, 0.0
    %v6267 = vmax.f32 %v5909, 0.0
    %v6268 = vmax.f32 %v5970, 0.0
    %v6269 = vmax.f32 %v5972, 0.0
    %v6270 = vmax.f32 %v6033, 0.0
    %v6271 = vmax.f32 %v6035, 0.0
    %v6272 = vmax.f32 %v6096, 0.0
    %v6273 = vmax.f32 %v6098, 0.0
    %v6274 = vmax.f32 %v6159, 0.0
    %v6275 = vmax.f32 %v6161, 0.0
    %v6276 = vmax.f32 %v6222, 0.0
    %v6277 = vmax.f32 %v6224, 0.0
    %v6278 = vmax.f32 %v5787, 0.0
    %v6279 = vmax.f32 %v5789, 0.0
    %v6280 = vmax.f32 %v5850, 0.0
    %v6281 = vmax.f32 %v5852, 0.0
    %v6282 = vmax.f32 %v5913, 0.0
    %v6283 = vmax.f32 %v5915, 0.0
    %v6284 = vmax.f32 %v5976, 0.0
    %v6285 = vmax.f32 %v5978, 0.0
    %v6286 = vmax.f32 %v6039, 0.0
    %v6287 = vmax.f32 %v6041, 0.0
    %v6288 = vmax.f32 %v6102, 0.0
    %v6289 = vmax.f32 %v6104, 0.0
    %v6290 = vmax.f32 %v6165, 0.0
    %v6291 = vmax.f32 %v6167, 0.0
    %v6292 = vmax.f32 %v6228, 0.0
    %v6293 = vmax.f32 %v6230, 0.0
    %v6294 = vmax.f32 %v5791, 0.0
    %v6295 = vmax.f32 %v5793, 0.0
    %v6296 = vmax.f32 %v5854, 0.0
    %v6297 = vmax.f32 %v5856, 0.0
    %v6298 = vmax.f32 %v5917, 0.0
    %v6299 = vmax.f32 %v5919, 0.0
    %v6300 = vmax.f32 %v5980, 0.0
    %v6301 = vmax.f32 %v5982, 0.0
    %v6302 = vmax.f32 %v6043, 0.0
    %v6303 = vmax.f32 %v6045, 0.0
    %v6304 = vmax.f32 %v6106, 0.0
    %v6305 = vmax.f32 %v6108, 0.0
    %v6306 = vmax.f32 %v6169, 0.0
    %v6307 = vmax.f32 %v6171, 0.0
    %v6308 = vmax.f32 %v6232, 0.0
    %v6309 = vmax.f32 %v6234, 0.0
    %v6310 = vmax.f32 %v5797, 0.0
    %v6311 = vmax.f32 %v5799, 0.0
    %v6312 = vmax.f32 %v5860, 0.0
    %v6313 = vmax.f32 %v5862, 0.0
    %v6314 = vmax.f32 %v5923, 0.0
    %v6315 = vmax.f32 %v5925, 0.0
    %v6316 = vmax.f32 %v5986, 0.0
    %v6317 = vmax.f32 %v5988, 0.0
    %v6318 = vmax.f32 %v6049, 0.0
    %v6319 = vmax.f32 %v6051, 0.0
    %v6320 = vmax.f32 %v6112, 0.0
    %v6321 = vmax.f32 %v6114, 0.0
    %v6322 = vmax.f32 %v6175, 0.0
    %v6323 = vmax.f32 %v6177, 0.0
    %v6324 = vmax.f32 %v6238, 0.0
    %v6325 = vmax.f32 %v6240, 0.0
    %v6326 = vmax.f32 %v5801, 0.0
    %v6327 = vmax.f32 %v5803, 0.0
    %v6328 = vmax.f32 %v5864, 0.0
    %v6329 = vmax.f32 %v5866, 0.0
    %v6330 = vmax.f32 %v5927, 0.0
    %v6331 = vmax.f32 %v5929, 0.0
    %v6332 = vmax.f32 %v5990, 0.0
    %v6333 = vmax.f32 %v5992, 0.0
    %v6334 = vmax.f32 %v6053, 0.0
    %v6335 = vmax.f32 %v6055, 0.0
    %v6336 = vmax.f32 %v6116, 0.0
    %v6337 = vmax.f32 %v6118, 0.0
    %v6338 = vmax.f32 %v6179, 0.0
    %v6339 = vmax.f32 %v6181, 0.0
    %v6340 = vmax.f32 %v6242, 0.0
    %v6341 = vmax.f32 %v6244, 0.0
    %v6342 = vpack.c.bf16 %v6262, %v6246
    %v6343 = vpack.c.bf16 %v6263, %v6247
    %v6344 = vpack.c.bf16 %v6264, %v6248
    %v6345 = vpack.c.bf16 %v6265, %v6249
    %v6346 = vpack.c.bf16 %v6266, %v6250
    %v6347 = vpack.c.bf16 %v6267, %v6251
    %v6348 = vpack.c.bf16 %v6268, %v6252
    %v6349 = vpack.c.bf16 %v6269, %v6253
    %v6350 = vpack.c.bf16 %v6270, %v6254
    %v6351 = vpack.c.bf16 %v6271, %v6255
    %v6352 = vpack.c.bf16 %v6272, %v6256
    %v6353 = vpack.c.bf16 %v6273, %v6257
    %v6354 = vpack.c.bf16 %v6274, %v6258
    %v6355 = vpack.c.bf16 %v6275, %v6259
    %v6356 = vpack.c.bf16 %v6276, %v6260
    %v6357 = vpack.c.bf16 %v6277, %v6261
    %v6358 = vpack.c.bf16 %v6294, %v6278
    %v6359 = vpack.c.bf16 %v6295, %v6279
    %v6360 = vpack.c.bf16 %v6296, %v6280
    %v6361 = vpack.c.bf16 %v6297, %v6281
    %v6362 = vpack.c.bf16 %v6298, %v6282
    %v6363 = vpack.c.bf16 %v6299, %v6283
    %v6364 = vpack.c.bf16 %v6300, %v6284
    %v6365 = vpack.c.bf16 %v6301, %v6285
    %v6366 = vpack.c.bf16 %v6302, %v6286
    %v6367 = vpack.c.bf16 %v6303, %v6287
    %v6368 = vpack.c.bf16 %v6304, %v6288
    %v6369 = vpack.c.bf16 %v6305, %v6289
    %v6370 = vpack.c.bf16 %v6306, %v6290
    %v6371 = vpack.c.bf16 %v6307, %v6291
    %v6372 = vpack.c.bf16 %v6308, %v6292
    %v6373 = vpack.c.bf16 %v6309, %v6293
    %v6374 = vpack.c.bf16 %v6326, %v6310
    %v6375 = vpack.c.bf16 %v6327, %v6311
    %v6376 = vpack.c.bf16 %v6328, %v6312
    %v6377 = vpack.c.bf16 %v6329, %v6313
    %v6378 = vpack.c.bf16 %v6330, %v6314
    %v6379 = vpack.c.bf16 %v6331, %v6315
    %v6380 = vpack.c.bf16 %v6332, %v6316
    %v6381 = vpack.c.bf16 %v6333, %v6317
    %v6382 = vpack.c.bf16 %v6334, %v6318
    %v6383 = vpack.c.bf16 %v6335, %v6319
    %v6384 = vpack.c.bf16 %v6336, %v6320
    %v6385 = vpack.c.bf16 %v6337, %v6321
    %v6386 = vpack.c.bf16 %v6338, %v6322
    %v6387 = vpack.c.bf16 %v6339, %v6323
    %v6388 = vpack.c.bf16 %v6340, %v6324
    %v6389 = vpack.c.bf16 %v6341, %v6325
    %s6390 = scalar_lea.vmem %s10, 1024
    %v6391 = vld [vmem:[%s6390] sm:$0xf]
    %v6392 = vld [vmem:[%s6390 + $0x4] sm:$0xf]
    %v6393 = vld [vmem:[%s6390 + $0x8] sm:$0xf]
    %v6394 = vld [vmem:[%s6390 + $0xc] sm:$0xf]
    %v6395 = vld [vmem:[%s6390 + $0x10] sm:$0xf]
    %v6396 = vld [vmem:[%s6390 + $0x14] sm:$0xf]
    %v6397 = vld [vmem:[%s6390 + $0x18] sm:$0xf]
    %v6398 = vld [vmem:[%s6390 + $0x1c] sm:$0xf]
    %v6399 = vld [vmem:[%s6390 + $0x20] sm:$0xf]
    %v6400 = vld [vmem:[%s6390 + $0x24] sm:$0xf]
    %v6401 = vld [vmem:[%s6390 + $0x28] sm:$0xf]
    %v6402 = vld [vmem:[%s6390 + $0x2c] sm:$0xf]
    %v6403 = vld [vmem:[%s6390 + $0x30] sm:$0xf]
    %v6404 = vld [vmem:[%s6390 + $0x34] sm:$0xf]
    %v6405 = vld [vmem:[%s6390 + $0x38] sm:$0xf]
    %v6406 = vld [vmem:[%s6390 + $0x3c] sm:$0xf]
    %v6407 = vld [vmem:[%s6390 + $0x40] sm:$0xf]
    %v6408 = vld [vmem:[%s6390 + $0x44] sm:$0xf]
    %v6409 = vld [vmem:[%s6390 + $0x48] sm:$0xf]
    %v6410 = vld [vmem:[%s6390 + $0x4c] sm:$0xf]
    %v6411 = vld [vmem:[%s6390 + $0x50] sm:$0xf]
    %v6412 = vld [vmem:[%s6390 + $0x54] sm:$0xf]
    %v6413 = vld [vmem:[%s6390 + $0x58] sm:$0xf]
    %v6414 = vld [vmem:[%s6390 + $0x5c] sm:$0xf]
    %v6415 = vld [vmem:[%s6390 + $0x60] sm:$0xf]
    %v6416 = vld [vmem:[%s6390 + $0x64] sm:$0xf]
    %v6417 = vld [vmem:[%s6390 + $0x68] sm:$0xf]
    %v6418 = vld [vmem:[%s6390 + $0x6c] sm:$0xf]
    %v6419 = vld [vmem:[%s6390 + $0x70] sm:$0xf]
    %v6420 = vld [vmem:[%s6390 + $0x74] sm:$0xf]
    %v6421 = vld [vmem:[%s6390 + $0x78] sm:$0xf]
    %v6422 = vld [vmem:[%s6390 + $0x7c] sm:$0xf]
    %v6423 = vld [vmem:[%s6390 + $0x80] sm:$0xf]
    %v6424 = vld [vmem:[%s6390 + $0x84] sm:$0xf]
    %v6425 = vld [vmem:[%s6390 + $0x88] sm:$0xf]
    %v6426 = vld [vmem:[%s6390 + $0x8c] sm:$0xf]
    %v6427 = vld [vmem:[%s6390 + $0x90] sm:$0xf]
    %v6428 = vld [vmem:[%s6390 + $0x94] sm:$0xf]
    %v6429 = vld [vmem:[%s6390 + $0x98] sm:$0xf]
    %v6430 = vld [vmem:[%s6390 + $0x9c] sm:$0xf]
    %v6431 = vld [vmem:[%s6390 + $0xa0] sm:$0xf]
    %v6432 = vld [vmem:[%s6390 + $0xa4] sm:$0xf]
    %v6433 = vld [vmem:[%s6390 + $0xa8] sm:$0xf]
    %v6434 = vld [vmem:[%s6390 + $0xac] sm:$0xf]
    %v6435 = vld [vmem:[%s6390 + $0xb0] sm:$0xf]
    %v6436 = vld [vmem:[%s6390 + $0xb4] sm:$0xf]
    %v6437 = vld [vmem:[%s6390 + $0xb8] sm:$0xf]
    %v6438 = vld [vmem:[%s6390 + $0xbc] sm:$0xf]
    %v6439 = vld [vmem:[%s6390 + $0xc0] sm:$0xf]
    %v6440 = vld [vmem:[%s6390 + $0xc4] sm:$0xf]
    %v6441 = vld [vmem:[%s6390 + $0xc8] sm:$0xf]
    %v6442 = vld [vmem:[%s6390 + $0xcc] sm:$0xf]
    %v6443 = vld [vmem:[%s6390 + $0xd0] sm:$0xf]
    %v6444 = vld [vmem:[%s6390 + $0xd4] sm:$0xf]
    %v6445 = vld [vmem:[%s6390 + $0xd8] sm:$0xf]
    %v6446 = vld [vmem:[%s6390 + $0xdc] sm:$0xf]
    %v6447 = vld [vmem:[%s6390 + $0xe0] sm:$0xf]
    %v6448 = vld [vmem:[%s6390 + $0xe4] sm:$0xf]
    %v6449 = vld [vmem:[%s6390 + $0xe8] sm:$0xf]
    %v6450 = vld [vmem:[%s6390 + $0xec] sm:$0xf]
    %v6451 = vld [vmem:[%s6390 + $0xf0] sm:$0xf]
    %v6452 = vld [vmem:[%s6390 + $0xf4] sm:$0xf]
    %v6453 = vld [vmem:[%s6390 + $0xf8] sm:$0xf]
    %v6454 = vld [vmem:[%s6390 + $0xfc] sm:$0xf]
    %v6455 = vld [vmem:[%s6390 + $0x100] sm:$0xf]
    %v6456 = vld [vmem:[%s6390 + $0x104] sm:$0xf]
    %v6457 = vld [vmem:[%s6390 + $0x108] sm:$0xf]
    %v6458 = vld [vmem:[%s6390 + $0x10c] sm:$0xf]
    %v6459 = vld [vmem:[%s6390 + $0x110] sm:$0xf]
    %v6460 = vld [vmem:[%s6390 + $0x114] sm:$0xf]
    %v6461 = vld [vmem:[%s6390 + $0x118] sm:$0xf]
    %v6462 = vld [vmem:[%s6390 + $0x11c] sm:$0xf]
    %v6463 = vld [vmem:[%s6390 + $0x120] sm:$0xf]
    %v6464 = vld [vmem:[%s6390 + $0x124] sm:$0xf]
    %v6465 = vld [vmem:[%s6390 + $0x128] sm:$0xf]
    %v6466 = vld [vmem:[%s6390 + $0x12c] sm:$0xf]
    %v6467 = vld [vmem:[%s6390 + $0x130] sm:$0xf]
    %v6468 = vld [vmem:[%s6390 + $0x134] sm:$0xf]
    %v6469 = vld [vmem:[%s6390 + $0x138] sm:$0xf]
    %v6470 = vld [vmem:[%s6390 + $0x13c] sm:$0xf]
    %v6471 = vld [vmem:[%s6390 + $0x140] sm:$0xf]
    %v6472 = vld [vmem:[%s6390 + $0x144] sm:$0xf]
    %v6473 = vld [vmem:[%s6390 + $0x148] sm:$0xf]
    %v6474 = vld [vmem:[%s6390 + $0x14c] sm:$0xf]
    %v6475 = vld [vmem:[%s6390 + $0x150] sm:$0xf]
    %v6476 = vld [vmem:[%s6390 + $0x154] sm:$0xf]
    %v6477 = vld [vmem:[%s6390 + $0x158] sm:$0xf]
    %v6478 = vld [vmem:[%s6390 + $0x15c] sm:$0xf]
    %v6479 = vld [vmem:[%s6390 + $0x160] sm:$0xf]
    %v6480 = vld [vmem:[%s6390 + $0x164] sm:$0xf]
    %v6481 = vld [vmem:[%s6390 + $0x168] sm:$0xf]
    %v6482 = vld [vmem:[%s6390 + $0x16c] sm:$0xf]
    %v6483 = vld [vmem:[%s6390 + $0x170] sm:$0xf]
    %v6484 = vld [vmem:[%s6390 + $0x174] sm:$0xf]
    %v6485 = vld [vmem:[%s6390 + $0x178] sm:$0xf]
    %v6486 = vld [vmem:[%s6390 + $0x17c] sm:$0xf]
    %v6487 = vld [vmem:[%s6390 + $0x180] sm:$0xf]
    %v6488 = vld [vmem:[%s6390 + $0x184] sm:$0xf]
    %v6489 = vld [vmem:[%s6390 + $0x188] sm:$0xf]
    %v6490 = vld [vmem:[%s6390 + $0x18c] sm:$0xf]
    %v6491 = vld [vmem:[%s6390 + $0x190] sm:$0xf]
    %v6492 = vld [vmem:[%s6390 + $0x194] sm:$0xf]
    %v6493 = vld [vmem:[%s6390 + $0x198] sm:$0xf]
    %v6494 = vld [vmem:[%s6390 + $0x19c] sm:$0xf]
    %v6495 = vld [vmem:[%s6390 + $0x1a0] sm:$0xf]
    %v6496 = vld [vmem:[%s6390 + $0x1a4] sm:$0xf]
    %v6497 = vld [vmem:[%s6390 + $0x1a8] sm:$0xf]
    %v6498 = vld [vmem:[%s6390 + $0x1ac] sm:$0xf]
    %v6499 = vld [vmem:[%s6390 + $0x1b0] sm:$0xf]
    %v6500 = vld [vmem:[%s6390 + $0x1b4] sm:$0xf]
    %v6501 = vld [vmem:[%s6390 + $0x1b8] sm:$0xf]
    %v6502 = vld [vmem:[%s6390 + $0x1bc] sm:$0xf]
    %v6503 = vld [vmem:[%s6390 + $0x1c0] sm:$0xf]
    %v6504 = vld [vmem:[%s6390 + $0x1c4] sm:$0xf]
    %v6505 = vld [vmem:[%s6390 + $0x1c8] sm:$0xf]
    %v6506 = vld [vmem:[%s6390 + $0x1cc] sm:$0xf]
    %v6507 = vld [vmem:[%s6390 + $0x1d0] sm:$0xf]
    %v6508 = vld [vmem:[%s6390 + $0x1d4] sm:$0xf]
    %v6509 = vld [vmem:[%s6390 + $0x1d8] sm:$0xf]
    %v6510 = vld [vmem:[%s6390 + $0x1dc] sm:$0xf]
    %v6511 = vld [vmem:[%s6390 + $0x1e0] sm:$0xf]
    %v6512 = vld [vmem:[%s6390 + $0x1e4] sm:$0xf]
    %v6513 = vld [vmem:[%s6390 + $0x1e8] sm:$0xf]
    %v6514 = vld [vmem:[%s6390 + $0x1ec] sm:$0xf]
    %v6515 = vld [vmem:[%s6390 + $0x1f0] sm:$0xf]
    %v6516 = vld [vmem:[%s6390 + $0x1f4] sm:$0xf]
    %v6517 = vld [vmem:[%s6390 + $0x1f8] sm:$0xf]
    %v6518 = vld [vmem:[%s6390 + $0x1fc] sm:$0xf]
    %v6519 = vld [vmem:[%s6390 + $0x200] sm:$0xf]
    %v6520 = vld [vmem:[%s6390 + $0x204] sm:$0xf]
    %v6521 = vld [vmem:[%s6390 + $0x208] sm:$0xf]
    %v6522 = vld [vmem:[%s6390 + $0x20c] sm:$0xf]
    %v6523 = vld [vmem:[%s6390 + $0x210] sm:$0xf]
    %v6524 = vld [vmem:[%s6390 + $0x214] sm:$0xf]
    %v6525 = vld [vmem:[%s6390 + $0x218] sm:$0xf]
    %v6526 = vld [vmem:[%s6390 + $0x21c] sm:$0xf]
    %v6527 = vld [vmem:[%s6390 + $0x220] sm:$0xf]
    %v6528 = vld [vmem:[%s6390 + $0x224] sm:$0xf]
    %v6529 = vld [vmem:[%s6390 + $0x228] sm:$0xf]
    %v6530 = vld [vmem:[%s6390 + $0x22c] sm:$0xf]
    %v6531 = vld [vmem:[%s6390 + $0x230] sm:$0xf]
    %v6532 = vld [vmem:[%s6390 + $0x234] sm:$0xf]
    %v6533 = vld [vmem:[%s6390 + $0x238] sm:$0xf]
    %v6534 = vld [vmem:[%s6390 + $0x23c] sm:$0xf]
    %v6535 = vld [vmem:[%s6390 + $0x240] sm:$0xf]
    %v6536 = vld [vmem:[%s6390 + $0x244] sm:$0xf]
    %v6537 = vld [vmem:[%s6390 + $0x248] sm:$0xf]
    %v6538 = vld [vmem:[%s6390 + $0x24c] sm:$0xf]
    %v6539 = vld [vmem:[%s6390 + $0x250] sm:$0xf]
    %v6540 = vld [vmem:[%s6390 + $0x254] sm:$0xf]
    %v6541 = vld [vmem:[%s6390 + $0x258] sm:$0xf]
    %v6542 = vld [vmem:[%s6390 + $0x25c] sm:$0xf]
    %v6543 = vld [vmem:[%s6390 + $0x260] sm:$0xf]
    %v6544 = vld [vmem:[%s6390 + $0x264] sm:$0xf]
    %v6545 = vld [vmem:[%s6390 + $0x268] sm:$0xf]
    %v6546 = vld [vmem:[%s6390 + $0x26c] sm:$0xf]
    %v6547 = vld [vmem:[%s6390 + $0x270] sm:$0xf]
    %v6548 = vld [vmem:[%s6390 + $0x274] sm:$0xf]
    %v6549 = vld [vmem:[%s6390 + $0x278] sm:$0xf]
    %v6550 = vld [vmem:[%s6390 + $0x27c] sm:$0xf]
    %v6551 = vld [vmem:[%s6390 + $0x280] sm:$0xf]
    %v6552 = vld [vmem:[%s6390 + $0x284] sm:$0xf]
    %v6553 = vld [vmem:[%s6390 + $0x288] sm:$0xf]
    %v6554 = vld [vmem:[%s6390 + $0x28c] sm:$0xf]
    %v6555 = vld [vmem:[%s6390 + $0x290] sm:$0xf]
    %v6556 = vld [vmem:[%s6390 + $0x294] sm:$0xf]
    %v6557 = vld [vmem:[%s6390 + $0x298] sm:$0xf]
    %v6558 = vld [vmem:[%s6390 + $0x29c] sm:$0xf]
    %v6559 = vld [vmem:[%s6390 + $0x2a0] sm:$0xf]
    %v6560 = vld [vmem:[%s6390 + $0x2a4] sm:$0xf]
    %v6561 = vld [vmem:[%s6390 + $0x2a8] sm:$0xf]
    %v6562 = vld [vmem:[%s6390 + $0x2ac] sm:$0xf]
    %v6563 = vld [vmem:[%s6390 + $0x2b0] sm:$0xf]
    %v6564 = vld [vmem:[%s6390 + $0x2b4] sm:$0xf]
    %v6565 = vld [vmem:[%s6390 + $0x2b8] sm:$0xf]
    %v6566 = vld [vmem:[%s6390 + $0x2bc] sm:$0xf]
    %v6567 = vld [vmem:[%s6390 + $0x2c0] sm:$0xf]
    %v6568 = vld [vmem:[%s6390 + $0x2c4] sm:$0xf]
    %v6569 = vld [vmem:[%s6390 + $0x2c8] sm:$0xf]
    %v6570 = vld [vmem:[%s6390 + $0x2cc] sm:$0xf]
    %v6571 = vld [vmem:[%s6390 + $0x2d0] sm:$0xf]
    %v6572 = vld [vmem:[%s6390 + $0x2d4] sm:$0xf]
    %v6573 = vld [vmem:[%s6390 + $0x2d8] sm:$0xf]
    %v6574 = vld [vmem:[%s6390 + $0x2dc] sm:$0xf]
    %v6575 = vld [vmem:[%s6390 + $0x2e0] sm:$0xf]
    %v6576 = vld [vmem:[%s6390 + $0x2e4] sm:$0xf]
    %v6577 = vld [vmem:[%s6390 + $0x2e8] sm:$0xf]
    %v6578 = vld [vmem:[%s6390 + $0x2ec] sm:$0xf]
    %v6579 = vld [vmem:[%s6390 + $0x2f0] sm:$0xf]
    %v6580 = vld [vmem:[%s6390 + $0x2f4] sm:$0xf]
    %v6581 = vld [vmem:[%s6390 + $0x2f8] sm:$0xf]
    %v6582 = vld [vmem:[%s6390 + $0x2fc] sm:$0xf]
    %v6583 = vld [vmem:[%s6390 + $0x300] sm:$0xf]
    %v6584 = vld [vmem:[%s6390 + $0x304] sm:$0xf]
    %v6585 = vld [vmem:[%s6390 + $0x308] sm:$0xf]
    %v6586 = vld [vmem:[%s6390 + $0x30c] sm:$0xf]
    %v6587 = vld [vmem:[%s6390 + $0x310] sm:$0xf]
    %v6588 = vld [vmem:[%s6390 + $0x314] sm:$0xf]
    %v6589 = vld [vmem:[%s6390 + $0x318] sm:$0xf]
    %v6590 = vld [vmem:[%s6390 + $0x31c] sm:$0xf]
    %v6591 = vld [vmem:[%s6390 + $0x320] sm:$0xf]
    %v6592 = vld [vmem:[%s6390 + $0x324] sm:$0xf]
    %v6593 = vld [vmem:[%s6390 + $0x328] sm:$0xf]
    %v6594 = vld [vmem:[%s6390 + $0x32c] sm:$0xf]
    %v6595 = vld [vmem:[%s6390 + $0x330] sm:$0xf]
    %v6596 = vld [vmem:[%s6390 + $0x334] sm:$0xf]
    %v6597 = vld [vmem:[%s6390 + $0x338] sm:$0xf]
    %v6598 = vld [vmem:[%s6390 + $0x33c] sm:$0xf]
    %v6599 = vld [vmem:[%s6390 + $0x340] sm:$0xf]
    %v6600 = vld [vmem:[%s6390 + $0x344] sm:$0xf]
    %v6601 = vld [vmem:[%s6390 + $0x348] sm:$0xf]
    %v6602 = vld [vmem:[%s6390 + $0x34c] sm:$0xf]
    %v6603 = vld [vmem:[%s6390 + $0x350] sm:$0xf]
    %v6604 = vld [vmem:[%s6390 + $0x354] sm:$0xf]
    %v6605 = vld [vmem:[%s6390 + $0x358] sm:$0xf]
    %v6606 = vld [vmem:[%s6390 + $0x35c] sm:$0xf]
    %v6607 = vld [vmem:[%s6390 + $0x360] sm:$0xf]
    %v6608 = vld [vmem:[%s6390 + $0x364] sm:$0xf]
    %v6609 = vld [vmem:[%s6390 + $0x368] sm:$0xf]
    %v6610 = vld [vmem:[%s6390 + $0x36c] sm:$0xf]
    %v6611 = vld [vmem:[%s6390 + $0x370] sm:$0xf]
    %v6612 = vld [vmem:[%s6390 + $0x374] sm:$0xf]
    %v6613 = vld [vmem:[%s6390 + $0x378] sm:$0xf]
    %v6614 = vld [vmem:[%s6390 + $0x37c] sm:$0xf]
    %v6615 = vld [vmem:[%s6390 + $0x380] sm:$0xf]
    %v6616 = vld [vmem:[%s6390 + $0x384] sm:$0xf]
    %v6617 = vld [vmem:[%s6390 + $0x388] sm:$0xf]
    %v6618 = vld [vmem:[%s6390 + $0x38c] sm:$0xf]
    %v6619 = vld [vmem:[%s6390 + $0x390] sm:$0xf]
    %v6620 = vld [vmem:[%s6390 + $0x394] sm:$0xf]
    %v6621 = vld [vmem:[%s6390 + $0x398] sm:$0xf]
    %v6622 = vld [vmem:[%s6390 + $0x39c] sm:$0xf]
    %v6623 = vld [vmem:[%s6390 + $0x3a0] sm:$0xf]
    %v6624 = vld [vmem:[%s6390 + $0x3a4] sm:$0xf]
    %v6625 = vld [vmem:[%s6390 + $0x3a8] sm:$0xf]
    %v6626 = vld [vmem:[%s6390 + $0x3ac] sm:$0xf]
    %v6627 = vld [vmem:[%s6390 + $0x3b0] sm:$0xf]
    %v6628 = vld [vmem:[%s6390 + $0x3b4] sm:$0xf]
    %v6629 = vld [vmem:[%s6390 + $0x3b8] sm:$0xf]
    %v6630 = vld [vmem:[%s6390 + $0x3bc] sm:$0xf]
    %v6631 = vld [vmem:[%s6390 + $0x3c0] sm:$0xf]
    %v6632 = vld [vmem:[%s6390 + $0x3c4] sm:$0xf]
    %v6633 = vld [vmem:[%s6390 + $0x3c8] sm:$0xf]
    %v6634 = vld [vmem:[%s6390 + $0x3cc] sm:$0xf]
    %v6635 = vld [vmem:[%s6390 + $0x3d0] sm:$0xf]
    %v6636 = vld [vmem:[%s6390 + $0x3d4] sm:$0xf]
    %v6637 = vld [vmem:[%s6390 + $0x3d8] sm:$0xf]
    %v6638 = vld [vmem:[%s6390 + $0x3dc] sm:$0xf]
    %v6639 = vld [vmem:[%s6390 + $0x3e0] sm:$0xf]
    %v6640 = vld [vmem:[%s6390 + $0x3e4] sm:$0xf]
    %v6641 = vld [vmem:[%s6390 + $0x3e8] sm:$0xf]
    %v6642 = vld [vmem:[%s6390 + $0x3ec] sm:$0xf]
    %v6643 = vld [vmem:[%s6390 + $0x3f0] sm:$0xf]
    %v6644 = vld [vmem:[%s6390 + $0x3f4] sm:$0xf]
    %v6645 = vld [vmem:[%s6390 + $0x3f8] sm:$0xf]
    %v6646 = vld [vmem:[%s6390 + $0x3fc] sm:$0xf]
    %s6647 = scalar_lea.vmem %s11, 1
    %v6648 = vld [vmem:[%s6647] sm:$0x1]
    %v6650 = vlaneseq
    %v6651 = vshrl.u32 %v6650, 7
    %v6652 = vsub.s32 0, %v6651
    %v6653 = vrot.slane %v6648, %v6652
    %v6911 = vunpack.c.l.b16 %v6391
    %v6912 = vunpack.c.l.b16 %v6392
    %v6913 = vunpack.c.l.b16 %v6393
    %v6914 = vunpack.c.l.b16 %v6394
    %v6915 = vunpack.c.l.b16 %v6395
    %v6916 = vunpack.c.l.b16 %v6396
    %v6917 = vunpack.c.l.b16 %v6397
    %v6918 = vunpack.c.l.b16 %v6398
    %v6919 = vunpack.c.l.b16 %v6399
    %v6920 = vunpack.c.l.b16 %v6400
    %v6921 = vunpack.c.l.b16 %v6401
    %v6922 = vunpack.c.l.b16 %v6402
    %v6923 = vunpack.c.l.b16 %v6403
    %v6924 = vunpack.c.l.b16 %v6404
    %v6925 = vunpack.c.l.b16 %v6405
    %v6926 = vunpack.c.l.b16 %v6406
    %v6927 = vunpack.c.l.b16 %v6407
    %v6928 = vunpack.c.l.b16 %v6408
    %v6929 = vunpack.c.l.b16 %v6409
    %v6930 = vunpack.c.l.b16 %v6410
    %v6931 = vunpack.c.l.b16 %v6411
    %v6932 = vunpack.c.l.b16 %v6412
    %v6933 = vunpack.c.l.b16 %v6413
    %v6934 = vunpack.c.l.b16 %v6414
    %v6935 = vunpack.c.l.b16 %v6415
    %v6936 = vunpack.c.l.b16 %v6416
    %v6937 = vunpack.c.l.b16 %v6417
    %v6938 = vunpack.c.l.b16 %v6418
    %v6939 = vunpack.c.l.b16 %v6419
    %v6940 = vunpack.c.l.b16 %v6420
    %v6941 = vunpack.c.l.b16 %v6421
    %v6942 = vunpack.c.l.b16 %v6422
    %v6943 = vunpack.c.l.b16 %v6423
    %v6944 = vunpack.c.l.b16 %v6424
    %v6945 = vunpack.c.l.b16 %v6425
    %v6946 = vunpack.c.l.b16 %v6426
    %v6947 = vunpack.c.l.b16 %v6427
    %v6948 = vunpack.c.l.b16 %v6428
    %v6949 = vunpack.c.l.b16 %v6429
    %v6950 = vunpack.c.l.b16 %v6430
    %v6951 = vunpack.c.l.b16 %v6431
    %v6952 = vunpack.c.l.b16 %v6432
    %v6953 = vunpack.c.l.b16 %v6433
    %v6954 = vunpack.c.l.b16 %v6434
    %v6955 = vunpack.c.l.b16 %v6435
    %v6956 = vunpack.c.l.b16 %v6436
    %v6957 = vunpack.c.l.b16 %v6437
    %v6958 = vunpack.c.l.b16 %v6438
    %v6959 = vunpack.c.l.b16 %v6439
    %v6960 = vunpack.c.l.b16 %v6440
    %v6961 = vunpack.c.l.b16 %v6441
    %v6962 = vunpack.c.l.b16 %v6442
    %v6963 = vunpack.c.l.b16 %v6443
    %v6964 = vunpack.c.l.b16 %v6444
    %v6965 = vunpack.c.l.b16 %v6445
    %v6966 = vunpack.c.l.b16 %v6446
    %v6967 = vunpack.c.l.b16 %v6447
    %v6968 = vunpack.c.l.b16 %v6448
    %v6969 = vunpack.c.l.b16 %v6449
    %v6970 = vunpack.c.l.b16 %v6450
    %v6971 = vunpack.c.l.b16 %v6451
    %v6972 = vunpack.c.l.b16 %v6452
    %v6973 = vunpack.c.l.b16 %v6453
    %v6974 = vunpack.c.l.b16 %v6454
    %v6975 = vunpack.c.l.b16 %v6455
    %v6976 = vunpack.c.l.b16 %v6456
    %v6977 = vunpack.c.l.b16 %v6457
    %v6978 = vunpack.c.l.b16 %v6458
    %v6979 = vunpack.c.l.b16 %v6459
    %v6980 = vunpack.c.l.b16 %v6460
    %v6981 = vunpack.c.l.b16 %v6461
    %v6982 = vunpack.c.l.b16 %v6462
    %v6983 = vunpack.c.l.b16 %v6463
    %v6984 = vunpack.c.l.b16 %v6464
    %v6985 = vunpack.c.l.b16 %v6465
    %v6986 = vunpack.c.l.b16 %v6466
    %v6987 = vunpack.c.l.b16 %v6467
    %v6988 = vunpack.c.l.b16 %v6468
    %v6989 = vunpack.c.l.b16 %v6469
    %v6990 = vunpack.c.l.b16 %v6470
    %v6991 = vunpack.c.l.b16 %v6471
    %v6992 = vunpack.c.l.b16 %v6472
    %v6993 = vunpack.c.l.b16 %v6473
    %v6994 = vunpack.c.l.b16 %v6474
    %v6995 = vunpack.c.l.b16 %v6475
    %v6996 = vunpack.c.l.b16 %v6476
    %v6997 = vunpack.c.l.b16 %v6477
    %v6998 = vunpack.c.l.b16 %v6478
    %v6999 = vunpack.c.l.b16 %v6479
    %v7000 = vunpack.c.l.b16 %v6480
    %v7001 = vunpack.c.l.b16 %v6481
    %v7002 = vunpack.c.l.b16 %v6482
    %v7003 = vunpack.c.l.b16 %v6483
    %v7004 = vunpack.c.l.b16 %v6484
    %v7005 = vunpack.c.l.b16 %v6485
    %v7006 = vunpack.c.l.b16 %v6486
    %v7007 = vunpack.c.l.b16 %v6487
    %v7008 = vunpack.c.l.b16 %v6488
    %v7009 = vunpack.c.l.b16 %v6489
    %v7010 = vunpack.c.l.b16 %v6490
    %v7011 = vunpack.c.l.b16 %v6491
    %v7012 = vunpack.c.l.b16 %v6492
    %v7013 = vunpack.c.l.b16 %v6493
    %v7014 = vunpack.c.l.b16 %v6494
    %v7015 = vunpack.c.l.b16 %v6495
    %v7016 = vunpack.c.l.b16 %v6496
    %v7017 = vunpack.c.l.b16 %v6497
    %v7018 = vunpack.c.l.b16 %v6498
    %v7019 = vunpack.c.l.b16 %v6499
    %v7020 = vunpack.c.l.b16 %v6500
    %v7021 = vunpack.c.l.b16 %v6501
    %v7022 = vunpack.c.l.b16 %v6502
    %v7023 = vunpack.c.l.b16 %v6503
    %v7024 = vunpack.c.l.b16 %v6504
    %v7025 = vunpack.c.l.b16 %v6505
    %v7026 = vunpack.c.l.b16 %v6506
    %v7027 = vunpack.c.l.b16 %v6507
    %v7028 = vunpack.c.l.b16 %v6508
    %v7029 = vunpack.c.l.b16 %v6509
    %v7030 = vunpack.c.l.b16 %v6510
    %v7031 = vunpack.c.l.b16 %v6511
    %v7032 = vunpack.c.l.b16 %v6512
    %v7033 = vunpack.c.l.b16 %v6513
    %v7034 = vunpack.c.l.b16 %v6514
    %v7035 = vunpack.c.l.b16 %v6515
    %v7036 = vunpack.c.l.b16 %v6516
    %v7037 = vunpack.c.l.b16 %v6517
    %v7038 = vunpack.c.l.b16 %v6518
    %v7039 = vunpack.c.l.b16 %v6519
    %v7040 = vunpack.c.l.b16 %v6520
    %v7041 = vunpack.c.l.b16 %v6521
    %v7042 = vunpack.c.l.b16 %v6522
    %v7043 = vunpack.c.l.b16 %v6523
    %v7044 = vunpack.c.l.b16 %v6524
    %v7045 = vunpack.c.l.b16 %v6525
    %v7046 = vunpack.c.l.b16 %v6526
    %v7047 = vunpack.c.l.b16 %v6527
    %v7048 = vunpack.c.l.b16 %v6528
    %v7049 = vunpack.c.l.b16 %v6529
    %v7050 = vunpack.c.l.b16 %v6530
    %v7051 = vunpack.c.l.b16 %v6531
    %v7052 = vunpack.c.l.b16 %v6532
    %v7053 = vunpack.c.l.b16 %v6533
    %v7054 = vunpack.c.l.b16 %v6534
    %v7055 = vunpack.c.l.b16 %v6535
    %v7056 = vunpack.c.l.b16 %v6536
    %v7057 = vunpack.c.l.b16 %v6537
    %v7058 = vunpack.c.l.b16 %v6538
    %v7059 = vunpack.c.l.b16 %v6539
    %v7060 = vunpack.c.l.b16 %v6540
    %v7061 = vunpack.c.l.b16 %v6541
    %v7062 = vunpack.c.l.b16 %v6542
    %v7063 = vunpack.c.l.b16 %v6543
    %v7064 = vunpack.c.l.b16 %v6544
    %v7065 = vunpack.c.l.b16 %v6545
    %v7066 = vunpack.c.l.b16 %v6546
    %v7067 = vunpack.c.l.b16 %v6547
    %v7068 = vunpack.c.l.b16 %v6548
    %v7069 = vunpack.c.l.b16 %v6549
    %v7070 = vunpack.c.l.b16 %v6550
    %v7071 = vunpack.c.l.b16 %v6551
    %v7072 = vunpack.c.l.b16 %v6552
    %v7073 = vunpack.c.l.b16 %v6553
    %v7074 = vunpack.c.l.b16 %v6554
    %v7075 = vunpack.c.l.b16 %v6555
    %v7076 = vunpack.c.l.b16 %v6556
    %v7077 = vunpack.c.l.b16 %v6557
    %v7078 = vunpack.c.l.b16 %v6558
    %v7079 = vunpack.c.l.b16 %v6559
    %v7080 = vunpack.c.l.b16 %v6560
    %v7081 = vunpack.c.l.b16 %v6561
    %v7082 = vunpack.c.l.b16 %v6562
    %v7083 = vunpack.c.l.b16 %v6563
    %v7084 = vunpack.c.l.b16 %v6564
    %v7085 = vunpack.c.l.b16 %v6565
    %v7086 = vunpack.c.l.b16 %v6566
    %v7087 = vunpack.c.l.b16 %v6567
    %v7088 = vunpack.c.l.b16 %v6568
    %v7089 = vunpack.c.l.b16 %v6569
    %v7090 = vunpack.c.l.b16 %v6570
    %v7091 = vunpack.c.l.b16 %v6571
    %v7092 = vunpack.c.l.b16 %v6572
    %v7093 = vunpack.c.l.b16 %v6573
    %v7094 = vunpack.c.l.b16 %v6574
    %v7095 = vunpack.c.l.b16 %v6575
    %v7096 = vunpack.c.l.b16 %v6576
    %v7097 = vunpack.c.l.b16 %v6577
    %v7098 = vunpack.c.l.b16 %v6578
    %v7099 = vunpack.c.l.b16 %v6579
    %v7100 = vunpack.c.l.b16 %v6580
    %v7101 = vunpack.c.l.b16 %v6581
    %v7102 = vunpack.c.l.b16 %v6582
    %v7103 = vunpack.c.l.b16 %v6583
    %v7104 = vunpack.c.l.b16 %v6584
    %v7105 = vunpack.c.l.b16 %v6585
    %v7106 = vunpack.c.l.b16 %v6586
    %v7107 = vunpack.c.l.b16 %v6587
    %v7108 = vunpack.c.l.b16 %v6588
    %v7109 = vunpack.c.l.b16 %v6589
    %v7110 = vunpack.c.l.b16 %v6590
    %v7111 = vunpack.c.l.b16 %v6591
    %v7112 = vunpack.c.l.b16 %v6592
    %v7113 = vunpack.c.l.b16 %v6593
    %v7114 = vunpack.c.l.b16 %v6594
    %v7115 = vunpack.c.l.b16 %v6595
    %v7116 = vunpack.c.l.b16 %v6596
    %v7117 = vunpack.c.l.b16 %v6597
    %v7118 = vunpack.c.l.b16 %v6598
    %v7119 = vunpack.c.l.b16 %v6599
    %v7120 = vunpack.c.l.b16 %v6600
    %v7121 = vunpack.c.l.b16 %v6601
    %v7122 = vunpack.c.l.b16 %v6602
    %v7123 = vunpack.c.l.b16 %v6603
    %v7124 = vunpack.c.l.b16 %v6604
    %v7125 = vunpack.c.l.b16 %v6605
    %v7126 = vunpack.c.l.b16 %v6606
    %v7127 = vunpack.c.l.b16 %v6607
    %v7128 = vunpack.c.l.b16 %v6608
    %v7129 = vunpack.c.l.b16 %v6609
    %v7130 = vunpack.c.l.b16 %v6610
    %v7131 = vunpack.c.l.b16 %v6611
    %v7132 = vunpack.c.l.b16 %v6612
    %v7133 = vunpack.c.l.b16 %v6613
    %v7134 = vunpack.c.l.b16 %v6614
    %v7135 = vunpack.c.l.b16 %v6615
    %v7136 = vunpack.c.l.b16 %v6616
    %v7137 = vunpack.c.l.b16 %v6617
    %v7138 = vunpack.c.l.b16 %v6618
    %v7139 = vunpack.c.l.b16 %v6619
    %v7140 = vunpack.c.l.b16 %v6620
    %v7141 = vunpack.c.l.b16 %v6621
    %v7142 = vunpack.c.l.b16 %v6622
    %v7143 = vunpack.c.l.b16 %v6623
    %v7144 = vunpack.c.l.b16 %v6624
    %v7145 = vunpack.c.l.b16 %v6625
    %v7146 = vunpack.c.l.b16 %v6626
    %v7147 = vunpack.c.l.b16 %v6627
    %v7148 = vunpack.c.l.b16 %v6628
    %v7149 = vunpack.c.l.b16 %v6629
    %v7150 = vunpack.c.l.b16 %v6630
    %v7151 = vunpack.c.l.b16 %v6631
    %v7152 = vunpack.c.l.b16 %v6632
    %v7153 = vunpack.c.l.b16 %v6633
    %v7154 = vunpack.c.l.b16 %v6634
    %v7155 = vunpack.c.l.b16 %v6635
    %v7156 = vunpack.c.l.b16 %v6636
    %v7157 = vunpack.c.l.b16 %v6637
    %v7158 = vunpack.c.l.b16 %v6638
    %v7159 = vunpack.c.l.b16 %v6639
    %v7160 = vunpack.c.l.b16 %v6640
    %v7161 = vunpack.c.l.b16 %v6641
    %v7162 = vunpack.c.l.b16 %v6642
    %v7163 = vunpack.c.l.b16 %v6643
    %v7164 = vunpack.c.l.b16 %v6644
    %v7165 = vunpack.c.l.b16 %v6645
    %v7166 = vunpack.c.l.b16 %v6646
    %v7167 = vpack.c.b16 %v6912, %v6911
    %v7168 = vpack.c.b16 %v6914, %v6913
    %v7169 = vpack.c.b16 %v6916, %v6915
    %v7170 = vpack.c.b16 %v6918, %v6917
    %v7171 = vpack.c.b16 %v6920, %v6919
    %v7172 = vpack.c.b16 %v6922, %v6921
    %v7173 = vpack.c.b16 %v6924, %v6923
    %v7174 = vpack.c.b16 %v6926, %v6925
    %v7175 = vpack.c.b16 %v6928, %v6927
    %v7176 = vpack.c.b16 %v6930, %v6929
    %v7177 = vpack.c.b16 %v6932, %v6931
    %v7178 = vpack.c.b16 %v6934, %v6933
    %v7179 = vpack.c.b16 %v6936, %v6935
    %v7180 = vpack.c.b16 %v6938, %v6937
    %v7181 = vpack.c.b16 %v6940, %v6939
    %v7182 = vpack.c.b16 %v6942, %v6941
    %v7183 = vpack.c.b16 %v6944, %v6943
    %v7184 = vpack.c.b16 %v6946, %v6945
    %v7185 = vpack.c.b16 %v6948, %v6947
    %v7186 = vpack.c.b16 %v6950, %v6949
    %v7187 = vpack.c.b16 %v6952, %v6951
    %v7188 = vpack.c.b16 %v6954, %v6953
    %v7189 = vpack.c.b16 %v6956, %v6955
    %v7190 = vpack.c.b16 %v6958, %v6957
    %v7191 = vpack.c.b16 %v6960, %v6959
    %v7192 = vpack.c.b16 %v6962, %v6961
    %v7193 = vpack.c.b16 %v6964, %v6963
    %v7194 = vpack.c.b16 %v6966, %v6965
    %v7195 = vpack.c.b16 %v6968, %v6967
    %v7196 = vpack.c.b16 %v6970, %v6969
    %v7197 = vpack.c.b16 %v6972, %v6971
    %v7198 = vpack.c.b16 %v6974, %v6973
    %v7199 = vpack.c.b16 %v6976, %v6975
    %v7200 = vpack.c.b16 %v6978, %v6977
    %v7201 = vpack.c.b16 %v6980, %v6979
    %v7202 = vpack.c.b16 %v6982, %v6981
    %v7203 = vpack.c.b16 %v6984, %v6983
    %v7204 = vpack.c.b16 %v6986, %v6985
    %v7205 = vpack.c.b16 %v6988, %v6987
    %v7206 = vpack.c.b16 %v6990, %v6989
    %v7207 = vpack.c.b16 %v6992, %v6991
    %v7208 = vpack.c.b16 %v6994, %v6993
    %v7209 = vpack.c.b16 %v6996, %v6995
    %v7210 = vpack.c.b16 %v6998, %v6997
    %v7211 = vpack.c.b16 %v7000, %v6999
    %v7212 = vpack.c.b16 %v7002, %v7001
    %v7213 = vpack.c.b16 %v7004, %v7003
    %v7214 = vpack.c.b16 %v7006, %v7005
    %v7215 = vpack.c.b16 %v7008, %v7007
    %v7216 = vpack.c.b16 %v7010, %v7009
    %v7217 = vpack.c.b16 %v7012, %v7011
    %v7218 = vpack.c.b16 %v7014, %v7013
    %v7219 = vpack.c.b16 %v7016, %v7015
    %v7220 = vpack.c.b16 %v7018, %v7017
    %v7221 = vpack.c.b16 %v7020, %v7019
    %v7222 = vpack.c.b16 %v7022, %v7021
    %v7223 = vpack.c.b16 %v7024, %v7023
    %v7224 = vpack.c.b16 %v7026, %v7025
    %v7225 = vpack.c.b16 %v7028, %v7027
    %v7226 = vpack.c.b16 %v7030, %v7029
    %v7227 = vpack.c.b16 %v7032, %v7031
    %v7228 = vpack.c.b16 %v7034, %v7033
    %v7229 = vpack.c.b16 %v7036, %v7035
    %v7230 = vpack.c.b16 %v7038, %v7037
    %v7231 = vpack.c.b16 %v7040, %v7039
    %v7232 = vpack.c.b16 %v7042, %v7041
    %v7233 = vpack.c.b16 %v7044, %v7043
    %v7234 = vpack.c.b16 %v7046, %v7045
    %v7235 = vpack.c.b16 %v7048, %v7047
    %v7236 = vpack.c.b16 %v7050, %v7049
    %v7237 = vpack.c.b16 %v7052, %v7051
    %v7238 = vpack.c.b16 %v7054, %v7053
    %v7239 = vpack.c.b16 %v7056, %v7055
    %v7240 = vpack.c.b16 %v7058, %v7057
    %v7241 = vpack.c.b16 %v7060, %v7059
    %v7242 = vpack.c.b16 %v7062, %v7061
    %v7243 = vpack.c.b16 %v7064, %v7063
    %v7244 = vpack.c.b16 %v7066, %v7065
    %v7245 = vpack.c.b16 %v7068, %v7067
    %v7246 = vpack.c.b16 %v7070, %v7069
    %v7247 = vpack.c.b16 %v7072, %v7071
    %v7248 = vpack.c.b16 %v7074, %v7073
    %v7249 = vpack.c.b16 %v7076, %v7075
    %v7250 = vpack.c.b16 %v7078, %v7077
    %v7251 = vpack.c.b16 %v7080, %v7079
    %v7252 = vpack.c.b16 %v7082, %v7081
    %v7253 = vpack.c.b16 %v7084, %v7083
    %v7254 = vpack.c.b16 %v7086, %v7085
    %v7255 = vpack.c.b16 %v7088, %v7087
    %v7256 = vpack.c.b16 %v7090, %v7089
    %v7257 = vpack.c.b16 %v7092, %v7091
    %v7258 = vpack.c.b16 %v7094, %v7093
    %v7259 = vpack.c.b16 %v7096, %v7095
    %v7260 = vpack.c.b16 %v7098, %v7097
    %v7261 = vpack.c.b16 %v7100, %v7099
    %v7262 = vpack.c.b16 %v7102, %v7101
    %v7263 = vpack.c.b16 %v7104, %v7103
    %v7264 = vpack.c.b16 %v7106, %v7105
    %v7265 = vpack.c.b16 %v7108, %v7107
    %v7266 = vpack.c.b16 %v7110, %v7109
    %v7267 = vpack.c.b16 %v7112, %v7111
    %v7268 = vpack.c.b16 %v7114, %v7113
    %v7269 = vpack.c.b16 %v7116, %v7115
    %v7270 = vpack.c.b16 %v7118, %v7117
    %v7271 = vpack.c.b16 %v7120, %v7119
    %v7272 = vpack.c.b16 %v7122, %v7121
    %v7273 = vpack.c.b16 %v7124, %v7123
    %v7274 = vpack.c.b16 %v7126, %v7125
    %v7275 = vpack.c.b16 %v7128, %v7127
    %v7276 = vpack.c.b16 %v7130, %v7129
    %v7277 = vpack.c.b16 %v7132, %v7131
    %v7278 = vpack.c.b16 %v7134, %v7133
    %v7279 = vpack.c.b16 %v7136, %v7135
    %v7280 = vpack.c.b16 %v7138, %v7137
    %v7281 = vpack.c.b16 %v7140, %v7139
    %v7282 = vpack.c.b16 %v7142, %v7141
    %v7283 = vpack.c.b16 %v7144, %v7143
    %v7284 = vpack.c.b16 %v7146, %v7145
    %v7285 = vpack.c.b16 %v7148, %v7147
    %v7286 = vpack.c.b16 %v7150, %v7149
    %v7287 = vpack.c.b16 %v7152, %v7151
    %v7288 = vpack.c.b16 %v7154, %v7153
    %v7289 = vpack.c.b16 %v7156, %v7155
    %v7290 = vpack.c.b16 %v7158, %v7157
    %v7291 = vpack.c.b16 %v7160, %v7159
    %v7292 = vpack.c.b16 %v7162, %v7161
    %v7293 = vpack.c.b16 %v7164, %v7163
    %v7294 = vpack.c.b16 %v7166, %v7165
    %7423 = vmatprep.subr.bf16.mxu0 0
    %7424 = vmatpush1.bf16.msra.mxu0 %v7167
    %7425 = vmatprep.subr.bf16.mxu0 0
    %7426 = vmatpush1.bf16.msra.mxu0 %v7168
    %7427 = vmatprep.subr.bf16.mxu0 0
    %7428 = vmatpush1.bf16.msra.mxu0 %v7169
    %7429 = vmatprep.subr.bf16.mxu0 0
    %7430 = vmatpush1.bf16.msra.mxu0 %v7170
    %7431 = vmatprep.subr.bf16.mxu0 0
    %7432 = vmatpush1.bf16.msra.mxu0 %v7171
    %7433 = vmatprep.subr.bf16.mxu0 0
    %7434 = vmatpush1.bf16.msra.mxu0 %v7172
    %7435 = vmatprep.subr.bf16.mxu0 0
    %7436 = vmatpush1.bf16.msra.mxu0 %v7173
    %7437 = vmatprep.subr.bf16.mxu0 0
    %7438 = vmatpush1.bf16.msra.mxu0 %v7174
    %7439 = vmatprep.subr.bf16.mxu0 0
    %7440 = vmatpush1.bf16.msra.mxu0 %v7175
    %7441 = vmatprep.subr.bf16.mxu0 0
    %7442 = vmatpush1.bf16.msra.mxu0 %v7176
    %7443 = vmatprep.subr.bf16.mxu0 0
    %7444 = vmatpush1.bf16.msra.mxu0 %v7177
    %7445 = vmatprep.subr.bf16.mxu0 0
    %7446 = vmatpush1.bf16.msra.mxu0 %v7178
    %7447 = vmatprep.subr.bf16.mxu0 0
    %7448 = vmatpush1.bf16.msra.mxu0 %v7179
    %7449 = vmatprep.subr.bf16.mxu0 0
    %7450 = vmatpush1.bf16.msra.mxu0 %v7180
    %7451 = vmatprep.subr.bf16.mxu0 0
    %7452 = vmatpush1.bf16.msra.mxu0 %v7181
    %7453 = vmatprep.subr.bf16.mxu0 0
    %7454 = vmatpush1.bf16.msra.mxu0 %v7182
    %7455 = vmatprep.mubr.bf16.mxu0 %v6343
    %7456 = vmatmul.mubr.bf16.gmra.mrb[0].mxu0 %v6342
    %v7457 = vpop.f32.mrb[0].mxu0
    %v7458 = vadd.f32 %v6653, %v7457
    %v7459 = vpop.f32.mrb[0].mxu0
    %v7460 = vpop.f32.mrb[0].mxu0
    %v7461 = vadd.f32 %v6653, %v7460
    %v7462 = vpop.f32.mrb[0].mxu0
    %7463 = vmatprep.mubr.bf16.mxu0 %v6359
    %7464 = vmatmul.mubr.bf16.gmra.mrb[0].mxu0 %v6358
    %v7465 = vpop.f32.mrb[0].mxu0
    %v7466 = vadd.f32 %v6653, %v7465
    %v7467 = vpop.f32.mrb[0].mxu0
    %v7468 = vpop.f32.mrb[0].mxu0
    %v7469 = vadd.f32 %v6653, %v7468
    %v7470 = vpop.f32.mrb[0].mxu0
    %7471 = vmatprep.mubr.bf16.mxu0 %v6375
    %7472 = vmatmul.mubr.bf16.gmra.mrb[0].mxu0 %v6374
    %v7473 = vpop.f32.mrb[0].mxu0
    %v7474 = vadd.f32 %v6653, %v7473
    %v7475 = vpop.f32.mrb[0].mxu0
    %v7476 = vpop.f32.mrb[0].mxu0
    %v7477 = vadd.f32 %v6653, %v7476
    %v7478 = vpop.f32.mrb[0].mxu0
    %7479 = vdwg.mxu0
    %7480 = vmatprep.subr.bf16.mxu0 0
    %7481 = vmatpush1.bf16.msra.mxu0 %v7183
    %7482 = vmatprep.subr.bf16.mxu0 0
    %7483 = vmatpush1.bf16.msra.mxu0 %v7184
    %7484 = vmatprep.subr.bf16.mxu0 0
    %7485 = vmatpush1.bf16.msra.mxu0 %v7185
    %7486 = vmatprep.subr.bf16.mxu0 0
    %7487 = vmatpush1.bf16.msra.mxu0 %v7186
    %7488 = vmatprep.subr.bf16.mxu0 0
    %7489 = vmatpush1.bf16.msra.mxu0 %v7187
    %7490 = vmatprep.subr.bf16.mxu0 0
    %7491 = vmatpush1.bf16.msra.mxu0 %v7188
    %7492 = vmatprep.subr.bf16.mxu0 0
    %7493 = vmatpush1.bf16.msra.mxu0 %v7189
    %7494 = vmatprep.subr.bf16.mxu0 0
    %7495 = vmatpush1.bf16.msra.mxu0 %v7190
    %7496 = vmatprep.subr.bf16.mxu0 0
    %7497 = vmatpush1.bf16.msra.mxu0 %v7191
    %7498 = vmatprep.subr.bf16.mxu0 0
    %7499 = vmatpush1.bf16.msra.mxu0 %v7192
    %7500 = vmatprep.subr.bf16.mxu0 0
    %7501 = vmatpush1.bf16.msra.mxu0 %v7193
    %7502 = vmatprep.subr.bf16.mxu0 0
    %7503 = vmatpush1.bf16.msra.mxu0 %v7194
    %7504 = vmatprep.subr.bf16.mxu0 0
    %7505 = vmatpush1.bf16.msra.mxu0 %v7195
    %7506 = vmatprep.subr.bf16.mxu0 0
    %7507 = vmatpush1.bf16.msra.mxu0 %v7196
    %7508 = vmatprep.subr.bf16.mxu0 0
    %7509 = vmatpush1.bf16.msra.mxu0 %v7197
    %7510 = vmatprep.subr.bf16.mxu0 0
    %7511 = vmatpush1.bf16.msra.mxu0 %v7198
    %7512 = vmatprep.mubr.bf16.mxu0 %v6345
    %7513 = vmatmul.mubr.bf16.gmra.mrb[0].mxu0 %v6344
    %v7514 = vpop.f32.mrb[0].mxu0
    %v7515 = vadd.f32 %v7458, %v7514
    %v7516 = vpop.f32.mrb[0].mxu0
    %v7517 = vpop.f32.mrb[0].mxu0
    %v7518 = vadd.f32 %v7461, %v7517
    %v7519 = vpop.f32.mrb[0].mxu0
    %7520 = vmatprep.mubr.bf16.mxu0 %v6361
    %7521 = vmatmul.mubr.bf16.gmra.mrb[0].mxu0 %v6360
    %v7522 = vpop.f32.mrb[0].mxu0
    %v7523 = vadd.f32 %v7466, %v7522
    %v7524 = vpop.f32.mrb[0].mxu0
    %v7525 = vpop.f32.mrb[0].mxu0
    %v7526 = vadd.f32 %v7469, %v7525
    %v7527 = vpop.f32.mrb[0].mxu0
    %7528 = vmatprep.mubr.bf16.mxu0 %v6377
    %7529 = vmatmul.mubr.bf16.gmra.mrb[0].mxu0 %v6376
    %v7530 = vpop.f32.mrb[0].mxu0
    %v7531 = vadd.f32 %v7474, %v7530
    %v7532 = vpop.f32.mrb[0].mxu0
    %v7533 = vpop.f32.mrb[0].mxu0
    %v7534 = vadd.f32 %v7477, %v7533
    %v7535 = vpop.f32.mrb[0].mxu0
    %7536 = vdwg.mxu0
    %7537 = vmatprep.subr.bf16.mxu0 0
    %7538 = vmatpush1.bf16.msra.mxu0 %v7199
    %7539 = vmatprep.subr.bf16.mxu0 0
    %7540 = vmatpush1.bf16.msra.mxu0 %v7200
    %7541 = vmatprep.subr.bf16.mxu0 0
    %7542 = vmatpush1.bf16.msra.mxu0 %v7201
    %7543 = vmatprep.subr.bf16.mxu0 0
    %7544 = vmatpush1.bf16.msra.mxu0 %v7202
    %7545 = vmatprep.subr.bf16.mxu0 0
    %7546 = vmatpush1.bf16.msra.mxu0 %v7203
    %7547 = vmatprep.subr.bf16.mxu0 0
    %7548 = vmatpush1.bf16.msra.mxu0 %v7204
    %7549 = vmatprep.subr.bf16.mxu0 0
    %7550 = vmatpush1.bf16.msra.mxu0 %v7205
    %7551 = vmatprep.subr.bf16.mxu0 0
    %7552 = vmatpush1.bf16.msra.mxu0 %v7206
    %7553 = vmatprep.subr.bf16.mxu0 0
    %7554 = vmatpush1.bf16.msra.mxu0 %v7207
    %7555 = vmatprep.subr.bf16.mxu0 0
    %7556 = vmatpush1.bf16.msra.mxu0 %v7208
    %7557 = vmatprep.subr.bf16.mxu0 0
    %7558 = vmatpush1.bf16.msra.mxu0 %v7209
    %7559 = vmatprep.subr.bf16.mxu0 0
    %7560 = vmatpush1.bf16.msra.mxu0 %v7210
    %7561 = vmatprep.subr.bf16.mxu0 0
    %7562 = vmatpush1.bf16.msra.mxu0 %v7211
    %7563 = vmatprep.subr.bf16.mxu0 0
    %7564 = vmatpush1.bf16.msra.mxu0 %v7212
    %7565 = vmatprep.subr.bf16.mxu0 0
    %7566 = vmatpush1.bf16.msra.mxu0 %v7213
    %7567 = vmatprep.subr.bf16.mxu0 0
    %7568 = vmatpush1.bf16.msra.mxu0 %v7214
    %7569 = vmatprep.mubr.bf16.mxu0 %v6347
    %7570 = vmatmul.mubr.bf16.gmra.mrb[0].mxu0 %v6346
    %v7571 = vpop.f32.mrb[0].mxu0
    %v7572 = vadd.f32 %v7515, %v7571
    %v7573 = vpop.f32.mrb[0].mxu0
    %v7574 = vpop.f32.mrb[0].mxu0
    %v7575 = vadd.f32 %v7518, %v7574
    %v7576 = vpop.f32.mrb[0].mxu0
    %7577 = vmatprep.mubr.bf16.mxu0 %v6363
    %7578 = vmatmul.mubr.bf16.gmra.mrb[0].mxu0 %v6362
    %v7579 = vpop.f32.mrb[0].mxu0
    %v7580 = vadd.f32 %v7523, %v7579
    %v7581 = vpop.f32.mrb[0].mxu0
    %v7582 = vpop.f32.mrb[0].mxu0
    %v7583 = vadd.f32 %v7526, %v7582
    %v7584 = vpop.f32.mrb[0].mxu0
    %7585 = vmatprep.mubr.bf16.mxu0 %v6379
    %7586 = vmatmul.mubr.bf16.gmra.mrb[0].mxu0 %v6378
    %v7587 = vpop.f32.mrb[0].mxu0
    %v7588 = vadd.f32 %v7531, %v7587
    %v7589 = vpop.f32.mrb[0].mxu0
    %v7590 = vpop.f32.mrb[0].mxu0
    %v7591 = vadd.f32 %v7534, %v7590
    %v7592 = vpop.f32.mrb[0].mxu0
    %7593 = vdwg.mxu0
    %7594 = vmatprep.subr.bf16.mxu0 0
    %7595 = vmatpush1.bf16.msra.mxu0 %v7215
    %7596 = vmatprep.subr.bf16.mxu0 0
    %7597 = vmatpush1.bf16.msra.mxu0 %v7216
    %7598 = vmatprep.subr.bf16.mxu0 0
    %7599 = vmatpush1.bf16.msra.mxu0 %v7217
    %7600 = vmatprep.subr.bf16.mxu0 0
    %7601 = vmatpush1.bf16.msra.mxu0 %v7218
    %7602 = vmatprep.subr.bf16.mxu0 0
    %7603 = vmatpush1.bf16.msra.mxu0 %v7219
    %7604 = vmatprep.subr.bf16.mxu0 0
    %7605 = vmatpush1.bf16.msra.mxu0 %v7220
    %7606 = vmatprep.subr.bf16.mxu0 0
    %7607 = vmatpush1.bf16.msra.mxu0 %v7221
    %7608 = vmatprep.subr.bf16.mxu0 0
    %7609 = vmatpush1.bf16.msra.mxu0 %v7222
    %7610 = vmatprep.subr.bf16.mxu0 0
    %7611 = vmatpush1.bf16.msra.mxu0 %v7223
    %7612 = vmatprep.subr.bf16.mxu0 0
    %7613 = vmatpush1.bf16.msra.mxu0 %v7224
    %7614 = vmatprep.subr.bf16.mxu0 0
    %7615 = vmatpush1.bf16.msra.mxu0 %v7225
    %7616 = vmatprep.subr.bf16.mxu0 0
    %7617 = vmatpush1.bf16.msra.mxu0 %v7226
    %7618 = vmatprep.subr.bf16.mxu0 0
    %7619 = vmatpush1.bf16.msra.mxu0 %v7227
    %7620 = vmatprep.subr.bf16.mxu0 0
    %7621 = vmatpush1.bf16.msra.mxu0 %v7228
    %7622 = vmatprep.subr.bf16.mxu0 0
    %7623 = vmatpush1.bf16.msra.mxu0 %v7229
    %7624 = vmatprep.subr.bf16.mxu0 0
    %7625 = vmatpush1.bf16.msra.mxu0 %v7230
    %7626 = vmatprep.mubr.bf16.mxu0 %v6349
    %7627 = vmatmul.mubr.bf16.gmra.mrb[0].mxu0 %v6348
    %v7628 = vpop.f32.mrb[0].mxu0
    %v7629 = vadd.f32 %v7572, %v7628
    %v7630 = vpop.f32.mrb[0].mxu0
    %v7631 = vpop.f32.mrb[0].mxu0
    %v7632 = vadd.f32 %v7575, %v7631
    %v7633 = vpop.f32.mrb[0].mxu0
    %7634 = vmatprep.mubr.bf16.mxu0 %v6365
    %7635 = vmatmul.mubr.bf16.gmra.mrb[0].mxu0 %v6364
    %v7636 = vpop.f32.mrb[0].mxu0
    %v7637 = vadd.f32 %v7580, %v7636
    %v7638 = vpop.f32.mrb[0].mxu0
    %v7639 = vpop.f32.mrb[0].mxu0
    %v7640 = vadd.f32 %v7583, %v7639
    %v7641 = vpop.f32.mrb[0].mxu0
    %7642 = vmatprep.mubr.bf16.mxu0 %v6381
    %7643 = vmatmul.mubr.bf16.gmra.mrb[0].mxu0 %v6380
    %v7644 = vpop.f32.mrb[0].mxu0
    %v7645 = vadd.f32 %v7588, %v7644
    %v7646 = vpop.f32.mrb[0].mxu0
    %v7647 = vpop.f32.mrb[0].mxu0
    %v7648 = vadd.f32 %v7591, %v7647
    %v7649 = vpop.f32.mrb[0].mxu0
    %7650 = vdwg.mxu0
    %7651 = vmatprep.subr.bf16.mxu0 0
    %7652 = vmatpush1.bf16.msra.mxu0 %v7231
    %7653 = vmatprep.subr.bf16.mxu0 0
    %7654 = vmatpush1.bf16.msra.mxu0 %v7232
    %7655 = vmatprep.subr.bf16.mxu0 0
    %7656 = vmatpush1.bf16.msra.mxu0 %v7233
    %7657 = vmatprep.subr.bf16.mxu0 0
    %7658 = vmatpush1.bf16.msra.mxu0 %v7234
    %7659 = vmatprep.subr.bf16.mxu0 0
    %7660 = vmatpush1.bf16.msra.mxu0 %v7235
    %7661 = vmatprep.subr.bf16.mxu0 0
    %7662 = vmatpush1.bf16.msra.mxu0 %v7236
    %7663 = vmatprep.subr.bf16.mxu0 0
    %7664 = vmatpush1.bf16.msra.mxu0 %v7237
    %7665 = vmatprep.subr.bf16.mxu0 0
    %7666 = vmatpush1.bf16.msra.mxu0 %v7238
    %7667 = vmatprep.subr.bf16.mxu0 0
    %7668 = vmatpush1.bf16.msra.mxu0 %v7239
    %7669 = vmatprep.subr.bf16.mxu0 0
    %7670 = vmatpush1.bf16.msra.mxu0 %v7240
    %7671 = vmatprep.subr.bf16.mxu0 0
    %7672 = vmatpush1.bf16.msra.mxu0 %v7241
    %7673 = vmatprep.subr.bf16.mxu0 0
    %7674 = vmatpush1.bf16.msra.mxu0 %v7242
    %7675 = vmatprep.subr.bf16.mxu0 0
    %7676 = vmatpush1.bf16.msra.mxu0 %v7243
    %7677 = vmatprep.subr.bf16.mxu0 0
    %7678 = vmatpush1.bf16.msra.mxu0 %v7244
    %7679 = vmatprep.subr.bf16.mxu0 0
    %7680 = vmatpush1.bf16.msra.mxu0 %v7245
    %7681 = vmatprep.subr.bf16.mxu0 0
    %7682 = vmatpush1.bf16.msra.mxu0 %v7246
    %7683 = vmatprep.mubr.bf16.mxu0 %v6351
    %7684 = vmatmul.mubr.bf16.gmra.mrb[0].mxu0 %v6350
    %v7685 = vpop.f32.mrb[0].mxu0
    %v7686 = vadd.f32 %v7629, %v7685
    %v7687 = vpop.f32.mrb[0].mxu0
    %v7688 = vpop.f32.mrb[0].mxu0
    %v7689 = vadd.f32 %v7632, %v7688
    %v7690 = vpop.f32.mrb[0].mxu0
    %7691 = vmatprep.mubr.bf16.mxu0 %v6367
    %7692 = vmatmul.mubr.bf16.gmra.mrb[0].mxu0 %v6366
    %v7693 = vpop.f32.mrb[0].mxu0
    %v7694 = vadd.f32 %v7637, %v7693
    %v7695 = vpop.f32.mrb[0].mxu0
    %v7696 = vpop.f32.mrb[0].mxu0
    %v7697 = vadd.f32 %v7640, %v7696
    %v7698 = vpop.f32.mrb[0].mxu0
    %7699 = vmatprep.mubr.bf16.mxu0 %v6383
    %7700 = vmatmul.mubr.bf16.gmra.mrb[0].mxu0 %v6382
    %v7701 = vpop.f32.mrb[0].mxu0
    %v7702 = vadd.f32 %v7645, %v7701
    %v7703 = vpop.f32.mrb[0].mxu0
    %v7704 = vpop.f32.mrb[0].mxu0
    %v7705 = vadd.f32 %v7648, %v7704
    %v7706 = vpop.f32.mrb[0].mxu0
    %7707 = vdwg.mxu0
    %7708 = vmatprep.subr.bf16.mxu0 0
    %7709 = vmatpush1.bf16.msra.mxu0 %v7247
    %7710 = vmatprep.subr.bf16.mxu0 0
    %7711 = vmatpush1.bf16.msra.mxu0 %v7248
    %7712 = vmatprep.subr.bf16.mxu0 0
    %7713 = vmatpush1.bf16.msra.mxu0 %v7249
    %7714 = vmatprep.subr.bf16.mxu0 0
    %7715 = vmatpush1.bf16.msra.mxu0 %v7250
    %7716 = vmatprep.subr.bf16.mxu0 0
    %7717 = vmatpush1.bf16.msra.mxu0 %v7251
    %7718 = vmatprep.subr.bf16.mxu0 0
    %7719 = vmatpush1.bf16.msra.mxu0 %v7252
    %7720 = vmatprep.subr.bf16.mxu0 0
    %7721 = vmatpush1.bf16.msra.mxu0 %v7253
    %7722 = vmatprep.subr.bf16.mxu0 0
    %7723 = vmatpush1.bf16.msra.mxu0 %v7254
    %7724 = vmatprep.subr.bf16.mxu0 0
    %7725 = vmatpush1.bf16.msra.mxu0 %v7255
    %7726 = vmatprep.subr.bf16.mxu0 0
    %7727 = vmatpush1.bf16.msra.mxu0 %v7256
    %7728 = vmatprep.subr.bf16.mxu0 0
    %7729 = vmatpush1.bf16.msra.mxu0 %v7257
    %7730 = vmatprep.subr.bf16.mxu0 0
    %7731 = vmatpush1.bf16.msra.mxu0 %v7258
    %7732 = vmatprep.subr.bf16.mxu0 0
    %7733 = vmatpush1.bf16.msra.mxu0 %v7259
    %7734 = vmatprep.subr.bf16.mxu0 0
    %7735 = vmatpush1.bf16.msra.mxu0 %v7260
    %7736 = vmatprep.subr.bf16.mxu0 0
    %7737 = vmatpush1.bf16.msra.mxu0 %v7261
    %7738 = vmatprep.subr.bf16.mxu0 0
    %7739 = vmatpush1.bf16.msra.mxu0 %v7262
    %7740 = vmatprep.mubr.bf16.mxu0 %v6353
    %7741 = vmatmul.mubr.bf16.gmra.mrb[0].mxu0 %v6352
    %v7742 = vpop.f32.mrb[0].mxu0
    %v7743 = vadd.f32 %v7686, %v7742
    %v7744 = vpop.f32.mrb[0].mxu0
    %v7745 = vpop.f32.mrb[0].mxu0
    %v7746 = vadd.f32 %v7689, %v7745
    %v7747 = vpop.f32.mrb[0].mxu0
    %7748 = vmatprep.mubr.bf16.mxu0 %v6369
    %7749 = vmatmul.mubr.bf16.gmra.mrb[0].mxu0 %v6368
    %v7750 = vpop.f32.mrb[0].mxu0
    %v7751 = vadd.f32 %v7694, %v7750
    %v7752 = vpop.f32.mrb[0].mxu0
    %v7753 = vpop.f32.mrb[0].mxu0
    %v7754 = vadd.f32 %v7697, %v7753
    %v7755 = vpop.f32.mrb[0].mxu0
    %7756 = vmatprep.mubr.bf16.mxu0 %v6385
    %7757 = vmatmul.mubr.bf16.gmra.mrb[0].mxu0 %v6384
    %v7758 = vpop.f32.mrb[0].mxu0
    %v7759 = vadd.f32 %v7702, %v7758
    %v7760 = vpop.f32.mrb[0].mxu0
    %v7761 = vpop.f32.mrb[0].mxu0
    %v7762 = vadd.f32 %v7705, %v7761
    %v7763 = vpop.f32.mrb[0].mxu0
    %7764 = vdwg.mxu0
    %7765 = vmatprep.subr.bf16.mxu0 0
    %7766 = vmatpush1.bf16.msra.mxu0 %v7263
    %7767 = vmatprep.subr.bf16.mxu0 0
    %7768 = vmatpush1.bf16.msra.mxu0 %v7264
    %7769 = vmatprep.subr.bf16.mxu0 0
    %7770 = vmatpush1.bf16.msra.mxu0 %v7265
    %7771 = vmatprep.subr.bf16.mxu0 0
    %7772 = vmatpush1.bf16.msra.mxu0 %v7266
    %7773 = vmatprep.subr.bf16.mxu0 0
    %7774 = vmatpush1.bf16.msra.mxu0 %v7267
    %7775 = vmatprep.subr.bf16.mxu0 0
    %7776 = vmatpush1.bf16.msra.mxu0 %v7268
    %7777 = vmatprep.subr.bf16.mxu0 0
    %7778 = vmatpush1.bf16.msra.mxu0 %v7269
    %7779 = vmatprep.subr.bf16.mxu0 0
    %7780 = vmatpush1.bf16.msra.mxu0 %v7270
    %7781 = vmatprep.subr.bf16.mxu0 0
    %7782 = vmatpush1.bf16.msra.mxu0 %v7271
    %7783 = vmatprep.subr.bf16.mxu0 0
    %7784 = vmatpush1.bf16.msra.mxu0 %v7272
    %7785 = vmatprep.subr.bf16.mxu0 0
    %7786 = vmatpush1.bf16.msra.mxu0 %v7273
    %7787 = vmatprep.subr.bf16.mxu0 0
    %7788 = vmatpush1.bf16.msra.mxu0 %v7274
    %7789 = vmatprep.subr.bf16.mxu0 0
    %7790 = vmatpush1.bf16.msra.mxu0 %v7275
    %7791 = vmatprep.subr.bf16.mxu0 0
    %7792 = vmatpush1.bf16.msra.mxu0 %v7276
    %7793 = vmatprep.subr.bf16.mxu0 0
    %7794 = vmatpush1.bf16.msra.mxu0 %v7277
    %7795 = vmatprep.subr.bf16.mxu0 0
    %7796 = vmatpush1.bf16.msra.mxu0 %v7278
    %7797 = vmatprep.mubr.bf16.mxu0 %v6355
    %7798 = vmatmul.mubr.bf16.gmra.mrb[0].mxu0 %v6354
    %v7799 = vpop.f32.mrb[0].mxu0
    %v7800 = vadd.f32 %v7743, %v7799
    %v7801 = vpop.f32.mrb[0].mxu0
    %v7802 = vpop.f32.mrb[0].mxu0
    %v7803 = vadd.f32 %v7746, %v7802
    %v7804 = vpop.f32.mrb[0].mxu0
    %7805 = vmatprep.mubr.bf16.mxu0 %v6371
    %7806 = vmatmul.mubr.bf16.gmra.mrb[0].mxu0 %v6370
    %v7807 = vpop.f32.mrb[0].mxu0
    %v7808 = vadd.f32 %v7751, %v7807
    %v7809 = vpop.f32.mrb[0].mxu0
    %v7810 = vpop.f32.mrb[0].mxu0
    %v7811 = vadd.f32 %v7754, %v7810
    %v7812 = vpop.f32.mrb[0].mxu0
    %7813 = vmatprep.mubr.bf16.mxu0 %v6387
    %7814 = vmatmul.mubr.bf16.gmra.mrb[0].mxu0 %v6386
    %v7815 = vpop.f32.mrb[0].mxu0
    %v7816 = vadd.f32 %v7759, %v7815
    %v7817 = vpop.f32.mrb[0].mxu0
    %v7818 = vpop.f32.mrb[0].mxu0
    %v7819 = vadd.f32 %v7762, %v7818
    %v7820 = vpop.f32.mrb[0].mxu0
    %7821 = vdwg.mxu0
    %7822 = vmatprep.subr.bf16.mxu0 0
    %7823 = vmatpush1.bf16.msra.mxu0 %v7279
    %7824 = vmatprep.subr.bf16.mxu0 0
    %7825 = vmatpush1.bf16.msra.mxu0 %v7280
    %7826 = vmatprep.subr.bf16.mxu0 0
    %7827 = vmatpush1.bf16.msra.mxu0 %v7281
    %7828 = vmatprep.subr.bf16.mxu0 0
    %7829 = vmatpush1.bf16.msra.mxu0 %v7282
    %7830 = vmatprep.subr.bf16.mxu0 0
    %7831 = vmatpush1.bf16.msra.mxu0 %v7283
    %7832 = vmatprep.subr.bf16.mxu0 0
    %7833 = vmatpush1.bf16.msra.mxu0 %v7284
    %7834 = vmatprep.subr.bf16.mxu0 0
    %7835 = vmatpush1.bf16.msra.mxu0 %v7285
    %7836 = vmatprep.subr.bf16.mxu0 0
    %7837 = vmatpush1.bf16.msra.mxu0 %v7286
    %7838 = vmatprep.subr.bf16.mxu0 0
    %7839 = vmatpush1.bf16.msra.mxu0 %v7287
    %7840 = vmatprep.subr.bf16.mxu0 0
    %7841 = vmatpush1.bf16.msra.mxu0 %v7288
    %7842 = vmatprep.subr.bf16.mxu0 0
    %7843 = vmatpush1.bf16.msra.mxu0 %v7289
    %7844 = vmatprep.subr.bf16.mxu0 0
    %7845 = vmatpush1.bf16.msra.mxu0 %v7290
    %7846 = vmatprep.subr.bf16.mxu0 0
    %7847 = vmatpush1.bf16.msra.mxu0 %v7291
    %7848 = vmatprep.subr.bf16.mxu0 0
    %7849 = vmatpush1.bf16.msra.mxu0 %v7292
    %7850 = vmatprep.subr.bf16.mxu0 0
    %7851 = vmatpush1.bf16.msra.mxu0 %v7293
    %7852 = vmatprep.subr.bf16.mxu0 0
    %7853 = vmatpush1.bf16.msra.mxu0 %v7294
    %7854 = vmatprep.mubr.bf16.mxu0 %v6357
    %7855 = vmatmul.mubr.bf16.gmra.mrb[0].mxu0 %v6356
    %v7856 = vpop.f32.mrb[0].mxu0
    %v7857 = vadd.f32 %v7800, %v7856
    %v7858 = vpop.f32.mrb[0].mxu0
    %v7859 = vpop.f32.mrb[0].mxu0
    %v7860 = vadd.f32 %v7803, %v7859
    %v7861 = vpop.f32.mrb[0].mxu0
    %7862 = vmatprep.mubr.bf16.mxu0 %v6373
    %7863 = vmatmul.mubr.bf16.gmra.mrb[0].mxu0 %v6372
    %v7864 = vpop.f32.mrb[0].mxu0
    %v7865 = vadd.f32 %v7808, %v7864
    %v7866 = vpop.f32.mrb[0].mxu0
    %v7867 = vpop.f32.mrb[0].mxu0
    %v7868 = vadd.f32 %v7811, %v7867
    %v7869 = vpop.f32.mrb[0].mxu0
    %7870 = vmatprep.mubr.bf16.mxu0 %v6389
    %7871 = vmatmul.mubr.bf16.gmra.mrb[0].mxu0 %v6388
    %v7872 = vpop.f32.mrb[0].mxu0
    %v7873 = vadd.f32 %v7816, %v7872
    %v7874 = vpop.f32.mrb[0].mxu0
    %v7875 = vpop.f32.mrb[0].mxu0
    %v7876 = vadd.f32 %v7819, %v7875
    %v7877 = vpop.f32.mrb[0].mxu0
    %7878 = vdwg.mxu0
    %v7879 = vadd.f32 %v5254, %v7857
    %v7880 = vadd.f32 %v5255, %v7860
    %v7881 = vadd.f32 %v5256, %v7865
    %v7882 = vadd.f32 %v5257, %v7868
    %v7883 = vadd.f32 %v5258, %v7873
    %v7884 = vadd.f32 %v5259, %v7876
    %s7885 = scalar_lea.vmem %s12, 1
    %v7886 = vld [vmem:[%s7885] sm:$0x1]
    %s7887 = scalar_lea.vmem %s13, 1
    %v7888 = vld [vmem:[%s7887] sm:$0x1]
    %v7889 = vsel %vm107, %v7879, 0.0
    %7890 = vadd.xlane.f32.xlu0 %v7889
    %v7891 = vpop.xlane.xlu0 %7890
    %v7892 = vsel %vm107, %v7880, 0.0
    %7893 = vadd.xlane.f32.xlu0 %v7892
    %v7894 = vpop.xlane.xlu0 %7893
    %v7895 = vsel %vm107, %v7881, 0.0
    %7896 = vadd.xlane.f32.xlu0 %v7895
    %v7897 = vpop.xlane.xlu0 %7896
    %v7898 = vsel %vm107, %v7882, 0.0
    %7899 = vadd.xlane.f32.xlu0 %v7898
    %v7900 = vpop.xlane.xlu0 %7899
    %v7901 = vsel %vm107, %v7883, 0.0
    %7902 = vadd.xlane.f32.xlu0 %v7901
    %v7903 = vpop.xlane.xlu0 %7902
    %v7904 = vsel %vm107, %v7884, 0.0
    %7905 = vadd.xlane.f32.xlu0 %v7904
    %v7906 = vpop.xlane.xlu0 %7905
    %v7907 = vmul.f32 %v7891, %v1343
    %v7908 = vmul.f32 %v7894, %v1343
    %v7909 = vmul.f32 %v7897, %v1343
    %v7910 = vmul.f32 %v7900, %v1343
    %v7911 = vmul.f32 %v7903, %v1343
    %v7912 = vmul.f32 %v7906, %v1343
    %v7913 = vsub.f32 %v7879, %v7907
    %v7914 = vsub.f32 %v7880, %v7908
    %v7915 = vsub.f32 %v7881, %v7909
    %v7916 = vsub.f32 %v7882, %v7910
    %v7917 = vsub.f32 %v7883, %v7911
    %v7918 = vsub.f32 %v7884, %v7912
    %v7919 = vmul.f32 %v7913, %v7913
    %v7920 = vmul.f32 %v7914, %v7914
    %v7921 = vmul.f32 %v7915, %v7915
    %v7922 = vmul.f32 %v7916, %v7916
    %v7923 = vmul.f32 %v7917, %v7917
    %v7924 = vmul.f32 %v7918, %v7918
    %v7925 = vsel %vm107, %v7919, 0.0
    %7926 = vadd.xlane.f32.xlu0 %v7925
    %v7927 = vpop.xlane.xlu0 %7926
    %v7928 = vsel %vm107, %v7920, 0.0
    %7929 = vadd.xlane.f32.xlu0 %v7928
    %v7930 = vpop.xlane.xlu0 %7929
    %v7931 = vsel %vm107, %v7921, 0.0
    %7932 = vadd.xlane.f32.xlu0 %v7931
    %v7933 = vpop.xlane.xlu0 %7932
    %v7934 = vsel %vm107, %v7922, 0.0
    %7935 = vadd.xlane.f32.xlu0 %v7934
    %v7936 = vpop.xlane.xlu0 %7935
    %v7937 = vsel %vm107, %v7923, 0.0
    %7938 = vadd.xlane.f32.xlu0 %v7937
    %v7939 = vpop.xlane.xlu0 %7938
    %v7940 = vsel %vm107, %v7924, 0.0
    %7941 = vadd.xlane.f32.xlu0 %v7940
    %v7942 = vpop.xlane.xlu0 %7941
    %v7943 = vmul.f32 %v7927, %v1343
    %v7944 = vmul.f32 %v7930, %v1343
    %v7945 = vmul.f32 %v7933, %v1343
    %v7946 = vmul.f32 %v7936, %v1343
    %v7947 = vmul.f32 %v7939, %v1343
    %v7948 = vmul.f32 %v7942, %v1343
    %v7949 = vadd.f32 %v7943, 1e-05
    %v7950 = vadd.f32 %v7944, 1e-05
    %v7951 = vadd.f32 %v7945, 1e-05
    %v7952 = vadd.f32 %v7946, 1e-05
    %v7953 = vadd.f32 %v7947, 1e-05
    %v7954 = vadd.f32 %v7948, 1e-05
    %v7955 = vrsqrt.pop %v7949
    %v7956 = vrsqrt.pop %v7950
    %v7957 = vrsqrt.pop %v7951
    %v7958 = vrsqrt.pop %v7952
    %v7959 = vrsqrt.pop %v7953
    %v7960 = vrsqrt.pop %v7954
    %v7961 = vmul.f32 %v7913, %v7955
    %v7962 = vmul.f32 %v7914, %v7956
    %v7963 = vmul.f32 %v7915, %v7957
    %v7964 = vmul.f32 %v7916, %v7958
    %v7965 = vmul.f32 %v7917, %v7959
    %v7966 = vmul.f32 %v7918, %v7960
    %v7968 = vlaneseq
    %v7969 = vshrl.u32 %v7968, 7
    %v7970 = vsub.s32 0, %v7969
    %v7971 = vrot.slane %v7886, %v7970
    %v7973 = vmul.f32 %v7961, %v7971
    %v7974 = vmul.f32 %v7962, %v7971
    %v7975 = vmul.f32 %v7963, %v7971
    %v7976 = vmul.f32 %v7964, %v7971
    %v7977 = vmul.f32 %v7965, %v7971
    %v7978 = vmul.f32 %v7966, %v7971
    %v7980 = vlaneseq
    %v7981 = vshrl.u32 %v7980, 7
    %v7982 = vsub.s32 0, %v7981
    %v7983 = vrot.slane %v7888, %v7982
    %v7985 = vadd.f32 %v7973, %v7983
    %v7986 = vadd.f32 %v7974, %v7983
    %v7987 = vadd.f32 %v7975, %v7983
    %v7988 = vadd.f32 %v7976, %v7983
    %v7989 = vadd.f32 %v7977, %v7983
    %v7990 = vadd.f32 %v7978, %v7983
    %v7991 = vld [vmem:[%s14] sm:$0xff]
    %v7992 = vld [vmem:[%s14 + $0x8] sm:$0xff]
    %v7993 = vld [vmem:[%s14 + $0x10] sm:$0xff]
    %v7994 = vld [vmem:[%s14 + $0x18] sm:$0xff]
    %v7995 = vld [vmem:[%s14 + $0x20] sm:$0xff]
    %v7996 = vld [vmem:[%s14 + $0x28] sm:$0xff]
    %v7997 = vld [vmem:[%s14 + $0x30] sm:$0xff]
    %v7998 = vld [vmem:[%s14 + $0x38] sm:$0xff]
    %s7999 = scalar_lea.vmem %s14, 64
    %v8000 = vld [vmem:[%s7999] sm:$0xff]
    %v8001 = vld [vmem:[%s7999 + $0x8] sm:$0xff]
    %v8002 = vld [vmem:[%s7999 + $0x10] sm:$0xff]
    %v8003 = vld [vmem:[%s7999 + $0x18] sm:$0xff]
    %v8004 = vld [vmem:[%s7999 + $0x20] sm:$0xff]
    %v8005 = vld [vmem:[%s7999 + $0x28] sm:$0xff]
    %v8006 = vld [vmem:[%s7999 + $0x30] sm:$0xff]
    %v8007 = vld [vmem:[%s7999 + $0x38] sm:$0xff]
    %v8009 = vsel %vm107, %v7986, 0
    %8011 = vmatprep.subr.mxu0 0.0
    %8012 = vmatpush1.msra.mxu0 %v8000
    %8013 = vmatprep.subr.mxu0 0.0
    %8014 = vmatpush1.msra.mxu0 %v8001
    %8015 = vmatprep.subr.mxu0 0.0
    %8016 = vmatpush1.msra.mxu0 %v8002
    %8017 = vmatprep.subr.mxu0 0.0
    %8018 = vmatpush1.msra.mxu0 %v8003
    %8019 = vmatprep.subr.mxu0 0.0
    %8020 = vmatpush1.msra.mxu0 %v8004
    %8021 = vmatprep.subr.mxu0 0.0
    %8022 = vmatpush1.msra.mxu0 %v8005
    %8023 = vmatprep.subr.mxu0 0.0
    %8024 = vmatpush1.msra.mxu0 %v8006
    %8025 = vmatprep.subr.mxu0 0.0
    %8026 = vmatpush1.msra.mxu0 %v8007
    %8027 = vmatprep.subr.mxu0 0.0
    %8028 = vmatpush1.msra.mxu0 0.0
    %8029 = vmatprep.subr.mxu0 0.0
    %8030 = vmatpush1.msra.mxu0 0.0
    %8031 = vmatprep.subr.mxu0 0.0
    %8032 = vmatpush1.msra.mxu0 0.0
    %8033 = vmatprep.subr.mxu0 0.0
    %8034 = vmatpush1.msra.mxu0 0.0
    %8035 = vmatprep.subr.mxu0 0.0
    %8036 = vmatpush1.msra.mxu0 0.0
    %8037 = vmatprep.subr.mxu0 0.0
    %8038 = vmatpush1.msra.mxu0 0.0
    %8039 = vmatprep.subr.mxu0 0.0
    %8040 = vmatpush1.msra.mxu0 0.0
    %8041 = vmatprep.subr.mxu0 0.0
    %8042 = vmatpush1.msra.mxu0 0.0
    %8043 = vmatprep.subr.mxu0 0.0
    %8044 = vmatpush1.msra.mxu0 0.0
    %8045 = vmatprep.subr.mxu0 0.0
    %8046 = vmatpush1.msra.mxu0 0.0
    %8047 = vmatprep.subr.mxu0 0.0
    %8048 = vmatpush1.msra.mxu0 0.0
    %8049 = vmatprep.subr.mxu0 0.0
    %8050 = vmatpush1.msra.mxu0 0.0
    %8051 = vmatprep.subr.mxu0 0.0
    %8052 = vmatpush1.msra.mxu0 0.0
    %8053 = vmatprep.subr.mxu0 0.0
    %8054 = vmatpush1.msra.mxu0 0.0
    %8055 = vmatprep.subr.mxu0 0.0
    %8056 = vmatpush1.msra.mxu0 0.0
    %8057 = vmatprep.subr.mxu0 0.0
    %8058 = vmatpush1.msra.mxu0 0.0
    %8059 = vmatprep.subr.mxu0 0.0
    %8060 = vmatpush1.msra.mxu0 0.0
    %8061 = vmatprep.subr.mxu0 0.0
    %8062 = vmatpush1.msra.mxu0 0.0
    %8063 = vmatprep.subr.mxu0 0.0
    %8064 = vmatpush1.msra.mxu0 0.0
    %8065 = vmatprep.subr.mxu0 0.0
    %8066 = vmatpush1.msra.mxu0 0.0
    %8067 = vmatprep.subr.mxu0 0.0
    %8068 = vmatpush1.msra.mxu0 0.0
    %8069 = vmatprep.subr.mxu0 0.0
    %8070 = vmatpush1.msra.mxu0 0.0
    %8071 = vmatprep.subr.mxu0 0.0
    %8072 = vmatpush1.msra.mxu0 0.0
    %8073 = vmatprep.subr.mxu0 0.0
    %8074 = vmatpush1.msra.mxu0 0.0
    %8075 = vmatprep.mubr.f32.mxu0 0.0
    %8076 = vmatmul.mubr.f32.gmra.mrb[0].mxu0 %v8009
    %v8077 = vpop.f32.mrb[0].mxu0
    %v8078 = vadd.f32 0.0, %v8077
    %v8079 = vpop.f32.mrb[0].mxu0
    %8080 = vdwg.mxu0
    %v8082 = vsel %vm107, %v7985, 0
    %8084 = vmatprep.subr.mxu0 0.0
    %8085 = vmatpush1.msra.mxu0 %v7991
    %8086 = vmatprep.subr.mxu0 0.0
    %8087 = vmatpush1.msra.mxu0 %v7992
    %8088 = vmatprep.subr.mxu0 0.0
    %8089 = vmatpush1.msra.mxu0 %v7993
    %8090 = vmatprep.subr.mxu0 0.0
    %8091 = vmatpush1.msra.mxu0 %v7994
    %8092 = vmatprep.subr.mxu0 0.0
    %8093 = vmatpush1.msra.mxu0 %v7995
    %8094 = vmatprep.subr.mxu0 0.0
    %8095 = vmatpush1.msra.mxu0 %v7996
    %8096 = vmatprep.subr.mxu0 0.0
    %8097 = vmatpush1.msra.mxu0 %v7997
    %8098 = vmatprep.subr.mxu0 0.0
    %8099 = vmatpush1.msra.mxu0 %v7998
    %8100 = vmatprep.subr.mxu0 0.0
    %8101 = vmatpush1.msra.mxu0 0.0
    %8102 = vmatprep.subr.mxu0 0.0
    %8103 = vmatpush1.msra.mxu0 0.0
    %8104 = vmatprep.subr.mxu0 0.0
    %8105 = vmatpush1.msra.mxu0 0.0
    %8106 = vmatprep.subr.mxu0 0.0
    %8107 = vmatpush1.msra.mxu0 0.0
    %8108 = vmatprep.subr.mxu0 0.0
    %8109 = vmatpush1.msra.mxu0 0.0
    %8110 = vmatprep.subr.mxu0 0.0
    %8111 = vmatpush1.msra.mxu0 0.0
    %8112 = vmatprep.subr.mxu0 0.0
    %8113 = vmatpush1.msra.mxu0 0.0
    %8114 = vmatprep.subr.mxu0 0.0
    %8115 = vmatpush1.msra.mxu0 0.0
    %8116 = vmatprep.subr.mxu0 0.0
    %8117 = vmatpush1.msra.mxu0 0.0
    %8118 = vmatprep.subr.mxu0 0.0
    %8119 = vmatpush1.msra.mxu0 0.0
    %8120 = vmatprep.subr.mxu0 0.0
    %8121 = vmatpush1.msra.mxu0 0.0
    %8122 = vmatprep.subr.mxu0 0.0
    %8123 = vmatpush1.msra.mxu0 0.0
    %8124 = vmatprep.subr.mxu0 0.0
    %8125 = vmatpush1.msra.mxu0 0.0
    %8126 = vmatprep.subr.mxu0 0.0
    %8127 = vmatpush1.msra.mxu0 0.0
    %8128 = vmatprep.subr.mxu0 0.0
    %8129 = vmatpush1.msra.mxu0 0.0
    %8130 = vmatprep.subr.mxu0 0.0
    %8131 = vmatpush1.msra.mxu0 0.0
    %8132 = vmatprep.subr.mxu0 0.0
    %8133 = vmatpush1.msra.mxu0 0.0
    %8134 = vmatprep.subr.mxu0 0.0
    %8135 = vmatpush1.msra.mxu0 0.0
    %8136 = vmatprep.subr.mxu0 0.0
    %8137 = vmatpush1.msra.mxu0 0.0
    %8138 = vmatprep.subr.mxu0 0.0
    %8139 = vmatpush1.msra.mxu0 0.0
    %8140 = vmatprep.subr.mxu0 0.0
    %8141 = vmatpush1.msra.mxu0 0.0
    %8142 = vmatprep.subr.mxu0 0.0
    %8143 = vmatpush1.msra.mxu0 0.0
    %8144 = vmatprep.subr.mxu0 0.0
    %8145 = vmatpush1.msra.mxu0 0.0
    %8146 = vmatprep.subr.mxu0 0.0
    %8147 = vmatpush1.msra.mxu0 0.0
    %8148 = vmatprep.mubr.f32.mxu0 0.0
    %8149 = vmatmul.mubr.f32.gmra.mrb[0].mxu0 %v8082
    %v8150 = vpop.f32.mrb[0].mxu0
    %v8151 = vadd.f32 %v8078, %v8150
    %v8152 = vpop.f32.mrb[0].mxu0
    %8153 = vdwg.mxu0
    %s8154 = scalar_lea.vmem %s14, 128
    %v8155 = vld [vmem:[%s8154] sm:$0xff]
    %v8156 = vld [vmem:[%s8154 + $0x8] sm:$0xff]
    %v8157 = vld [vmem:[%s8154 + $0x10] sm:$0xff]
    %v8158 = vld [vmem:[%s8154 + $0x18] sm:$0xff]
    %v8159 = vld [vmem:[%s8154 + $0x20] sm:$0xff]
    %v8160 = vld [vmem:[%s8154 + $0x28] sm:$0xff]
    %v8161 = vld [vmem:[%s8154 + $0x30] sm:$0xff]
    %v8162 = vld [vmem:[%s8154 + $0x38] sm:$0xff]
    %v8164 = vsel %vm107, %v7987, 0
    %8166 = vmatprep.subr.mxu0 0.0
    %8167 = vmatpush1.msra.mxu0 %v8155
    %8168 = vmatprep.subr.mxu0 0.0
    %8169 = vmatpush1.msra.mxu0 %v8156
    %8170 = vmatprep.subr.mxu0 0.0
    %8171 = vmatpush1.msra.mxu0 %v8157
    %8172 = vmatprep.subr.mxu0 0.0
    %8173 = vmatpush1.msra.mxu0 %v8158
    %8174 = vmatprep.subr.mxu0 0.0
    %8175 = vmatpush1.msra.mxu0 %v8159
    %8176 = vmatprep.subr.mxu0 0.0
    %8177 = vmatpush1.msra.mxu0 %v8160
    %8178 = vmatprep.subr.mxu0 0.0
    %8179 = vmatpush1.msra.mxu0 %v8161
    %8180 = vmatprep.subr.mxu0 0.0
    %8181 = vmatpush1.msra.mxu0 %v8162
    %8182 = vmatprep.subr.mxu0 0.0
    %8183 = vmatpush1.msra.mxu0 0.0
    %8184 = vmatprep.subr.mxu0 0.0
    %8185 = vmatpush1.msra.mxu0 0.0
    %8186 = vmatprep.subr.mxu0 0.0
    %8187 = vmatpush1.msra.mxu0 0.0
    %8188 = vmatprep.subr.mxu0 0.0
    %8189 = vmatpush1.msra.mxu0 0.0
    %8190 = vmatprep.subr.mxu0 0.0
    %8191 = vmatpush1.msra.mxu0 0.0
    %8192 = vmatprep.subr.mxu0 0.0
    %8193 = vmatpush1.msra.mxu0 0.0
    %8194 = vmatprep.subr.mxu0 0.0
    %8195 = vmatpush1.msra.mxu0 0.0
    %8196 = vmatprep.subr.mxu0 0.0
    %8197 = vmatpush1.msra.mxu0 0.0
    %8198 = vmatprep.subr.mxu0 0.0
    %8199 = vmatpush1.msra.mxu0 0.0
    %8200 = vmatprep.subr.mxu0 0.0
    %8201 = vmatpush1.msra.mxu0 0.0
    %8202 = vmatprep.subr.mxu0 0.0
    %8203 = vmatpush1.msra.mxu0 0.0
    %8204 = vmatprep.subr.mxu0 0.0
    %8205 = vmatpush1.msra.mxu0 0.0
    %8206 = vmatprep.subr.mxu0 0.0
    %8207 = vmatpush1.msra.mxu0 0.0
    %8208 = vmatprep.subr.mxu0 0.0
    %8209 = vmatpush1.msra.mxu0 0.0
    %8210 = vmatprep.subr.mxu0 0.0
    %8211 = vmatpush1.msra.mxu0 0.0
    %8212 = vmatprep.subr.mxu0 0.0
    %8213 = vmatpush1.msra.mxu0 0.0
    %8214 = vmatprep.subr.mxu0 0.0
    %8215 = vmatpush1.msra.mxu0 0.0
    %8216 = vmatprep.subr.mxu0 0.0
    %8217 = vmatpush1.msra.mxu0 0.0
    %8218 = vmatprep.subr.mxu0 0.0
    %8219 = vmatpush1.msra.mxu0 0.0
    %8220 = vmatprep.subr.mxu0 0.0
    %8221 = vmatpush1.msra.mxu0 0.0
    %8222 = vmatprep.subr.mxu0 0.0
    %8223 = vmatpush1.msra.mxu0 0.0
    %8224 = vmatprep.subr.mxu0 0.0
    %8225 = vmatpush1.msra.mxu0 0.0
    %8226 = vmatprep.subr.mxu0 0.0
    %8227 = vmatpush1.msra.mxu0 0.0
    %8228 = vmatprep.subr.mxu0 0.0
    %8229 = vmatpush1.msra.mxu0 0.0
    %8230 = vmatprep.mubr.f32.mxu0 0.0
    %8231 = vmatmul.mubr.f32.gmra.mrb[0].mxu0 %v8164
    %v8232 = vpop.f32.mrb[0].mxu0
    %v8233 = vadd.f32 0.0, %v8232
    %v8234 = vpop.f32.mrb[0].mxu0
    %8235 = vdwg.mxu0
    %v8236 = vadd.f32 %v8151, %v8233
    %s8237 = scalar_lea.vmem %s14, 192
    %v8238 = vld [vmem:[%s8237] sm:$0xff]
    %v8239 = vld [vmem:[%s8237 + $0x8] sm:$0xff]
    %v8240 = vld [vmem:[%s8237 + $0x10] sm:$0xff]
    %v8241 = vld [vmem:[%s8237 + $0x18] sm:$0xff]
    %v8242 = vld [vmem:[%s8237 + $0x20] sm:$0xff]
    %v8243 = vld [vmem:[%s8237 + $0x28] sm:$0xff]
    %v8244 = vld [vmem:[%s8237 + $0x30] sm:$0xff]
    %v8245 = vld [vmem:[%s8237 + $0x38] sm:$0xff]
    %v8247 = vsel %vm107, %v7988, 0
    %8249 = vmatprep.subr.mxu0 0.0
    %8250 = vmatpush1.msra.mxu0 %v8238
    %8251 = vmatprep.subr.mxu0 0.0
    %8252 = vmatpush1.msra.mxu0 %v8239
    %8253 = vmatprep.subr.mxu0 0.0
    %8254 = vmatpush1.msra.mxu0 %v8240
    %8255 = vmatprep.subr.mxu0 0.0
    %8256 = vmatpush1.msra.mxu0 %v8241
    %8257 = vmatprep.subr.mxu0 0.0
    %8258 = vmatpush1.msra.mxu0 %v8242
    %8259 = vmatprep.subr.mxu0 0.0
    %8260 = vmatpush1.msra.mxu0 %v8243
    %8261 = vmatprep.subr.mxu0 0.0
    %8262 = vmatpush1.msra.mxu0 %v8244
    %8263 = vmatprep.subr.mxu0 0.0
    %8264 = vmatpush1.msra.mxu0 %v8245
    %8265 = vmatprep.subr.mxu0 0.0
    %8266 = vmatpush1.msra.mxu0 0.0
    %8267 = vmatprep.subr.mxu0 0.0
    %8268 = vmatpush1.msra.mxu0 0.0
    %8269 = vmatprep.subr.mxu0 0.0
    %8270 = vmatpush1.msra.mxu0 0.0
    %8271 = vmatprep.subr.mxu0 0.0
    %8272 = vmatpush1.msra.mxu0 0.0
    %8273 = vmatprep.subr.mxu0 0.0
    %8274 = vmatpush1.msra.mxu0 0.0
    %8275 = vmatprep.subr.mxu0 0.0
    %8276 = vmatpush1.msra.mxu0 0.0
    %8277 = vmatprep.subr.mxu0 0.0
    %8278 = vmatpush1.msra.mxu0 0.0
    %8279 = vmatprep.subr.mxu0 0.0
    %8280 = vmatpush1.msra.mxu0 0.0
    %8281 = vmatprep.subr.mxu0 0.0
    %8282 = vmatpush1.msra.mxu0 0.0
    %8283 = vmatprep.subr.mxu0 0.0
    %8284 = vmatpush1.msra.mxu0 0.0
    %8285 = vmatprep.subr.mxu0 0.0
    %8286 = vmatpush1.msra.mxu0 0.0
    %8287 = vmatprep.subr.mxu0 0.0
    %8288 = vmatpush1.msra.mxu0 0.0
    %8289 = vmatprep.subr.mxu0 0.0
    %8290 = vmatpush1.msra.mxu0 0.0
    %8291 = vmatprep.subr.mxu0 0.0
    %8292 = vmatpush1.msra.mxu0 0.0
    %8293 = vmatprep.subr.mxu0 0.0
    %8294 = vmatpush1.msra.mxu0 0.0
    %8295 = vmatprep.subr.mxu0 0.0
    %8296 = vmatpush1.msra.mxu0 0.0
    %8297 = vmatprep.subr.mxu0 0.0
    %8298 = vmatpush1.msra.mxu0 0.0
    %8299 = vmatprep.subr.mxu0 0.0
    %8300 = vmatpush1.msra.mxu0 0.0
    %8301 = vmatprep.subr.mxu0 0.0
    %8302 = vmatpush1.msra.mxu0 0.0
    %8303 = vmatprep.subr.mxu0 0.0
    %8304 = vmatpush1.msra.mxu0 0.0
    %8305 = vmatprep.subr.mxu0 0.0
    %8306 = vmatpush1.msra.mxu0 0.0
    %8307 = vmatprep.subr.mxu0 0.0
    %8308 = vmatpush1.msra.mxu0 0.0
    %8309 = vmatprep.subr.mxu0 0.0
    %8310 = vmatpush1.msra.mxu0 0.0
    %8311 = vmatprep.subr.mxu0 0.0
    %8312 = vmatpush1.msra.mxu0 0.0
    %8313 = vmatprep.mubr.f32.mxu0 0.0
    %8314 = vmatmul.mubr.f32.gmra.mrb[0].mxu0 %v8247
    %v8315 = vpop.f32.mrb[0].mxu0
    %v8316 = vadd.f32 0.0, %v8315
    %v8317 = vpop.f32.mrb[0].mxu0
    %8318 = vdwg.mxu0
    %v8319 = vadd.f32 %v8236, %v8316
    %s8320 = scalar_lea.vmem %s14, 256
    %v8321 = vld [vmem:[%s8320] sm:$0xff]
    %v8322 = vld [vmem:[%s8320 + $0x8] sm:$0xff]
    %v8323 = vld [vmem:[%s8320 + $0x10] sm:$0xff]
    %v8324 = vld [vmem:[%s8320 + $0x18] sm:$0xff]
    %v8325 = vld [vmem:[%s8320 + $0x20] sm:$0xff]
    %v8326 = vld [vmem:[%s8320 + $0x28] sm:$0xff]
    %v8327 = vld [vmem:[%s8320 + $0x30] sm:$0xff]
    %v8328 = vld [vmem:[%s8320 + $0x38] sm:$0xff]
    %v8330 = vsel %vm107, %v7989, 0
    %8332 = vmatprep.subr.mxu0 0.0
    %8333 = vmatpush1.msra.mxu0 %v8321
    %8334 = vmatprep.subr.mxu0 0.0
    %8335 = vmatpush1.msra.mxu0 %v8322
    %8336 = vmatprep.subr.mxu0 0.0
    %8337 = vmatpush1.msra.mxu0 %v8323
    %8338 = vmatprep.subr.mxu0 0.0
    %8339 = vmatpush1.msra.mxu0 %v8324
    %8340 = vmatprep.subr.mxu0 0.0
    %8341 = vmatpush1.msra.mxu0 %v8325
    %8342 = vmatprep.subr.mxu0 0.0
    %8343 = vmatpush1.msra.mxu0 %v8326
    %8344 = vmatprep.subr.mxu0 0.0
    %8345 = vmatpush1.msra.mxu0 %v8327
    %8346 = vmatprep.subr.mxu0 0.0
    %8347 = vmatpush1.msra.mxu0 %v8328
    %8348 = vmatprep.subr.mxu0 0.0
    %8349 = vmatpush1.msra.mxu0 0.0
    %8350 = vmatprep.subr.mxu0 0.0
    %8351 = vmatpush1.msra.mxu0 0.0
    %8352 = vmatprep.subr.mxu0 0.0
    %8353 = vmatpush1.msra.mxu0 0.0
    %8354 = vmatprep.subr.mxu0 0.0
    %8355 = vmatpush1.msra.mxu0 0.0
    %8356 = vmatprep.subr.mxu0 0.0
    %8357 = vmatpush1.msra.mxu0 0.0
    %8358 = vmatprep.subr.mxu0 0.0
    %8359 = vmatpush1.msra.mxu0 0.0
    %8360 = vmatprep.subr.mxu0 0.0
    %8361 = vmatpush1.msra.mxu0 0.0
    %8362 = vmatprep.subr.mxu0 0.0
    %8363 = vmatpush1.msra.mxu0 0.0
    %8364 = vmatprep.subr.mxu0 0.0
    %8365 = vmatpush1.msra.mxu0 0.0
    %8366 = vmatprep.subr.mxu0 0.0
    %8367 = vmatpush1.msra.mxu0 0.0
    %8368 = vmatprep.subr.mxu0 0.0
    %8369 = vmatpush1.msra.mxu0 0.0
    %8370 = vmatprep.subr.mxu0 0.0
    %8371 = vmatpush1.msra.mxu0 0.0
    %8372 = vmatprep.subr.mxu0 0.0
    %8373 = vmatpush1.msra.mxu0 0.0
    %8374 = vmatprep.subr.mxu0 0.0
    %8375 = vmatpush1.msra.mxu0 0.0
    %8376 = vmatprep.subr.mxu0 0.0
    %8377 = vmatpush1.msra.mxu0 0.0
    %8378 = vmatprep.subr.mxu0 0.0
    %8379 = vmatpush1.msra.mxu0 0.0
    %8380 = vmatprep.subr.mxu0 0.0
    %8381 = vmatpush1.msra.mxu0 0.0
    %8382 = vmatprep.subr.mxu0 0.0
    %8383 = vmatpush1.msra.mxu0 0.0
    %8384 = vmatprep.subr.mxu0 0.0
    %8385 = vmatpush1.msra.mxu0 0.0
    %8386 = vmatprep.subr.mxu0 0.0
    %8387 = vmatpush1.msra.mxu0 0.0
    %8388 = vmatprep.subr.mxu0 0.0
    %8389 = vmatpush1.msra.mxu0 0.0
    %8390 = vmatprep.subr.mxu0 0.0
    %8391 = vmatpush1.msra.mxu0 0.0
    %8392 = vmatprep.subr.mxu0 0.0
    %8393 = vmatpush1.msra.mxu0 0.0
    %8394 = vmatprep.subr.mxu0 0.0
    %8395 = vmatpush1.msra.mxu0 0.0
    %8396 = vmatprep.mubr.f32.mxu0 0.0
    %8397 = vmatmul.mubr.f32.gmra.mrb[0].mxu0 %v8330
    %v8398 = vpop.f32.mrb[0].mxu0
    %v8399 = vadd.f32 0.0, %v8398
    %v8400 = vpop.f32.mrb[0].mxu0
    %8401 = vdwg.mxu0
    %v8402 = vadd.f32 %v8319, %v8399
    %s8403 = scalar_lea.vmem %s14, 320
    %v8404 = vld [vmem:[%s8403] sm:$0xff]
    %v8405 = vld [vmem:[%s8403 + $0x8] sm:$0xff]
    %v8406 = vld [vmem:[%s8403 + $0x10] sm:$0xff]
    %v8407 = vld [vmem:[%s8403 + $0x18] sm:$0xff]
    %v8408 = vld [vmem:[%s8403 + $0x20] sm:$0xff]
    %v8409 = vld [vmem:[%s8403 + $0x28] sm:$0xff]
    %v8410 = vld [vmem:[%s8403 + $0x30] sm:$0xff]
    %v8411 = vld [vmem:[%s8403 + $0x38] sm:$0xff]
    %v8413 = vsel %vm107, %v7990, 0
    %8415 = vmatprep.subr.mxu0 0.0
    %8416 = vmatpush1.msra.mxu0 %v8404
    %8417 = vmatprep.subr.mxu0 0.0
    %8418 = vmatpush1.msra.mxu0 %v8405
    %8419 = vmatprep.subr.mxu0 0.0
    %8420 = vmatpush1.msra.mxu0 %v8406
    %8421 = vmatprep.subr.mxu0 0.0
    %8422 = vmatpush1.msra.mxu0 %v8407
    %8423 = vmatprep.subr.mxu0 0.0
    %8424 = vmatpush1.msra.mxu0 %v8408
    %8425 = vmatprep.subr.mxu0 0.0
    %8426 = vmatpush1.msra.mxu0 %v8409
    %8427 = vmatprep.subr.mxu0 0.0
    %8428 = vmatpush1.msra.mxu0 %v8410
    %8429 = vmatprep.subr.mxu0 0.0
    %8430 = vmatpush1.msra.mxu0 %v8411
    %8431 = vmatprep.subr.mxu0 0.0
    %8432 = vmatpush1.msra.mxu0 0.0
    %8433 = vmatprep.subr.mxu0 0.0
    %8434 = vmatpush1.msra.mxu0 0.0
    %8435 = vmatprep.subr.mxu0 0.0
    %8436 = vmatpush1.msra.mxu0 0.0
    %8437 = vmatprep.subr.mxu0 0.0
    %8438 = vmatpush1.msra.mxu0 0.0
    %8439 = vmatprep.subr.mxu0 0.0
    %8440 = vmatpush1.msra.mxu0 0.0
    %8441 = vmatprep.subr.mxu0 0.0
    %8442 = vmatpush1.msra.mxu0 0.0
    %8443 = vmatprep.subr.mxu0 0.0
    %8444 = vmatpush1.msra.mxu0 0.0
    %8445 = vmatprep.subr.mxu0 0.0
    %8446 = vmatpush1.msra.mxu0 0.0
    %8447 = vmatprep.subr.mxu0 0.0
    %8448 = vmatpush1.msra.mxu0 0.0
    %8449 = vmatprep.subr.mxu0 0.0
    %8450 = vmatpush1.msra.mxu0 0.0
    %8451 = vmatprep.subr.mxu0 0.0
    %8452 = vmatpush1.msra.mxu0 0.0
    %8453 = vmatprep.subr.mxu0 0.0
    %8454 = vmatpush1.msra.mxu0 0.0
    %8455 = vmatprep.subr.mxu0 0.0
    %8456 = vmatpush1.msra.mxu0 0.0
    %8457 = vmatprep.subr.mxu0 0.0
    %8458 = vmatpush1.msra.mxu0 0.0
    %8459 = vmatprep.subr.mxu0 0.0
    %8460 = vmatpush1.msra.mxu0 0.0
    %8461 = vmatprep.subr.mxu0 0.0
    %8462 = vmatpush1.msra.mxu0 0.0
    %8463 = vmatprep.subr.mxu0 0.0
    %8464 = vmatpush1.msra.mxu0 0.0
    %8465 = vmatprep.subr.mxu0 0.0
    %8466 = vmatpush1.msra.mxu0 0.0
    %8467 = vmatprep.subr.mxu0 0.0
    %8468 = vmatpush1.msra.mxu0 0.0
    %8469 = vmatprep.subr.mxu0 0.0
    %8470 = vmatpush1.msra.mxu0 0.0
    %8471 = vmatprep.subr.mxu0 0.0
    %8472 = vmatpush1.msra.mxu0 0.0
    %8473 = vmatprep.subr.mxu0 0.0
    %8474 = vmatpush1.msra.mxu0 0.0
    %8475 = vmatprep.subr.mxu0 0.0
    %8476 = vmatpush1.msra.mxu0 0.0
    %8477 = vmatprep.subr.mxu0 0.0
    %8478 = vmatpush1.msra.mxu0 0.0
    %8479 = vmatprep.mubr.f32.mxu0 0.0
    %8480 = vmatmul.mubr.f32.gmra.mrb[0].mxu0 %v8413
    %v8481 = vpop.f32.mrb[0].mxu0
    %v8482 = vadd.f32 0.0, %v8481
    %v8483 = vpop.f32.mrb[0].mxu0
    %8484 = vdwg.mxu0
    %v8485 = vadd.f32 %v8402, %v8482
    %v8486 = vld [vmem:[%s15] sm:$0x1]
    %v8488 = vlaneseq
    %v8489 = vshrl.u32 %v8488, 7
    %v8490 = vsub.s32 0, %v8489
    %v8491 = vrot.slane %v8486, %v8490
    %v8493 = vadd.f32 %v8485, %v8491
    %8494 = vst.msk [vmem:[#allocation2] sm:$0xff] %vm107, %v8493
    // Predicated region
    $region66: #{forward_pallas.1} parent=1 // pred_check
      _
    $region67: #{forward_pallas.1} parent=1 // pred_check_branch
      %8496 = sbr.rel (0) target = $region69
    $region68: #{forward_pallas.1} parent=1 // pred_region
      %s8498 = ssub.s32 128, 128
      %8499 = vsyncadd [#allocation3], %s8498
      %s8501 = sshll.u32 [#allocation2], 4
      %s8502 = int_to_ptr.vmem [resolvable:$true] %s8501
      %8504 = dma.vmem_to_hbm [thread:$0]  %s8502, 128, %s16, [#allocation3]
    $region69: #{forward_pallas.1} parent=1 // pred_fallthru
      _
    // Predicated region
    $region70: #{forward_pallas.1} parent=1 // pred_check
      _
    $region71: #{forward_pallas.1} parent=1 // pred_check_branch
      %8506 = sbr.rel (0) target = $region73
    $region72: #{forward_pallas.1} parent=1 // pred_region
      %8507 = dma.done [#allocation3], 128
    $region73: #{forward_pallas.1} parent=1 // pred_fallthru
      _
    %8508 = vsyncpa [#allocation3], 1

</llo_original>
